<compile_context>
chip_gen: v5e
topology: v5e:2x2
jax: 0.10.0
libtpu: 0.0.40
codegen_flags: <defaults>
</compile_context>

<pallas_src>
import functools

import jax
import jax.numpy as jnp
from jax.experimental import pallas as pl
from jax.experimental.pallas import tpu as pltpu

RESNET_FTRS = 2048     # models.resnet152().fc.in_features
DENSENET_FTRS = 2208   # models.densenet161().classifier.in_features
NUM_CLASSES = 16
COUT = RESNET_FTRS + DENSENET_FTRS                  # 4256
COUT_PAD = ((COUT + 127) // 128) * 128              # 4352 (lane aligned)
HEAD_LANES = 128                                    # padded lane width for head/output
OUT_SUBLANES = 8                                    # (8,128)-aligned output slab
ACC_SUBLANES = 8                                    # GAP accumulator sublanes


# ----------------------------------------------------------------------------
# Fused Pallas kernel: conv(im2col matmul, both branches) -> ReLU -> GAP accum
#                      -> [finalize] block-diag classifier -> head -> sigmoid
# ----------------------------------------------------------------------------
def _fused_kernel(inv_hw, hw, need_mask,
                  p_ref, wc_ref, bc_ref, fcw_ref, fcb_ref,
                  w1_ref, b1_ref, w2_ref, b2_ref,
                  out_ref, acc_ref):
    """Grid = (batch, row_tiles).

    p_ref   : (1, tile_hw, K)      bf16 im2col patch tile of batch b (K = 9*Cin)
    wc_ref  : (K, COUT_PAD)        bf16 fused conv weight [resnet | densenet | 0]
    bc_ref  : (1, COUT_PAD)        f32 fused conv bias
    fcw_ref : (COUT_PAD, 128)      bf16 block-diag classifier (gives cat(o1,o2))
    fcb_ref : (1, 128)             f32 classifier bias [fc_r_b | fc_d_b | 0]
    w1/b1   : (128,128)/(1,128)    f32 padded head fc1
    w2/b2   : (128,128)/(1,128)    f32 padded head fc2
    out_ref : (8, 128)             f32 lane-dense output slab for batch b
    acc_ref : (8, COUT_PAD)        f32 pooled-sum accumulator (VMEM scratch)
    """
    rt = pl.program_id(1)

    @pl.when(rt == 0)
    def _init():
        acc_ref[...] = jnp.zeros_like(acc_ref)

    # conv as im2col matmul (bf16 MXU, f32 accumulate) + bias + ReLU
    conv = jnp.dot(p_ref[0], wc_ref[...], preferred_element_type=jnp.float32)
    conv = jnp.maximum(conv + bc_ref[...], 0.0)

    if need_mask:
        # static path: only emitted when HW was zero-padded to a tile multiple;
        # padded rows would otherwise contribute relu(bias) to the pooled sum.
        tile_hw = conv.shape[0]
        row = rt * tile_hw + jax.lax.broadcasted_iota(jnp.int32, (tile_hw, 1), 0)
        conv = jnp.where(row < hw, conv, 0.0)

    # partial global-average-pool: fold rows into 8-sublane groups with pure
    # vreg-wise VPU adds (no per-step cross-sublane XLU reduce)
    acc_ref[...] += conv.reshape(-1, ACC_SUBLANES, conv.shape[-1]).sum(axis=0)

    @pl.when(rt == pl.num_programs(1) - 1)
    def _finalize():
        # single 8->1 cross-sublane reduce per batch
        pooled = jnp.sum(acc_ref[...], axis=0, keepdims=True) * inv_hw      # (1, COUT_PAD)
        # block-diagonal classifier == cat(resnet_fc(pool_r), densenet_fc(pool_d))
        cat = jnp.dot(pooled.astype(jnp.bfloat16), fcw_ref[...],
                      preferred_element_type=jnp.float32) + fcb_ref[...]    # (1, 128)
        h = jnp.maximum(jnp.dot(cat, w1_ref[...],
                                preferred_element_type=jnp.float32) + b1_ref[...], 0.0)
        z = jnp.dot(h, w2_ref[...],
                    preferred_element_type=jnp.float32) + b2_ref[...]
        sig = jax.nn.sigmoid(z)
        out_ref[...] = jnp.broadcast_to(sig, (OUT_SUBLANES, HEAD_LANES))


def _fused_call(patches, w_cat, b_cat, fc_cat, fc_b, w1p, b1p, w2p, b2p,
                *, hw, tile_hw):
    B, hw_pad, K = patches.shape
    n_rt = hw_pad // tile_hw
    kernel = functools.partial(_fused_kernel, 1.0 / float(hw), hw, hw_pad != hw)
    const = lambda b, rt: (0, 0)

    # Conservative VMEM budget: leaves headroom inside v7x's 64 MiB physical
    # VMEM, and is well below the 128 MiB on v5e/v6e.
    est = (2 * tile_hw * max(K, 128) * 2              # patch tiles (2 buffers, bf16)
           + tile_hw * COUT_PAD * 4                   # f32 conv intermediate
           + 2 * ((K + 15) // 16 * 16) * COUT_PAD * 2 # fused conv W (2 buffers, bf16)
           + 2 * COUT_PAD * HEAD_LANES * 2            # block-diag classifier (bf16)
           + ACC_SUBLANES * COUT_PAD * 4              # GAP accumulator
           + 8 * HEAD_LANES * HEAD_LANES * 4)         # head weights/biases/out (gen.)
    vmem_limit = int(min(48 * 1024 * 1024, max(32 * 1024 * 1024, 2 * est)))

    out = pl.pallas_call(
        kernel,
        out_shape=jax.ShapeDtypeStruct((B * OUT_SUBLANES, HEAD_LANES), jnp.float32),
        grid_spec=pltpu.PrefetchScalarGridSpec(
            num_scalar_prefetch=0,
            grid=(B, n_rt),
            in_specs=[
                pl.BlockSpec((1, tile_hw, K), lambda b, rt: (b, rt, 0)),  # patches
                pl.BlockSpec((K, COUT_PAD), const),                       # fused conv W
                pl.BlockSpec((1, COUT_PAD), const),                       # fused conv b
                pl.BlockSpec((COUT_PAD, HEAD_LANES), const),              # block-diag fc
                pl.BlockSpec((1, HEAD_LANES), const),                     # fc bias
                pl.BlockSpec((HEAD_LANES, HEAD_LANES), const),            # head fc1 W
                pl.BlockSpec((1, HEAD_LANES), const),                     # head fc1 b
                pl.BlockSpec((HEAD_LANES, HEAD_LANES), const),            # head fc2 W
                pl.BlockSpec((1, HEAD_LANES), const),                     # head fc2 b
            ],
            out_specs=pl.BlockSpec((OUT_SUBLANES, HEAD_LANES), lambda b, rt: (b, 0)),
            scratch_shapes=[pltpu.VMEM((ACC_SUBLANES, COUT_PAD), jnp.float32)],
        ),
        compiler_params=pltpu.CompilerParams(
            dimension_semantics=("parallel", "arbitrary"),
            vmem_limit_bytes=vmem_limit,
        ),
    )(patches, w_cat, b_cat, fc_cat, fc_b, w1p, b1p, w2p, b2p)
    # lane-dense slab -> (B, 16)
    return out.reshape(B, OUT_SUBLANES, HEAD_LANES)[:, 0, :NUM_CLASSES]


# ----------------------------------------------------------------------------
# Plain-JAX glue (layout / im2col / parameter prep)
# ----------------------------------------------------------------------------
def _im2col_3x3(x_nhwc):
    """3x3, stride 1, padding 1 -> (B, H*W, 9*C), tap order (kh, kw, ci)."""
    B, H, W, C = x_nhwc.shape
    xp = jnp.pad(x_nhwc, ((0, 0), (1, 1), (1, 1), (0, 0)))
    cols = [xp[:, dh:dh + H, dw:dw + W, :] for dh in range(3) for dw in range(3)]
    p = jnp.stack(cols, axis=3)               # (B, H, W, 9, C)
    return p.reshape(B, H * W, 9 * C)


def init_params(key, cin):
    """Deterministic synthetic parameters (shapes follow the torch module)."""
    ks = jax.random.split(key, 12)
    s = 0.05
    n = lambda k, shp: (jax.random.normal(k, shp, jnp.float32) * s)
    return {
        # resnet152 branch stand-in
        "conv_r_w": n(ks[0], (RESNET_FTRS, cin, 3, 3)),    # torch conv (Cout,Cin,kh,kw)
        "conv_r_b": n(ks[1], (RESNET_FTRS,)),
        "fc_r_w":   n(ks[2], (NUM_CLASSES, RESNET_FTRS)),  # torch Linear (out,in)
        "fc_r_b":   n(ks[3], (NUM_CLASSES,)),
        # densenet161 branch stand-in
        "conv_d_w": n(ks[4], (DENSENET_FTRS, cin, 3, 3)),
        "conv_d_b": n(ks[5], (DENSENET_FTRS,)),
        "fc_d_w":   n(ks[6], (NUM_CLASSES, DENSENET_FTRS)),
        "fc_d_b":   n(ks[7], (NUM_CLASSES,)),
        # MyDenseNet head (exact shapes from the module)
        "fc1_w": n(ks[8], (32, 32)),
        "fc1_b": n(ks[9], (32,)),
        "fc2_w": n(ks[10], (NUM_CLASSES, 32)),
        "fc2_b": n(ks[11], (NUM_CLASSES,)),
    }


@jax.jit
def my_densenet_forward(params, x_nchw):
    # NCHW -> NHWC, cast to bf16 ONCE before im2col (fused prologue, half the bytes)
    x = jnp.transpose(x_nchw, (0, 2, 3, 1)).astype(jnp.bfloat16)
    B, H, W, C = x.shape
    HW = H * W
    K = 9 * C

    # im2col patches in bf16; K is NOT lane-padded (stays the full last dim of the
    # array / block, which Pallas allows) -> far less HBM patch traffic.
    patches = _im2col_3x3(x)                                  # (B, HW, 9C) bf16

    # pad HW to a 128-multiple so the row axis pipelines with large tiles;
    # padded rows are masked inside the kernel before the GAP accumulate.
    HW_pad = ((HW + 127) // 128) * 128
    tile_hw = 512 if HW_pad % 512 == 0 else (256 if HW_pad % 256 == 0 else 128)
    if HW_pad != HW:
        patches = jnp.pad(patches, ((0, 0), (0, HW_pad - HW), (0, 0)))

    # fused conv weight/bias along Cout: [resnet 2048 | densenet 2208 | zero pad]
    wr = jnp.transpose(params["conv_r_w"], (2, 3, 1, 0)).reshape(K, RESNET_FTRS)
    wd = jnp.transpose(params["conv_d_w"], (2, 3, 1, 0)).reshape(K, DENSENET_FTRS)
    w_cat = jnp.concatenate([wr, wd], axis=1)
    w_cat = jnp.pad(w_cat, ((0, 0), (0, COUT_PAD - COUT))).astype(jnp.bfloat16)
    b_cat = jnp.pad(jnp.concatenate([params["conv_r_b"], params["conv_d_b"]]),
                    (0, COUT_PAD - COUT)).reshape(1, COUT_PAD).astype(jnp.float32)

    # block-diagonal classifier: pooled @ fc_cat + fc_b == cat(o1, o2); bf16 halves
    # its resident VMEM/DMA footprint (accumulation stays f32 in-kernel).
    fc_cat = jnp.zeros((COUT_PAD, HEAD_LANES), jnp.float32)
    fc_cat = fc_cat.at[:RESNET_FTRS, :NUM_CLASSES].set(params["fc_r_w"].T)
    fc_cat = fc_cat.at[RESNET_FTRS:COUT, NUM_CLASSES:2 * NUM_CLASSES].set(params["fc_d_w"].T)
    fc_cat = fc_cat.astype(jnp.bfloat16)
    fc_b = jnp.zeros((1, HEAD_LANES), jnp.float32)
    fc_b = fc_b.at[0, :NUM_CLASSES].set(params["fc_r_b"])
    fc_b = fc_b.at[0, NUM_CLASSES:2 * NUM_CLASSES].set(params["fc_d_b"])

    # head fc1/fc2, zero-padded to (128,128) lane-dense f32 tiles (tiny; kept f32)
    w1p = jnp.zeros((HEAD_LANES, HEAD_LANES), jnp.float32).at[:32, :32].set(params["fc1_w"].T)
    b1p = jnp.zeros((1, HEAD_LANES), jnp.float32).at[0, :32].set(params["fc1_b"])
    w2p = jnp.zeros((HEAD_LANES, HEAD_LANES), jnp.float32).at[:32, :NUM_CLASSES].set(params["fc2_w"].T)
    b2p = jnp.zeros((1, HEAD_LANES), jnp.float32).at[0, :NUM_CLASSES].set(params["fc2_b"])

    return _fused_call(patches, w_cat, b_cat, fc_cat, fc_b, w1p, b1p, w2p, b2p,
                       hw=HW, tile_hw=tile_hw)


# ----------------------------------------------------------------------------
# Pure-JAX reference (same semantics as the fused kernel, f32 throughout)
# ----------------------------------------------------------------------------
def _reference(params, x_nchw):
    x = jnp.transpose(x_nchw, (0, 2, 3, 1)).astype(jnp.float32)
    B, H, W, C = x.shape
    patches = _im2col_3x3(x)                                  # (B, HW, 9C)

    def branch(wt, bt, fw, fb):
        w = jnp.transpose(wt, (2, 3, 1, 0)).reshape(9 * C, -1)
        conv = jnp.maximum(jnp.einsum("bpk,kc->bpc", patches, w) + bt, 0.0)
        pooled = conv.mean(axis=1)
        return pooled @ fw.T + fb

    o1 = branch(params["conv_r_w"], params["conv_r_b"], params["fc_r_w"], params["fc_r_b"])
    o2 = branch(params["conv_d_w"], params["conv_d_b"], params["fc_d_w"], params["fc_d_b"])
    cat = jnp.concatenate([o1, o2], axis=1)
    h = jnp.maximum(cat @ params["fc1_w"].T + params["fc1_b"], 0.0)
    return jax.nn.sigmoid(h @ params["fc2_w"].T + params["fc2_b"])


if __name__ == "__main__":
    key = jax.random.PRNGKey(0)
    k_p, k_x = jax.random.split(key)
    B, C, Hs, Ws = 2, 4, 16, 16
    params = init_params(k_p, cin=C)
    x = jax.random.normal(k_x, (B, C, Hs, Ws), jnp.float32)   # NCHW, like PyTorch

    out = my_densenet_forward(params, x)
    out = jax.block_until_ready(out)

    assert out.shape == (B, NUM_CLASSES)
    assert bool(jnp.all((out >= 0.0) & (out <= 1.0)))
    ref = _reference(params, x)
    assert bool(jnp.allclose(out, ref, atol=2e-2, rtol=2e-2)), (
        f"max abs err {float(jnp.max(jnp.abs(out - ref)))}")
    print("KERNEL_OK")
</pallas_src>

<mosaic_0001>
module attributes {stable_mosaic.version = 11 : i64} {
  func.func @_fused_kernel(%arg0: i32, %arg1: i32, %arg2: memref<1x256x36xbf16, #tpu.memory_space<vmem>>, %arg3: memref<36x4352xbf16, #tpu.memory_space<vmem>>, %arg4: memref<1x4352xf32, #tpu.memory_space<vmem>>, %arg5: memref<4352x128xbf16, #tpu.memory_space<vmem>>, %arg6: memref<1x128xf32, #tpu.memory_space<vmem>>, %arg7: memref<128x128xf32, #tpu.memory_space<vmem>>, %arg8: memref<1x128xf32, #tpu.memory_space<vmem>>, %arg9: memref<128x128xf32, #tpu.memory_space<vmem>>, %arg10: memref<1x128xf32, #tpu.memory_space<vmem>>, %arg11: memref<8x128xf32, #tpu.memory_space<vmem>>, %arg12: memref<8x4352xf32, #tpu.memory_space<vmem>>) attributes {dimension_semantics = [#tpu.dimension_semantics<parallel>, #tpu.dimension_semantics<arbitrary>], iteration_bounds = array<i64: 2, 1>, scalar_prefetch = 0 : i64, scratch_operands = 1 : i64, tpu.core_type = #tpu.core_type<tc>, window_params = [{transform_indices = @transform_0, window_bounds = array<i64: 1, 256, 36>}, {pipeline_mode = #tpu.pipeline_mode<synchronous>, transform_indices = @transform_1, window_bounds = array<i64: 36, 4352>}, {pipeline_mode = #tpu.pipeline_mode<synchronous>, transform_indices = @transform_2, window_bounds = array<i64: 1, 4352>}, {pipeline_mode = #tpu.pipeline_mode<synchronous>, transform_indices = @transform_3, window_bounds = array<i64: 4352, 128>}, {pipeline_mode = #tpu.pipeline_mode<synchronous>, transform_indices = @transform_4, window_bounds = array<i64: 1, 128>}, {pipeline_mode = #tpu.pipeline_mode<synchronous>, transform_indices = @transform_5, window_bounds = array<i64: 128, 128>}, {pipeline_mode = #tpu.pipeline_mode<synchronous>, transform_indices = @transform_6, window_bounds = array<i64: 1, 128>}, {pipeline_mode = #tpu.pipeline_mode<synchronous>, transform_indices = @transform_7, window_bounds = array<i64: 128, 128>}, {pipeline_mode = #tpu.pipeline_mode<synchronous>, transform_indices = @transform_8, window_bounds = array<i64: 1, 128>}, {transform_indices = @transform_9, window_bounds = array<i64: 8, 128>}]} {
    %c0_i32 = arith.constant 0 : i32
    %0 = arith.cmpi eq, %arg1, %c0_i32 : i32
    %1 = arith.extui %0 : i1 to i32
    %c0_i32_0 = arith.constant 0 : i32
    %2 = arith.cmpi ne, %1, %c0_i32_0 : i32
    scf.if %2 {
      %cst_15 = arith.constant 0.000000e+00 : f32
      %20 = vector.broadcast %cst_15 : f32 to vector<8x4352xf32>
      %c0_16 = arith.constant 0 : index
      %c0_17 = arith.constant 0 : index
      %21 = vector.load %arg12[%c0_16, %c0_17] : memref<8x4352xf32, #tpu.memory_space<vmem>>, vector<8x4352xf32>
      tpu.vector_store %arg12[%c0_16, %c0_17], %20 {strides = array<i32>} : memref<8x4352xf32, #tpu.memory_space<vmem>>, vector<8x4352xf32>,
    } else {
    }
    %c0 = arith.constant 0 : index
    %c0_1 = arith.constant 0 : index
    %c0_2 = arith.constant 0 : index
    %3 = vector.load %arg2[%c0, %c0_1, %c0_2] : memref<1x256x36xbf16, #tpu.memory_space<vmem>>, vector<1x256x36xbf16>
    %4 = vector.shape_cast %3 : vector<1x256x36xbf16> to vector<256x36xbf16>
    %c0_3 = arith.constant 0 : index
    %c0_4 = arith.constant 0 : index
    %5 = vector.load %arg3[%c0_3, %c0_4] : memref<36x4352xbf16, #tpu.memory_space<vmem>>, vector<36x4352xbf16>
    %cst = arith.constant dense<0.000000e+00> : vector<256x4352xf32>
    %6 = tpu.matmul %4, %5, %cst {dimension_numbers = #tpu.dot_dimension_numbers<[1], [0], [0], [1], [0, 0, 1, 1], [], []>} : vector<256x36xbf16>, vector<36x4352xbf16>, vector<256x4352xf32> -> vector<256x4352xf32>
    %c0_5 = arith.constant 0 : index
    %c0_6 = arith.constant 0 : index
    %7 = vector.load %arg4[%c0_5, %c0_6] : memref<1x4352xf32, #tpu.memory_space<vmem>>, vector<1x4352xf32>
    %8 = vector.broadcast %7 : vector<1x4352xf32> to vector<256x4352xf32>
    %9 = arith.addf %6, %8 : vector<256x4352xf32>
    %cst_7 = arith.constant 0.000000e+00 : f32
    %10 = vector.broadcast %cst_7 : f32 to vector<256x4352xf32>
    %11 = arith.maximumf %9, %10 : vector<256x4352xf32>
    %c0_8 = arith.constant 0 : index
    %c0_9 = arith.constant 0 : index
    %12 = vector.load %arg12[%c0_8, %c0_9] : memref<8x4352xf32, #tpu.memory_space<vmem>>, vector<8x4352xf32>
    %13 = vector.shape_cast %11 : vector<256x4352xf32> to vector<32x8x4352xf32>
    %cst_10 = arith.constant dense<0.000000e+00> : vector<8x4352xf32>
    %14 = vector.multi_reduction <add>, %13, %cst_10 [0] : vector<32x8x4352xf32> to vector<8x4352xf32>
    %15 = arith.addf %12, %14 : vector<8x4352xf32>
    %c0_11 = arith.constant 0 : index
    %c0_12 = arith.constant 0 : index
    %16 = vector.load %arg12[%c0_11, %c0_12] : memref<8x4352xf32, #tpu.memory_space<vmem>>, vector<8x4352xf32>
    tpu.vector_store %arg12[%c0_11, %c0_12], %15 {strides = array<i32>} : memref<8x4352xf32, #tpu.memory_space<vmem>>, vector<8x4352xf32>,
    %c0_i32_13 = arith.constant 0 : i32
    %17 = arith.cmpi eq, %arg1, %c0_i32_13 : i32
    %18 = arith.extui %17 : i1 to i32
    %c0_i32_14 = arith.constant 0 : i32
    %19 = arith.cmpi ne, %18, %c0_i32_14 : i32
    scf.if %19 {
      %c0_15 = arith.constant 0 : index
      %c0_16 = arith.constant 0 : index
      %20 = vector.load %arg12[%c0_15, %c0_16] : memref<8x4352xf32, #tpu.memory_space<vmem>>, vector<8x4352xf32>
      %cst_17 = arith.constant dense<0.000000e+00> : vector<4352xf32>
      %21 = vector.multi_reduction <add>, %20, %cst_17 [0] : vector<8x4352xf32> to vector<4352xf32>
      %22 = vector.shape_cast %21 : vector<4352xf32> to vector<1x4352xf32>
      %cst_18 = arith.constant 3.906250e-03 : f32
      %23 = vector.broadcast %cst_18 : f32 to vector<1x4352xf32>
      %24 = arith.mulf %22, %23 : vector<1x4352xf32>
      %25 = arith.truncf %24 : vector<1x4352xf32> to vector<1x4352xbf16>
      %c0_19 = arith.constant 0 : index
      %c0_20 = arith.constant 0 : index
      %26 = vector.load %arg5[%c0_19, %c0_20] : memref<4352x128xbf16, #tpu.memory_space<vmem>>, vector<4352x128xbf16>
      %cst_21 = arith.constant dense<0.000000e+00> : vector<1x128xf32>
      %27 = tpu.matmul %25, %26, %cst_21 {dimension_numbers = #tpu.dot_dimension_numbers<[1], [0], [0], [1], [0, 0, 1, 1], [], []>} : vector<1x4352xbf16>, vector<4352x128xbf16>, vector<1x128xf32> -> vector<1x128xf32>
      %c0_22 = arith.constant 0 : index
      %c0_23 = arith.constant 0 : index
      %28 = vector.load %arg6[%c0_22, %c0_23] : memref<1x128xf32, #tpu.memory_space<vmem>>, vector<1x128xf32>
      %29 = arith.addf %27, %28 : vector<1x128xf32>
      %c0_24 = arith.constant 0 : index
      %c0_25 = arith.constant 0 : index
      %30 = vector.load %arg7[%c0_24, %c0_25] : memref<128x128xf32, #tpu.memory_space<vmem>>, vector<128x128xf32>
      %cst_26 = arith.constant dense<0.000000e+00> : vector<1x128xf32>
      %31 = tpu.matmul %29, %30, %cst_26 {dimension_numbers = #tpu.dot_dimension_numbers<[1], [0], [0], [1], [0, 0, 1, 1], [], []>} : vector<1x128xf32>, vector<128x128xf32>, vector<1x128xf32> -> vector<1x128xf32>
      %c0_27 = arith.constant 0 : index
      %c0_28 = arith.constant 0 : index
      %32 = vector.load %arg8[%c0_27, %c0_28] : memref<1x128xf32, #tpu.memory_space<vmem>>, vector<1x128xf32>
      %33 = arith.addf %31, %32 : vector<1x128xf32>
      %cst_29 = arith.constant 0.000000e+00 : f32
      %34 = vector.broadcast %cst_29 : f32 to vector<1x128xf32>
      %35 = arith.maximumf %33, %34 : vector<1x128xf32>
      %c0_30 = arith.constant 0 : index
      %c0_31 = arith.constant 0 : index
      %36 = vector.load %arg9[%c0_30, %c0_31] : memref<128x128xf32, #tpu.memory_space<vmem>>, vector<128x128xf32>
      %cst_32 = arith.constant dense<0.000000e+00> : vector<1x128xf32>
      %37 = tpu.matmul %35, %36, %cst_32 {dimension_numbers = #tpu.dot_dimension_numbers<[1], [0], [0], [1], [0, 0, 1, 1], [], []>} : vector<1x128xf32>, vector<128x128xf32>, vector<1x128xf32> -> vector<1x128xf32>
      %c0_33 = arith.constant 0 : index
      %c0_34 = arith.constant 0 : index
      %38 = vector.load %arg10[%c0_33, %c0_34] : memref<1x128xf32, #tpu.memory_space<vmem>>, vector<1x128xf32>
      %39 = arith.addf %37, %38 : vector<1x128xf32>
      %40 = arith.negf %39 : vector<1x128xf32>
      %41 = math.exp %40 : vector<1x128xf32>
      %cst_35 = arith.constant 1.000000e+00 : f32
      %42 = vector.broadcast %cst_35 : f32 to vector<1x128xf32>
      %43 = arith.addf %42, %41 : vector<1x128xf32>
      %44 = arith.divf %42, %43 : vector<1x128xf32>
      %45 = vector.shape_cast %44 : vector<1x128xf32> to vector<1x128xf32>
      %46 = vector.broadcast %45 : vector<1x128xf32> to vector<8x128xf32>
      %c0_36 = arith.constant 0 : index
      %c0_37 = arith.constant 0 : index
      %47 = vector.load %arg11[%c0_36, %c0_37] : memref<8x128xf32, #tpu.memory_space<vmem>>, vector<8x128xf32>
      tpu.vector_store %arg11[%c0_36, %c0_37], %46 {strides = array<i32>} : memref<8x128xf32, #tpu.memory_space<vmem>>, vector<8x128xf32>,
    } else {
    }
    return
  }
  func.func @transform_0(%arg0: i32, %arg1: i32) -> (i32, i32, i32) {
    %c0_i32 = arith.constant 0 : i32
    %c0_i32_0 = arith.constant 0 : i32
    return %arg0, %arg1, %c0_i32 : i32, i32, i32
  }
  func.func @transform_1(%arg0: i32, %arg1: i32) -> (i32, i32) {
    %c0_i32 = arith.constant 0 : i32
    %c0_i32_0 = arith.constant 0 : i32
    %c0_i32_1 = arith.constant 0 : i32
    return %c0_i32, %c0_i32_0 : i32, i32
  }
  func.func @transform_2(%arg0: i32, %arg1: i32) -> (i32, i32) {
    %c0_i32 = arith.constant 0 : i32
    %c0_i32_0 = arith.constant 0 : i32
    %c0_i32_1 = arith.constant 0 : i32
    return %c0_i32, %c0_i32_0 : i32, i32
  }
  func.func @transform_3(%arg0: i32, %arg1: i32) -> (i32, i32) {
    %c0_i32 = arith.constant 0 : i32
    %c0_i32_0 = arith.constant 0 : i32
    %c0_i32_1 = arith.constant 0 : i32
    return %c0_i32, %c0_i32_0 : i32, i32
  }
  func.func @transform_4(%arg0: i32, %arg1: i32) -> (i32, i32) {
    %c0_i32 = arith.constant 0 : i32
    %c0_i32_0 = arith.constant 0 : i32
    %c0_i32_1 = arith.constant 0 : i32
    return %c0_i32, %c0_i32_0 : i32, i32
  }
  func.func @transform_5(%arg0: i32, %arg1: i32) -> (i32, i32) {
    %c0_i32 = arith.constant 0 : i32
    %c0_i32_0 = arith.constant 0 : i32
    %c0_i32_1 = arith.constant 0 : i32
    return %c0_i32, %c0_i32_0 : i32, i32
  }
  func.func @transform_6(%arg0: i32, %arg1: i32) -> (i32, i32) {
    %c0_i32 = arith.constant 0 : i32
    %c0_i32_0 = arith.constant 0 : i32
    %c0_i32_1 = arith.constant 0 : i32
    return %c0_i32, %c0_i32_0 : i32, i32
  }
  func.func @transform_7(%arg0: i32, %arg1: i32) -> (i32, i32) {
    %c0_i32 = arith.constant 0 : i32
    %c0_i32_0 = arith.constant 0 : i32
    %c0_i32_1 = arith.constant 0 : i32
    return %c0_i32, %c0_i32_0 : i32, i32
  }
  func.func @transform_8(%arg0: i32, %arg1: i32) -> (i32, i32) {
    %c0_i32 = arith.constant 0 : i32
    %c0_i32_0 = arith.constant 0 : i32
    %c0_i32_1 = arith.constant 0 : i32
    return %c0_i32, %c0_i32_0 : i32, i32
  }
  func.func @transform_9(%arg0: i32, %arg1: i32) -> (i32, i32) {
    %c0_i32 = arith.constant 0 : i32
    %c0_i32_0 = arith.constant 0 : i32
    return %arg0, %c0_i32 : i32, i32
  }
}

</mosaic_0001>

<llo_original>
// kernel: my_densenet_forward.1
$region0: #{my_densenet_forward.1}
  #allocation0 [shape = 'u32[]', space=smem, size = 0x4, offset = 0x4, fixed_abs, tag = 'smem constant byte address 0x4 - core index']
  #allocation1 [shape = 'u32[72,128]{1,0:T(1,128)}', space=vmem, size = 0x9000, scoped, tag = 'internal scratch']
  #allocation2 [shape = 'f32[8,4352]{1,0:T(8,128)}', space=vmem, size = 0x22000, scoped, tag = 'scratch operand']
  %s0 = inlined_call_operand.vmem [shape: bf16[2,256,36], index: 0, kind: input, shape index: {}]
  %s1 = inlined_call_operand.vmem [shape: bf16[36,4352], index: 1, kind: input, shape index: {}]
  %s2 = inlined_call_operand.vmem [shape: f32[1,4352], index: 2, kind: input, shape index: {}]
  %s3 = inlined_call_operand.vmem [shape: bf16[4352,128], index: 3, kind: input, shape index: {}]
  %s4 = inlined_call_operand.vmem [shape: f32[1,128], index: 4, kind: input, shape index: {}]
  %s5 = inlined_call_operand.vmem [shape: f32[128,128], index: 5, kind: input, shape index: {}]
  %s6 = inlined_call_operand.vmem [shape: f32[1,128], index: 6, kind: input, shape index: {}]
  %s7 = inlined_call_operand.vmem [shape: f32[128,128], index: 7, kind: input, shape index: {}]
  %s8 = inlined_call_operand.vmem [shape: f32[1,128], index: 8, kind: input, shape index: {}]
  %s9 = inlined_call_operand.vmem [shape: f32[16,128], index: 9, kind: output, shape index: {}]
  %s10 = sld [smem:[#allocation0]]
  $region77: #{my_densenet_forward.1} parent=0
    _
  %s12 = ssub.s32 1, %s10
  %s13 = scalar_select 0, %s12, %s10
  loop: start=0, step=1, limit=4
  $region2: #{my_densenet_forward.1} parent=0 // loop_pre_header
    _
  $region3: #{my_densenet_forward.1} parent=0 // loop_header
    %s15 = sphi 0, %s19
    %p16 = scmp.ge.s32.totalorder %s15, 4
    %s22 = sphi 0, %s34
    %s23 = sphi 0, %s30
    %s24 = sphi 0, %s22
    %s25 = sphi 0, %s23
    %s26 = sphi 0, %s24
    %s27 = sphi 0, %s25
    %s39 = sphi 0, %s41
    %s42 = sphi 0, %s39
    %s43 = sphi 0, %s42
    %s59 = sphi 0, %s43
    %s63 = sphi 0, %s63
    %s65 = sphi 0, %s63
    %s66 = sphi 0, %s65
    %s80 = sphi 0, %s66
    %s84 = sphi 0, %s84
    %s86 = sphi 0, %s84
    %s87 = sphi 0, %s86
    %s101 = sphi 0, %s87
    %s105 = sphi 0, %s105
    %s107 = sphi 0, %s105
    %s108 = sphi 0, %s107
    %s122 = sphi 0, %s108
    %s126 = sphi 0, %s126
    %s128 = sphi 0, %s126
    %s129 = sphi 0, %s128
    %s143 = sphi 0, %s129
    %s147 = sphi 0, %s147
    %s149 = sphi 0, %s147
    %s150 = sphi 0, %s149
    %s164 = sphi 0, %s150
    %s168 = sphi 0, %s168
    %s170 = sphi 0, %s168
    %s171 = sphi 0, %s170
    %s185 = sphi 0, %s171
    %s189 = sphi 0, %s189
    %s191 = sphi 0, %s189
    %s192 = sphi 0, %s191
    %s206 = sphi 0, %s192
    %s210 = sphi 0, %s210
    %s212 = sphi 0, %s210
    %s213 = sphi 0, %s212
    %s227 = sphi 0, %s213
    %s233 = sphi 0, %s235
    %s236 = sphi 0, %s233
    %s237 = sphi 0, %s236
    %s253 = sphi 0, %s237
  $region4: #{my_densenet_forward.1} parent=0 // loop_header_branch
    %18 = sbr.rel (%p16) target = $region8
  $region5: #{my_densenet_forward.1} parent=0 // loop_body
    %s20 = ssub.s32 %s15, 1
    %s21 = ssub.s32 %s15, 2
    %s28 = sadd.s32 1, %s23
    %p29 = scmp.ge.s32.totalorder %s28, 1
    %s30 = scalar_select %p29, 0, %s28
    %s31 = sadd.s32 1, %s22
    %s32 = scalar_select %p29, %s31, %s22
    %p33 = scmp.ge.s32.totalorder %s32, 2
    %s34 = scalar_select %p33, 0, %s32
    %s35 = ssub.s32 %s22, %s34
    %s36 = ssub.s32 %s23, %s30
    %s37 = sor.u32 %s35, %s36
    %p38 = scmp.eq.s32.totalorder %s37, 0
    %s40 = sadd.s32 %s39, 1
    %s41 = scalar_select %p38, %s39, %s40
    %p44 = pneg %p38
    %p45 = scmp.eq.s32.totalorder %s15, 1
    %p46 = por %p44, %p45
    %p47 = scmp.ne.s32.totalorder %s39, %s42
    %p48 = scmp.eq.s32.totalorder %s15, 0
    %p49 = por %p47, %p48
    %p50 = scmp.ne.s32.totalorder %s39, %s42
    %p51 = scmp.eq.s32.totalorder %s20, 1
    %p52 = por %p50, %p51
    %p53 = scmp.ne.s32.totalorder %s42, %s43
    %p54 = scmp.eq.s32.totalorder %s20, 0
    %p55 = por %p53, %p54
    %p56 = scmp.ne.s32.totalorder %s42, %s43
    %p57 = scmp.eq.s32.totalorder %s21, 1
    %p58 = por %p56, %p57
    %p60 = scmp.ne.s32.totalorder %s43, %s59
    %p61 = scmp.eq.s32.totalorder %s21, 0
    %p62 = por %p60, %p61
    %s64 = sadd.s32 %s63, 1
    %p67 = scmp.eq.s32.totalorder %s15, 1
    %p68 = scmp.ne.s32.totalorder %s63, %s65
    %p69 = scmp.eq.s32.totalorder %s15, 0
    %p70 = por %p68, %p69
    %p71 = scmp.ne.s32.totalorder %s63, %s65
    %p72 = scmp.eq.s32.totalorder %s20, 1
    %p73 = por %p71, %p72
    %p74 = scmp.ne.s32.totalorder %s65, %s66
    %p75 = scmp.eq.s32.totalorder %s20, 0
    %p76 = por %p74, %p75
    %p77 = scmp.ne.s32.totalorder %s65, %s66
    %p78 = scmp.eq.s32.totalorder %s21, 1
    %p79 = por %p77, %p78
    %p81 = scmp.ne.s32.totalorder %s66, %s80
    %p82 = scmp.eq.s32.totalorder %s21, 0
    %p83 = por %p81, %p82
    %s85 = sadd.s32 %s84, 1
    %p88 = scmp.eq.s32.totalorder %s15, 1
    %p89 = scmp.ne.s32.totalorder %s84, %s86
    %p90 = scmp.eq.s32.totalorder %s15, 0
    %p91 = por %p89, %p90
    %p92 = scmp.ne.s32.totalorder %s84, %s86
    %p93 = scmp.eq.s32.totalorder %s20, 1
    %p94 = por %p92, %p93
    %p95 = scmp.ne.s32.totalorder %s86, %s87
    %p96 = scmp.eq.s32.totalorder %s20, 0
    %p97 = por %p95, %p96
    %p98 = scmp.ne.s32.totalorder %s86, %s87
    %p99 = scmp.eq.s32.totalorder %s21, 1
    %p100 = por %p98, %p99
    %p102 = scmp.ne.s32.totalorder %s87, %s101
    %p103 = scmp.eq.s32.totalorder %s21, 0
    %p104 = por %p102, %p103
    %s106 = sadd.s32 %s105, 1
    %p109 = scmp.eq.s32.totalorder %s15, 1
    %p110 = scmp.ne.s32.totalorder %s105, %s107
    %p111 = scmp.eq.s32.totalorder %s15, 0
    %p112 = por %p110, %p111
    %p113 = scmp.ne.s32.totalorder %s105, %s107
    %p114 = scmp.eq.s32.totalorder %s20, 1
    %p115 = por %p113, %p114
    %p116 = scmp.ne.s32.totalorder %s107, %s108
    %p117 = scmp.eq.s32.totalorder %s20, 0
    %p118 = por %p116, %p117
    %p119 = scmp.ne.s32.totalorder %s107, %s108
    %p120 = scmp.eq.s32.totalorder %s21, 1
    %p121 = por %p119, %p120
    %p123 = scmp.ne.s32.totalorder %s108, %s122
    %p124 = scmp.eq.s32.totalorder %s21, 0
    %p125 = por %p123, %p124
    %s127 = sadd.s32 %s126, 1
    %p130 = scmp.eq.s32.totalorder %s15, 1
    %p131 = scmp.ne.s32.totalorder %s126, %s128
    %p132 = scmp.eq.s32.totalorder %s15, 0
    %p133 = por %p131, %p132
    %p134 = scmp.ne.s32.totalorder %s126, %s128
    %p135 = scmp.eq.s32.totalorder %s20, 1
    %p136 = por %p134, %p135
    %p137 = scmp.ne.s32.totalorder %s128, %s129
    %p138 = scmp.eq.s32.totalorder %s20, 0
    %p139 = por %p137, %p138
    %p140 = scmp.ne.s32.totalorder %s128, %s129
    %p141 = scmp.eq.s32.totalorder %s21, 1
    %p142 = por %p140, %p141
    %p144 = scmp.ne.s32.totalorder %s129, %s143
    %p145 = scmp.eq.s32.totalorder %s21, 0
    %p146 = por %p144, %p145
    %s148 = sadd.s32 %s147, 1
    %p151 = scmp.eq.s32.totalorder %s15, 1
    %p152 = scmp.ne.s32.totalorder %s147, %s149
    %p153 = scmp.eq.s32.totalorder %s15, 0
    %p154 = por %p152, %p153
    %p155 = scmp.ne.s32.totalorder %s147, %s149
    %p156 = scmp.eq.s32.totalorder %s20, 1
    %p157 = por %p155, %p156
    %p158 = scmp.ne.s32.totalorder %s149, %s150
    %p159 = scmp.eq.s32.totalorder %s20, 0
    %p160 = por %p158, %p159
    %p161 = scmp.ne.s32.totalorder %s149, %s150
    %p162 = scmp.eq.s32.totalorder %s21, 1
    %p163 = por %p161, %p162
    %p165 = scmp.ne.s32.totalorder %s150, %s164
    %p166 = scmp.eq.s32.totalorder %s21, 0
    %p167 = por %p165, %p166
    %s169 = sadd.s32 %s168, 1
    %p172 = scmp.eq.s32.totalorder %s15, 1
    %p173 = scmp.ne.s32.totalorder %s168, %s170
    %p174 = scmp.eq.s32.totalorder %s15, 0
    %p175 = por %p173, %p174
    %p176 = scmp.ne.s32.totalorder %s168, %s170
    %p177 = scmp.eq.s32.totalorder %s20, 1
    %p178 = por %p176, %p177
    %p179 = scmp.ne.s32.totalorder %s170, %s171
    %p180 = scmp.eq.s32.totalorder %s20, 0
    %p181 = por %p179, %p180
    %p182 = scmp.ne.s32.totalorder %s170, %s171
    %p183 = scmp.eq.s32.totalorder %s21, 1
    %p184 = por %p182, %p183
    %p186 = scmp.ne.s32.totalorder %s171, %s185
    %p187 = scmp.eq.s32.totalorder %s21, 0
    %p188 = por %p186, %p187
    %s190 = sadd.s32 %s189, 1
    %p193 = scmp.eq.s32.totalorder %s15, 1
    %p194 = scmp.ne.s32.totalorder %s189, %s191
    %p195 = scmp.eq.s32.totalorder %s15, 0
    %p196 = por %p194, %p195
    %p197 = scmp.ne.s32.totalorder %s189, %s191
    %p198 = scmp.eq.s32.totalorder %s20, 1
    %p199 = por %p197, %p198
    %p200 = scmp.ne.s32.totalorder %s191, %s192
    %p201 = scmp.eq.s32.totalorder %s20, 0
    %p202 = por %p200, %p201
    %p203 = scmp.ne.s32.totalorder %s191, %s192
    %p204 = scmp.eq.s32.totalorder %s21, 1
    %p205 = por %p203, %p204
    %p207 = scmp.ne.s32.totalorder %s192, %s206
    %p208 = scmp.eq.s32.totalorder %s21, 0
    %p209 = por %p207, %p208
    %s211 = sadd.s32 %s210, 1
    %p214 = scmp.eq.s32.totalorder %s15, 1
    %p215 = scmp.ne.s32.totalorder %s210, %s212
    %p216 = scmp.eq.s32.totalorder %s15, 0
    %p217 = por %p215, %p216
    %p218 = scmp.ne.s32.totalorder %s210, %s212
    %p219 = scmp.eq.s32.totalorder %s20, 1
    %p220 = por %p218, %p219
    %p221 = scmp.ne.s32.totalorder %s212, %s213
    %p222 = scmp.eq.s32.totalorder %s20, 0
    %p223 = por %p221, %p222
    %p224 = scmp.ne.s32.totalorder %s212, %s213
    %p225 = scmp.eq.s32.totalorder %s21, 1
    %p226 = por %p224, %p225
    %p228 = scmp.ne.s32.totalorder %s213, %s227
    %p229 = scmp.eq.s32.totalorder %s21, 0
    %p230 = por %p228, %p229
    %s231 = ssub.s32 %s22, %s34
    %p232 = scmp.eq.s32.totalorder %s231, 0
    %s234 = sadd.s32 %s233, 1
    %s235 = scalar_select %p232, %s233, %s234
    %p238 = pneg %p232
    %p239 = scmp.eq.s32.totalorder %s15, 1
    %p240 = por %p238, %p239
    %p241 = scmp.ne.s32.totalorder %s233, %s236
    %p242 = scmp.eq.s32.totalorder %s15, 0
    %p243 = por %p241, %p242
    %p244 = scmp.ne.s32.totalorder %s233, %s236
    %p245 = scmp.eq.s32.totalorder %s20, 1
    %p246 = por %p244, %p245
    %p247 = scmp.ne.s32.totalorder %s236, %s237
    %p248 = scmp.eq.s32.totalorder %s20, 0
    %p249 = por %p247, %p248
    %p250 = scmp.ne.s32.totalorder %s236, %s237
    %p251 = scmp.eq.s32.totalorder %s21, 1
    %p252 = por %p250, %p251
    %p254 = scmp.ne.s32.totalorder %s237, %s253
    %p255 = scmp.eq.s32.totalorder %s21, 0
    %p256 = por %p254, %p255
    %p257 = scmp.le.s32.totalorder 1, %s15
    %p258 = scmp.lt.s32.totalorder %s15, 3
    %p259 = pnand %p257, %p258
    %p260 = pneg %p259
    // Predicated region
    $region9: #{my_densenet_forward.1} parent=5 // pred_check
      _
    $region10: #{my_densenet_forward.1} parent=5 // pred_check_branch
      %262 = sbr.rel (%p259) target = $region12
    $region11: #{my_densenet_forward.1} parent=5 // pred_region
      %s263 = ssub.s32 %s15, 1
      // Predicated region
      $region13: #{my_densenet_forward.1} parent=11 // pred_check
        %p264 = pneg %p76
      $region14: #{my_densenet_forward.1} parent=11 // pred_check_branch
        %266 = sbr.rel (%p264) target = $region16
      $region15: #{my_densenet_forward.1} parent=11 // pred_region
        _
      $region16: #{my_densenet_forward.1} parent=11 // pred_fallthru
        _
      // Predicated region
      $region17: #{my_densenet_forward.1} parent=11 // pred_check
        %p267 = pneg %p97
      $region18: #{my_densenet_forward.1} parent=11 // pred_check_branch
        %269 = sbr.rel (%p267) target = $region20
      $region19: #{my_densenet_forward.1} parent=11 // pred_region
        _
      $region20: #{my_densenet_forward.1} parent=11 // pred_fallthru
        _
      // Predicated region
      $region21: #{my_densenet_forward.1} parent=11 // pred_check
        %p270 = pneg %p118
      $region22: #{my_densenet_forward.1} parent=11 // pred_check_branch
        %272 = sbr.rel (%p270) target = $region24
      $region23: #{my_densenet_forward.1} parent=11 // pred_region
        _
      $region24: #{my_densenet_forward.1} parent=11 // pred_fallthru
        _
      // Predicated region
      $region25: #{my_densenet_forward.1} parent=11 // pred_check
        %p273 = pneg %p139
      $region26: #{my_densenet_forward.1} parent=11 // pred_check_branch
        %275 = sbr.rel (%p273) target = $region28
      $region27: #{my_densenet_forward.1} parent=11 // pred_region
        _
      $region28: #{my_densenet_forward.1} parent=11 // pred_fallthru
        _
      // Predicated region
      $region29: #{my_densenet_forward.1} parent=11 // pred_check
        %p276 = pneg %p160
      $region30: #{my_densenet_forward.1} parent=11 // pred_check_branch
        %278 = sbr.rel (%p276) target = $region32
      $region31: #{my_densenet_forward.1} parent=11 // pred_region
        _
      $region32: #{my_densenet_forward.1} parent=11 // pred_fallthru
        _
      // Predicated region
      $region33: #{my_densenet_forward.1} parent=11 // pred_check
        %p279 = pneg %p181
      $region34: #{my_densenet_forward.1} parent=11 // pred_check_branch
        %281 = sbr.rel (%p279) target = $region36
      $region35: #{my_densenet_forward.1} parent=11 // pred_region
        _
      $region36: #{my_densenet_forward.1} parent=11 // pred_fallthru
        _
      // Predicated region
      $region37: #{my_densenet_forward.1} parent=11 // pred_check
        %p282 = pneg %p202
      $region38: #{my_densenet_forward.1} parent=11 // pred_check_branch
        %284 = sbr.rel (%p282) target = $region40
      $region39: #{my_densenet_forward.1} parent=11 // pred_region
        _
      $region40: #{my_densenet_forward.1} parent=11 // pred_fallthru
        _
      // Predicated region
      $region41: #{my_densenet_forward.1} parent=11 // pred_check
        %p285 = pneg %p223
      $region42: #{my_densenet_forward.1} parent=11 // pred_check_branch
        %287 = sbr.rel (%p285) target = $region44
      $region43: #{my_densenet_forward.1} parent=11 // pred_region
        _
      $region44: #{my_densenet_forward.1} parent=11 // pred_fallthru
        _
    $region12: #{my_densenet_forward.1} parent=5 // pred_fallthru
      _
    %p288 = scmp.lt.s32.totalorder %s15, 2
    // Predicated region
    $region45: #{my_densenet_forward.1} parent=5 // pred_check
      %p289 = pneg %p288
    $region46: #{my_densenet_forward.1} parent=5 // pred_check_branch
      %291 = sbr.rel (%p289) target = $region48
    $region47: #{my_densenet_forward.1} parent=5 // pred_region
      // Predicated region
      $region49: #{my_densenet_forward.1} parent=47 // pred_check
        %p292 = pneg %p49
      $region50: #{my_densenet_forward.1} parent=47 // pred_check_branch
        %294 = sbr.rel (%p292) target = $region52
      $region51: #{my_densenet_forward.1} parent=47 // pred_region
        %s295 = smul.u32 32, %s23
        %p296 = scmp.lt.s32.totalorder %s22, 1
        %s297 = scalar_select %p296, %s22, 1
        %p298 = scmp.lt.s32.totalorder %s295, 31
        %s299 = scalar_select %p298, %s295, 31
        %s300 = smul.addr %s297, 32
        %s301 = sadd.s32 %s299, %s300
        %s302 = smul.addr %s301, 4
        %s303 = scalar_lea.vmem %s0, %s302
        %s304 = smul.u32 32, %s23
      $region52: #{my_densenet_forward.1} parent=47 // pred_fallthru
        _
    $region48: #{my_densenet_forward.1} parent=5 // pred_fallthru
      _
    %p305 = scmp.le.s32.totalorder 1, %s15
    %p306 = scmp.lt.s32.totalorder %s15, 3
    %p307 = pnand %p305, %p306
    %p308 = pneg %p307
    // Predicated region
    $region53: #{my_densenet_forward.1} parent=5 // pred_check
      _
    $region54: #{my_densenet_forward.1} parent=5 // pred_check_branch
      %310 = sbr.rel (%p307) target = $region56
    $region55: #{my_densenet_forward.1} parent=5 // pred_region
      %s311 = ssub.s32 %s15, 1
      %s312 = smul.u32 32, %s25
      %p313 = scmp.lt.s32.totalorder %s24, 1
      %s314 = scalar_select %p313, %s24, 1
      %p315 = scmp.lt.s32.totalorder %s312, 31
      %s316 = scalar_select %p315, %s312, 31
      %s317 = smul.addr %s314, 32
      %s318 = sadd.s32 %s316, %s317
      %s319 = smul.addr %s318, 4
      %s320 = scalar_lea.vmem %s0, %s319
      %p321 = pneg %p55
      %p322 = pneg %p52
      %p323 = pneg %p76
      %p324 = pneg %p73
      %p325 = pneg %p97
      %p326 = pneg %p94
      %p327 = pneg %p118
      %p328 = pneg %p115
      %p329 = pneg %p139
      %p330 = pneg %p136
      %p331 = pneg %p160
      %p332 = pneg %p157
      %p333 = pneg %p181
      %p334 = pneg %p178
      %p335 = pneg %p202
      %p336 = pneg %p199
      %p337 = pneg %p223
      %p338 = pneg %p220
      %p339 = pneg %p249
      %p340 = pneg %p246
      %p341 = scmp.lt.s32.totalorder %s24, 1
      %s342 = scalar_select %p341, %s24, 1
      %s343 = smul.addr %s342, 8
      %s344 = scalar_lea.vmem %s9, %s343
      %s345 = smul.u32 32, %s25
      %p346 = scmp.lt.s32.totalorder %s24, 1
      %s347 = scalar_select %p346, %s24, 1
      %p348 = scmp.lt.s32.totalorder %s345, 31
      %s349 = scalar_select %p348, %s345, 31
      %s350 = smul.addr %s347, 32
      %s351 = sadd.s32 %s349, %s350
      %s352 = smul.addr %s351, 4
      %s353 = scalar_lea.vmem %s0, %s352
      %s354 = smul.u32 32, %s25
      %p355 = scmp.lt.s32.totalorder %s24, 1
      %s356 = scalar_select %p355, %s24, 1
      %s357 = smul.addr %s356, 8
      %s358 = scalar_lea.vmem %s9, %s357
      %p360 = scmp.eq.s32.totalorder %s25, 0
      // Predicated region
      $region57: #{my_densenet_forward.1} parent=55 // pred_check
        %p361 = pneg %p360
      $region58: #{my_densenet_forward.1} parent=55 // pred_check_branch
        %363 = sbr.rel (%p361) target = $region60
      $region59: #{my_densenet_forward.1} parent=55 // pred_region
        %364 = vst [vmem:[#allocation2] sm:$0xff] 0.0
        %365 = vst [vmem:[#allocation2 + $0x8] sm:$0xff] 0.0
        %366 = vst [vmem:[#allocation2 + $0x10] sm:$0xff] 0.0
        %367 = vst [vmem:[#allocation2 + $0x18] sm:$0xff] 0.0
        %368 = vst [vmem:[#allocation2 + $0x20] sm:$0xff] 0.0
        %369 = vst [vmem:[#allocation2 + $0x28] sm:$0xff] 0.0
        %370 = vst [vmem:[#allocation2 + $0x30] sm:$0xff] 0.0
        %371 = vst [vmem:[#allocation2 + $0x38] sm:$0xff] 0.0
        %372 = vst [vmem:[#allocation2 + $0x40] sm:$0xff] 0.0
        %373 = vst [vmem:[#allocation2 + $0x48] sm:$0xff] 0.0
        %374 = vst [vmem:[#allocation2 + $0x50] sm:$0xff] 0.0
        %375 = vst [vmem:[#allocation2 + $0x58] sm:$0xff] 0.0
        %376 = vst [vmem:[#allocation2 + $0x60] sm:$0xff] 0.0
        %377 = vst [vmem:[#allocation2 + $0x68] sm:$0xff] 0.0
        %378 = vst [vmem:[#allocation2 + $0x70] sm:$0xff] 0.0
        %379 = vst [vmem:[#allocation2 + $0x78] sm:$0xff] 0.0
        %380 = vst [vmem:[#allocation2 + $0x80] sm:$0xff] 0.0
        %381 = vst [vmem:[#allocation2 + $0x88] sm:$0xff] 0.0
        %382 = vst [vmem:[#allocation2 + $0x90] sm:$0xff] 0.0
        %383 = vst [vmem:[#allocation2 + $0x98] sm:$0xff] 0.0
        %384 = vst [vmem:[#allocation2 + $0xa0] sm:$0xff] 0.0
        %385 = vst [vmem:[#allocation2 + $0xa8] sm:$0xff] 0.0
        %386 = vst [vmem:[#allocation2 + $0xb0] sm:$0xff] 0.0
        %387 = vst [vmem:[#allocation2 + $0xb8] sm:$0xff] 0.0
        %388 = vst [vmem:[#allocation2 + $0xc0] sm:$0xff] 0.0
        %389 = vst [vmem:[#allocation2 + $0xc8] sm:$0xff] 0.0
        %390 = vst [vmem:[#allocation2 + $0xd0] sm:$0xff] 0.0
        %391 = vst [vmem:[#allocation2 + $0xd8] sm:$0xff] 0.0
        %392 = vst [vmem:[#allocation2 + $0xe0] sm:$0xff] 0.0
        %393 = vst [vmem:[#allocation2 + $0xe8] sm:$0xff] 0.0
        %394 = vst [vmem:[#allocation2 + $0xf0] sm:$0xff] 0.0
        %395 = vst [vmem:[#allocation2 + $0xf8] sm:$0xff] 0.0
        %396 = vst [vmem:[#allocation2 + $0x100] sm:$0xff] 0.0
        %397 = vst [vmem:[#allocation2 + $0x108] sm:$0xff] 0.0
      $region60: #{my_densenet_forward.1} parent=55 // pred_fallthru
        _
      %v398 = vld [vmem:[%s353] sm:$0xf]
      %v399 = vld [vmem:[%s353 + $0x4] sm:$0xf]
      %v400 = vld [vmem:[%s353 + $0x8] sm:$0xf]
      %v401 = vld [vmem:[%s353 + $0xc] sm:$0xf]
      %v402 = vld [vmem:[%s353 + $0x10] sm:$0xf]
      %v403 = vld [vmem:[%s353 + $0x14] sm:$0xf]
      %v404 = vld [vmem:[%s353 + $0x18] sm:$0xf]
      %v405 = vld [vmem:[%s353 + $0x1c] sm:$0xf]
      %v406 = vld [vmem:[%s353 + $0x20] sm:$0xf]
      %v407 = vld [vmem:[%s353 + $0x24] sm:$0xf]
      %v408 = vld [vmem:[%s353 + $0x28] sm:$0xf]
      %v409 = vld [vmem:[%s353 + $0x2c] sm:$0xf]
      %v410 = vld [vmem:[%s353 + $0x30] sm:$0xf]
      %v411 = vld [vmem:[%s353 + $0x34] sm:$0xf]
      %v412 = vld [vmem:[%s353 + $0x38] sm:$0xf]
      %v413 = vld [vmem:[%s353 + $0x3c] sm:$0xf]
      %v414 = vld [vmem:[%s353 + $0x40] sm:$0xf]
      %v415 = vld [vmem:[%s353 + $0x44] sm:$0xf]
      %v416 = vld [vmem:[%s353 + $0x48] sm:$0xf]
      %v417 = vld [vmem:[%s353 + $0x4c] sm:$0xf]
      %v418 = vld [vmem:[%s353 + $0x50] sm:$0xf]
      %v419 = vld [vmem:[%s353 + $0x54] sm:$0xf]
      %v420 = vld [vmem:[%s353 + $0x58] sm:$0xf]
      %v421 = vld [vmem:[%s353 + $0x5c] sm:$0xf]
      %v422 = vld [vmem:[%s353 + $0x60] sm:$0xf]
      %v423 = vld [vmem:[%s353 + $0x64] sm:$0xf]
      %v424 = vld [vmem:[%s353 + $0x68] sm:$0xf]
      %v425 = vld [vmem:[%s353 + $0x6c] sm:$0xf]
      %v426 = vld [vmem:[%s353 + $0x70] sm:$0xf]
      %v427 = vld [vmem:[%s353 + $0x74] sm:$0xf]
      %v428 = vld [vmem:[%s353 + $0x78] sm:$0xf]
      %v429 = vld [vmem:[%s353 + $0x7c] sm:$0xf]
      %v430 = vld [vmem:[%s1] sm:$0xff]
      %v431 = vld [vmem:[%s1 + $0x8] sm:$0xff]
      %v432 = vld [vmem:[%s1 + $0x10] sm:$0xff]
      %v433 = vld [vmem:[%s1 + $0x18] sm:$0xff]
      %v434 = vld [vmem:[%s1 + $0x20] sm:$0xff]
      %v435 = vld [vmem:[%s1 + $0x28] sm:$0xff]
      %v436 = vld [vmem:[%s1 + $0x30] sm:$0xff]
      %v437 = vld [vmem:[%s1 + $0x38] sm:$0xff]
      %v438 = vld [vmem:[%s1 + $0x40] sm:$0xff]
      %v439 = vld [vmem:[%s1 + $0x48] sm:$0xff]
      %v440 = vld [vmem:[%s1 + $0x50] sm:$0xff]
      %v441 = vld [vmem:[%s1 + $0x58] sm:$0xff]
      %v442 = vld [vmem:[%s1 + $0x60] sm:$0xff]
      %v443 = vld [vmem:[%s1 + $0x68] sm:$0xff]
      %v444 = vld [vmem:[%s1 + $0x70] sm:$0xff]
      %v445 = vld [vmem:[%s1 + $0x78] sm:$0xff]
      %v446 = vld [vmem:[%s1 + $0x80] sm:$0xff]
      %v447 = vld [vmem:[%s1 + $0x88] sm:$0xff]
      %v448 = vld [vmem:[%s1 + $0x90] sm:$0xff]
      %v449 = vld [vmem:[%s1 + $0x98] sm:$0xff]
      %v450 = vld [vmem:[%s1 + $0xa0] sm:$0xff]
      %v451 = vld [vmem:[%s1 + $0xa8] sm:$0xff]
      %v452 = vld [vmem:[%s1 + $0xb0] sm:$0xff]
      %v453 = vld [vmem:[%s1 + $0xb8] sm:$0xff]
      %v454 = vld [vmem:[%s1 + $0xc0] sm:$0xff]
      %v455 = vld [vmem:[%s1 + $0xc8] sm:$0xff]
      %v456 = vld [vmem:[%s1 + $0xd0] sm:$0xff]
      %v457 = vld [vmem:[%s1 + $0xd8] sm:$0xff]
      %v458 = vld [vmem:[%s1 + $0xe0] sm:$0xff]
      %v459 = vld [vmem:[%s1 + $0xe8] sm:$0xff]
      %v460 = vld [vmem:[%s1 + $0xf0] sm:$0xff]
      %v461 = vld [vmem:[%s1 + $0xf8] sm:$0xff]
      %v462 = vld [vmem:[%s1 + $0x100] sm:$0xff]
      %v463 = vld [vmem:[%s1 + $0x108] sm:$0xff]
      %v464 = vld [vmem:[%s1 + $0x110] sm:$0xff]
      %v465 = vld [vmem:[%s1 + $0x118] sm:$0xff]
      %v466 = vld [vmem:[%s1 + $0x120] sm:$0xff]
      %v467 = vld [vmem:[%s1 + $0x128] sm:$0xff]
      %v468 = vld [vmem:[%s1 + $0x130] sm:$0xff]
      %v469 = vld [vmem:[%s1 + $0x138] sm:$0xff]
      %v470 = vld [vmem:[%s1 + $0x140] sm:$0xff]
      %v471 = vld [vmem:[%s1 + $0x148] sm:$0xff]
      %v472 = vld [vmem:[%s1 + $0x150] sm:$0xff]
      %v473 = vld [vmem:[%s1 + $0x158] sm:$0xff]
      %v474 = vld [vmem:[%s1 + $0x160] sm:$0xff]
      %v475 = vld [vmem:[%s1 + $0x168] sm:$0xff]
      %v476 = vld [vmem:[%s1 + $0x170] sm:$0xff]
      %v477 = vld [vmem:[%s1 + $0x178] sm:$0xff]
      %v478 = vld [vmem:[%s1 + $0x180] sm:$0xff]
      %v479 = vld [vmem:[%s1 + $0x188] sm:$0xff]
      %v480 = vld [vmem:[%s1 + $0x190] sm:$0xff]
      %v481 = vld [vmem:[%s1 + $0x198] sm:$0xff]
      %v482 = vld [vmem:[%s1 + $0x1a0] sm:$0xff]
      %v483 = vld [vmem:[%s1 + $0x1a8] sm:$0xff]
      %v484 = vld [vmem:[%s1 + $0x1b0] sm:$0xff]
      %v485 = vld [vmem:[%s1 + $0x1b8] sm:$0xff]
      %v486 = vld [vmem:[%s1 + $0x1c0] sm:$0xff]
      %v487 = vld [vmem:[%s1 + $0x1c8] sm:$0xff]
      %v488 = vld [vmem:[%s1 + $0x1d0] sm:$0xff]
      %v489 = vld [vmem:[%s1 + $0x1d8] sm:$0xff]
      %v490 = vld [vmem:[%s1 + $0x1e0] sm:$0xff]
      %v491 = vld [vmem:[%s1 + $0x1e8] sm:$0xff]
      %v492 = vld [vmem:[%s1 + $0x1f0] sm:$0xff]
      %v493 = vld [vmem:[%s1 + $0x1f8] sm:$0xff]
      %v494 = vld [vmem:[%s1 + $0x200] sm:$0xff]
      %v495 = vld [vmem:[%s1 + $0x208] sm:$0xff]
      %v496 = vld [vmem:[%s1 + $0x210] sm:$0xff]
      %v497 = vld [vmem:[%s1 + $0x218] sm:$0xff]
      %v498 = vld [vmem:[%s1 + $0x220] sm:$0x33]
      %v499 = vld [vmem:[%s1 + $0x228] sm:$0x33]
      %v500 = vld [vmem:[%s1 + $0x230] sm:$0x33]
      %v501 = vld [vmem:[%s1 + $0x238] sm:$0x33]
      %v502 = vld [vmem:[%s1 + $0x240] sm:$0x33]
      %v503 = vld [vmem:[%s1 + $0x248] sm:$0x33]
      %v504 = vld [vmem:[%s1 + $0x250] sm:$0x33]
      %v505 = vld [vmem:[%s1 + $0x258] sm:$0x33]
      %v506 = vld [vmem:[%s1 + $0x260] sm:$0x33]
      %v507 = vld [vmem:[%s1 + $0x268] sm:$0x33]
      %v508 = vld [vmem:[%s1 + $0x270] sm:$0x33]
      %v509 = vld [vmem:[%s1 + $0x278] sm:$0x33]
      %v510 = vld [vmem:[%s1 + $0x280] sm:$0x33]
      %v511 = vld [vmem:[%s1 + $0x288] sm:$0x33]
      %v512 = vld [vmem:[%s1 + $0x290] sm:$0x33]
      %v513 = vld [vmem:[%s1 + $0x298] sm:$0x33]
      %v514 = vld [vmem:[%s1 + $0x2a0] sm:$0x33]
      %v515 = vld [vmem:[%s2] sm:$0xff]
      %v516 = vld [vmem:[%s2 + $0x8] sm:$0xff]
      %v517 = vld [vmem:[%s2 + $0x10] sm:$0xff]
      %v518 = vld [vmem:[%s2 + $0x18] sm:$0xff]
      %v519 = vld [vmem:[%s2 + $0x20] sm:$0x3]
      %v525 = vperm.slane %v515, 0
      %v526 = vperm.slane %v515, 1
      %v527 = vperm.slane %v515, 2
      %v528 = vperm.slane %v515, 3
      %v529 = vperm.slane %v515, 4
      %v530 = vperm.slane %v515, 5
      %v531 = vperm.slane %v515, 6
      %v532 = vperm.slane %v515, 7
      %v533 = vperm.slane %v516, 0
      %v534 = vperm.slane %v516, 1
      %v535 = vperm.slane %v516, 2
      %v536 = vperm.slane %v516, 3
      %v537 = vperm.slane %v516, 4
      %v538 = vperm.slane %v516, 5
      %v539 = vperm.slane %v516, 6
      %v540 = vperm.slane %v516, 7
      %v541 = vperm.slane %v517, 0
      %v542 = vperm.slane %v517, 1
      %v543 = vperm.slane %v517, 2
      %v544 = vperm.slane %v517, 3
      %v545 = vperm.slane %v517, 4
      %v546 = vperm.slane %v517, 5
      %v547 = vperm.slane %v517, 6
      %v548 = vperm.slane %v517, 7
      %v549 = vperm.slane %v518, 0
      %v550 = vperm.slane %v518, 1
      %v551 = vperm.slane %v518, 2
      %v552 = vperm.slane %v518, 3
      %v553 = vperm.slane %v518, 4
      %v554 = vperm.slane %v518, 5
      %v555 = vperm.slane %v518, 6
      %v556 = vperm.slane %v518, 7
      %v557 = vperm.slane %v519, 0
      %v558 = vperm.slane %v519, 1
      %v625 = vunpack.c.l.b16 %v398
      %v626 = vunpack.c.l.b16 %v399
      %v627 = vunpack.c.l.b16 %v400
      %v628 = vunpack.c.l.b16 %v401
      %v629 = vunpack.c.l.b16 %v402
      %v630 = vunpack.c.l.b16 %v403
      %v631 = vunpack.c.l.b16 %v404
      %v632 = vunpack.c.l.b16 %v405
      %v633 = vunpack.c.l.b16 %v406
      %v634 = vunpack.c.l.b16 %v407
      %v635 = vunpack.c.l.b16 %v408
      %v636 = vunpack.c.l.b16 %v409
      %v637 = vunpack.c.l.b16 %v410
      %v638 = vunpack.c.l.b16 %v411
      %v639 = vunpack.c.l.b16 %v412
      %v640 = vunpack.c.l.b16 %v413
      %v641 = vunpack.c.l.b16 %v414
      %v642 = vunpack.c.l.b16 %v415
      %v643 = vunpack.c.l.b16 %v416
      %v644 = vunpack.c.l.b16 %v417
      %v645 = vunpack.c.l.b16 %v418
      %v646 = vunpack.c.l.b16 %v419
      %v647 = vunpack.c.l.b16 %v420
      %v648 = vunpack.c.l.b16 %v421
      %v649 = vunpack.c.l.b16 %v422
      %v650 = vunpack.c.l.b16 %v423
      %v651 = vunpack.c.l.b16 %v424
      %v652 = vunpack.c.l.b16 %v425
      %v653 = vunpack.c.l.b16 %v426
      %v654 = vunpack.c.l.b16 %v427
      %v655 = vunpack.c.l.b16 %v428
      %v656 = vunpack.c.l.b16 %v429
      %v657 = vpack.c.b16 %v626, %v625
      %v658 = vpack.c.b16 %v628, %v627
      %v659 = vpack.c.b16 %v630, %v629
      %v660 = vpack.c.b16 %v632, %v631
      %v661 = vpack.c.b16 %v634, %v633
      %v662 = vpack.c.b16 %v636, %v635
      %v663 = vpack.c.b16 %v638, %v637
      %v664 = vpack.c.b16 %v640, %v639
      %v665 = vpack.c.b16 %v642, %v641
      %v666 = vpack.c.b16 %v644, %v643
      %v667 = vpack.c.b16 %v646, %v645
      %v668 = vpack.c.b16 %v648, %v647
      %v669 = vpack.c.b16 %v650, %v649
      %v670 = vpack.c.b16 %v652, %v651
      %v671 = vpack.c.b16 %v654, %v653
      %v672 = vpack.c.b16 %v656, %v655
      %v758 = vunpack.c.l.b16 %v430
      %v759 = vunpack.c.h.b16 %v430
      %v760 = vunpack.c.l.b16 %v431
      %v761 = vunpack.c.h.b16 %v431
      %v762 = vunpack.c.l.b16 %v432
      %v763 = vunpack.c.h.b16 %v432
      %v764 = vunpack.c.l.b16 %v433
      %v765 = vunpack.c.h.b16 %v433
      %v766 = vunpack.c.l.b16 %v434
      %v767 = vunpack.c.h.b16 %v434
      %v768 = vunpack.c.l.b16 %v435
      %v769 = vunpack.c.h.b16 %v435
      %v770 = vunpack.c.l.b16 %v436
      %v771 = vunpack.c.h.b16 %v436
      %v772 = vunpack.c.l.b16 %v437
      %v773 = vunpack.c.h.b16 %v437
      %v774 = vunpack.c.l.b16 %v438
      %v775 = vunpack.c.h.b16 %v438
      %v776 = vunpack.c.l.b16 %v439
      %v777 = vunpack.c.h.b16 %v439
      %v778 = vunpack.c.l.b16 %v440
      %v779 = vunpack.c.h.b16 %v440
      %v780 = vunpack.c.l.b16 %v441
      %v781 = vunpack.c.h.b16 %v441
      %v782 = vunpack.c.l.b16 %v442
      %v783 = vunpack.c.h.b16 %v442
      %v784 = vunpack.c.l.b16 %v443
      %v785 = vunpack.c.h.b16 %v443
      %v786 = vunpack.c.l.b16 %v444
      %v787 = vunpack.c.h.b16 %v444
      %v788 = vunpack.c.l.b16 %v445
      %v789 = vunpack.c.h.b16 %v445
      %v790 = vunpack.c.l.b16 %v446
      %v791 = vunpack.c.h.b16 %v446
      %v792 = vunpack.c.l.b16 %v447
      %v793 = vunpack.c.h.b16 %v447
      %v794 = vunpack.c.l.b16 %v448
      %v795 = vunpack.c.h.b16 %v448
      %v796 = vunpack.c.l.b16 %v449
      %v797 = vunpack.c.h.b16 %v449
      %v798 = vunpack.c.l.b16 %v450
      %v799 = vunpack.c.h.b16 %v450
      %v800 = vunpack.c.l.b16 %v451
      %v801 = vunpack.c.h.b16 %v451
      %v802 = vunpack.c.l.b16 %v452
      %v803 = vunpack.c.h.b16 %v452
      %v804 = vunpack.c.l.b16 %v453
      %v805 = vunpack.c.h.b16 %v453
      %v806 = vunpack.c.l.b16 %v454
      %v807 = vunpack.c.h.b16 %v454
      %v808 = vunpack.c.l.b16 %v455
      %v809 = vunpack.c.h.b16 %v455
      %v810 = vunpack.c.l.b16 %v456
      %v811 = vunpack.c.h.b16 %v456
      %v812 = vunpack.c.l.b16 %v457
      %v813 = vunpack.c.h.b16 %v457
      %v814 = vunpack.c.l.b16 %v458
      %v815 = vunpack.c.h.b16 %v458
      %v816 = vunpack.c.l.b16 %v459
      %v817 = vunpack.c.h.b16 %v459
      %v818 = vunpack.c.l.b16 %v460
      %v819 = vunpack.c.h.b16 %v460
      %v820 = vunpack.c.l.b16 %v461
      %v821 = vunpack.c.h.b16 %v461
      %v822 = vunpack.c.l.b16 %v462
      %v823 = vunpack.c.h.b16 %v462
      %v824 = vunpack.c.l.b16 %v463
      %v825 = vunpack.c.h.b16 %v463
      %v826 = vunpack.c.l.b16 %v464
      %v827 = vunpack.c.h.b16 %v464
      %v828 = vunpack.c.l.b16 %v465
      %v829 = vunpack.c.h.b16 %v465
      %v830 = vunpack.c.l.b16 %v466
      %v831 = vunpack.c.h.b16 %v466
      %v832 = vunpack.c.l.b16 %v467
      %v833 = vunpack.c.h.b16 %v467
      %v834 = vunpack.c.l.b16 %v468
      %v835 = vunpack.c.h.b16 %v468
      %v836 = vunpack.c.l.b16 %v469
      %v837 = vunpack.c.h.b16 %v469
      %v838 = vunpack.c.l.b16 %v470
      %v839 = vunpack.c.h.b16 %v470
      %v840 = vunpack.c.l.b16 %v471
      %v841 = vunpack.c.h.b16 %v471
      %v842 = vunpack.c.l.b16 %v472
      %v843 = vunpack.c.h.b16 %v472
      %v844 = vunpack.c.l.b16 %v473
      %v845 = vunpack.c.h.b16 %v473
      %v846 = vunpack.c.l.b16 %v474
      %v847 = vunpack.c.h.b16 %v474
      %v848 = vunpack.c.l.b16 %v475
      %v849 = vunpack.c.h.b16 %v475
      %v850 = vunpack.c.l.b16 %v476
      %v851 = vunpack.c.h.b16 %v476
      %v852 = vunpack.c.l.b16 %v477
      %v853 = vunpack.c.h.b16 %v477
      %v854 = vunpack.c.l.b16 %v478
      %v855 = vunpack.c.h.b16 %v478
      %v856 = vunpack.c.l.b16 %v479
      %v857 = vunpack.c.h.b16 %v479
      %v858 = vunpack.c.l.b16 %v480
      %v859 = vunpack.c.h.b16 %v480
      %v860 = vunpack.c.l.b16 %v481
      %v861 = vunpack.c.h.b16 %v481
      %v862 = vunpack.c.l.b16 %v482
      %v863 = vunpack.c.h.b16 %v482
      %v864 = vunpack.c.l.b16 %v483
      %v865 = vunpack.c.h.b16 %v483
      %v866 = vunpack.c.l.b16 %v484
      %v867 = vunpack.c.h.b16 %v484
      %v868 = vunpack.c.l.b16 %v485
      %v869 = vunpack.c.h.b16 %v485
      %v870 = vunpack.c.l.b16 %v486
      %v871 = vunpack.c.h.b16 %v486
      %v872 = vunpack.c.l.b16 %v487
      %v873 = vunpack.c.h.b16 %v487
      %v874 = vunpack.c.l.b16 %v488
      %v875 = vunpack.c.h.b16 %v488
      %v876 = vunpack.c.l.b16 %v489
      %v877 = vunpack.c.h.b16 %v489
      %v878 = vunpack.c.l.b16 %v490
      %v879 = vunpack.c.h.b16 %v490
      %v880 = vunpack.c.l.b16 %v491
      %v881 = vunpack.c.h.b16 %v491
      %v882 = vunpack.c.l.b16 %v492
      %v883 = vunpack.c.h.b16 %v492
      %v884 = vunpack.c.l.b16 %v493
      %v885 = vunpack.c.h.b16 %v493
      %v886 = vunpack.c.l.b16 %v494
      %v887 = vunpack.c.h.b16 %v494
      %v888 = vunpack.c.l.b16 %v495
      %v889 = vunpack.c.h.b16 %v495
      %v890 = vunpack.c.l.b16 %v496
      %v891 = vunpack.c.h.b16 %v496
      %v892 = vunpack.c.l.b16 %v497
      %v893 = vunpack.c.h.b16 %v497
      %v894 = vunpack.c.l.b16 %v498
      %v895 = vunpack.c.h.b16 %v498
      %v896 = vunpack.c.l.b16 %v499
      %v897 = vunpack.c.h.b16 %v499
      %v898 = vunpack.c.l.b16 %v500
      %v899 = vunpack.c.h.b16 %v500
      %v900 = vunpack.c.l.b16 %v501
      %v901 = vunpack.c.h.b16 %v501
      %v902 = vunpack.c.l.b16 %v502
      %v903 = vunpack.c.h.b16 %v502
      %v904 = vunpack.c.l.b16 %v503
      %v905 = vunpack.c.h.b16 %v503
      %v906 = vunpack.c.l.b16 %v504
      %v907 = vunpack.c.h.b16 %v504
      %v908 = vunpack.c.l.b16 %v505
      %v909 = vunpack.c.h.b16 %v505
      %v910 = vunpack.c.l.b16 %v506
      %v911 = vunpack.c.h.b16 %v506
      %v912 = vunpack.c.l.b16 %v507
      %v913 = vunpack.c.h.b16 %v507
      %v914 = vunpack.c.l.b16 %v508
      %v915 = vunpack.c.h.b16 %v508
      %v916 = vunpack.c.l.b16 %v509
      %v917 = vunpack.c.h.b16 %v509
      %v918 = vunpack.c.l.b16 %v510
      %v919 = vunpack.c.h.b16 %v510
      %v920 = vunpack.c.l.b16 %v511
      %v921 = vunpack.c.h.b16 %v511
      %v922 = vunpack.c.l.b16 %v512
      %v923 = vunpack.c.h.b16 %v512
      %v924 = vunpack.c.l.b16 %v513
      %v925 = vunpack.c.h.b16 %v513
      %v926 = vunpack.c.l.b16 %v514
      %v927 = vunpack.c.h.b16 %v514
      %v928 = vpack.c.b16 %v792, %v758
      %v929 = vpack.c.b16 %v793, %v759
      %v930 = vpack.c.b16 %v794, %v760
      %v931 = vpack.c.b16 %v795, %v761
      %v932 = vpack.c.b16 %v796, %v762
      %v933 = vpack.c.b16 %v797, %v763
      %v934 = vpack.c.b16 %v798, %v764
      %v935 = vpack.c.b16 %v799, %v765
      %v936 = vpack.c.b16 %v800, %v766
      %v937 = vpack.c.b16 %v801, %v767
      %v938 = vpack.c.b16 %v802, %v768
      %v939 = vpack.c.b16 %v803, %v769
      %v940 = vpack.c.b16 %v804, %v770
      %v941 = vpack.c.b16 %v805, %v771
      %v942 = vpack.c.b16 %v806, %v772
      %v943 = vpack.c.b16 %v807, %v773
      %v944 = vpack.c.b16 %v808, %v774
      %v945 = vpack.c.b16 %v809, %v775
      %v946 = vpack.c.b16 %v810, %v776
      %v947 = vpack.c.b16 %v811, %v777
      %v948 = vpack.c.b16 %v812, %v778
      %v949 = vpack.c.b16 %v813, %v779
      %v950 = vpack.c.b16 %v814, %v780
      %v951 = vpack.c.b16 %v815, %v781
      %v952 = vpack.c.b16 %v816, %v782
      %v953 = vpack.c.b16 %v817, %v783
      %v954 = vpack.c.b16 %v818, %v784
      %v955 = vpack.c.b16 %v819, %v785
      %v956 = vpack.c.b16 %v820, %v786
      %v957 = vpack.c.b16 %v821, %v787
      %v958 = vpack.c.b16 %v822, %v788
      %v959 = vpack.c.b16 %v823, %v789
      %v960 = vpack.c.b16 %v824, %v790
      %v961 = vpack.c.b16 %v825, %v791
      %v962 = vpack.c.b16 %v860, %v826
      %v963 = vpack.c.b16 %v861, %v827
      %v964 = vpack.c.b16 %v862, %v828
      %v965 = vpack.c.b16 %v863, %v829
      %v966 = vpack.c.b16 %v864, %v830
      %v967 = vpack.c.b16 %v865, %v831
      %v968 = vpack.c.b16 %v866, %v832
      %v969 = vpack.c.b16 %v867, %v833
      %v970 = vpack.c.b16 %v868, %v834
      %v971 = vpack.c.b16 %v869, %v835
      %v972 = vpack.c.b16 %v870, %v836
      %v973 = vpack.c.b16 %v871, %v837
      %v974 = vpack.c.b16 %v872, %v838
      %v975 = vpack.c.b16 %v873, %v839
      %v976 = vpack.c.b16 %v874, %v840
      %v977 = vpack.c.b16 %v875, %v841
      %v978 = vpack.c.b16 %v876, %v842
      %v979 = vpack.c.b16 %v877, %v843
      %v980 = vpack.c.b16 %v878, %v844
      %v981 = vpack.c.b16 %v879, %v845
      %v982 = vpack.c.b16 %v880, %v846
      %v983 = vpack.c.b16 %v881, %v847
      %v984 = vpack.c.b16 %v882, %v848
      %v985 = vpack.c.b16 %v883, %v849
      %v986 = vpack.c.b16 %v884, %v850
      %v987 = vpack.c.b16 %v885, %v851
      %v988 = vpack.c.b16 %v886, %v852
      %v989 = vpack.c.b16 %v887, %v853
      %v990 = vpack.c.b16 %v888, %v854
      %v991 = vpack.c.b16 %v889, %v855
      %v992 = vpack.c.b16 %v890, %v856
      %v993 = vpack.c.b16 %v891, %v857
      %v994 = vpack.c.b16 %v892, %v858
      %v995 = vpack.c.b16 %v893, %v859
      %v996 = vpack.c.b16 %v894, %v894
      %v997 = vpack.c.b16 %v895, %v895
      %v998 = vpack.c.b16 %v896, %v896
      %v999 = vpack.c.b16 %v897, %v897
      %v1000 = vpack.c.b16 %v898, %v898
      %v1001 = vpack.c.b16 %v899, %v899
      %v1002 = vpack.c.b16 %v900, %v900
      %v1003 = vpack.c.b16 %v901, %v901
      %v1004 = vpack.c.b16 %v902, %v902
      %v1005 = vpack.c.b16 %v903, %v903
      %v1006 = vpack.c.b16 %v904, %v904
      %v1007 = vpack.c.b16 %v905, %v905
      %v1008 = vpack.c.b16 %v906, %v906
      %v1009 = vpack.c.b16 %v907, %v907
      %v1010 = vpack.c.b16 %v908, %v908
      %v1011 = vpack.c.b16 %v909, %v909
      %v1012 = vpack.c.b16 %v910, %v910
      %v1013 = vpack.c.b16 %v911, %v911
      %v1014 = vpack.c.b16 %v912, %v912
      %v1015 = vpack.c.b16 %v913, %v913
      %v1016 = vpack.c.b16 %v914, %v914
      %v1017 = vpack.c.b16 %v915, %v915
      %v1018 = vpack.c.b16 %v916, %v916
      %v1019 = vpack.c.b16 %v917, %v917
      %v1020 = vpack.c.b16 %v918, %v918
      %v1021 = vpack.c.b16 %v919, %v919
      %v1022 = vpack.c.b16 %v920, %v920
      %v1023 = vpack.c.b16 %v921, %v921
      %v1024 = vpack.c.b16 %v922, %v922
      %v1025 = vpack.c.b16 %v923, %v923
      %v1026 = vpack.c.b16 %v924, %v924
      %v1027 = vpack.c.b16 %v925, %v925
      %v1028 = vpack.c.b16 %v926, %v926
      %v1029 = vpack.c.b16 %v927, %v927
      %vm1098 = vcmask 293888
      %v1100 = vsel %vm1098, %v657, 0
      %v1103 = vsel %vm1098, %v658, 0
      %v1106 = vsel %vm1098, %v659, 0
      %v1109 = vsel %vm1098, %v660, 0
      %v1112 = vsel %vm1098, %v661, 0
      %v1115 = vsel %vm1098, %v662, 0
      %v1118 = vsel %vm1098, %v663, 0
      %v1121 = vsel %vm1098, %v664, 0
      %v1124 = vsel %vm1098, %v665, 0
      %v1127 = vsel %vm1098, %v666, 0
      %v1130 = vsel %vm1098, %v667, 0
      %v1133 = vsel %vm1098, %v668, 0
      %v1136 = vsel %vm1098, %v669, 0
      %v1139 = vsel %vm1098, %v670, 0
      %v1142 = vsel %vm1098, %v671, 0
      %v1145 = vsel %vm1098, %v672, 0
      %vm1147 = vcmask 1041408
      %v1149 = vsel %vm1147, %v996, 0
      %v1152 = vsel %vm1147, %v997, 0
      %v1155 = vsel %vm1147, %v998, 0
      %v1158 = vsel %vm1147, %v999, 0
      %v1161 = vsel %vm1147, %v1000, 0
      %v1164 = vsel %vm1147, %v1001, 0
      %v1167 = vsel %vm1147, %v1002, 0
      %v1170 = vsel %vm1147, %v1003, 0
      %v1173 = vsel %vm1147, %v1004, 0
      %v1176 = vsel %vm1147, %v1005, 0
      %v1179 = vsel %vm1147, %v1006, 0
      %v1182 = vsel %vm1147, %v1007, 0
      %v1185 = vsel %vm1147, %v1008, 0
      %v1188 = vsel %vm1147, %v1009, 0
      %v1191 = vsel %vm1147, %v1010, 0
      %v1194 = vsel %vm1147, %v1011, 0
      %v1197 = vsel %vm1147, %v1012, 0
      %v1200 = vsel %vm1147, %v1013, 0
      %v1203 = vsel %vm1147, %v1014, 0
      %v1206 = vsel %vm1147, %v1015, 0
      %v1209 = vsel %vm1147, %v1016, 0
      %v1212 = vsel %vm1147, %v1017, 0
      %v1215 = vsel %vm1147, %v1018, 0
      %v1218 = vsel %vm1147, %v1019, 0
      %v1221 = vsel %vm1147, %v1020, 0
      %v1224 = vsel %vm1147, %v1021, 0
      %v1227 = vsel %vm1147, %v1022, 0
      %v1230 = vsel %vm1147, %v1023, 0
      %v1233 = vsel %vm1147, %v1024, 0
      %v1236 = vsel %vm1147, %v1025, 0
      %v1239 = vsel %vm1147, %v1026, 0
      %v1242 = vsel %vm1147, %v1027, 0
      %v1245 = vsel %vm1147, %v1028, 0
      %v1248 = vsel %vm1147, %v1029, 0
      %1250 = vmatpush.bf16.msra.mxu0 0
      %1251 = vmatpush.bf16.msra.mxu0 0
      %1252 = vmatpush.bf16.msra.mxu0 0
      %1253 = vmatpush.bf16.msra.mxu0 0
      %1254 = vmatpush.bf16.msra.mxu0 0
      %1255 = vmatpush.bf16.msra.mxu0 %v1149
      %1256 = vmatpush.bf16.msra.mxu0 %v962
      %1257 = vmatpush.bf16.msra.mxu0 %v928
      %1258 = vmatmul.bf16.gmra.mxu0 %v1100
      %v1259 = vpop.f32.mrf.mxu0
      %v1260 = vadd.f32 %v525, %v1259
      %v1261 = vpop.f32.mrf.mxu0
      %v1262 = vadd.f32 %v525, %v1261
      %1263 = vmatmul.bf16.gmra.mxu0 %v1103
      %v1264 = vpop.f32.mrf.mxu0
      %v1265 = vadd.f32 %v525, %v1264
      %v1266 = vpop.f32.mrf.mxu0
      %v1267 = vadd.f32 %v525, %v1266
      %1268 = vmatmul.bf16.gmra.mxu0 %v1106
      %v1269 = vpop.f32.mrf.mxu0
      %v1270 = vadd.f32 %v525, %v1269
      %v1271 = vpop.f32.mrf.mxu0
      %v1272 = vadd.f32 %v525, %v1271
      %1273 = vmatmul.bf16.gmra.mxu0 %v1109
      %v1274 = vpop.f32.mrf.mxu0
      %v1275 = vadd.f32 %v525, %v1274
      %v1276 = vpop.f32.mrf.mxu0
      %v1277 = vadd.f32 %v525, %v1276
      %1278 = vmatmul.bf16.gmra.mxu0 %v1112
      %v1279 = vpop.f32.mrf.mxu0
      %v1280 = vadd.f32 %v525, %v1279
      %v1281 = vpop.f32.mrf.mxu0
      %v1282 = vadd.f32 %v525, %v1281
      %1283 = vmatmul.bf16.gmra.mxu0 %v1115
      %v1284 = vpop.f32.mrf.mxu0
      %v1285 = vadd.f32 %v525, %v1284
      %v1286 = vpop.f32.mrf.mxu0
      %v1287 = vadd.f32 %v525, %v1286
      %1288 = vmatmul.bf16.gmra.mxu0 %v1118
      %v1289 = vpop.f32.mrf.mxu0
      %v1290 = vadd.f32 %v525, %v1289
      %v1291 = vpop.f32.mrf.mxu0
      %v1292 = vadd.f32 %v525, %v1291
      %1293 = vmatmul.bf16.gmra.mxu0 %v1121
      %v1294 = vpop.f32.mrf.mxu0
      %v1295 = vadd.f32 %v525, %v1294
      %v1296 = vpop.f32.mrf.mxu0
      %v1297 = vadd.f32 %v525, %v1296
      %1298 = vmatmul.bf16.gmra.mxu0 %v1124
      %v1299 = vpop.f32.mrf.mxu0
      %v1300 = vadd.f32 %v525, %v1299
      %v1301 = vpop.f32.mrf.mxu0
      %v1302 = vadd.f32 %v525, %v1301
      %1303 = vmatmul.bf16.gmra.mxu0 %v1127
      %v1304 = vpop.f32.mrf.mxu0
      %v1305 = vadd.f32 %v525, %v1304
      %v1306 = vpop.f32.mrf.mxu0
      %v1307 = vadd.f32 %v525, %v1306
      %1308 = vmatmul.bf16.gmra.mxu0 %v1130
      %v1309 = vpop.f32.mrf.mxu0
      %v1310 = vadd.f32 %v525, %v1309
      %v1311 = vpop.f32.mrf.mxu0
      %v1312 = vadd.f32 %v525, %v1311
      %1313 = vmatmul.bf16.gmra.mxu0 %v1133
      %v1314 = vpop.f32.mrf.mxu0
      %v1315 = vadd.f32 %v525, %v1314
      %v1316 = vpop.f32.mrf.mxu0
      %v1317 = vadd.f32 %v525, %v1316
      %1318 = vmatmul.bf16.gmra.mxu0 %v1136
      %v1319 = vpop.f32.mrf.mxu0
      %v1320 = vadd.f32 %v525, %v1319
      %v1321 = vpop.f32.mrf.mxu0
      %v1322 = vadd.f32 %v525, %v1321
      %1323 = vmatmul.bf16.gmra.mxu0 %v1139
      %v1324 = vpop.f32.mrf.mxu0
      %v1325 = vadd.f32 %v525, %v1324
      %v1326 = vpop.f32.mrf.mxu0
      %v1327 = vadd.f32 %v525, %v1326
      %1328 = vmatmul.bf16.gmra.mxu0 %v1142
      %v1329 = vpop.f32.mrf.mxu0
      %v1330 = vadd.f32 %v525, %v1329
      %v1331 = vpop.f32.mrf.mxu0
      %v1332 = vadd.f32 %v525, %v1331
      %1333 = vmatmul.bf16.gmra.mxu0 %v1145
      %v1334 = vpop.f32.mrf.mxu0
      %v1335 = vadd.f32 %v525, %v1334
      %v1336 = vpop.f32.mrf.mxu0
      %v1337 = vadd.f32 %v525, %v1336
      %1338 = vdwg.mxu0
      %1339 = vmatpush.bf16.msra.mxu0 0
      %1340 = vmatpush.bf16.msra.mxu0 0
      %1341 = vmatpush.bf16.msra.mxu0 0
      %1342 = vmatpush.bf16.msra.mxu0 0
      %1343 = vmatpush.bf16.msra.mxu0 0
      %1344 = vmatpush.bf16.msra.mxu0 %v1152
      %1345 = vmatpush.bf16.msra.mxu0 %v963
      %1346 = vmatpush.bf16.msra.mxu0 %v929
      %1347 = vmatmul.bf16.gmra.mxu0 %v1100
      %v1348 = vpop.f32.mrf.mxu0
      %v1349 = vadd.f32 %v526, %v1348
      %v1350 = vpop.f32.mrf.mxu0
      %v1351 = vadd.f32 %v526, %v1350
      %1352 = vmatmul.bf16.gmra.mxu0 %v1103
      %v1353 = vpop.f32.mrf.mxu0
      %v1354 = vadd.f32 %v526, %v1353
      %v1355 = vpop.f32.mrf.mxu0
      %v1356 = vadd.f32 %v526, %v1355
      %1357 = vmatmul.bf16.gmra.mxu0 %v1106
      %v1358 = vpop.f32.mrf.mxu0
      %v1359 = vadd.f32 %v526, %v1358
      %v1360 = vpop.f32.mrf.mxu0
      %v1361 = vadd.f32 %v526, %v1360
      %1362 = vmatmul.bf16.gmra.mxu0 %v1109
      %v1363 = vpop.f32.mrf.mxu0
      %v1364 = vadd.f32 %v526, %v1363
      %v1365 = vpop.f32.mrf.mxu0
      %v1366 = vadd.f32 %v526, %v1365
      %1367 = vmatmul.bf16.gmra.mxu0 %v1112
      %v1368 = vpop.f32.mrf.mxu0
      %v1369 = vadd.f32 %v526, %v1368
      %v1370 = vpop.f32.mrf.mxu0
      %v1371 = vadd.f32 %v526, %v1370
      %1372 = vmatmul.bf16.gmra.mxu0 %v1115
      %v1373 = vpop.f32.mrf.mxu0
      %v1374 = vadd.f32 %v526, %v1373
      %v1375 = vpop.f32.mrf.mxu0
      %v1376 = vadd.f32 %v526, %v1375
      %1377 = vmatmul.bf16.gmra.mxu0 %v1118
      %v1378 = vpop.f32.mrf.mxu0
      %v1379 = vadd.f32 %v526, %v1378
      %v1380 = vpop.f32.mrf.mxu0
      %v1381 = vadd.f32 %v526, %v1380
      %1382 = vmatmul.bf16.gmra.mxu0 %v1121
      %v1383 = vpop.f32.mrf.mxu0
      %v1384 = vadd.f32 %v526, %v1383
      %v1385 = vpop.f32.mrf.mxu0
      %v1386 = vadd.f32 %v526, %v1385
      %1387 = vmatmul.bf16.gmra.mxu0 %v1124
      %v1388 = vpop.f32.mrf.mxu0
      %v1389 = vadd.f32 %v526, %v1388
      %v1390 = vpop.f32.mrf.mxu0
      %v1391 = vadd.f32 %v526, %v1390
      %1392 = vmatmul.bf16.gmra.mxu0 %v1127
      %v1393 = vpop.f32.mrf.mxu0
      %v1394 = vadd.f32 %v526, %v1393
      %v1395 = vpop.f32.mrf.mxu0
      %v1396 = vadd.f32 %v526, %v1395
      %1397 = vmatmul.bf16.gmra.mxu0 %v1130
      %v1398 = vpop.f32.mrf.mxu0
      %v1399 = vadd.f32 %v526, %v1398
      %v1400 = vpop.f32.mrf.mxu0
      %v1401 = vadd.f32 %v526, %v1400
      %1402 = vmatmul.bf16.gmra.mxu0 %v1133
      %v1403 = vpop.f32.mrf.mxu0
      %v1404 = vadd.f32 %v526, %v1403
      %v1405 = vpop.f32.mrf.mxu0
      %v1406 = vadd.f32 %v526, %v1405
      %1407 = vmatmul.bf16.gmra.mxu0 %v1136
      %v1408 = vpop.f32.mrf.mxu0
      %v1409 = vadd.f32 %v526, %v1408
      %v1410 = vpop.f32.mrf.mxu0
      %v1411 = vadd.f32 %v526, %v1410
      %1412 = vmatmul.bf16.gmra.mxu0 %v1139
      %v1413 = vpop.f32.mrf.mxu0
      %v1414 = vadd.f32 %v526, %v1413
      %v1415 = vpop.f32.mrf.mxu0
      %v1416 = vadd.f32 %v526, %v1415
      %1417 = vmatmul.bf16.gmra.mxu0 %v1142
      %v1418 = vpop.f32.mrf.mxu0
      %v1419 = vadd.f32 %v526, %v1418
      %v1420 = vpop.f32.mrf.mxu0
      %v1421 = vadd.f32 %v526, %v1420
      %1422 = vmatmul.bf16.gmra.mxu0 %v1145
      %v1423 = vpop.f32.mrf.mxu0
      %v1424 = vadd.f32 %v526, %v1423
      %v1425 = vpop.f32.mrf.mxu0
      %v1426 = vadd.f32 %v526, %v1425
      %1427 = vdwg.mxu0
      %1428 = vmatpush.bf16.msra.mxu0 0
      %1429 = vmatpush.bf16.msra.mxu0 0
      %1430 = vmatpush.bf16.msra.mxu0 0
      %1431 = vmatpush.bf16.msra.mxu0 0
      %1432 = vmatpush.bf16.msra.mxu0 0
      %1433 = vmatpush.bf16.msra.mxu0 %v1155
      %1434 = vmatpush.bf16.msra.mxu0 %v964
      %1435 = vmatpush.bf16.msra.mxu0 %v930
      %1436 = vmatmul.bf16.gmra.mxu0 %v1100
      %v1437 = vpop.f32.mrf.mxu0
      %v1438 = vadd.f32 %v527, %v1437
      %v1439 = vpop.f32.mrf.mxu0
      %v1440 = vadd.f32 %v527, %v1439
      %1441 = vmatmul.bf16.gmra.mxu0 %v1103
      %v1442 = vpop.f32.mrf.mxu0
      %v1443 = vadd.f32 %v527, %v1442
      %v1444 = vpop.f32.mrf.mxu0
      %v1445 = vadd.f32 %v527, %v1444
      %1446 = vmatmul.bf16.gmra.mxu0 %v1106
      %v1447 = vpop.f32.mrf.mxu0
      %v1448 = vadd.f32 %v527, %v1447
      %v1449 = vpop.f32.mrf.mxu0
      %v1450 = vadd.f32 %v527, %v1449
      %1451 = vmatmul.bf16.gmra.mxu0 %v1109
      %v1452 = vpop.f32.mrf.mxu0
      %v1453 = vadd.f32 %v527, %v1452
      %v1454 = vpop.f32.mrf.mxu0
      %v1455 = vadd.f32 %v527, %v1454
      %1456 = vmatmul.bf16.gmra.mxu0 %v1112
      %v1457 = vpop.f32.mrf.mxu0
      %v1458 = vadd.f32 %v527, %v1457
      %v1459 = vpop.f32.mrf.mxu0
      %v1460 = vadd.f32 %v527, %v1459
      %1461 = vmatmul.bf16.gmra.mxu0 %v1115
      %v1462 = vpop.f32.mrf.mxu0
      %v1463 = vadd.f32 %v527, %v1462
      %v1464 = vpop.f32.mrf.mxu0
      %v1465 = vadd.f32 %v527, %v1464
      %1466 = vmatmul.bf16.gmra.mxu0 %v1118
      %v1467 = vpop.f32.mrf.mxu0
      %v1468 = vadd.f32 %v527, %v1467
      %v1469 = vpop.f32.mrf.mxu0
      %v1470 = vadd.f32 %v527, %v1469
      %1471 = vmatmul.bf16.gmra.mxu0 %v1121
      %v1472 = vpop.f32.mrf.mxu0
      %v1473 = vadd.f32 %v527, %v1472
      %v1474 = vpop.f32.mrf.mxu0
      %v1475 = vadd.f32 %v527, %v1474
      %1476 = vmatmul.bf16.gmra.mxu0 %v1124
      %v1477 = vpop.f32.mrf.mxu0
      %v1478 = vadd.f32 %v527, %v1477
      %v1479 = vpop.f32.mrf.mxu0
      %v1480 = vadd.f32 %v527, %v1479
      %1481 = vmatmul.bf16.gmra.mxu0 %v1127
      %v1482 = vpop.f32.mrf.mxu0
      %v1483 = vadd.f32 %v527, %v1482
      %v1484 = vpop.f32.mrf.mxu0
      %v1485 = vadd.f32 %v527, %v1484
      %1486 = vmatmul.bf16.gmra.mxu0 %v1130
      %v1487 = vpop.f32.mrf.mxu0
      %v1488 = vadd.f32 %v527, %v1487
      %v1489 = vpop.f32.mrf.mxu0
      %v1490 = vadd.f32 %v527, %v1489
      %1491 = vmatmul.bf16.gmra.mxu0 %v1133
      %v1492 = vpop.f32.mrf.mxu0
      %v1493 = vadd.f32 %v527, %v1492
      %v1494 = vpop.f32.mrf.mxu0
      %v1495 = vadd.f32 %v527, %v1494
      %1496 = vmatmul.bf16.gmra.mxu0 %v1136
      %v1497 = vpop.f32.mrf.mxu0
      %v1498 = vadd.f32 %v527, %v1497
      %v1499 = vpop.f32.mrf.mxu0
      %v1500 = vadd.f32 %v527, %v1499
      %1501 = vmatmul.bf16.gmra.mxu0 %v1139
      %v1502 = vpop.f32.mrf.mxu0
      %v1503 = vadd.f32 %v527, %v1502
      %v1504 = vpop.f32.mrf.mxu0
      %v1505 = vadd.f32 %v527, %v1504
      %1506 = vmatmul.bf16.gmra.mxu0 %v1142
      %v1507 = vpop.f32.mrf.mxu0
      %v1508 = vadd.f32 %v527, %v1507
      %v1509 = vpop.f32.mrf.mxu0
      %v1510 = vadd.f32 %v527, %v1509
      %1511 = vmatmul.bf16.gmra.mxu0 %v1145
      %v1512 = vpop.f32.mrf.mxu0
      %v1513 = vadd.f32 %v527, %v1512
      %v1514 = vpop.f32.mrf.mxu0
      %v1515 = vadd.f32 %v527, %v1514
      %1516 = vdwg.mxu0
      %1517 = vmatpush.bf16.msra.mxu0 0
      %1518 = vmatpush.bf16.msra.mxu0 0
      %1519 = vmatpush.bf16.msra.mxu0 0
      %1520 = vmatpush.bf16.msra.mxu0 0
      %1521 = vmatpush.bf16.msra.mxu0 0
      %1522 = vmatpush.bf16.msra.mxu0 %v1158
      %1523 = vmatpush.bf16.msra.mxu0 %v965
      %1524 = vmatpush.bf16.msra.mxu0 %v931
      %1525 = vmatmul.bf16.gmra.mxu0 %v1100
      %v1526 = vpop.f32.mrf.mxu0
      %v1527 = vadd.f32 %v528, %v1526
      %v1528 = vpop.f32.mrf.mxu0
      %v1529 = vadd.f32 %v528, %v1528
      %1530 = vmatmul.bf16.gmra.mxu0 %v1103
      %v1531 = vpop.f32.mrf.mxu0
      %v1532 = vadd.f32 %v528, %v1531
      %v1533 = vpop.f32.mrf.mxu0
      %v1534 = vadd.f32 %v528, %v1533
      %1535 = vmatmul.bf16.gmra.mxu0 %v1106
      %v1536 = vpop.f32.mrf.mxu0
      %v1537 = vadd.f32 %v528, %v1536
      %v1538 = vpop.f32.mrf.mxu0
      %v1539 = vadd.f32 %v528, %v1538
      %1540 = vmatmul.bf16.gmra.mxu0 %v1109
      %v1541 = vpop.f32.mrf.mxu0
      %v1542 = vadd.f32 %v528, %v1541
      %v1543 = vpop.f32.mrf.mxu0
      %v1544 = vadd.f32 %v528, %v1543
      %1545 = vmatmul.bf16.gmra.mxu0 %v1112
      %v1546 = vpop.f32.mrf.mxu0
      %v1547 = vadd.f32 %v528, %v1546
      %v1548 = vpop.f32.mrf.mxu0
      %v1549 = vadd.f32 %v528, %v1548
      %1550 = vmatmul.bf16.gmra.mxu0 %v1115
      %v1551 = vpop.f32.mrf.mxu0
      %v1552 = vadd.f32 %v528, %v1551
      %v1553 = vpop.f32.mrf.mxu0
      %v1554 = vadd.f32 %v528, %v1553
      %1555 = vmatmul.bf16.gmra.mxu0 %v1118
      %v1556 = vpop.f32.mrf.mxu0
      %v1557 = vadd.f32 %v528, %v1556
      %v1558 = vpop.f32.mrf.mxu0
      %v1559 = vadd.f32 %v528, %v1558
      %1560 = vmatmul.bf16.gmra.mxu0 %v1121
      %v1561 = vpop.f32.mrf.mxu0
      %v1562 = vadd.f32 %v528, %v1561
      %v1563 = vpop.f32.mrf.mxu0
      %v1564 = vadd.f32 %v528, %v1563
      %1565 = vmatmul.bf16.gmra.mxu0 %v1124
      %v1566 = vpop.f32.mrf.mxu0
      %v1567 = vadd.f32 %v528, %v1566
      %v1568 = vpop.f32.mrf.mxu0
      %v1569 = vadd.f32 %v528, %v1568
      %1570 = vmatmul.bf16.gmra.mxu0 %v1127
      %v1571 = vpop.f32.mrf.mxu0
      %v1572 = vadd.f32 %v528, %v1571
      %v1573 = vpop.f32.mrf.mxu0
      %v1574 = vadd.f32 %v528, %v1573
      %1575 = vmatmul.bf16.gmra.mxu0 %v1130
      %v1576 = vpop.f32.mrf.mxu0
      %v1577 = vadd.f32 %v528, %v1576
      %v1578 = vpop.f32.mrf.mxu0
      %v1579 = vadd.f32 %v528, %v1578
      %1580 = vmatmul.bf16.gmra.mxu0 %v1133
      %v1581 = vpop.f32.mrf.mxu0
      %v1582 = vadd.f32 %v528, %v1581
      %v1583 = vpop.f32.mrf.mxu0
      %v1584 = vadd.f32 %v528, %v1583
      %1585 = vmatmul.bf16.gmra.mxu0 %v1136
      %v1586 = vpop.f32.mrf.mxu0
      %v1587 = vadd.f32 %v528, %v1586
      %v1588 = vpop.f32.mrf.mxu0
      %v1589 = vadd.f32 %v528, %v1588
      %1590 = vmatmul.bf16.gmra.mxu0 %v1139
      %v1591 = vpop.f32.mrf.mxu0
      %v1592 = vadd.f32 %v528, %v1591
      %v1593 = vpop.f32.mrf.mxu0
      %v1594 = vadd.f32 %v528, %v1593
      %1595 = vmatmul.bf16.gmra.mxu0 %v1142
      %v1596 = vpop.f32.mrf.mxu0
      %v1597 = vadd.f32 %v528, %v1596
      %v1598 = vpop.f32.mrf.mxu0
      %v1599 = vadd.f32 %v528, %v1598
      %1600 = vmatmul.bf16.gmra.mxu0 %v1145
      %v1601 = vpop.f32.mrf.mxu0
      %v1602 = vadd.f32 %v528, %v1601
      %v1603 = vpop.f32.mrf.mxu0
      %v1604 = vadd.f32 %v528, %v1603
      %1605 = vdwg.mxu0
      %1606 = vmatpush.bf16.msra.mxu0 0
      %1607 = vmatpush.bf16.msra.mxu0 0
      %1608 = vmatpush.bf16.msra.mxu0 0
      %1609 = vmatpush.bf16.msra.mxu0 0
      %1610 = vmatpush.bf16.msra.mxu0 0
      %1611 = vmatpush.bf16.msra.mxu0 %v1161
      %1612 = vmatpush.bf16.msra.mxu0 %v966
      %1613 = vmatpush.bf16.msra.mxu0 %v932
      %1614 = vmatmul.bf16.gmra.mxu0 %v1100
      %v1615 = vpop.f32.mrf.mxu0
      %v1616 = vadd.f32 %v529, %v1615
      %v1617 = vpop.f32.mrf.mxu0
      %v1618 = vadd.f32 %v529, %v1617
      %1619 = vmatmul.bf16.gmra.mxu0 %v1103
      %v1620 = vpop.f32.mrf.mxu0
      %v1621 = vadd.f32 %v529, %v1620
      %v1622 = vpop.f32.mrf.mxu0
      %v1623 = vadd.f32 %v529, %v1622
      %1624 = vmatmul.bf16.gmra.mxu0 %v1106
      %v1625 = vpop.f32.mrf.mxu0
      %v1626 = vadd.f32 %v529, %v1625
      %v1627 = vpop.f32.mrf.mxu0
      %v1628 = vadd.f32 %v529, %v1627
      %1629 = vmatmul.bf16.gmra.mxu0 %v1109
      %v1630 = vpop.f32.mrf.mxu0
      %v1631 = vadd.f32 %v529, %v1630
      %v1632 = vpop.f32.mrf.mxu0
      %v1633 = vadd.f32 %v529, %v1632
      %1634 = vmatmul.bf16.gmra.mxu0 %v1112
      %v1635 = vpop.f32.mrf.mxu0
      %v1636 = vadd.f32 %v529, %v1635
      %v1637 = vpop.f32.mrf.mxu0
      %v1638 = vadd.f32 %v529, %v1637
      %1639 = vmatmul.bf16.gmra.mxu0 %v1115
      %v1640 = vpop.f32.mrf.mxu0
      %v1641 = vadd.f32 %v529, %v1640
      %v1642 = vpop.f32.mrf.mxu0
      %v1643 = vadd.f32 %v529, %v1642
      %1644 = vmatmul.bf16.gmra.mxu0 %v1118
      %v1645 = vpop.f32.mrf.mxu0
      %v1646 = vadd.f32 %v529, %v1645
      %v1647 = vpop.f32.mrf.mxu0
      %v1648 = vadd.f32 %v529, %v1647
      %1649 = vmatmul.bf16.gmra.mxu0 %v1121
      %v1650 = vpop.f32.mrf.mxu0
      %v1651 = vadd.f32 %v529, %v1650
      %v1652 = vpop.f32.mrf.mxu0
      %v1653 = vadd.f32 %v529, %v1652
      %1654 = vmatmul.bf16.gmra.mxu0 %v1124
      %v1655 = vpop.f32.mrf.mxu0
      %v1656 = vadd.f32 %v529, %v1655
      %v1657 = vpop.f32.mrf.mxu0
      %v1658 = vadd.f32 %v529, %v1657
      %1659 = vmatmul.bf16.gmra.mxu0 %v1127
      %v1660 = vpop.f32.mrf.mxu0
      %v1661 = vadd.f32 %v529, %v1660
      %v1662 = vpop.f32.mrf.mxu0
      %v1663 = vadd.f32 %v529, %v1662
      %1664 = vmatmul.bf16.gmra.mxu0 %v1130
      %v1665 = vpop.f32.mrf.mxu0
      %v1666 = vadd.f32 %v529, %v1665
      %v1667 = vpop.f32.mrf.mxu0
      %v1668 = vadd.f32 %v529, %v1667
      %1669 = vmatmul.bf16.gmra.mxu0 %v1133
      %v1670 = vpop.f32.mrf.mxu0
      %v1671 = vadd.f32 %v529, %v1670
      %v1672 = vpop.f32.mrf.mxu0
      %v1673 = vadd.f32 %v529, %v1672
      %1674 = vmatmul.bf16.gmra.mxu0 %v1136
      %v1675 = vpop.f32.mrf.mxu0
      %v1676 = vadd.f32 %v529, %v1675
      %v1677 = vpop.f32.mrf.mxu0
      %v1678 = vadd.f32 %v529, %v1677
      %1679 = vmatmul.bf16.gmra.mxu0 %v1139
      %v1680 = vpop.f32.mrf.mxu0
      %v1681 = vadd.f32 %v529, %v1680
      %v1682 = vpop.f32.mrf.mxu0
      %v1683 = vadd.f32 %v529, %v1682
      %1684 = vmatmul.bf16.gmra.mxu0 %v1142
      %v1685 = vpop.f32.mrf.mxu0
      %v1686 = vadd.f32 %v529, %v1685
      %v1687 = vpop.f32.mrf.mxu0
      %v1688 = vadd.f32 %v529, %v1687
      %1689 = vmatmul.bf16.gmra.mxu0 %v1145
      %v1690 = vpop.f32.mrf.mxu0
      %v1691 = vadd.f32 %v529, %v1690
      %v1692 = vpop.f32.mrf.mxu0
      %v1693 = vadd.f32 %v529, %v1692
      %1694 = vdwg.mxu0
      %1695 = vmatpush.bf16.msra.mxu0 0
      %1696 = vmatpush.bf16.msra.mxu0 0
      %1697 = vmatpush.bf16.msra.mxu0 0
      %1698 = vmatpush.bf16.msra.mxu0 0
      %1699 = vmatpush.bf16.msra.mxu0 0
      %1700 = vmatpush.bf16.msra.mxu0 %v1164
      %1701 = vmatpush.bf16.msra.mxu0 %v967
      %1702 = vmatpush.bf16.msra.mxu0 %v933
      %1703 = vmatmul.bf16.gmra.mxu0 %v1100
      %v1704 = vpop.f32.mrf.mxu0
      %v1705 = vadd.f32 %v530, %v1704
      %v1706 = vpop.f32.mrf.mxu0
      %v1707 = vadd.f32 %v530, %v1706
      %1708 = vmatmul.bf16.gmra.mxu0 %v1103
      %v1709 = vpop.f32.mrf.mxu0
      %v1710 = vadd.f32 %v530, %v1709
      %v1711 = vpop.f32.mrf.mxu0
      %v1712 = vadd.f32 %v530, %v1711
      %1713 = vmatmul.bf16.gmra.mxu0 %v1106
      %v1714 = vpop.f32.mrf.mxu0
      %v1715 = vadd.f32 %v530, %v1714
      %v1716 = vpop.f32.mrf.mxu0
      %v1717 = vadd.f32 %v530, %v1716
      %1718 = vmatmul.bf16.gmra.mxu0 %v1109
      %v1719 = vpop.f32.mrf.mxu0
      %v1720 = vadd.f32 %v530, %v1719
      %v1721 = vpop.f32.mrf.mxu0
      %v1722 = vadd.f32 %v530, %v1721
      %1723 = vmatmul.bf16.gmra.mxu0 %v1112
      %v1724 = vpop.f32.mrf.mxu0
      %v1725 = vadd.f32 %v530, %v1724
      %v1726 = vpop.f32.mrf.mxu0
      %v1727 = vadd.f32 %v530, %v1726
      %1728 = vmatmul.bf16.gmra.mxu0 %v1115
      %v1729 = vpop.f32.mrf.mxu0
      %v1730 = vadd.f32 %v530, %v1729
      %v1731 = vpop.f32.mrf.mxu0
      %v1732 = vadd.f32 %v530, %v1731
      %1733 = vmatmul.bf16.gmra.mxu0 %v1118
      %v1734 = vpop.f32.mrf.mxu0
      %v1735 = vadd.f32 %v530, %v1734
      %v1736 = vpop.f32.mrf.mxu0
      %v1737 = vadd.f32 %v530, %v1736
      %1738 = vmatmul.bf16.gmra.mxu0 %v1121
      %v1739 = vpop.f32.mrf.mxu0
      %v1740 = vadd.f32 %v530, %v1739
      %v1741 = vpop.f32.mrf.mxu0
      %v1742 = vadd.f32 %v530, %v1741
      %1743 = vmatmul.bf16.gmra.mxu0 %v1124
      %v1744 = vpop.f32.mrf.mxu0
      %v1745 = vadd.f32 %v530, %v1744
      %v1746 = vpop.f32.mrf.mxu0
      %v1747 = vadd.f32 %v530, %v1746
      %1748 = vmatmul.bf16.gmra.mxu0 %v1127
      %v1749 = vpop.f32.mrf.mxu0
      %v1750 = vadd.f32 %v530, %v1749
      %v1751 = vpop.f32.mrf.mxu0
      %v1752 = vadd.f32 %v530, %v1751
      %1753 = vmatmul.bf16.gmra.mxu0 %v1130
      %v1754 = vpop.f32.mrf.mxu0
      %v1755 = vadd.f32 %v530, %v1754
      %v1756 = vpop.f32.mrf.mxu0
      %v1757 = vadd.f32 %v530, %v1756
      %1758 = vmatmul.bf16.gmra.mxu0 %v1133
      %v1759 = vpop.f32.mrf.mxu0
      %v1760 = vadd.f32 %v530, %v1759
      %v1761 = vpop.f32.mrf.mxu0
      %v1762 = vadd.f32 %v530, %v1761
      %1763 = vmatmul.bf16.gmra.mxu0 %v1136
      %v1764 = vpop.f32.mrf.mxu0
      %v1765 = vadd.f32 %v530, %v1764
      %v1766 = vpop.f32.mrf.mxu0
      %v1767 = vadd.f32 %v530, %v1766
      %1768 = vmatmul.bf16.gmra.mxu0 %v1139
      %v1769 = vpop.f32.mrf.mxu0
      %v1770 = vadd.f32 %v530, %v1769
      %v1771 = vpop.f32.mrf.mxu0
      %v1772 = vadd.f32 %v530, %v1771
      %1773 = vmatmul.bf16.gmra.mxu0 %v1142
      %v1774 = vpop.f32.mrf.mxu0
      %v1775 = vadd.f32 %v530, %v1774
      %v1776 = vpop.f32.mrf.mxu0
      %v1777 = vadd.f32 %v530, %v1776
      %1778 = vmatmul.bf16.gmra.mxu0 %v1145
      %v1779 = vpop.f32.mrf.mxu0
      %v1780 = vadd.f32 %v530, %v1779
      %v1781 = vpop.f32.mrf.mxu0
      %v1782 = vadd.f32 %v530, %v1781
      %1783 = vdwg.mxu0
      %1784 = vmatpush.bf16.msra.mxu0 0
      %1785 = vmatpush.bf16.msra.mxu0 0
      %1786 = vmatpush.bf16.msra.mxu0 0
      %1787 = vmatpush.bf16.msra.mxu0 0
      %1788 = vmatpush.bf16.msra.mxu0 0
      %1789 = vmatpush.bf16.msra.mxu0 %v1167
      %1790 = vmatpush.bf16.msra.mxu0 %v968
      %1791 = vmatpush.bf16.msra.mxu0 %v934
      %1792 = vmatmul.bf16.gmra.mxu0 %v1100
      %v1793 = vpop.f32.mrf.mxu0
      %v1794 = vadd.f32 %v531, %v1793
      %v1795 = vpop.f32.mrf.mxu0
      %v1796 = vadd.f32 %v531, %v1795
      %1797 = vmatmul.bf16.gmra.mxu0 %v1103
      %v1798 = vpop.f32.mrf.mxu0
      %v1799 = vadd.f32 %v531, %v1798
      %v1800 = vpop.f32.mrf.mxu0
      %v1801 = vadd.f32 %v531, %v1800
      %1802 = vmatmul.bf16.gmra.mxu0 %v1106
      %v1803 = vpop.f32.mrf.mxu0
      %v1804 = vadd.f32 %v531, %v1803
      %v1805 = vpop.f32.mrf.mxu0
      %v1806 = vadd.f32 %v531, %v1805
      %1807 = vmatmul.bf16.gmra.mxu0 %v1109
      %v1808 = vpop.f32.mrf.mxu0
      %v1809 = vadd.f32 %v531, %v1808
      %v1810 = vpop.f32.mrf.mxu0
      %v1811 = vadd.f32 %v531, %v1810
      %1812 = vmatmul.bf16.gmra.mxu0 %v1112
      %v1813 = vpop.f32.mrf.mxu0
      %v1814 = vadd.f32 %v531, %v1813
      %v1815 = vpop.f32.mrf.mxu0
      %v1816 = vadd.f32 %v531, %v1815
      %1817 = vmatmul.bf16.gmra.mxu0 %v1115
      %v1818 = vpop.f32.mrf.mxu0
      %v1819 = vadd.f32 %v531, %v1818
      %v1820 = vpop.f32.mrf.mxu0
      %v1821 = vadd.f32 %v531, %v1820
      %1822 = vmatmul.bf16.gmra.mxu0 %v1118
      %v1823 = vpop.f32.mrf.mxu0
      %v1824 = vadd.f32 %v531, %v1823
      %v1825 = vpop.f32.mrf.mxu0
      %v1826 = vadd.f32 %v531, %v1825
      %1827 = vmatmul.bf16.gmra.mxu0 %v1121
      %v1828 = vpop.f32.mrf.mxu0
      %v1829 = vadd.f32 %v531, %v1828
      %v1830 = vpop.f32.mrf.mxu0
      %v1831 = vadd.f32 %v531, %v1830
      %1832 = vmatmul.bf16.gmra.mxu0 %v1124
      %v1833 = vpop.f32.mrf.mxu0
      %v1834 = vadd.f32 %v531, %v1833
      %v1835 = vpop.f32.mrf.mxu0
      %v1836 = vadd.f32 %v531, %v1835
      %1837 = vmatmul.bf16.gmra.mxu0 %v1127
      %v1838 = vpop.f32.mrf.mxu0
      %v1839 = vadd.f32 %v531, %v1838
      %v1840 = vpop.f32.mrf.mxu0
      %v1841 = vadd.f32 %v531, %v1840
      %1842 = vmatmul.bf16.gmra.mxu0 %v1130
      %v1843 = vpop.f32.mrf.mxu0
      %v1844 = vadd.f32 %v531, %v1843
      %v1845 = vpop.f32.mrf.mxu0
      %v1846 = vadd.f32 %v531, %v1845
      %1847 = vmatmul.bf16.gmra.mxu0 %v1133
      %v1848 = vpop.f32.mrf.mxu0
      %v1849 = vadd.f32 %v531, %v1848
      %v1850 = vpop.f32.mrf.mxu0
      %v1851 = vadd.f32 %v531, %v1850
      %1852 = vmatmul.bf16.gmra.mxu0 %v1136
      %v1853 = vpop.f32.mrf.mxu0
      %v1854 = vadd.f32 %v531, %v1853
      %v1855 = vpop.f32.mrf.mxu0
      %v1856 = vadd.f32 %v531, %v1855
      %1857 = vmatmul.bf16.gmra.mxu0 %v1139
      %v1858 = vpop.f32.mrf.mxu0
      %v1859 = vadd.f32 %v531, %v1858
      %v1860 = vpop.f32.mrf.mxu0
      %v1861 = vadd.f32 %v531, %v1860
      %1862 = vmatmul.bf16.gmra.mxu0 %v1142
      %v1863 = vpop.f32.mrf.mxu0
      %v1864 = vadd.f32 %v531, %v1863
      %v1865 = vpop.f32.mrf.mxu0
      %v1866 = vadd.f32 %v531, %v1865
      %1867 = vmatmul.bf16.gmra.mxu0 %v1145
      %v1868 = vpop.f32.mrf.mxu0
      %v1869 = vadd.f32 %v531, %v1868
      %v1870 = vpop.f32.mrf.mxu0
      %v1871 = vadd.f32 %v531, %v1870
      %1872 = vdwg.mxu0
      %1873 = vmatpush.bf16.msra.mxu0 0
      %1874 = vmatpush.bf16.msra.mxu0 0
      %1875 = vmatpush.bf16.msra.mxu0 0
      %1876 = vmatpush.bf16.msra.mxu0 0
      %1877 = vmatpush.bf16.msra.mxu0 0
      %1878 = vmatpush.bf16.msra.mxu0 %v1170
      %1879 = vmatpush.bf16.msra.mxu0 %v969
      %1880 = vmatpush.bf16.msra.mxu0 %v935
      %1881 = vmatmul.bf16.gmra.mxu0 %v1100
      %v1882 = vpop.f32.mrf.mxu0
      %v1883 = vadd.f32 %v532, %v1882
      %v1884 = vpop.f32.mrf.mxu0
      %v1885 = vadd.f32 %v532, %v1884
      %1886 = vmatmul.bf16.gmra.mxu0 %v1103
      %v1887 = vpop.f32.mrf.mxu0
      %v1888 = vadd.f32 %v532, %v1887
      %v1889 = vpop.f32.mrf.mxu0
      %v1890 = vadd.f32 %v532, %v1889
      %1891 = vmatmul.bf16.gmra.mxu0 %v1106
      %v1892 = vpop.f32.mrf.mxu0
      %v1893 = vadd.f32 %v532, %v1892
      %v1894 = vpop.f32.mrf.mxu0
      %v1895 = vadd.f32 %v532, %v1894
      %1896 = vmatmul.bf16.gmra.mxu0 %v1109
      %v1897 = vpop.f32.mrf.mxu0
      %v1898 = vadd.f32 %v532, %v1897
      %v1899 = vpop.f32.mrf.mxu0
      %v1900 = vadd.f32 %v532, %v1899
      %1901 = vmatmul.bf16.gmra.mxu0 %v1112
      %v1902 = vpop.f32.mrf.mxu0
      %v1903 = vadd.f32 %v532, %v1902
      %v1904 = vpop.f32.mrf.mxu0
      %v1905 = vadd.f32 %v532, %v1904
      %1906 = vmatmul.bf16.gmra.mxu0 %v1115
      %v1907 = vpop.f32.mrf.mxu0
      %v1908 = vadd.f32 %v532, %v1907
      %v1909 = vpop.f32.mrf.mxu0
      %v1910 = vadd.f32 %v532, %v1909
      %1911 = vmatmul.bf16.gmra.mxu0 %v1118
      %v1912 = vpop.f32.mrf.mxu0
      %v1913 = vadd.f32 %v532, %v1912
      %v1914 = vpop.f32.mrf.mxu0
      %v1915 = vadd.f32 %v532, %v1914
      %1916 = vmatmul.bf16.gmra.mxu0 %v1121
      %v1917 = vpop.f32.mrf.mxu0
      %v1918 = vadd.f32 %v532, %v1917
      %v1919 = vpop.f32.mrf.mxu0
      %v1920 = vadd.f32 %v532, %v1919
      %1921 = vmatmul.bf16.gmra.mxu0 %v1124
      %v1922 = vpop.f32.mrf.mxu0
      %v1923 = vadd.f32 %v532, %v1922
      %v1924 = vpop.f32.mrf.mxu0
      %v1925 = vadd.f32 %v532, %v1924
      %1926 = vmatmul.bf16.gmra.mxu0 %v1127
      %v1927 = vpop.f32.mrf.mxu0
      %v1928 = vadd.f32 %v532, %v1927
      %v1929 = vpop.f32.mrf.mxu0
      %v1930 = vadd.f32 %v532, %v1929
      %1931 = vmatmul.bf16.gmra.mxu0 %v1130
      %v1932 = vpop.f32.mrf.mxu0
      %v1933 = vadd.f32 %v532, %v1932
      %v1934 = vpop.f32.mrf.mxu0
      %v1935 = vadd.f32 %v532, %v1934
      %1936 = vmatmul.bf16.gmra.mxu0 %v1133
      %v1937 = vpop.f32.mrf.mxu0
      %v1938 = vadd.f32 %v532, %v1937
      %v1939 = vpop.f32.mrf.mxu0
      %v1940 = vadd.f32 %v532, %v1939
      %1941 = vmatmul.bf16.gmra.mxu0 %v1136
      %v1942 = vpop.f32.mrf.mxu0
      %v1943 = vadd.f32 %v532, %v1942
      %v1944 = vpop.f32.mrf.mxu0
      %v1945 = vadd.f32 %v532, %v1944
      %1946 = vmatmul.bf16.gmra.mxu0 %v1139
      %v1947 = vpop.f32.mrf.mxu0
      %v1948 = vadd.f32 %v532, %v1947
      %v1949 = vpop.f32.mrf.mxu0
      %v1950 = vadd.f32 %v532, %v1949
      %1951 = vmatmul.bf16.gmra.mxu0 %v1142
      %v1952 = vpop.f32.mrf.mxu0
      %v1953 = vadd.f32 %v532, %v1952
      %v1954 = vpop.f32.mrf.mxu0
      %v1955 = vadd.f32 %v532, %v1954
      %1956 = vmatmul.bf16.gmra.mxu0 %v1145
      %v1957 = vpop.f32.mrf.mxu0
      %v1958 = vadd.f32 %v532, %v1957
      %v1959 = vpop.f32.mrf.mxu0
      %v1960 = vadd.f32 %v532, %v1959
      %1961 = vdwg.mxu0
      %1962 = vmatpush.bf16.msra.mxu0 0
      %1963 = vmatpush.bf16.msra.mxu0 0
      %1964 = vmatpush.bf16.msra.mxu0 0
      %1965 = vmatpush.bf16.msra.mxu0 0
      %1966 = vmatpush.bf16.msra.mxu0 0
      %1967 = vmatpush.bf16.msra.mxu0 %v1173
      %1968 = vmatpush.bf16.msra.mxu0 %v970
      %1969 = vmatpush.bf16.msra.mxu0 %v936
      %1970 = vmatmul.bf16.gmra.mxu0 %v1100
      %v1971 = vpop.f32.mrf.mxu0
      %v1972 = vadd.f32 %v533, %v1971
      %v1973 = vpop.f32.mrf.mxu0
      %v1974 = vadd.f32 %v533, %v1973
      %1975 = vmatmul.bf16.gmra.mxu0 %v1103
      %v1976 = vpop.f32.mrf.mxu0
      %v1977 = vadd.f32 %v533, %v1976
      %v1978 = vpop.f32.mrf.mxu0
      %v1979 = vadd.f32 %v533, %v1978
      %1980 = vmatmul.bf16.gmra.mxu0 %v1106
      %v1981 = vpop.f32.mrf.mxu0
      %v1982 = vadd.f32 %v533, %v1981
      %v1983 = vpop.f32.mrf.mxu0
      %v1984 = vadd.f32 %v533, %v1983
      %1985 = vmatmul.bf16.gmra.mxu0 %v1109
      %v1986 = vpop.f32.mrf.mxu0
      %v1987 = vadd.f32 %v533, %v1986
      %v1988 = vpop.f32.mrf.mxu0
      %v1989 = vadd.f32 %v533, %v1988
      %1990 = vmatmul.bf16.gmra.mxu0 %v1112
      %v1991 = vpop.f32.mrf.mxu0
      %v1992 = vadd.f32 %v533, %v1991
      %v1993 = vpop.f32.mrf.mxu0
      %v1994 = vadd.f32 %v533, %v1993
      %1995 = vmatmul.bf16.gmra.mxu0 %v1115
      %v1996 = vpop.f32.mrf.mxu0
      %v1997 = vadd.f32 %v533, %v1996
      %v1998 = vpop.f32.mrf.mxu0
      %v1999 = vadd.f32 %v533, %v1998
      %2000 = vmatmul.bf16.gmra.mxu0 %v1118
      %v2001 = vpop.f32.mrf.mxu0
      %v2002 = vadd.f32 %v533, %v2001
      %v2003 = vpop.f32.mrf.mxu0
      %v2004 = vadd.f32 %v533, %v2003
      %2005 = vmatmul.bf16.gmra.mxu0 %v1121
      %v2006 = vpop.f32.mrf.mxu0
      %v2007 = vadd.f32 %v533, %v2006
      %v2008 = vpop.f32.mrf.mxu0
      %v2009 = vadd.f32 %v533, %v2008
      %2010 = vmatmul.bf16.gmra.mxu0 %v1124
      %v2011 = vpop.f32.mrf.mxu0
      %v2012 = vadd.f32 %v533, %v2011
      %v2013 = vpop.f32.mrf.mxu0
      %v2014 = vadd.f32 %v533, %v2013
      %2015 = vmatmul.bf16.gmra.mxu0 %v1127
      %v2016 = vpop.f32.mrf.mxu0
      %v2017 = vadd.f32 %v533, %v2016
      %v2018 = vpop.f32.mrf.mxu0
      %v2019 = vadd.f32 %v533, %v2018
      %2020 = vmatmul.bf16.gmra.mxu0 %v1130
      %v2021 = vpop.f32.mrf.mxu0
      %v2022 = vadd.f32 %v533, %v2021
      %v2023 = vpop.f32.mrf.mxu0
      %v2024 = vadd.f32 %v533, %v2023
      %2025 = vmatmul.bf16.gmra.mxu0 %v1133
      %v2026 = vpop.f32.mrf.mxu0
      %v2027 = vadd.f32 %v533, %v2026
      %v2028 = vpop.f32.mrf.mxu0
      %v2029 = vadd.f32 %v533, %v2028
      %2030 = vmatmul.bf16.gmra.mxu0 %v1136
      %v2031 = vpop.f32.mrf.mxu0
      %v2032 = vadd.f32 %v533, %v2031
      %v2033 = vpop.f32.mrf.mxu0
      %v2034 = vadd.f32 %v533, %v2033
      %2035 = vmatmul.bf16.gmra.mxu0 %v1139
      %v2036 = vpop.f32.mrf.mxu0
      %v2037 = vadd.f32 %v533, %v2036
      %v2038 = vpop.f32.mrf.mxu0
      %v2039 = vadd.f32 %v533, %v2038
      %2040 = vmatmul.bf16.gmra.mxu0 %v1142
      %v2041 = vpop.f32.mrf.mxu0
      %v2042 = vadd.f32 %v533, %v2041
      %v2043 = vpop.f32.mrf.mxu0
      %v2044 = vadd.f32 %v533, %v2043
      %2045 = vmatmul.bf16.gmra.mxu0 %v1145
      %v2046 = vpop.f32.mrf.mxu0
      %v2047 = vadd.f32 %v533, %v2046
      %v2048 = vpop.f32.mrf.mxu0
      %v2049 = vadd.f32 %v533, %v2048
      %2050 = vdwg.mxu0
      %2051 = vmatpush.bf16.msra.mxu0 0
      %2052 = vmatpush.bf16.msra.mxu0 0
      %2053 = vmatpush.bf16.msra.mxu0 0
      %2054 = vmatpush.bf16.msra.mxu0 0
      %2055 = vmatpush.bf16.msra.mxu0 0
      %2056 = vmatpush.bf16.msra.mxu0 %v1176
      %2057 = vmatpush.bf16.msra.mxu0 %v971
      %2058 = vmatpush.bf16.msra.mxu0 %v937
      %2059 = vmatmul.bf16.gmra.mxu0 %v1100
      %v2060 = vpop.f32.mrf.mxu0
      %v2061 = vadd.f32 %v534, %v2060
      %v2062 = vpop.f32.mrf.mxu0
      %v2063 = vadd.f32 %v534, %v2062
      %2064 = vmatmul.bf16.gmra.mxu0 %v1103
      %v2065 = vpop.f32.mrf.mxu0
      %v2066 = vadd.f32 %v534, %v2065
      %v2067 = vpop.f32.mrf.mxu0
      %v2068 = vadd.f32 %v534, %v2067
      %2069 = vmatmul.bf16.gmra.mxu0 %v1106
      %v2070 = vpop.f32.mrf.mxu0
      %v2071 = vadd.f32 %v534, %v2070
      %v2072 = vpop.f32.mrf.mxu0
      %v2073 = vadd.f32 %v534, %v2072
      %2074 = vmatmul.bf16.gmra.mxu0 %v1109
      %v2075 = vpop.f32.mrf.mxu0
      %v2076 = vadd.f32 %v534, %v2075
      %v2077 = vpop.f32.mrf.mxu0
      %v2078 = vadd.f32 %v534, %v2077
      %2079 = vmatmul.bf16.gmra.mxu0 %v1112
      %v2080 = vpop.f32.mrf.mxu0
      %v2081 = vadd.f32 %v534, %v2080
      %v2082 = vpop.f32.mrf.mxu0
      %v2083 = vadd.f32 %v534, %v2082
      %2084 = vmatmul.bf16.gmra.mxu0 %v1115
      %v2085 = vpop.f32.mrf.mxu0
      %v2086 = vadd.f32 %v534, %v2085
      %v2087 = vpop.f32.mrf.mxu0
      %v2088 = vadd.f32 %v534, %v2087
      %2089 = vmatmul.bf16.gmra.mxu0 %v1118
      %v2090 = vpop.f32.mrf.mxu0
      %v2091 = vadd.f32 %v534, %v2090
      %v2092 = vpop.f32.mrf.mxu0
      %v2093 = vadd.f32 %v534, %v2092
      %2094 = vmatmul.bf16.gmra.mxu0 %v1121
      %v2095 = vpop.f32.mrf.mxu0
      %v2096 = vadd.f32 %v534, %v2095
      %v2097 = vpop.f32.mrf.mxu0
      %v2098 = vadd.f32 %v534, %v2097
      %2099 = vmatmul.bf16.gmra.mxu0 %v1124
      %v2100 = vpop.f32.mrf.mxu0
      %v2101 = vadd.f32 %v534, %v2100
      %v2102 = vpop.f32.mrf.mxu0
      %v2103 = vadd.f32 %v534, %v2102
      %2104 = vmatmul.bf16.gmra.mxu0 %v1127
      %v2105 = vpop.f32.mrf.mxu0
      %v2106 = vadd.f32 %v534, %v2105
      %v2107 = vpop.f32.mrf.mxu0
      %v2108 = vadd.f32 %v534, %v2107
      %2109 = vmatmul.bf16.gmra.mxu0 %v1130
      %v2110 = vpop.f32.mrf.mxu0
      %v2111 = vadd.f32 %v534, %v2110
      %v2112 = vpop.f32.mrf.mxu0
      %v2113 = vadd.f32 %v534, %v2112
      %2114 = vmatmul.bf16.gmra.mxu0 %v1133
      %v2115 = vpop.f32.mrf.mxu0
      %v2116 = vadd.f32 %v534, %v2115
      %v2117 = vpop.f32.mrf.mxu0
      %v2118 = vadd.f32 %v534, %v2117
      %2119 = vmatmul.bf16.gmra.mxu0 %v1136
      %v2120 = vpop.f32.mrf.mxu0
      %v2121 = vadd.f32 %v534, %v2120
      %v2122 = vpop.f32.mrf.mxu0
      %v2123 = vadd.f32 %v534, %v2122
      %2124 = vmatmul.bf16.gmra.mxu0 %v1139
      %v2125 = vpop.f32.mrf.mxu0
      %v2126 = vadd.f32 %v534, %v2125
      %v2127 = vpop.f32.mrf.mxu0
      %v2128 = vadd.f32 %v534, %v2127
      %2129 = vmatmul.bf16.gmra.mxu0 %v1142
      %v2130 = vpop.f32.mrf.mxu0
      %v2131 = vadd.f32 %v534, %v2130
      %v2132 = vpop.f32.mrf.mxu0
      %v2133 = vadd.f32 %v534, %v2132
      %2134 = vmatmul.bf16.gmra.mxu0 %v1145
      %v2135 = vpop.f32.mrf.mxu0
      %v2136 = vadd.f32 %v534, %v2135
      %v2137 = vpop.f32.mrf.mxu0
      %v2138 = vadd.f32 %v534, %v2137
      %2139 = vdwg.mxu0
      %2140 = vmatpush.bf16.msra.mxu0 0
      %2141 = vmatpush.bf16.msra.mxu0 0
      %2142 = vmatpush.bf16.msra.mxu0 0
      %2143 = vmatpush.bf16.msra.mxu0 0
      %2144 = vmatpush.bf16.msra.mxu0 0
      %2145 = vmatpush.bf16.msra.mxu0 %v1179
      %2146 = vmatpush.bf16.msra.mxu0 %v972
      %2147 = vmatpush.bf16.msra.mxu0 %v938
      %2148 = vmatmul.bf16.gmra.mxu0 %v1100
      %v2149 = vpop.f32.mrf.mxu0
      %v2150 = vadd.f32 %v535, %v2149
      %v2151 = vpop.f32.mrf.mxu0
      %v2152 = vadd.f32 %v535, %v2151
      %2153 = vmatmul.bf16.gmra.mxu0 %v1103
      %v2154 = vpop.f32.mrf.mxu0
      %v2155 = vadd.f32 %v535, %v2154
      %v2156 = vpop.f32.mrf.mxu0
      %v2157 = vadd.f32 %v535, %v2156
      %2158 = vmatmul.bf16.gmra.mxu0 %v1106
      %v2159 = vpop.f32.mrf.mxu0
      %v2160 = vadd.f32 %v535, %v2159
      %v2161 = vpop.f32.mrf.mxu0
      %v2162 = vadd.f32 %v535, %v2161
      %2163 = vmatmul.bf16.gmra.mxu0 %v1109
      %v2164 = vpop.f32.mrf.mxu0
      %v2165 = vadd.f32 %v535, %v2164
      %v2166 = vpop.f32.mrf.mxu0
      %v2167 = vadd.f32 %v535, %v2166
      %2168 = vmatmul.bf16.gmra.mxu0 %v1112
      %v2169 = vpop.f32.mrf.mxu0
      %v2170 = vadd.f32 %v535, %v2169
      %v2171 = vpop.f32.mrf.mxu0
      %v2172 = vadd.f32 %v535, %v2171
      %2173 = vmatmul.bf16.gmra.mxu0 %v1115
      %v2174 = vpop.f32.mrf.mxu0
      %v2175 = vadd.f32 %v535, %v2174
      %v2176 = vpop.f32.mrf.mxu0
      %v2177 = vadd.f32 %v535, %v2176
      %2178 = vmatmul.bf16.gmra.mxu0 %v1118
      %v2179 = vpop.f32.mrf.mxu0
      %v2180 = vadd.f32 %v535, %v2179
      %v2181 = vpop.f32.mrf.mxu0
      %v2182 = vadd.f32 %v535, %v2181
      %2183 = vmatmul.bf16.gmra.mxu0 %v1121
      %v2184 = vpop.f32.mrf.mxu0
      %v2185 = vadd.f32 %v535, %v2184
      %v2186 = vpop.f32.mrf.mxu0
      %v2187 = vadd.f32 %v535, %v2186
      %2188 = vmatmul.bf16.gmra.mxu0 %v1124
      %v2189 = vpop.f32.mrf.mxu0
      %v2190 = vadd.f32 %v535, %v2189
      %v2191 = vpop.f32.mrf.mxu0
      %v2192 = vadd.f32 %v535, %v2191
      %2193 = vmatmul.bf16.gmra.mxu0 %v1127
      %v2194 = vpop.f32.mrf.mxu0
      %v2195 = vadd.f32 %v535, %v2194
      %v2196 = vpop.f32.mrf.mxu0
      %v2197 = vadd.f32 %v535, %v2196
      %2198 = vmatmul.bf16.gmra.mxu0 %v1130
      %v2199 = vpop.f32.mrf.mxu0
      %v2200 = vadd.f32 %v535, %v2199
      %v2201 = vpop.f32.mrf.mxu0
      %v2202 = vadd.f32 %v535, %v2201
      %2203 = vmatmul.bf16.gmra.mxu0 %v1133
      %v2204 = vpop.f32.mrf.mxu0
      %v2205 = vadd.f32 %v535, %v2204
      %v2206 = vpop.f32.mrf.mxu0
      %v2207 = vadd.f32 %v535, %v2206
      %2208 = vmatmul.bf16.gmra.mxu0 %v1136
      %v2209 = vpop.f32.mrf.mxu0
      %v2210 = vadd.f32 %v535, %v2209
      %v2211 = vpop.f32.mrf.mxu0
      %v2212 = vadd.f32 %v535, %v2211
      %2213 = vmatmul.bf16.gmra.mxu0 %v1139
      %v2214 = vpop.f32.mrf.mxu0
      %v2215 = vadd.f32 %v535, %v2214
      %v2216 = vpop.f32.mrf.mxu0
      %v2217 = vadd.f32 %v535, %v2216
      %2218 = vmatmul.bf16.gmra.mxu0 %v1142
      %v2219 = vpop.f32.mrf.mxu0
      %v2220 = vadd.f32 %v535, %v2219
      %v2221 = vpop.f32.mrf.mxu0
      %v2222 = vadd.f32 %v535, %v2221
      %2223 = vmatmul.bf16.gmra.mxu0 %v1145
      %v2224 = vpop.f32.mrf.mxu0
      %v2225 = vadd.f32 %v535, %v2224
      %v2226 = vpop.f32.mrf.mxu0
      %v2227 = vadd.f32 %v535, %v2226
      %2228 = vdwg.mxu0
      %2229 = vmatpush.bf16.msra.mxu0 0
      %2230 = vmatpush.bf16.msra.mxu0 0
      %2231 = vmatpush.bf16.msra.mxu0 0
      %2232 = vmatpush.bf16.msra.mxu0 0
      %2233 = vmatpush.bf16.msra.mxu0 0
      %2234 = vmatpush.bf16.msra.mxu0 %v1182
      %2235 = vmatpush.bf16.msra.mxu0 %v973
      %2236 = vmatpush.bf16.msra.mxu0 %v939
      %2237 = vmatmul.bf16.gmra.mxu0 %v1100
      %v2238 = vpop.f32.mrf.mxu0
      %v2239 = vadd.f32 %v536, %v2238
      %v2240 = vpop.f32.mrf.mxu0
      %v2241 = vadd.f32 %v536, %v2240
      %2242 = vmatmul.bf16.gmra.mxu0 %v1103
      %v2243 = vpop.f32.mrf.mxu0
      %v2244 = vadd.f32 %v536, %v2243
      %v2245 = vpop.f32.mrf.mxu0
      %v2246 = vadd.f32 %v536, %v2245
      %2247 = vmatmul.bf16.gmra.mxu0 %v1106
      %v2248 = vpop.f32.mrf.mxu0
      %v2249 = vadd.f32 %v536, %v2248
      %v2250 = vpop.f32.mrf.mxu0
      %v2251 = vadd.f32 %v536, %v2250
      %2252 = vmatmul.bf16.gmra.mxu0 %v1109
      %v2253 = vpop.f32.mrf.mxu0
      %v2254 = vadd.f32 %v536, %v2253
      %v2255 = vpop.f32.mrf.mxu0
      %v2256 = vadd.f32 %v536, %v2255
      %2257 = vmatmul.bf16.gmra.mxu0 %v1112
      %v2258 = vpop.f32.mrf.mxu0
      %v2259 = vadd.f32 %v536, %v2258
      %v2260 = vpop.f32.mrf.mxu0
      %v2261 = vadd.f32 %v536, %v2260
      %2262 = vmatmul.bf16.gmra.mxu0 %v1115
      %v2263 = vpop.f32.mrf.mxu0
      %v2264 = vadd.f32 %v536, %v2263
      %v2265 = vpop.f32.mrf.mxu0
      %v2266 = vadd.f32 %v536, %v2265
      %2267 = vmatmul.bf16.gmra.mxu0 %v1118
      %v2268 = vpop.f32.mrf.mxu0
      %v2269 = vadd.f32 %v536, %v2268
      %v2270 = vpop.f32.mrf.mxu0
      %v2271 = vadd.f32 %v536, %v2270
      %2272 = vmatmul.bf16.gmra.mxu0 %v1121
      %v2273 = vpop.f32.mrf.mxu0
      %v2274 = vadd.f32 %v536, %v2273
      %v2275 = vpop.f32.mrf.mxu0
      %v2276 = vadd.f32 %v536, %v2275
      %2277 = vmatmul.bf16.gmra.mxu0 %v1124
      %v2278 = vpop.f32.mrf.mxu0
      %v2279 = vadd.f32 %v536, %v2278
      %v2280 = vpop.f32.mrf.mxu0
      %v2281 = vadd.f32 %v536, %v2280
      %2282 = vmatmul.bf16.gmra.mxu0 %v1127
      %v2283 = vpop.f32.mrf.mxu0
      %v2284 = vadd.f32 %v536, %v2283
      %v2285 = vpop.f32.mrf.mxu0
      %v2286 = vadd.f32 %v536, %v2285
      %2287 = vmatmul.bf16.gmra.mxu0 %v1130
      %v2288 = vpop.f32.mrf.mxu0
      %v2289 = vadd.f32 %v536, %v2288
      %v2290 = vpop.f32.mrf.mxu0
      %v2291 = vadd.f32 %v536, %v2290
      %2292 = vmatmul.bf16.gmra.mxu0 %v1133
      %v2293 = vpop.f32.mrf.mxu0
      %v2294 = vadd.f32 %v536, %v2293
      %v2295 = vpop.f32.mrf.mxu0
      %v2296 = vadd.f32 %v536, %v2295
      %2297 = vmatmul.bf16.gmra.mxu0 %v1136
      %v2298 = vpop.f32.mrf.mxu0
      %v2299 = vadd.f32 %v536, %v2298
      %v2300 = vpop.f32.mrf.mxu0
      %v2301 = vadd.f32 %v536, %v2300
      %2302 = vmatmul.bf16.gmra.mxu0 %v1139
      %v2303 = vpop.f32.mrf.mxu0
      %v2304 = vadd.f32 %v536, %v2303
      %v2305 = vpop.f32.mrf.mxu0
      %v2306 = vadd.f32 %v536, %v2305
      %2307 = vmatmul.bf16.gmra.mxu0 %v1142
      %v2308 = vpop.f32.mrf.mxu0
      %v2309 = vadd.f32 %v536, %v2308
      %v2310 = vpop.f32.mrf.mxu0
      %v2311 = vadd.f32 %v536, %v2310
      %2312 = vmatmul.bf16.gmra.mxu0 %v1145
      %v2313 = vpop.f32.mrf.mxu0
      %v2314 = vadd.f32 %v536, %v2313
      %v2315 = vpop.f32.mrf.mxu0
      %v2316 = vadd.f32 %v536, %v2315
      %2317 = vdwg.mxu0
      %2318 = vmatpush.bf16.msra.mxu0 0
      %2319 = vmatpush.bf16.msra.mxu0 0
      %2320 = vmatpush.bf16.msra.mxu0 0
      %2321 = vmatpush.bf16.msra.mxu0 0
      %2322 = vmatpush.bf16.msra.mxu0 0
      %2323 = vmatpush.bf16.msra.mxu0 %v1185
      %2324 = vmatpush.bf16.msra.mxu0 %v974
      %2325 = vmatpush.bf16.msra.mxu0 %v940
      %2326 = vmatmul.bf16.gmra.mxu0 %v1100
      %v2327 = vpop.f32.mrf.mxu0
      %v2328 = vadd.f32 %v537, %v2327
      %v2329 = vpop.f32.mrf.mxu0
      %v2330 = vadd.f32 %v537, %v2329
      %2331 = vmatmul.bf16.gmra.mxu0 %v1103
      %v2332 = vpop.f32.mrf.mxu0
      %v2333 = vadd.f32 %v537, %v2332
      %v2334 = vpop.f32.mrf.mxu0
      %v2335 = vadd.f32 %v537, %v2334
      %2336 = vmatmul.bf16.gmra.mxu0 %v1106
      %v2337 = vpop.f32.mrf.mxu0
      %v2338 = vadd.f32 %v537, %v2337
      %v2339 = vpop.f32.mrf.mxu0
      %v2340 = vadd.f32 %v537, %v2339
      %2341 = vmatmul.bf16.gmra.mxu0 %v1109
      %v2342 = vpop.f32.mrf.mxu0
      %v2343 = vadd.f32 %v537, %v2342
      %v2344 = vpop.f32.mrf.mxu0
      %v2345 = vadd.f32 %v537, %v2344
      %2346 = vmatmul.bf16.gmra.mxu0 %v1112
      %v2347 = vpop.f32.mrf.mxu0
      %v2348 = vadd.f32 %v537, %v2347
      %v2349 = vpop.f32.mrf.mxu0
      %v2350 = vadd.f32 %v537, %v2349
      %2351 = vmatmul.bf16.gmra.mxu0 %v1115
      %v2352 = vpop.f32.mrf.mxu0
      %v2353 = vadd.f32 %v537, %v2352
      %v2354 = vpop.f32.mrf.mxu0
      %v2355 = vadd.f32 %v537, %v2354
      %2356 = vmatmul.bf16.gmra.mxu0 %v1118
      %v2357 = vpop.f32.mrf.mxu0
      %v2358 = vadd.f32 %v537, %v2357
      %v2359 = vpop.f32.mrf.mxu0
      %v2360 = vadd.f32 %v537, %v2359
      %2361 = vmatmul.bf16.gmra.mxu0 %v1121
      %v2362 = vpop.f32.mrf.mxu0
      %v2363 = vadd.f32 %v537, %v2362
      %v2364 = vpop.f32.mrf.mxu0
      %v2365 = vadd.f32 %v537, %v2364
      %2366 = vmatmul.bf16.gmra.mxu0 %v1124
      %v2367 = vpop.f32.mrf.mxu0
      %v2368 = vadd.f32 %v537, %v2367
      %v2369 = vpop.f32.mrf.mxu0
      %v2370 = vadd.f32 %v537, %v2369
      %2371 = vmatmul.bf16.gmra.mxu0 %v1127
      %v2372 = vpop.f32.mrf.mxu0
      %v2373 = vadd.f32 %v537, %v2372
      %v2374 = vpop.f32.mrf.mxu0
      %v2375 = vadd.f32 %v537, %v2374
      %2376 = vmatmul.bf16.gmra.mxu0 %v1130
      %v2377 = vpop.f32.mrf.mxu0
      %v2378 = vadd.f32 %v537, %v2377
      %v2379 = vpop.f32.mrf.mxu0
      %v2380 = vadd.f32 %v537, %v2379
      %2381 = vmatmul.bf16.gmra.mxu0 %v1133
      %v2382 = vpop.f32.mrf.mxu0
      %v2383 = vadd.f32 %v537, %v2382
      %v2384 = vpop.f32.mrf.mxu0
      %v2385 = vadd.f32 %v537, %v2384
      %2386 = vmatmul.bf16.gmra.mxu0 %v1136
      %v2387 = vpop.f32.mrf.mxu0
      %v2388 = vadd.f32 %v537, %v2387
      %v2389 = vpop.f32.mrf.mxu0
      %v2390 = vadd.f32 %v537, %v2389
      %2391 = vmatmul.bf16.gmra.mxu0 %v1139
      %v2392 = vpop.f32.mrf.mxu0
      %v2393 = vadd.f32 %v537, %v2392
      %v2394 = vpop.f32.mrf.mxu0
      %v2395 = vadd.f32 %v537, %v2394
      %2396 = vmatmul.bf16.gmra.mxu0 %v1142
      %v2397 = vpop.f32.mrf.mxu0
      %v2398 = vadd.f32 %v537, %v2397
      %v2399 = vpop.f32.mrf.mxu0
      %v2400 = vadd.f32 %v537, %v2399
      %2401 = vmatmul.bf16.gmra.mxu0 %v1145
      %v2402 = vpop.f32.mrf.mxu0
      %v2403 = vadd.f32 %v537, %v2402
      %v2404 = vpop.f32.mrf.mxu0
      %v2405 = vadd.f32 %v537, %v2404
      %2406 = vdwg.mxu0
      %2407 = vmatpush.bf16.msra.mxu0 0
      %2408 = vmatpush.bf16.msra.mxu0 0
      %2409 = vmatpush.bf16.msra.mxu0 0
      %2410 = vmatpush.bf16.msra.mxu0 0
      %2411 = vmatpush.bf16.msra.mxu0 0
      %2412 = vmatpush.bf16.msra.mxu0 %v1188
      %2413 = vmatpush.bf16.msra.mxu0 %v975
      %2414 = vmatpush.bf16.msra.mxu0 %v941
      %2415 = vmatmul.bf16.gmra.mxu0 %v1100
      %v2416 = vpop.f32.mrf.mxu0
      %v2417 = vadd.f32 %v538, %v2416
      %v2418 = vpop.f32.mrf.mxu0
      %v2419 = vadd.f32 %v538, %v2418
      %2420 = vmatmul.bf16.gmra.mxu0 %v1103
      %v2421 = vpop.f32.mrf.mxu0
      %v2422 = vadd.f32 %v538, %v2421
      %v2423 = vpop.f32.mrf.mxu0
      %v2424 = vadd.f32 %v538, %v2423
      %2425 = vmatmul.bf16.gmra.mxu0 %v1106
      %v2426 = vpop.f32.mrf.mxu0
      %v2427 = vadd.f32 %v538, %v2426
      %v2428 = vpop.f32.mrf.mxu0
      %v2429 = vadd.f32 %v538, %v2428
      %2430 = vmatmul.bf16.gmra.mxu0 %v1109
      %v2431 = vpop.f32.mrf.mxu0
      %v2432 = vadd.f32 %v538, %v2431
      %v2433 = vpop.f32.mrf.mxu0
      %v2434 = vadd.f32 %v538, %v2433
      %2435 = vmatmul.bf16.gmra.mxu0 %v1112
      %v2436 = vpop.f32.mrf.mxu0
      %v2437 = vadd.f32 %v538, %v2436
      %v2438 = vpop.f32.mrf.mxu0
      %v2439 = vadd.f32 %v538, %v2438
      %2440 = vmatmul.bf16.gmra.mxu0 %v1115
      %v2441 = vpop.f32.mrf.mxu0
      %v2442 = vadd.f32 %v538, %v2441
      %v2443 = vpop.f32.mrf.mxu0
      %v2444 = vadd.f32 %v538, %v2443
      %2445 = vmatmul.bf16.gmra.mxu0 %v1118
      %v2446 = vpop.f32.mrf.mxu0
      %v2447 = vadd.f32 %v538, %v2446
      %v2448 = vpop.f32.mrf.mxu0
      %v2449 = vadd.f32 %v538, %v2448
      %2450 = vmatmul.bf16.gmra.mxu0 %v1121
      %v2451 = vpop.f32.mrf.mxu0
      %v2452 = vadd.f32 %v538, %v2451
      %v2453 = vpop.f32.mrf.mxu0
      %v2454 = vadd.f32 %v538, %v2453
      %2455 = vmatmul.bf16.gmra.mxu0 %v1124
      %v2456 = vpop.f32.mrf.mxu0
      %v2457 = vadd.f32 %v538, %v2456
      %v2458 = vpop.f32.mrf.mxu0
      %v2459 = vadd.f32 %v538, %v2458
      %2460 = vmatmul.bf16.gmra.mxu0 %v1127
      %v2461 = vpop.f32.mrf.mxu0
      %v2462 = vadd.f32 %v538, %v2461
      %v2463 = vpop.f32.mrf.mxu0
      %v2464 = vadd.f32 %v538, %v2463
      %2465 = vmatmul.bf16.gmra.mxu0 %v1130
      %v2466 = vpop.f32.mrf.mxu0
      %v2467 = vadd.f32 %v538, %v2466
      %v2468 = vpop.f32.mrf.mxu0
      %v2469 = vadd.f32 %v538, %v2468
      %2470 = vmatmul.bf16.gmra.mxu0 %v1133
      %v2471 = vpop.f32.mrf.mxu0
      %v2472 = vadd.f32 %v538, %v2471
      %v2473 = vpop.f32.mrf.mxu0
      %v2474 = vadd.f32 %v538, %v2473
      %2475 = vmatmul.bf16.gmra.mxu0 %v1136
      %v2476 = vpop.f32.mrf.mxu0
      %v2477 = vadd.f32 %v538, %v2476
      %v2478 = vpop.f32.mrf.mxu0
      %v2479 = vadd.f32 %v538, %v2478
      %2480 = vmatmul.bf16.gmra.mxu0 %v1139
      %v2481 = vpop.f32.mrf.mxu0
      %v2482 = vadd.f32 %v538, %v2481
      %v2483 = vpop.f32.mrf.mxu0
      %v2484 = vadd.f32 %v538, %v2483
      %2485 = vmatmul.bf16.gmra.mxu0 %v1142
      %v2486 = vpop.f32.mrf.mxu0
      %v2487 = vadd.f32 %v538, %v2486
      %v2488 = vpop.f32.mrf.mxu0
      %v2489 = vadd.f32 %v538, %v2488
      %2490 = vmatmul.bf16.gmra.mxu0 %v1145
      %v2491 = vpop.f32.mrf.mxu0
      %v2492 = vadd.f32 %v538, %v2491
      %v2493 = vpop.f32.mrf.mxu0
      %v2494 = vadd.f32 %v538, %v2493
      %2495 = vdwg.mxu0
      %2496 = vmatpush.bf16.msra.mxu0 0
      %2497 = vmatpush.bf16.msra.mxu0 0
      %2498 = vmatpush.bf16.msra.mxu0 0
      %2499 = vmatpush.bf16.msra.mxu0 0
      %2500 = vmatpush.bf16.msra.mxu0 0
      %2501 = vmatpush.bf16.msra.mxu0 %v1191
      %2502 = vmatpush.bf16.msra.mxu0 %v976
      %2503 = vmatpush.bf16.msra.mxu0 %v942
      %2504 = vmatmul.bf16.gmra.mxu0 %v1100
      %v2505 = vpop.f32.mrf.mxu0
      %v2506 = vadd.f32 %v539, %v2505
      %v2507 = vpop.f32.mrf.mxu0
      %v2508 = vadd.f32 %v539, %v2507
      %2509 = vmatmul.bf16.gmra.mxu0 %v1103
      %v2510 = vpop.f32.mrf.mxu0
      %v2511 = vadd.f32 %v539, %v2510
      %v2512 = vpop.f32.mrf.mxu0
      %v2513 = vadd.f32 %v539, %v2512
      %2514 = vmatmul.bf16.gmra.mxu0 %v1106
      %v2515 = vpop.f32.mrf.mxu0
      %v2516 = vadd.f32 %v539, %v2515
      %v2517 = vpop.f32.mrf.mxu0
      %v2518 = vadd.f32 %v539, %v2517
      %2519 = vmatmul.bf16.gmra.mxu0 %v1109
      %v2520 = vpop.f32.mrf.mxu0
      %v2521 = vadd.f32 %v539, %v2520
      %v2522 = vpop.f32.mrf.mxu0
      %v2523 = vadd.f32 %v539, %v2522
      %2524 = vmatmul.bf16.gmra.mxu0 %v1112
      %v2525 = vpop.f32.mrf.mxu0
      %v2526 = vadd.f32 %v539, %v2525
      %v2527 = vpop.f32.mrf.mxu0
      %v2528 = vadd.f32 %v539, %v2527
      %2529 = vmatmul.bf16.gmra.mxu0 %v1115
      %v2530 = vpop.f32.mrf.mxu0
      %v2531 = vadd.f32 %v539, %v2530
      %v2532 = vpop.f32.mrf.mxu0
      %v2533 = vadd.f32 %v539, %v2532
      %2534 = vmatmul.bf16.gmra.mxu0 %v1118
      %v2535 = vpop.f32.mrf.mxu0
      %v2536 = vadd.f32 %v539, %v2535
      %v2537 = vpop.f32.mrf.mxu0
      %v2538 = vadd.f32 %v539, %v2537
      %2539 = vmatmul.bf16.gmra.mxu0 %v1121
      %v2540 = vpop.f32.mrf.mxu0
      %v2541 = vadd.f32 %v539, %v2540
      %v2542 = vpop.f32.mrf.mxu0
      %v2543 = vadd.f32 %v539, %v2542
      %2544 = vmatmul.bf16.gmra.mxu0 %v1124
      %v2545 = vpop.f32.mrf.mxu0
      %v2546 = vadd.f32 %v539, %v2545
      %v2547 = vpop.f32.mrf.mxu0
      %v2548 = vadd.f32 %v539, %v2547
      %2549 = vmatmul.bf16.gmra.mxu0 %v1127
      %v2550 = vpop.f32.mrf.mxu0
      %v2551 = vadd.f32 %v539, %v2550
      %v2552 = vpop.f32.mrf.mxu0
      %v2553 = vadd.f32 %v539, %v2552
      %2554 = vmatmul.bf16.gmra.mxu0 %v1130
      %v2555 = vpop.f32.mrf.mxu0
      %v2556 = vadd.f32 %v539, %v2555
      %v2557 = vpop.f32.mrf.mxu0
      %v2558 = vadd.f32 %v539, %v2557
      %2559 = vmatmul.bf16.gmra.mxu0 %v1133
      %v2560 = vpop.f32.mrf.mxu0
      %v2561 = vadd.f32 %v539, %v2560
      %v2562 = vpop.f32.mrf.mxu0
      %v2563 = vadd.f32 %v539, %v2562
      %2564 = vmatmul.bf16.gmra.mxu0 %v1136
      %v2565 = vpop.f32.mrf.mxu0
      %v2566 = vadd.f32 %v539, %v2565
      %v2567 = vpop.f32.mrf.mxu0
      %v2568 = vadd.f32 %v539, %v2567
      %2569 = vmatmul.bf16.gmra.mxu0 %v1139
      %v2570 = vpop.f32.mrf.mxu0
      %v2571 = vadd.f32 %v539, %v2570
      %v2572 = vpop.f32.mrf.mxu0
      %v2573 = vadd.f32 %v539, %v2572
      %2574 = vmatmul.bf16.gmra.mxu0 %v1142
      %v2575 = vpop.f32.mrf.mxu0
      %v2576 = vadd.f32 %v539, %v2575
      %v2577 = vpop.f32.mrf.mxu0
      %v2578 = vadd.f32 %v539, %v2577
      %2579 = vmatmul.bf16.gmra.mxu0 %v1145
      %v2580 = vpop.f32.mrf.mxu0
      %v2581 = vadd.f32 %v539, %v2580
      %v2582 = vpop.f32.mrf.mxu0
      %v2583 = vadd.f32 %v539, %v2582
      %2584 = vdwg.mxu0
      %2585 = vmatpush.bf16.msra.mxu0 0
      %2586 = vmatpush.bf16.msra.mxu0 0
      %2587 = vmatpush.bf16.msra.mxu0 0
      %2588 = vmatpush.bf16.msra.mxu0 0
      %2589 = vmatpush.bf16.msra.mxu0 0
      %2590 = vmatpush.bf16.msra.mxu0 %v1194
      %2591 = vmatpush.bf16.msra.mxu0 %v977
      %2592 = vmatpush.bf16.msra.mxu0 %v943
      %2593 = vmatmul.bf16.gmra.mxu0 %v1100
      %v2594 = vpop.f32.mrf.mxu0
      %v2595 = vadd.f32 %v540, %v2594
      %v2596 = vpop.f32.mrf.mxu0
      %v2597 = vadd.f32 %v540, %v2596
      %2598 = vmatmul.bf16.gmra.mxu0 %v1103
      %v2599 = vpop.f32.mrf.mxu0
      %v2600 = vadd.f32 %v540, %v2599
      %v2601 = vpop.f32.mrf.mxu0
      %v2602 = vadd.f32 %v540, %v2601
      %2603 = vmatmul.bf16.gmra.mxu0 %v1106
      %v2604 = vpop.f32.mrf.mxu0
      %v2605 = vadd.f32 %v540, %v2604
      %v2606 = vpop.f32.mrf.mxu0
      %v2607 = vadd.f32 %v540, %v2606
      %2608 = vmatmul.bf16.gmra.mxu0 %v1109
      %v2609 = vpop.f32.mrf.mxu0
      %v2610 = vadd.f32 %v540, %v2609
      %v2611 = vpop.f32.mrf.mxu0
      %v2612 = vadd.f32 %v540, %v2611
      %2613 = vmatmul.bf16.gmra.mxu0 %v1112
      %v2614 = vpop.f32.mrf.mxu0
      %v2615 = vadd.f32 %v540, %v2614
      %v2616 = vpop.f32.mrf.mxu0
      %v2617 = vadd.f32 %v540, %v2616
      %2618 = vmatmul.bf16.gmra.mxu0 %v1115
      %v2619 = vpop.f32.mrf.mxu0
      %v2620 = vadd.f32 %v540, %v2619
      %v2621 = vpop.f32.mrf.mxu0
      %v2622 = vadd.f32 %v540, %v2621
      %2623 = vmatmul.bf16.gmra.mxu0 %v1118
      %v2624 = vpop.f32.mrf.mxu0
      %v2625 = vadd.f32 %v540, %v2624
      %v2626 = vpop.f32.mrf.mxu0
      %v2627 = vadd.f32 %v540, %v2626
      %2628 = vmatmul.bf16.gmra.mxu0 %v1121
      %v2629 = vpop.f32.mrf.mxu0
      %v2630 = vadd.f32 %v540, %v2629
      %v2631 = vpop.f32.mrf.mxu0
      %v2632 = vadd.f32 %v540, %v2631
      %2633 = vmatmul.bf16.gmra.mxu0 %v1124
      %v2634 = vpop.f32.mrf.mxu0
      %v2635 = vadd.f32 %v540, %v2634
      %v2636 = vpop.f32.mrf.mxu0
      %v2637 = vadd.f32 %v540, %v2636
      %2638 = vmatmul.bf16.gmra.mxu0 %v1127
      %v2639 = vpop.f32.mrf.mxu0
      %v2640 = vadd.f32 %v540, %v2639
      %v2641 = vpop.f32.mrf.mxu0
      %v2642 = vadd.f32 %v540, %v2641
      %2643 = vmatmul.bf16.gmra.mxu0 %v1130
      %v2644 = vpop.f32.mrf.mxu0
      %v2645 = vadd.f32 %v540, %v2644
      %v2646 = vpop.f32.mrf.mxu0
      %v2647 = vadd.f32 %v540, %v2646
      %2648 = vmatmul.bf16.gmra.mxu0 %v1133
      %v2649 = vpop.f32.mrf.mxu0
      %v2650 = vadd.f32 %v540, %v2649
      %v2651 = vpop.f32.mrf.mxu0
      %v2652 = vadd.f32 %v540, %v2651
      %2653 = vmatmul.bf16.gmra.mxu0 %v1136
      %v2654 = vpop.f32.mrf.mxu0
      %v2655 = vadd.f32 %v540, %v2654
      %v2656 = vpop.f32.mrf.mxu0
      %v2657 = vadd.f32 %v540, %v2656
      %2658 = vmatmul.bf16.gmra.mxu0 %v1139
      %v2659 = vpop.f32.mrf.mxu0
      %v2660 = vadd.f32 %v540, %v2659
      %v2661 = vpop.f32.mrf.mxu0
      %v2662 = vadd.f32 %v540, %v2661
      %2663 = vmatmul.bf16.gmra.mxu0 %v1142
      %v2664 = vpop.f32.mrf.mxu0
      %v2665 = vadd.f32 %v540, %v2664
      %v2666 = vpop.f32.mrf.mxu0
      %v2667 = vadd.f32 %v540, %v2666
      %2668 = vmatmul.bf16.gmra.mxu0 %v1145
      %v2669 = vpop.f32.mrf.mxu0
      %v2670 = vadd.f32 %v540, %v2669
      %v2671 = vpop.f32.mrf.mxu0
      %v2672 = vadd.f32 %v540, %v2671
      %2673 = vdwg.mxu0
      %2674 = vmatpush.bf16.msra.mxu0 0
      %2675 = vmatpush.bf16.msra.mxu0 0
      %2676 = vmatpush.bf16.msra.mxu0 0
      %2677 = vmatpush.bf16.msra.mxu0 0
      %2678 = vmatpush.bf16.msra.mxu0 0
      %2679 = vmatpush.bf16.msra.mxu0 %v1197
      %2680 = vmatpush.bf16.msra.mxu0 %v978
      %2681 = vmatpush.bf16.msra.mxu0 %v944
      %2682 = vmatmul.bf16.gmra.mxu0 %v1100
      %v2683 = vpop.f32.mrf.mxu0
      %v2684 = vadd.f32 %v541, %v2683
      %v2685 = vpop.f32.mrf.mxu0
      %v2686 = vadd.f32 %v541, %v2685
      %2687 = vmatmul.bf16.gmra.mxu0 %v1103
      %v2688 = vpop.f32.mrf.mxu0
      %v2689 = vadd.f32 %v541, %v2688
      %v2690 = vpop.f32.mrf.mxu0
      %v2691 = vadd.f32 %v541, %v2690
      %2692 = vmatmul.bf16.gmra.mxu0 %v1106
      %v2693 = vpop.f32.mrf.mxu0
      %v2694 = vadd.f32 %v541, %v2693
      %v2695 = vpop.f32.mrf.mxu0
      %v2696 = vadd.f32 %v541, %v2695
      %2697 = vmatmul.bf16.gmra.mxu0 %v1109
      %v2698 = vpop.f32.mrf.mxu0
      %v2699 = vadd.f32 %v541, %v2698
      %v2700 = vpop.f32.mrf.mxu0
      %v2701 = vadd.f32 %v541, %v2700
      %2702 = vmatmul.bf16.gmra.mxu0 %v1112
      %v2703 = vpop.f32.mrf.mxu0
      %v2704 = vadd.f32 %v541, %v2703
      %v2705 = vpop.f32.mrf.mxu0
      %v2706 = vadd.f32 %v541, %v2705
      %2707 = vmatmul.bf16.gmra.mxu0 %v1115
      %v2708 = vpop.f32.mrf.mxu0
      %v2709 = vadd.f32 %v541, %v2708
      %v2710 = vpop.f32.mrf.mxu0
      %v2711 = vadd.f32 %v541, %v2710
      %2712 = vmatmul.bf16.gmra.mxu0 %v1118
      %v2713 = vpop.f32.mrf.mxu0
      %v2714 = vadd.f32 %v541, %v2713
      %v2715 = vpop.f32.mrf.mxu0
      %v2716 = vadd.f32 %v541, %v2715
      %2717 = vmatmul.bf16.gmra.mxu0 %v1121
      %v2718 = vpop.f32.mrf.mxu0
      %v2719 = vadd.f32 %v541, %v2718
      %v2720 = vpop.f32.mrf.mxu0
      %v2721 = vadd.f32 %v541, %v2720
      %2722 = vmatmul.bf16.gmra.mxu0 %v1124
      %v2723 = vpop.f32.mrf.mxu0
      %v2724 = vadd.f32 %v541, %v2723
      %v2725 = vpop.f32.mrf.mxu0
      %v2726 = vadd.f32 %v541, %v2725
      %2727 = vmatmul.bf16.gmra.mxu0 %v1127
      %v2728 = vpop.f32.mrf.mxu0
      %v2729 = vadd.f32 %v541, %v2728
      %v2730 = vpop.f32.mrf.mxu0
      %v2731 = vadd.f32 %v541, %v2730
      %2732 = vmatmul.bf16.gmra.mxu0 %v1130
      %v2733 = vpop.f32.mrf.mxu0
      %v2734 = vadd.f32 %v541, %v2733
      %v2735 = vpop.f32.mrf.mxu0
      %v2736 = vadd.f32 %v541, %v2735
      %2737 = vmatmul.bf16.gmra.mxu0 %v1133
      %v2738 = vpop.f32.mrf.mxu0
      %v2739 = vadd.f32 %v541, %v2738
      %v2740 = vpop.f32.mrf.mxu0
      %v2741 = vadd.f32 %v541, %v2740
      %2742 = vmatmul.bf16.gmra.mxu0 %v1136
      %v2743 = vpop.f32.mrf.mxu0
      %v2744 = vadd.f32 %v541, %v2743
      %v2745 = vpop.f32.mrf.mxu0
      %v2746 = vadd.f32 %v541, %v2745
      %2747 = vmatmul.bf16.gmra.mxu0 %v1139
      %v2748 = vpop.f32.mrf.mxu0
      %v2749 = vadd.f32 %v541, %v2748
      %v2750 = vpop.f32.mrf.mxu0
      %v2751 = vadd.f32 %v541, %v2750
      %2752 = vmatmul.bf16.gmra.mxu0 %v1142
      %v2753 = vpop.f32.mrf.mxu0
      %v2754 = vadd.f32 %v541, %v2753
      %v2755 = vpop.f32.mrf.mxu0
      %v2756 = vadd.f32 %v541, %v2755
      %2757 = vmatmul.bf16.gmra.mxu0 %v1145
      %v2758 = vpop.f32.mrf.mxu0
      %v2759 = vadd.f32 %v541, %v2758
      %v2760 = vpop.f32.mrf.mxu0
      %v2761 = vadd.f32 %v541, %v2760
      %2762 = vdwg.mxu0
      %2763 = vmatpush.bf16.msra.mxu0 0
      %2764 = vmatpush.bf16.msra.mxu0 0
      %2765 = vmatpush.bf16.msra.mxu0 0
      %2766 = vmatpush.bf16.msra.mxu0 0
      %2767 = vmatpush.bf16.msra.mxu0 0
      %2768 = vmatpush.bf16.msra.mxu0 %v1200
      %2769 = vmatpush.bf16.msra.mxu0 %v979
      %2770 = vmatpush.bf16.msra.mxu0 %v945
      %2771 = vmatmul.bf16.gmra.mxu0 %v1100
      %v2772 = vpop.f32.mrf.mxu0
      %v2773 = vadd.f32 %v542, %v2772
      %v2774 = vpop.f32.mrf.mxu0
      %v2775 = vadd.f32 %v542, %v2774
      %2776 = vmatmul.bf16.gmra.mxu0 %v1103
      %v2777 = vpop.f32.mrf.mxu0
      %v2778 = vadd.f32 %v542, %v2777
      %v2779 = vpop.f32.mrf.mxu0
      %v2780 = vadd.f32 %v542, %v2779
      %2781 = vmatmul.bf16.gmra.mxu0 %v1106
      %v2782 = vpop.f32.mrf.mxu0
      %v2783 = vadd.f32 %v542, %v2782
      %v2784 = vpop.f32.mrf.mxu0
      %v2785 = vadd.f32 %v542, %v2784
      %2786 = vmatmul.bf16.gmra.mxu0 %v1109
      %v2787 = vpop.f32.mrf.mxu0
      %v2788 = vadd.f32 %v542, %v2787
      %v2789 = vpop.f32.mrf.mxu0
      %v2790 = vadd.f32 %v542, %v2789
      %2791 = vmatmul.bf16.gmra.mxu0 %v1112
      %v2792 = vpop.f32.mrf.mxu0
      %v2793 = vadd.f32 %v542, %v2792
      %v2794 = vpop.f32.mrf.mxu0
      %v2795 = vadd.f32 %v542, %v2794
      %2796 = vmatmul.bf16.gmra.mxu0 %v1115
      %v2797 = vpop.f32.mrf.mxu0
      %v2798 = vadd.f32 %v542, %v2797
      %v2799 = vpop.f32.mrf.mxu0
      %v2800 = vadd.f32 %v542, %v2799
      %2801 = vmatmul.bf16.gmra.mxu0 %v1118
      %v2802 = vpop.f32.mrf.mxu0
      %v2803 = vadd.f32 %v542, %v2802
      %v2804 = vpop.f32.mrf.mxu0
      %v2805 = vadd.f32 %v542, %v2804
      %2806 = vmatmul.bf16.gmra.mxu0 %v1121
      %v2807 = vpop.f32.mrf.mxu0
      %v2808 = vadd.f32 %v542, %v2807
      %v2809 = vpop.f32.mrf.mxu0
      %v2810 = vadd.f32 %v542, %v2809
      %2811 = vmatmul.bf16.gmra.mxu0 %v1124
      %v2812 = vpop.f32.mrf.mxu0
      %v2813 = vadd.f32 %v542, %v2812
      %v2814 = vpop.f32.mrf.mxu0
      %v2815 = vadd.f32 %v542, %v2814
      %2816 = vmatmul.bf16.gmra.mxu0 %v1127
      %v2817 = vpop.f32.mrf.mxu0
      %v2818 = vadd.f32 %v542, %v2817
      %v2819 = vpop.f32.mrf.mxu0
      %v2820 = vadd.f32 %v542, %v2819
      %2821 = vmatmul.bf16.gmra.mxu0 %v1130
      %v2822 = vpop.f32.mrf.mxu0
      %v2823 = vadd.f32 %v542, %v2822
      %v2824 = vpop.f32.mrf.mxu0
      %v2825 = vadd.f32 %v542, %v2824
      %2826 = vmatmul.bf16.gmra.mxu0 %v1133
      %v2827 = vpop.f32.mrf.mxu0
      %v2828 = vadd.f32 %v542, %v2827
      %v2829 = vpop.f32.mrf.mxu0
      %v2830 = vadd.f32 %v542, %v2829
      %2831 = vmatmul.bf16.gmra.mxu0 %v1136
      %v2832 = vpop.f32.mrf.mxu0
      %v2833 = vadd.f32 %v542, %v2832
      %v2834 = vpop.f32.mrf.mxu0
      %v2835 = vadd.f32 %v542, %v2834
      %2836 = vmatmul.bf16.gmra.mxu0 %v1139
      %v2837 = vpop.f32.mrf.mxu0
      %v2838 = vadd.f32 %v542, %v2837
      %v2839 = vpop.f32.mrf.mxu0
      %v2840 = vadd.f32 %v542, %v2839
      %2841 = vmatmul.bf16.gmra.mxu0 %v1142
      %v2842 = vpop.f32.mrf.mxu0
      %v2843 = vadd.f32 %v542, %v2842
      %v2844 = vpop.f32.mrf.mxu0
      %v2845 = vadd.f32 %v542, %v2844
      %2846 = vmatmul.bf16.gmra.mxu0 %v1145
      %v2847 = vpop.f32.mrf.mxu0
      %v2848 = vadd.f32 %v542, %v2847
      %v2849 = vpop.f32.mrf.mxu0
      %v2850 = vadd.f32 %v542, %v2849
      %2851 = vdwg.mxu0
      %2852 = vmatpush.bf16.msra.mxu0 0
      %2853 = vmatpush.bf16.msra.mxu0 0
      %2854 = vmatpush.bf16.msra.mxu0 0
      %2855 = vmatpush.bf16.msra.mxu0 0
      %2856 = vmatpush.bf16.msra.mxu0 0
      %2857 = vmatpush.bf16.msra.mxu0 %v1203
      %2858 = vmatpush.bf16.msra.mxu0 %v980
      %2859 = vmatpush.bf16.msra.mxu0 %v946
      %2860 = vmatmul.bf16.gmra.mxu0 %v1100
      %v2861 = vpop.f32.mrf.mxu0
      %v2862 = vadd.f32 %v543, %v2861
      %v2863 = vpop.f32.mrf.mxu0
      %v2864 = vadd.f32 %v543, %v2863
      %2865 = vmatmul.bf16.gmra.mxu0 %v1103
      %v2866 = vpop.f32.mrf.mxu0
      %v2867 = vadd.f32 %v543, %v2866
      %v2868 = vpop.f32.mrf.mxu0
      %v2869 = vadd.f32 %v543, %v2868
      %2870 = vmatmul.bf16.gmra.mxu0 %v1106
      %v2871 = vpop.f32.mrf.mxu0
      %v2872 = vadd.f32 %v543, %v2871
      %v2873 = vpop.f32.mrf.mxu0
      %v2874 = vadd.f32 %v543, %v2873
      %2875 = vmatmul.bf16.gmra.mxu0 %v1109
      %v2876 = vpop.f32.mrf.mxu0
      %v2877 = vadd.f32 %v543, %v2876
      %v2878 = vpop.f32.mrf.mxu0
      %v2879 = vadd.f32 %v543, %v2878
      %2880 = vmatmul.bf16.gmra.mxu0 %v1112
      %v2881 = vpop.f32.mrf.mxu0
      %v2882 = vadd.f32 %v543, %v2881
      %v2883 = vpop.f32.mrf.mxu0
      %v2884 = vadd.f32 %v543, %v2883
      %2885 = vmatmul.bf16.gmra.mxu0 %v1115
      %v2886 = vpop.f32.mrf.mxu0
      %v2887 = vadd.f32 %v543, %v2886
      %v2888 = vpop.f32.mrf.mxu0
      %v2889 = vadd.f32 %v543, %v2888
      %2890 = vmatmul.bf16.gmra.mxu0 %v1118
      %v2891 = vpop.f32.mrf.mxu0
      %v2892 = vadd.f32 %v543, %v2891
      %v2893 = vpop.f32.mrf.mxu0
      %v2894 = vadd.f32 %v543, %v2893
      %2895 = vmatmul.bf16.gmra.mxu0 %v1121
      %v2896 = vpop.f32.mrf.mxu0
      %v2897 = vadd.f32 %v543, %v2896
      %v2898 = vpop.f32.mrf.mxu0
      %v2899 = vadd.f32 %v543, %v2898
      %2900 = vmatmul.bf16.gmra.mxu0 %v1124
      %v2901 = vpop.f32.mrf.mxu0
      %v2902 = vadd.f32 %v543, %v2901
      %v2903 = vpop.f32.mrf.mxu0
      %v2904 = vadd.f32 %v543, %v2903
      %2905 = vmatmul.bf16.gmra.mxu0 %v1127
      %v2906 = vpop.f32.mrf.mxu0
      %v2907 = vadd.f32 %v543, %v2906
      %v2908 = vpop.f32.mrf.mxu0
      %v2909 = vadd.f32 %v543, %v2908
      %2910 = vmatmul.bf16.gmra.mxu0 %v1130
      %v2911 = vpop.f32.mrf.mxu0
      %v2912 = vadd.f32 %v543, %v2911
      %v2913 = vpop.f32.mrf.mxu0
      %v2914 = vadd.f32 %v543, %v2913
      %2915 = vmatmul.bf16.gmra.mxu0 %v1133
      %v2916 = vpop.f32.mrf.mxu0
      %v2917 = vadd.f32 %v543, %v2916
      %v2918 = vpop.f32.mrf.mxu0
      %v2919 = vadd.f32 %v543, %v2918
      %2920 = vmatmul.bf16.gmra.mxu0 %v1136
      %v2921 = vpop.f32.mrf.mxu0
      %v2922 = vadd.f32 %v543, %v2921
      %v2923 = vpop.f32.mrf.mxu0
      %v2924 = vadd.f32 %v543, %v2923
      %2925 = vmatmul.bf16.gmra.mxu0 %v1139
      %v2926 = vpop.f32.mrf.mxu0
      %v2927 = vadd.f32 %v543, %v2926
      %v2928 = vpop.f32.mrf.mxu0
      %v2929 = vadd.f32 %v543, %v2928
      %2930 = vmatmul.bf16.gmra.mxu0 %v1142
      %v2931 = vpop.f32.mrf.mxu0
      %v2932 = vadd.f32 %v543, %v2931
      %v2933 = vpop.f32.mrf.mxu0
      %v2934 = vadd.f32 %v543, %v2933
      %2935 = vmatmul.bf16.gmra.mxu0 %v1145
      %v2936 = vpop.f32.mrf.mxu0
      %v2937 = vadd.f32 %v543, %v2936
      %v2938 = vpop.f32.mrf.mxu0
      %v2939 = vadd.f32 %v543, %v2938
      %2940 = vdwg.mxu0
      %2941 = vmatpush.bf16.msra.mxu0 0
      %2942 = vmatpush.bf16.msra.mxu0 0
      %2943 = vmatpush.bf16.msra.mxu0 0
      %2944 = vmatpush.bf16.msra.mxu0 0
      %2945 = vmatpush.bf16.msra.mxu0 0
      %2946 = vmatpush.bf16.msra.mxu0 %v1206
      %2947 = vmatpush.bf16.msra.mxu0 %v981
      %2948 = vmatpush.bf16.msra.mxu0 %v947
      %2949 = vmatmul.bf16.gmra.mxu0 %v1100
      %v2950 = vpop.f32.mrf.mxu0
      %v2951 = vadd.f32 %v544, %v2950
      %v2952 = vpop.f32.mrf.mxu0
      %v2953 = vadd.f32 %v544, %v2952
      %2954 = vmatmul.bf16.gmra.mxu0 %v1103
      %v2955 = vpop.f32.mrf.mxu0
      %v2956 = vadd.f32 %v544, %v2955
      %v2957 = vpop.f32.mrf.mxu0
      %v2958 = vadd.f32 %v544, %v2957
      %2959 = vmatmul.bf16.gmra.mxu0 %v1106
      %v2960 = vpop.f32.mrf.mxu0
      %v2961 = vadd.f32 %v544, %v2960
      %v2962 = vpop.f32.mrf.mxu0
      %v2963 = vadd.f32 %v544, %v2962
      %2964 = vmatmul.bf16.gmra.mxu0 %v1109
      %v2965 = vpop.f32.mrf.mxu0
      %v2966 = vadd.f32 %v544, %v2965
      %v2967 = vpop.f32.mrf.mxu0
      %v2968 = vadd.f32 %v544, %v2967
      %2969 = vmatmul.bf16.gmra.mxu0 %v1112
      %v2970 = vpop.f32.mrf.mxu0
      %v2971 = vadd.f32 %v544, %v2970
      %v2972 = vpop.f32.mrf.mxu0
      %v2973 = vadd.f32 %v544, %v2972
      %2974 = vmatmul.bf16.gmra.mxu0 %v1115
      %v2975 = vpop.f32.mrf.mxu0
      %v2976 = vadd.f32 %v544, %v2975
      %v2977 = vpop.f32.mrf.mxu0
      %v2978 = vadd.f32 %v544, %v2977
      %2979 = vmatmul.bf16.gmra.mxu0 %v1118
      %v2980 = vpop.f32.mrf.mxu0
      %v2981 = vadd.f32 %v544, %v2980
      %v2982 = vpop.f32.mrf.mxu0
      %v2983 = vadd.f32 %v544, %v2982
      %2984 = vmatmul.bf16.gmra.mxu0 %v1121
      %v2985 = vpop.f32.mrf.mxu0
      %v2986 = vadd.f32 %v544, %v2985
      %v2987 = vpop.f32.mrf.mxu0
      %v2988 = vadd.f32 %v544, %v2987
      %2989 = vmatmul.bf16.gmra.mxu0 %v1124
      %v2990 = vpop.f32.mrf.mxu0
      %v2991 = vadd.f32 %v544, %v2990
      %v2992 = vpop.f32.mrf.mxu0
      %v2993 = vadd.f32 %v544, %v2992
      %2994 = vmatmul.bf16.gmra.mxu0 %v1127
      %v2995 = vpop.f32.mrf.mxu0
      %v2996 = vadd.f32 %v544, %v2995
      %v2997 = vpop.f32.mrf.mxu0
      %v2998 = vadd.f32 %v544, %v2997
      %2999 = vmatmul.bf16.gmra.mxu0 %v1130
      %v3000 = vpop.f32.mrf.mxu0
      %v3001 = vadd.f32 %v544, %v3000
      %v3002 = vpop.f32.mrf.mxu0
      %v3003 = vadd.f32 %v544, %v3002
      %3004 = vmatmul.bf16.gmra.mxu0 %v1133
      %v3005 = vpop.f32.mrf.mxu0
      %v3006 = vadd.f32 %v544, %v3005
      %v3007 = vpop.f32.mrf.mxu0
      %v3008 = vadd.f32 %v544, %v3007
      %3009 = vmatmul.bf16.gmra.mxu0 %v1136
      %v3010 = vpop.f32.mrf.mxu0
      %v3011 = vadd.f32 %v544, %v3010
      %v3012 = vpop.f32.mrf.mxu0
      %v3013 = vadd.f32 %v544, %v3012
      %3014 = vmatmul.bf16.gmra.mxu0 %v1139
      %v3015 = vpop.f32.mrf.mxu0
      %v3016 = vadd.f32 %v544, %v3015
      %v3017 = vpop.f32.mrf.mxu0
      %v3018 = vadd.f32 %v544, %v3017
      %3019 = vmatmul.bf16.gmra.mxu0 %v1142
      %v3020 = vpop.f32.mrf.mxu0
      %v3021 = vadd.f32 %v544, %v3020
      %v3022 = vpop.f32.mrf.mxu0
      %v3023 = vadd.f32 %v544, %v3022
      %3024 = vmatmul.bf16.gmra.mxu0 %v1145
      %v3025 = vpop.f32.mrf.mxu0
      %v3026 = vadd.f32 %v544, %v3025
      %v3027 = vpop.f32.mrf.mxu0
      %v3028 = vadd.f32 %v544, %v3027
      %3029 = vdwg.mxu0
      %3030 = vmatpush.bf16.msra.mxu0 0
      %3031 = vmatpush.bf16.msra.mxu0 0
      %3032 = vmatpush.bf16.msra.mxu0 0
      %3033 = vmatpush.bf16.msra.mxu0 0
      %3034 = vmatpush.bf16.msra.mxu0 0
      %3035 = vmatpush.bf16.msra.mxu0 %v1209
      %3036 = vmatpush.bf16.msra.mxu0 %v982
      %3037 = vmatpush.bf16.msra.mxu0 %v948
      %3038 = vmatmul.bf16.gmra.mxu0 %v1100
      %v3039 = vpop.f32.mrf.mxu0
      %v3040 = vadd.f32 %v545, %v3039
      %v3041 = vpop.f32.mrf.mxu0
      %v3042 = vadd.f32 %v545, %v3041
      %3043 = vmatmul.bf16.gmra.mxu0 %v1103
      %v3044 = vpop.f32.mrf.mxu0
      %v3045 = vadd.f32 %v545, %v3044
      %v3046 = vpop.f32.mrf.mxu0
      %v3047 = vadd.f32 %v545, %v3046
      %3048 = vmatmul.bf16.gmra.mxu0 %v1106
      %v3049 = vpop.f32.mrf.mxu0
      %v3050 = vadd.f32 %v545, %v3049
      %v3051 = vpop.f32.mrf.mxu0
      %v3052 = vadd.f32 %v545, %v3051
      %3053 = vmatmul.bf16.gmra.mxu0 %v1109
      %v3054 = vpop.f32.mrf.mxu0
      %v3055 = vadd.f32 %v545, %v3054
      %v3056 = vpop.f32.mrf.mxu0
      %v3057 = vadd.f32 %v545, %v3056
      %3058 = vmatmul.bf16.gmra.mxu0 %v1112
      %v3059 = vpop.f32.mrf.mxu0
      %v3060 = vadd.f32 %v545, %v3059
      %v3061 = vpop.f32.mrf.mxu0
      %v3062 = vadd.f32 %v545, %v3061
      %3063 = vmatmul.bf16.gmra.mxu0 %v1115
      %v3064 = vpop.f32.mrf.mxu0
      %v3065 = vadd.f32 %v545, %v3064
      %v3066 = vpop.f32.mrf.mxu0
      %v3067 = vadd.f32 %v545, %v3066
      %3068 = vmatmul.bf16.gmra.mxu0 %v1118
      %v3069 = vpop.f32.mrf.mxu0
      %v3070 = vadd.f32 %v545, %v3069
      %v3071 = vpop.f32.mrf.mxu0
      %v3072 = vadd.f32 %v545, %v3071
      %3073 = vmatmul.bf16.gmra.mxu0 %v1121
      %v3074 = vpop.f32.mrf.mxu0
      %v3075 = vadd.f32 %v545, %v3074
      %v3076 = vpop.f32.mrf.mxu0
      %v3077 = vadd.f32 %v545, %v3076
      %3078 = vmatmul.bf16.gmra.mxu0 %v1124
      %v3079 = vpop.f32.mrf.mxu0
      %v3080 = vadd.f32 %v545, %v3079
      %v3081 = vpop.f32.mrf.mxu0
      %v3082 = vadd.f32 %v545, %v3081
      %3083 = vmatmul.bf16.gmra.mxu0 %v1127
      %v3084 = vpop.f32.mrf.mxu0
      %v3085 = vadd.f32 %v545, %v3084
      %v3086 = vpop.f32.mrf.mxu0
      %v3087 = vadd.f32 %v545, %v3086
      %3088 = vmatmul.bf16.gmra.mxu0 %v1130
      %v3089 = vpop.f32.mrf.mxu0
      %v3090 = vadd.f32 %v545, %v3089
      %v3091 = vpop.f32.mrf.mxu0
      %v3092 = vadd.f32 %v545, %v3091
      %3093 = vmatmul.bf16.gmra.mxu0 %v1133
      %v3094 = vpop.f32.mrf.mxu0
      %v3095 = vadd.f32 %v545, %v3094
      %v3096 = vpop.f32.mrf.mxu0
      %v3097 = vadd.f32 %v545, %v3096
      %3098 = vmatmul.bf16.gmra.mxu0 %v1136
      %v3099 = vpop.f32.mrf.mxu0
      %v3100 = vadd.f32 %v545, %v3099
      %v3101 = vpop.f32.mrf.mxu0
      %v3102 = vadd.f32 %v545, %v3101
      %3103 = vmatmul.bf16.gmra.mxu0 %v1139
      %v3104 = vpop.f32.mrf.mxu0
      %v3105 = vadd.f32 %v545, %v3104
      %v3106 = vpop.f32.mrf.mxu0
      %v3107 = vadd.f32 %v545, %v3106
      %3108 = vmatmul.bf16.gmra.mxu0 %v1142
      %v3109 = vpop.f32.mrf.mxu0
      %v3110 = vadd.f32 %v545, %v3109
      %v3111 = vpop.f32.mrf.mxu0
      %v3112 = vadd.f32 %v545, %v3111
      %3113 = vmatmul.bf16.gmra.mxu0 %v1145
      %v3114 = vpop.f32.mrf.mxu0
      %v3115 = vadd.f32 %v545, %v3114
      %v3116 = vpop.f32.mrf.mxu0
      %v3117 = vadd.f32 %v545, %v3116
      %3118 = vdwg.mxu0
      %3119 = vmatpush.bf16.msra.mxu0 0
      %3120 = vmatpush.bf16.msra.mxu0 0
      %3121 = vmatpush.bf16.msra.mxu0 0
      %3122 = vmatpush.bf16.msra.mxu0 0
      %3123 = vmatpush.bf16.msra.mxu0 0
      %3124 = vmatpush.bf16.msra.mxu0 %v1212
      %3125 = vmatpush.bf16.msra.mxu0 %v983
      %3126 = vmatpush.bf16.msra.mxu0 %v949
      %3127 = vmatmul.bf16.gmra.mxu0 %v1100
      %v3128 = vpop.f32.mrf.mxu0
      %v3129 = vadd.f32 %v546, %v3128
      %v3130 = vpop.f32.mrf.mxu0
      %v3131 = vadd.f32 %v546, %v3130
      %3132 = vmatmul.bf16.gmra.mxu0 %v1103
      %v3133 = vpop.f32.mrf.mxu0
      %v3134 = vadd.f32 %v546, %v3133
      %v3135 = vpop.f32.mrf.mxu0
      %v3136 = vadd.f32 %v546, %v3135
      %3137 = vmatmul.bf16.gmra.mxu0 %v1106
      %v3138 = vpop.f32.mrf.mxu0
      %v3139 = vadd.f32 %v546, %v3138
      %v3140 = vpop.f32.mrf.mxu0
      %v3141 = vadd.f32 %v546, %v3140
      %3142 = vmatmul.bf16.gmra.mxu0 %v1109
      %v3143 = vpop.f32.mrf.mxu0
      %v3144 = vadd.f32 %v546, %v3143
      %v3145 = vpop.f32.mrf.mxu0
      %v3146 = vadd.f32 %v546, %v3145
      %3147 = vmatmul.bf16.gmra.mxu0 %v1112
      %v3148 = vpop.f32.mrf.mxu0
      %v3149 = vadd.f32 %v546, %v3148
      %v3150 = vpop.f32.mrf.mxu0
      %v3151 = vadd.f32 %v546, %v3150
      %3152 = vmatmul.bf16.gmra.mxu0 %v1115
      %v3153 = vpop.f32.mrf.mxu0
      %v3154 = vadd.f32 %v546, %v3153
      %v3155 = vpop.f32.mrf.mxu0
      %v3156 = vadd.f32 %v546, %v3155
      %3157 = vmatmul.bf16.gmra.mxu0 %v1118
      %v3158 = vpop.f32.mrf.mxu0
      %v3159 = vadd.f32 %v546, %v3158
      %v3160 = vpop.f32.mrf.mxu0
      %v3161 = vadd.f32 %v546, %v3160
      %3162 = vmatmul.bf16.gmra.mxu0 %v1121
      %v3163 = vpop.f32.mrf.mxu0
      %v3164 = vadd.f32 %v546, %v3163
      %v3165 = vpop.f32.mrf.mxu0
      %v3166 = vadd.f32 %v546, %v3165
      %3167 = vmatmul.bf16.gmra.mxu0 %v1124
      %v3168 = vpop.f32.mrf.mxu0
      %v3169 = vadd.f32 %v546, %v3168
      %v3170 = vpop.f32.mrf.mxu0
      %v3171 = vadd.f32 %v546, %v3170
      %3172 = vmatmul.bf16.gmra.mxu0 %v1127
      %v3173 = vpop.f32.mrf.mxu0
      %v3174 = vadd.f32 %v546, %v3173
      %v3175 = vpop.f32.mrf.mxu0
      %v3176 = vadd.f32 %v546, %v3175
      %3177 = vmatmul.bf16.gmra.mxu0 %v1130
      %v3178 = vpop.f32.mrf.mxu0
      %v3179 = vadd.f32 %v546, %v3178
      %v3180 = vpop.f32.mrf.mxu0
      %v3181 = vadd.f32 %v546, %v3180
      %3182 = vmatmul.bf16.gmra.mxu0 %v1133
      %v3183 = vpop.f32.mrf.mxu0
      %v3184 = vadd.f32 %v546, %v3183
      %v3185 = vpop.f32.mrf.mxu0
      %v3186 = vadd.f32 %v546, %v3185
      %3187 = vmatmul.bf16.gmra.mxu0 %v1136
      %v3188 = vpop.f32.mrf.mxu0
      %v3189 = vadd.f32 %v546, %v3188
      %v3190 = vpop.f32.mrf.mxu0
      %v3191 = vadd.f32 %v546, %v3190
      %3192 = vmatmul.bf16.gmra.mxu0 %v1139
      %v3193 = vpop.f32.mrf.mxu0
      %v3194 = vadd.f32 %v546, %v3193
      %v3195 = vpop.f32.mrf.mxu0
      %v3196 = vadd.f32 %v546, %v3195
      %3197 = vmatmul.bf16.gmra.mxu0 %v1142
      %v3198 = vpop.f32.mrf.mxu0
      %v3199 = vadd.f32 %v546, %v3198
      %v3200 = vpop.f32.mrf.mxu0
      %v3201 = vadd.f32 %v546, %v3200
      %3202 = vmatmul.bf16.gmra.mxu0 %v1145
      %v3203 = vpop.f32.mrf.mxu0
      %v3204 = vadd.f32 %v546, %v3203
      %v3205 = vpop.f32.mrf.mxu0
      %v3206 = vadd.f32 %v546, %v3205
      %3207 = vdwg.mxu0
      %3208 = vmatpush.bf16.msra.mxu0 0
      %3209 = vmatpush.bf16.msra.mxu0 0
      %3210 = vmatpush.bf16.msra.mxu0 0
      %3211 = vmatpush.bf16.msra.mxu0 0
      %3212 = vmatpush.bf16.msra.mxu0 0
      %3213 = vmatpush.bf16.msra.mxu0 %v1215
      %3214 = vmatpush.bf16.msra.mxu0 %v984
      %3215 = vmatpush.bf16.msra.mxu0 %v950
      %3216 = vmatmul.bf16.gmra.mxu0 %v1100
      %v3217 = vpop.f32.mrf.mxu0
      %v3218 = vadd.f32 %v547, %v3217
      %v3219 = vpop.f32.mrf.mxu0
      %v3220 = vadd.f32 %v547, %v3219
      %3221 = vmatmul.bf16.gmra.mxu0 %v1103
      %v3222 = vpop.f32.mrf.mxu0
      %v3223 = vadd.f32 %v547, %v3222
      %v3224 = vpop.f32.mrf.mxu0
      %v3225 = vadd.f32 %v547, %v3224
      %3226 = vmatmul.bf16.gmra.mxu0 %v1106
      %v3227 = vpop.f32.mrf.mxu0
      %v3228 = vadd.f32 %v547, %v3227
      %v3229 = vpop.f32.mrf.mxu0
      %v3230 = vadd.f32 %v547, %v3229
      %3231 = vmatmul.bf16.gmra.mxu0 %v1109
      %v3232 = vpop.f32.mrf.mxu0
      %v3233 = vadd.f32 %v547, %v3232
      %v3234 = vpop.f32.mrf.mxu0
      %v3235 = vadd.f32 %v547, %v3234
      %3236 = vmatmul.bf16.gmra.mxu0 %v1112
      %v3237 = vpop.f32.mrf.mxu0
      %v3238 = vadd.f32 %v547, %v3237
      %v3239 = vpop.f32.mrf.mxu0
      %v3240 = vadd.f32 %v547, %v3239
      %3241 = vmatmul.bf16.gmra.mxu0 %v1115
      %v3242 = vpop.f32.mrf.mxu0
      %v3243 = vadd.f32 %v547, %v3242
      %v3244 = vpop.f32.mrf.mxu0
      %v3245 = vadd.f32 %v547, %v3244
      %3246 = vmatmul.bf16.gmra.mxu0 %v1118
      %v3247 = vpop.f32.mrf.mxu0
      %v3248 = vadd.f32 %v547, %v3247
      %v3249 = vpop.f32.mrf.mxu0
      %v3250 = vadd.f32 %v547, %v3249
      %3251 = vmatmul.bf16.gmra.mxu0 %v1121
      %v3252 = vpop.f32.mrf.mxu0
      %v3253 = vadd.f32 %v547, %v3252
      %v3254 = vpop.f32.mrf.mxu0
      %v3255 = vadd.f32 %v547, %v3254
      %3256 = vmatmul.bf16.gmra.mxu0 %v1124
      %v3257 = vpop.f32.mrf.mxu0
      %v3258 = vadd.f32 %v547, %v3257
      %v3259 = vpop.f32.mrf.mxu0
      %v3260 = vadd.f32 %v547, %v3259
      %3261 = vmatmul.bf16.gmra.mxu0 %v1127
      %v3262 = vpop.f32.mrf.mxu0
      %v3263 = vadd.f32 %v547, %v3262
      %v3264 = vpop.f32.mrf.mxu0
      %v3265 = vadd.f32 %v547, %v3264
      %3266 = vmatmul.bf16.gmra.mxu0 %v1130
      %v3267 = vpop.f32.mrf.mxu0
      %v3268 = vadd.f32 %v547, %v3267
      %v3269 = vpop.f32.mrf.mxu0
      %v3270 = vadd.f32 %v547, %v3269
      %3271 = vmatmul.bf16.gmra.mxu0 %v1133
      %v3272 = vpop.f32.mrf.mxu0
      %v3273 = vadd.f32 %v547, %v3272
      %v3274 = vpop.f32.mrf.mxu0
      %v3275 = vadd.f32 %v547, %v3274
      %3276 = vmatmul.bf16.gmra.mxu0 %v1136
      %v3277 = vpop.f32.mrf.mxu0
      %v3278 = vadd.f32 %v547, %v3277
      %v3279 = vpop.f32.mrf.mxu0
      %v3280 = vadd.f32 %v547, %v3279
      %3281 = vmatmul.bf16.gmra.mxu0 %v1139
      %v3282 = vpop.f32.mrf.mxu0
      %v3283 = vadd.f32 %v547, %v3282
      %v3284 = vpop.f32.mrf.mxu0
      %v3285 = vadd.f32 %v547, %v3284
      %3286 = vmatmul.bf16.gmra.mxu0 %v1142
      %v3287 = vpop.f32.mrf.mxu0
      %v3288 = vadd.f32 %v547, %v3287
      %v3289 = vpop.f32.mrf.mxu0
      %v3290 = vadd.f32 %v547, %v3289
      %3291 = vmatmul.bf16.gmra.mxu0 %v1145
      %v3292 = vpop.f32.mrf.mxu0
      %v3293 = vadd.f32 %v547, %v3292
      %v3294 = vpop.f32.mrf.mxu0
      %v3295 = vadd.f32 %v547, %v3294
      %3296 = vdwg.mxu0
      %3297 = vmatpush.bf16.msra.mxu0 0
      %3298 = vmatpush.bf16.msra.mxu0 0
      %3299 = vmatpush.bf16.msra.mxu0 0
      %3300 = vmatpush.bf16.msra.mxu0 0
      %3301 = vmatpush.bf16.msra.mxu0 0
      %3302 = vmatpush.bf16.msra.mxu0 %v1218
      %3303 = vmatpush.bf16.msra.mxu0 %v985
      %3304 = vmatpush.bf16.msra.mxu0 %v951
      %3305 = vmatmul.bf16.gmra.mxu0 %v1100
      %v3306 = vpop.f32.mrf.mxu0
      %v3307 = vadd.f32 %v548, %v3306
      %v3308 = vpop.f32.mrf.mxu0
      %v3309 = vadd.f32 %v548, %v3308
      %3310 = vmatmul.bf16.gmra.mxu0 %v1103
      %v3311 = vpop.f32.mrf.mxu0
      %v3312 = vadd.f32 %v548, %v3311
      %v3313 = vpop.f32.mrf.mxu0
      %v3314 = vadd.f32 %v548, %v3313
      %3315 = vmatmul.bf16.gmra.mxu0 %v1106
      %v3316 = vpop.f32.mrf.mxu0
      %v3317 = vadd.f32 %v548, %v3316
      %v3318 = vpop.f32.mrf.mxu0
      %v3319 = vadd.f32 %v548, %v3318
      %3320 = vmatmul.bf16.gmra.mxu0 %v1109
      %v3321 = vpop.f32.mrf.mxu0
      %v3322 = vadd.f32 %v548, %v3321
      %v3323 = vpop.f32.mrf.mxu0
      %v3324 = vadd.f32 %v548, %v3323
      %3325 = vmatmul.bf16.gmra.mxu0 %v1112
      %v3326 = vpop.f32.mrf.mxu0
      %v3327 = vadd.f32 %v548, %v3326
      %v3328 = vpop.f32.mrf.mxu0
      %v3329 = vadd.f32 %v548, %v3328
      %3330 = vmatmul.bf16.gmra.mxu0 %v1115
      %v3331 = vpop.f32.mrf.mxu0
      %v3332 = vadd.f32 %v548, %v3331
      %v3333 = vpop.f32.mrf.mxu0
      %v3334 = vadd.f32 %v548, %v3333
      %3335 = vmatmul.bf16.gmra.mxu0 %v1118
      %v3336 = vpop.f32.mrf.mxu0
      %v3337 = vadd.f32 %v548, %v3336
      %v3338 = vpop.f32.mrf.mxu0
      %v3339 = vadd.f32 %v548, %v3338
      %3340 = vmatmul.bf16.gmra.mxu0 %v1121
      %v3341 = vpop.f32.mrf.mxu0
      %v3342 = vadd.f32 %v548, %v3341
      %v3343 = vpop.f32.mrf.mxu0
      %v3344 = vadd.f32 %v548, %v3343
      %3345 = vmatmul.bf16.gmra.mxu0 %v1124
      %v3346 = vpop.f32.mrf.mxu0
      %v3347 = vadd.f32 %v548, %v3346
      %v3348 = vpop.f32.mrf.mxu0
      %v3349 = vadd.f32 %v548, %v3348
      %3350 = vmatmul.bf16.gmra.mxu0 %v1127
      %v3351 = vpop.f32.mrf.mxu0
      %v3352 = vadd.f32 %v548, %v3351
      %v3353 = vpop.f32.mrf.mxu0
      %v3354 = vadd.f32 %v548, %v3353
      %3355 = vmatmul.bf16.gmra.mxu0 %v1130
      %v3356 = vpop.f32.mrf.mxu0
      %v3357 = vadd.f32 %v548, %v3356
      %v3358 = vpop.f32.mrf.mxu0
      %v3359 = vadd.f32 %v548, %v3358
      %3360 = vmatmul.bf16.gmra.mxu0 %v1133
      %v3361 = vpop.f32.mrf.mxu0
      %v3362 = vadd.f32 %v548, %v3361
      %v3363 = vpop.f32.mrf.mxu0
      %v3364 = vadd.f32 %v548, %v3363
      %3365 = vmatmul.bf16.gmra.mxu0 %v1136
      %v3366 = vpop.f32.mrf.mxu0
      %v3367 = vadd.f32 %v548, %v3366
      %v3368 = vpop.f32.mrf.mxu0
      %v3369 = vadd.f32 %v548, %v3368
      %3370 = vmatmul.bf16.gmra.mxu0 %v1139
      %v3371 = vpop.f32.mrf.mxu0
      %v3372 = vadd.f32 %v548, %v3371
      %v3373 = vpop.f32.mrf.mxu0
      %v3374 = vadd.f32 %v548, %v3373
      %3375 = vmatmul.bf16.gmra.mxu0 %v1142
      %v3376 = vpop.f32.mrf.mxu0
      %v3377 = vadd.f32 %v548, %v3376
      %v3378 = vpop.f32.mrf.mxu0
      %v3379 = vadd.f32 %v548, %v3378
      %3380 = vmatmul.bf16.gmra.mxu0 %v1145
      %v3381 = vpop.f32.mrf.mxu0
      %v3382 = vadd.f32 %v548, %v3381
      %v3383 = vpop.f32.mrf.mxu0
      %v3384 = vadd.f32 %v548, %v3383
      %3385 = vdwg.mxu0
      %3386 = vmatpush.bf16.msra.mxu0 0
      %3387 = vmatpush.bf16.msra.mxu0 0
      %3388 = vmatpush.bf16.msra.mxu0 0
      %3389 = vmatpush.bf16.msra.mxu0 0
      %3390 = vmatpush.bf16.msra.mxu0 0
      %3391 = vmatpush.bf16.msra.mxu0 %v1221
      %3392 = vmatpush.bf16.msra.mxu0 %v986
      %3393 = vmatpush.bf16.msra.mxu0 %v952
      %3394 = vmatmul.bf16.gmra.mxu0 %v1100
      %v3395 = vpop.f32.mrf.mxu0
      %v3396 = vadd.f32 %v549, %v3395
      %v3397 = vpop.f32.mrf.mxu0
      %v3398 = vadd.f32 %v549, %v3397
      %3399 = vmatmul.bf16.gmra.mxu0 %v1103
      %v3400 = vpop.f32.mrf.mxu0
      %v3401 = vadd.f32 %v549, %v3400
      %v3402 = vpop.f32.mrf.mxu0
      %v3403 = vadd.f32 %v549, %v3402
      %3404 = vmatmul.bf16.gmra.mxu0 %v1106
      %v3405 = vpop.f32.mrf.mxu0
      %v3406 = vadd.f32 %v549, %v3405
      %v3407 = vpop.f32.mrf.mxu0
      %v3408 = vadd.f32 %v549, %v3407
      %3409 = vmatmul.bf16.gmra.mxu0 %v1109
      %v3410 = vpop.f32.mrf.mxu0
      %v3411 = vadd.f32 %v549, %v3410
      %v3412 = vpop.f32.mrf.mxu0
      %v3413 = vadd.f32 %v549, %v3412
      %3414 = vmatmul.bf16.gmra.mxu0 %v1112
      %v3415 = vpop.f32.mrf.mxu0
      %v3416 = vadd.f32 %v549, %v3415
      %v3417 = vpop.f32.mrf.mxu0
      %v3418 = vadd.f32 %v549, %v3417
      %3419 = vmatmul.bf16.gmra.mxu0 %v1115
      %v3420 = vpop.f32.mrf.mxu0
      %v3421 = vadd.f32 %v549, %v3420
      %v3422 = vpop.f32.mrf.mxu0
      %v3423 = vadd.f32 %v549, %v3422
      %3424 = vmatmul.bf16.gmra.mxu0 %v1118
      %v3425 = vpop.f32.mrf.mxu0
      %v3426 = vadd.f32 %v549, %v3425
      %v3427 = vpop.f32.mrf.mxu0
      %v3428 = vadd.f32 %v549, %v3427
      %3429 = vmatmul.bf16.gmra.mxu0 %v1121
      %v3430 = vpop.f32.mrf.mxu0
      %v3431 = vadd.f32 %v549, %v3430
      %v3432 = vpop.f32.mrf.mxu0
      %v3433 = vadd.f32 %v549, %v3432
      %3434 = vmatmul.bf16.gmra.mxu0 %v1124
      %v3435 = vpop.f32.mrf.mxu0
      %v3436 = vadd.f32 %v549, %v3435
      %v3437 = vpop.f32.mrf.mxu0
      %v3438 = vadd.f32 %v549, %v3437
      %3439 = vmatmul.bf16.gmra.mxu0 %v1127
      %v3440 = vpop.f32.mrf.mxu0
      %v3441 = vadd.f32 %v549, %v3440
      %v3442 = vpop.f32.mrf.mxu0
      %v3443 = vadd.f32 %v549, %v3442
      %3444 = vmatmul.bf16.gmra.mxu0 %v1130
      %v3445 = vpop.f32.mrf.mxu0
      %v3446 = vadd.f32 %v549, %v3445
      %v3447 = vpop.f32.mrf.mxu0
      %v3448 = vadd.f32 %v549, %v3447
      %3449 = vmatmul.bf16.gmra.mxu0 %v1133
      %v3450 = vpop.f32.mrf.mxu0
      %v3451 = vadd.f32 %v549, %v3450
      %v3452 = vpop.f32.mrf.mxu0
      %v3453 = vadd.f32 %v549, %v3452
      %3454 = vmatmul.bf16.gmra.mxu0 %v1136
      %v3455 = vpop.f32.mrf.mxu0
      %v3456 = vadd.f32 %v549, %v3455
      %v3457 = vpop.f32.mrf.mxu0
      %v3458 = vadd.f32 %v549, %v3457
      %3459 = vmatmul.bf16.gmra.mxu0 %v1139
      %v3460 = vpop.f32.mrf.mxu0
      %v3461 = vadd.f32 %v549, %v3460
      %v3462 = vpop.f32.mrf.mxu0
      %v3463 = vadd.f32 %v549, %v3462
      %3464 = vmatmul.bf16.gmra.mxu0 %v1142
      %v3465 = vpop.f32.mrf.mxu0
      %v3466 = vadd.f32 %v549, %v3465
      %v3467 = vpop.f32.mrf.mxu0
      %v3468 = vadd.f32 %v549, %v3467
      %3469 = vmatmul.bf16.gmra.mxu0 %v1145
      %v3470 = vpop.f32.mrf.mxu0
      %v3471 = vadd.f32 %v549, %v3470
      %v3472 = vpop.f32.mrf.mxu0
      %v3473 = vadd.f32 %v549, %v3472
      %3474 = vdwg.mxu0
      %3475 = vmatpush.bf16.msra.mxu0 0
      %3476 = vmatpush.bf16.msra.mxu0 0
      %3477 = vmatpush.bf16.msra.mxu0 0
      %3478 = vmatpush.bf16.msra.mxu0 0
      %3479 = vmatpush.bf16.msra.mxu0 0
      %3480 = vmatpush.bf16.msra.mxu0 %v1224
      %3481 = vmatpush.bf16.msra.mxu0 %v987
      %3482 = vmatpush.bf16.msra.mxu0 %v953
      %3483 = vmatmul.bf16.gmra.mxu0 %v1100
      %v3484 = vpop.f32.mrf.mxu0
      %v3485 = vadd.f32 %v550, %v3484
      %v3486 = vpop.f32.mrf.mxu0
      %v3487 = vadd.f32 %v550, %v3486
      %3488 = vmatmul.bf16.gmra.mxu0 %v1103
      %v3489 = vpop.f32.mrf.mxu0
      %v3490 = vadd.f32 %v550, %v3489
      %v3491 = vpop.f32.mrf.mxu0
      %v3492 = vadd.f32 %v550, %v3491
      %3493 = vmatmul.bf16.gmra.mxu0 %v1106
      %v3494 = vpop.f32.mrf.mxu0
      %v3495 = vadd.f32 %v550, %v3494
      %v3496 = vpop.f32.mrf.mxu0
      %v3497 = vadd.f32 %v550, %v3496
      %3498 = vmatmul.bf16.gmra.mxu0 %v1109
      %v3499 = vpop.f32.mrf.mxu0
      %v3500 = vadd.f32 %v550, %v3499
      %v3501 = vpop.f32.mrf.mxu0
      %v3502 = vadd.f32 %v550, %v3501
      %3503 = vmatmul.bf16.gmra.mxu0 %v1112
      %v3504 = vpop.f32.mrf.mxu0
      %v3505 = vadd.f32 %v550, %v3504
      %v3506 = vpop.f32.mrf.mxu0
      %v3507 = vadd.f32 %v550, %v3506
      %3508 = vmatmul.bf16.gmra.mxu0 %v1115
      %v3509 = vpop.f32.mrf.mxu0
      %v3510 = vadd.f32 %v550, %v3509
      %v3511 = vpop.f32.mrf.mxu0
      %v3512 = vadd.f32 %v550, %v3511
      %3513 = vmatmul.bf16.gmra.mxu0 %v1118
      %v3514 = vpop.f32.mrf.mxu0
      %v3515 = vadd.f32 %v550, %v3514
      %v3516 = vpop.f32.mrf.mxu0
      %v3517 = vadd.f32 %v550, %v3516
      %3518 = vmatmul.bf16.gmra.mxu0 %v1121
      %v3519 = vpop.f32.mrf.mxu0
      %v3520 = vadd.f32 %v550, %v3519
      %v3521 = vpop.f32.mrf.mxu0
      %v3522 = vadd.f32 %v550, %v3521
      %3523 = vmatmul.bf16.gmra.mxu0 %v1124
      %v3524 = vpop.f32.mrf.mxu0
      %v3525 = vadd.f32 %v550, %v3524
      %v3526 = vpop.f32.mrf.mxu0
      %v3527 = vadd.f32 %v550, %v3526
      %3528 = vmatmul.bf16.gmra.mxu0 %v1127
      %v3529 = vpop.f32.mrf.mxu0
      %v3530 = vadd.f32 %v550, %v3529
      %v3531 = vpop.f32.mrf.mxu0
      %v3532 = vadd.f32 %v550, %v3531
      %3533 = vmatmul.bf16.gmra.mxu0 %v1130
      %v3534 = vpop.f32.mrf.mxu0
      %v3535 = vadd.f32 %v550, %v3534
      %v3536 = vpop.f32.mrf.mxu0
      %v3537 = vadd.f32 %v550, %v3536
      %3538 = vmatmul.bf16.gmra.mxu0 %v1133
      %v3539 = vpop.f32.mrf.mxu0
      %v3540 = vadd.f32 %v550, %v3539
      %v3541 = vpop.f32.mrf.mxu0
      %v3542 = vadd.f32 %v550, %v3541
      %3543 = vmatmul.bf16.gmra.mxu0 %v1136
      %v3544 = vpop.f32.mrf.mxu0
      %v3545 = vadd.f32 %v550, %v3544
      %v3546 = vpop.f32.mrf.mxu0
      %v3547 = vadd.f32 %v550, %v3546
      %3548 = vmatmul.bf16.gmra.mxu0 %v1139
      %v3549 = vpop.f32.mrf.mxu0
      %v3550 = vadd.f32 %v550, %v3549
      %v3551 = vpop.f32.mrf.mxu0
      %v3552 = vadd.f32 %v550, %v3551
      %3553 = vmatmul.bf16.gmra.mxu0 %v1142
      %v3554 = vpop.f32.mrf.mxu0
      %v3555 = vadd.f32 %v550, %v3554
      %v3556 = vpop.f32.mrf.mxu0
      %v3557 = vadd.f32 %v550, %v3556
      %3558 = vmatmul.bf16.gmra.mxu0 %v1145
      %v3559 = vpop.f32.mrf.mxu0
      %v3560 = vadd.f32 %v550, %v3559
      %v3561 = vpop.f32.mrf.mxu0
      %v3562 = vadd.f32 %v550, %v3561
      %3563 = vdwg.mxu0
      %3564 = vmatpush.bf16.msra.mxu0 0
      %3565 = vmatpush.bf16.msra.mxu0 0
      %3566 = vmatpush.bf16.msra.mxu0 0
      %3567 = vmatpush.bf16.msra.mxu0 0
      %3568 = vmatpush.bf16.msra.mxu0 0
      %3569 = vmatpush.bf16.msra.mxu0 %v1227
      %3570 = vmatpush.bf16.msra.mxu0 %v988
      %3571 = vmatpush.bf16.msra.mxu0 %v954
      %3572 = vmatmul.bf16.gmra.mxu0 %v1100
      %v3573 = vpop.f32.mrf.mxu0
      %v3574 = vadd.f32 %v551, %v3573
      %v3575 = vpop.f32.mrf.mxu0
      %v3576 = vadd.f32 %v551, %v3575
      %3577 = vmatmul.bf16.gmra.mxu0 %v1103
      %v3578 = vpop.f32.mrf.mxu0
      %v3579 = vadd.f32 %v551, %v3578
      %v3580 = vpop.f32.mrf.mxu0
      %v3581 = vadd.f32 %v551, %v3580
      %3582 = vmatmul.bf16.gmra.mxu0 %v1106
      %v3583 = vpop.f32.mrf.mxu0
      %v3584 = vadd.f32 %v551, %v3583
      %v3585 = vpop.f32.mrf.mxu0
      %v3586 = vadd.f32 %v551, %v3585
      %3587 = vmatmul.bf16.gmra.mxu0 %v1109
      %v3588 = vpop.f32.mrf.mxu0
      %v3589 = vadd.f32 %v551, %v3588
      %v3590 = vpop.f32.mrf.mxu0
      %v3591 = vadd.f32 %v551, %v3590
      %3592 = vmatmul.bf16.gmra.mxu0 %v1112
      %v3593 = vpop.f32.mrf.mxu0
      %v3594 = vadd.f32 %v551, %v3593
      %v3595 = vpop.f32.mrf.mxu0
      %v3596 = vadd.f32 %v551, %v3595
      %3597 = vmatmul.bf16.gmra.mxu0 %v1115
      %v3598 = vpop.f32.mrf.mxu0
      %v3599 = vadd.f32 %v551, %v3598
      %v3600 = vpop.f32.mrf.mxu0
      %v3601 = vadd.f32 %v551, %v3600
      %3602 = vmatmul.bf16.gmra.mxu0 %v1118
      %v3603 = vpop.f32.mrf.mxu0
      %v3604 = vadd.f32 %v551, %v3603
      %v3605 = vpop.f32.mrf.mxu0
      %v3606 = vadd.f32 %v551, %v3605
      %3607 = vmatmul.bf16.gmra.mxu0 %v1121
      %v3608 = vpop.f32.mrf.mxu0
      %v3609 = vadd.f32 %v551, %v3608
      %v3610 = vpop.f32.mrf.mxu0
      %v3611 = vadd.f32 %v551, %v3610
      %3612 = vmatmul.bf16.gmra.mxu0 %v1124
      %v3613 = vpop.f32.mrf.mxu0
      %v3614 = vadd.f32 %v551, %v3613
      %v3615 = vpop.f32.mrf.mxu0
      %v3616 = vadd.f32 %v551, %v3615
      %3617 = vmatmul.bf16.gmra.mxu0 %v1127
      %v3618 = vpop.f32.mrf.mxu0
      %v3619 = vadd.f32 %v551, %v3618
      %v3620 = vpop.f32.mrf.mxu0
      %v3621 = vadd.f32 %v551, %v3620
      %3622 = vmatmul.bf16.gmra.mxu0 %v1130
      %v3623 = vpop.f32.mrf.mxu0
      %v3624 = vadd.f32 %v551, %v3623
      %v3625 = vpop.f32.mrf.mxu0
      %v3626 = vadd.f32 %v551, %v3625
      %3627 = vmatmul.bf16.gmra.mxu0 %v1133
      %v3628 = vpop.f32.mrf.mxu0
      %v3629 = vadd.f32 %v551, %v3628
      %v3630 = vpop.f32.mrf.mxu0
      %v3631 = vadd.f32 %v551, %v3630
      %3632 = vmatmul.bf16.gmra.mxu0 %v1136
      %v3633 = vpop.f32.mrf.mxu0
      %v3634 = vadd.f32 %v551, %v3633
      %v3635 = vpop.f32.mrf.mxu0
      %v3636 = vadd.f32 %v551, %v3635
      %3637 = vmatmul.bf16.gmra.mxu0 %v1139
      %v3638 = vpop.f32.mrf.mxu0
      %v3639 = vadd.f32 %v551, %v3638
      %v3640 = vpop.f32.mrf.mxu0
      %v3641 = vadd.f32 %v551, %v3640
      %3642 = vmatmul.bf16.gmra.mxu0 %v1142
      %v3643 = vpop.f32.mrf.mxu0
      %v3644 = vadd.f32 %v551, %v3643
      %v3645 = vpop.f32.mrf.mxu0
      %v3646 = vadd.f32 %v551, %v3645
      %3647 = vmatmul.bf16.gmra.mxu0 %v1145
      %v3648 = vpop.f32.mrf.mxu0
      %v3649 = vadd.f32 %v551, %v3648
      %v3650 = vpop.f32.mrf.mxu0
      %v3651 = vadd.f32 %v551, %v3650
      %3652 = vdwg.mxu0
      %3653 = vmatpush.bf16.msra.mxu0 0
      %3654 = vmatpush.bf16.msra.mxu0 0
      %3655 = vmatpush.bf16.msra.mxu0 0
      %3656 = vmatpush.bf16.msra.mxu0 0
      %3657 = vmatpush.bf16.msra.mxu0 0
      %3658 = vmatpush.bf16.msra.mxu0 %v1230
      %3659 = vmatpush.bf16.msra.mxu0 %v989
      %3660 = vmatpush.bf16.msra.mxu0 %v955
      %3661 = vmatmul.bf16.gmra.mxu0 %v1100
      %v3662 = vpop.f32.mrf.mxu0
      %v3663 = vadd.f32 %v552, %v3662
      %v3664 = vpop.f32.mrf.mxu0
      %v3665 = vadd.f32 %v552, %v3664
      %3666 = vmatmul.bf16.gmra.mxu0 %v1103
      %v3667 = vpop.f32.mrf.mxu0
      %v3668 = vadd.f32 %v552, %v3667
      %v3669 = vpop.f32.mrf.mxu0
      %v3670 = vadd.f32 %v552, %v3669
      %3671 = vmatmul.bf16.gmra.mxu0 %v1106
      %v3672 = vpop.f32.mrf.mxu0
      %v3673 = vadd.f32 %v552, %v3672
      %v3674 = vpop.f32.mrf.mxu0
      %v3675 = vadd.f32 %v552, %v3674
      %3676 = vmatmul.bf16.gmra.mxu0 %v1109
      %v3677 = vpop.f32.mrf.mxu0
      %v3678 = vadd.f32 %v552, %v3677
      %v3679 = vpop.f32.mrf.mxu0
      %v3680 = vadd.f32 %v552, %v3679
      %3681 = vmatmul.bf16.gmra.mxu0 %v1112
      %v3682 = vpop.f32.mrf.mxu0
      %v3683 = vadd.f32 %v552, %v3682
      %v3684 = vpop.f32.mrf.mxu0
      %v3685 = vadd.f32 %v552, %v3684
      %3686 = vmatmul.bf16.gmra.mxu0 %v1115
      %v3687 = vpop.f32.mrf.mxu0
      %v3688 = vadd.f32 %v552, %v3687
      %v3689 = vpop.f32.mrf.mxu0
      %v3690 = vadd.f32 %v552, %v3689
      %3691 = vmatmul.bf16.gmra.mxu0 %v1118
      %v3692 = vpop.f32.mrf.mxu0
      %v3693 = vadd.f32 %v552, %v3692
      %v3694 = vpop.f32.mrf.mxu0
      %v3695 = vadd.f32 %v552, %v3694
      %3696 = vmatmul.bf16.gmra.mxu0 %v1121
      %v3697 = vpop.f32.mrf.mxu0
      %v3698 = vadd.f32 %v552, %v3697
      %v3699 = vpop.f32.mrf.mxu0
      %v3700 = vadd.f32 %v552, %v3699
      %3701 = vmatmul.bf16.gmra.mxu0 %v1124
      %v3702 = vpop.f32.mrf.mxu0
      %v3703 = vadd.f32 %v552, %v3702
      %v3704 = vpop.f32.mrf.mxu0
      %v3705 = vadd.f32 %v552, %v3704
      %3706 = vmatmul.bf16.gmra.mxu0 %v1127
      %v3707 = vpop.f32.mrf.mxu0
      %v3708 = vadd.f32 %v552, %v3707
      %v3709 = vpop.f32.mrf.mxu0
      %v3710 = vadd.f32 %v552, %v3709
      %3711 = vmatmul.bf16.gmra.mxu0 %v1130
      %v3712 = vpop.f32.mrf.mxu0
      %v3713 = vadd.f32 %v552, %v3712
      %v3714 = vpop.f32.mrf.mxu0
      %v3715 = vadd.f32 %v552, %v3714
      %3716 = vmatmul.bf16.gmra.mxu0 %v1133
      %v3717 = vpop.f32.mrf.mxu0
      %v3718 = vadd.f32 %v552, %v3717
      %v3719 = vpop.f32.mrf.mxu0
      %v3720 = vadd.f32 %v552, %v3719
      %3721 = vmatmul.bf16.gmra.mxu0 %v1136
      %v3722 = vpop.f32.mrf.mxu0
      %v3723 = vadd.f32 %v552, %v3722
      %v3724 = vpop.f32.mrf.mxu0
      %v3725 = vadd.f32 %v552, %v3724
      %3726 = vmatmul.bf16.gmra.mxu0 %v1139
      %v3727 = vpop.f32.mrf.mxu0
      %v3728 = vadd.f32 %v552, %v3727
      %v3729 = vpop.f32.mrf.mxu0
      %v3730 = vadd.f32 %v552, %v3729
      %3731 = vmatmul.bf16.gmra.mxu0 %v1142
      %v3732 = vpop.f32.mrf.mxu0
      %v3733 = vadd.f32 %v552, %v3732
      %v3734 = vpop.f32.mrf.mxu0
      %v3735 = vadd.f32 %v552, %v3734
      %3736 = vmatmul.bf16.gmra.mxu0 %v1145
      %v3737 = vpop.f32.mrf.mxu0
      %v3738 = vadd.f32 %v552, %v3737
      %v3739 = vpop.f32.mrf.mxu0
      %v3740 = vadd.f32 %v552, %v3739
      %3741 = vdwg.mxu0
      %3742 = vmatpush.bf16.msra.mxu0 0
      %3743 = vmatpush.bf16.msra.mxu0 0
      %3744 = vmatpush.bf16.msra.mxu0 0
      %3745 = vmatpush.bf16.msra.mxu0 0
      %3746 = vmatpush.bf16.msra.mxu0 0
      %3747 = vmatpush.bf16.msra.mxu0 %v1233
      %3748 = vmatpush.bf16.msra.mxu0 %v990
      %3749 = vmatpush.bf16.msra.mxu0 %v956
      %3750 = vmatmul.bf16.gmra.mxu0 %v1100
      %v3751 = vpop.f32.mrf.mxu0
      %v3752 = vadd.f32 %v553, %v3751
      %v3753 = vpop.f32.mrf.mxu0
      %v3754 = vadd.f32 %v553, %v3753
      %3755 = vmatmul.bf16.gmra.mxu0 %v1103
      %v3756 = vpop.f32.mrf.mxu0
      %v3757 = vadd.f32 %v553, %v3756
      %v3758 = vpop.f32.mrf.mxu0
      %v3759 = vadd.f32 %v553, %v3758
      %3760 = vmatmul.bf16.gmra.mxu0 %v1106
      %v3761 = vpop.f32.mrf.mxu0
      %v3762 = vadd.f32 %v553, %v3761
      %v3763 = vpop.f32.mrf.mxu0
      %v3764 = vadd.f32 %v553, %v3763
      %3765 = vmatmul.bf16.gmra.mxu0 %v1109
      %v3766 = vpop.f32.mrf.mxu0
      %v3767 = vadd.f32 %v553, %v3766
      %v3768 = vpop.f32.mrf.mxu0
      %v3769 = vadd.f32 %v553, %v3768
      %3770 = vmatmul.bf16.gmra.mxu0 %v1112
      %v3771 = vpop.f32.mrf.mxu0
      %v3772 = vadd.f32 %v553, %v3771
      %v3773 = vpop.f32.mrf.mxu0
      %v3774 = vadd.f32 %v553, %v3773
      %3775 = vmatmul.bf16.gmra.mxu0 %v1115
      %v3776 = vpop.f32.mrf.mxu0
      %v3777 = vadd.f32 %v553, %v3776
      %v3778 = vpop.f32.mrf.mxu0
      %v3779 = vadd.f32 %v553, %v3778
      %3780 = vmatmul.bf16.gmra.mxu0 %v1118
      %v3781 = vpop.f32.mrf.mxu0
      %v3782 = vadd.f32 %v553, %v3781
      %v3783 = vpop.f32.mrf.mxu0
      %v3784 = vadd.f32 %v553, %v3783
      %3785 = vmatmul.bf16.gmra.mxu0 %v1121
      %v3786 = vpop.f32.mrf.mxu0
      %v3787 = vadd.f32 %v553, %v3786
      %v3788 = vpop.f32.mrf.mxu0
      %v3789 = vadd.f32 %v553, %v3788
      %3790 = vmatmul.bf16.gmra.mxu0 %v1124
      %v3791 = vpop.f32.mrf.mxu0
      %v3792 = vadd.f32 %v553, %v3791
      %v3793 = vpop.f32.mrf.mxu0
      %v3794 = vadd.f32 %v553, %v3793
      %3795 = vmatmul.bf16.gmra.mxu0 %v1127
      %v3796 = vpop.f32.mrf.mxu0
      %v3797 = vadd.f32 %v553, %v3796
      %v3798 = vpop.f32.mrf.mxu0
      %v3799 = vadd.f32 %v553, %v3798
      %3800 = vmatmul.bf16.gmra.mxu0 %v1130
      %v3801 = vpop.f32.mrf.mxu0
      %v3802 = vadd.f32 %v553, %v3801
      %v3803 = vpop.f32.mrf.mxu0
      %v3804 = vadd.f32 %v553, %v3803
      %3805 = vmatmul.bf16.gmra.mxu0 %v1133
      %v3806 = vpop.f32.mrf.mxu0
      %v3807 = vadd.f32 %v553, %v3806
      %v3808 = vpop.f32.mrf.mxu0
      %v3809 = vadd.f32 %v553, %v3808
      %3810 = vmatmul.bf16.gmra.mxu0 %v1136
      %v3811 = vpop.f32.mrf.mxu0
      %v3812 = vadd.f32 %v553, %v3811
      %v3813 = vpop.f32.mrf.mxu0
      %v3814 = vadd.f32 %v553, %v3813
      %3815 = vmatmul.bf16.gmra.mxu0 %v1139
      %v3816 = vpop.f32.mrf.mxu0
      %v3817 = vadd.f32 %v553, %v3816
      %v3818 = vpop.f32.mrf.mxu0
      %v3819 = vadd.f32 %v553, %v3818
      %3820 = vmatmul.bf16.gmra.mxu0 %v1142
      %v3821 = vpop.f32.mrf.mxu0
      %v3822 = vadd.f32 %v553, %v3821
      %v3823 = vpop.f32.mrf.mxu0
      %v3824 = vadd.f32 %v553, %v3823
      %3825 = vmatmul.bf16.gmra.mxu0 %v1145
      %v3826 = vpop.f32.mrf.mxu0
      %v3827 = vadd.f32 %v553, %v3826
      %v3828 = vpop.f32.mrf.mxu0
      %v3829 = vadd.f32 %v553, %v3828
      %3830 = vdwg.mxu0
      %3831 = vmatpush.bf16.msra.mxu0 0
      %3832 = vmatpush.bf16.msra.mxu0 0
      %3833 = vmatpush.bf16.msra.mxu0 0
      %3834 = vmatpush.bf16.msra.mxu0 0
      %3835 = vmatpush.bf16.msra.mxu0 0
      %3836 = vmatpush.bf16.msra.mxu0 %v1236
      %3837 = vmatpush.bf16.msra.mxu0 %v991
      %3838 = vmatpush.bf16.msra.mxu0 %v957
      %3839 = vmatmul.bf16.gmra.mxu0 %v1100
      %v3840 = vpop.f32.mrf.mxu0
      %v3841 = vadd.f32 %v554, %v3840
      %v3842 = vpop.f32.mrf.mxu0
      %v3843 = vadd.f32 %v554, %v3842
      %3844 = vmatmul.bf16.gmra.mxu0 %v1103
      %v3845 = vpop.f32.mrf.mxu0
      %v3846 = vadd.f32 %v554, %v3845
      %v3847 = vpop.f32.mrf.mxu0
      %v3848 = vadd.f32 %v554, %v3847
      %3849 = vmatmul.bf16.gmra.mxu0 %v1106
      %v3850 = vpop.f32.mrf.mxu0
      %v3851 = vadd.f32 %v554, %v3850
      %v3852 = vpop.f32.mrf.mxu0
      %v3853 = vadd.f32 %v554, %v3852
      %3854 = vmatmul.bf16.gmra.mxu0 %v1109
      %v3855 = vpop.f32.mrf.mxu0
      %v3856 = vadd.f32 %v554, %v3855
      %v3857 = vpop.f32.mrf.mxu0
      %v3858 = vadd.f32 %v554, %v3857
      %3859 = vmatmul.bf16.gmra.mxu0 %v1112
      %v3860 = vpop.f32.mrf.mxu0
      %v3861 = vadd.f32 %v554, %v3860
      %v3862 = vpop.f32.mrf.mxu0
      %v3863 = vadd.f32 %v554, %v3862
      %3864 = vmatmul.bf16.gmra.mxu0 %v1115
      %v3865 = vpop.f32.mrf.mxu0
      %v3866 = vadd.f32 %v554, %v3865
      %v3867 = vpop.f32.mrf.mxu0
      %v3868 = vadd.f32 %v554, %v3867
      %3869 = vmatmul.bf16.gmra.mxu0 %v1118
      %v3870 = vpop.f32.mrf.mxu0
      %v3871 = vadd.f32 %v554, %v3870
      %v3872 = vpop.f32.mrf.mxu0
      %v3873 = vadd.f32 %v554, %v3872
      %3874 = vmatmul.bf16.gmra.mxu0 %v1121
      %v3875 = vpop.f32.mrf.mxu0
      %v3876 = vadd.f32 %v554, %v3875
      %v3877 = vpop.f32.mrf.mxu0
      %v3878 = vadd.f32 %v554, %v3877
      %3879 = vmatmul.bf16.gmra.mxu0 %v1124
      %v3880 = vpop.f32.mrf.mxu0
      %v3881 = vadd.f32 %v554, %v3880
      %v3882 = vpop.f32.mrf.mxu0
      %v3883 = vadd.f32 %v554, %v3882
      %3884 = vmatmul.bf16.gmra.mxu0 %v1127
      %v3885 = vpop.f32.mrf.mxu0
      %v3886 = vadd.f32 %v554, %v3885
      %v3887 = vpop.f32.mrf.mxu0
      %v3888 = vadd.f32 %v554, %v3887
      %3889 = vmatmul.bf16.gmra.mxu0 %v1130
      %v3890 = vpop.f32.mrf.mxu0
      %v3891 = vadd.f32 %v554, %v3890
      %v3892 = vpop.f32.mrf.mxu0
      %v3893 = vadd.f32 %v554, %v3892
      %3894 = vmatmul.bf16.gmra.mxu0 %v1133
      %v3895 = vpop.f32.mrf.mxu0
      %v3896 = vadd.f32 %v554, %v3895
      %v3897 = vpop.f32.mrf.mxu0
      %v3898 = vadd.f32 %v554, %v3897
      %3899 = vmatmul.bf16.gmra.mxu0 %v1136
      %v3900 = vpop.f32.mrf.mxu0
      %v3901 = vadd.f32 %v554, %v3900
      %v3902 = vpop.f32.mrf.mxu0
      %v3903 = vadd.f32 %v554, %v3902
      %3904 = vmatmul.bf16.gmra.mxu0 %v1139
      %v3905 = vpop.f32.mrf.mxu0
      %v3906 = vadd.f32 %v554, %v3905
      %v3907 = vpop.f32.mrf.mxu0
      %v3908 = vadd.f32 %v554, %v3907
      %3909 = vmatmul.bf16.gmra.mxu0 %v1142
      %v3910 = vpop.f32.mrf.mxu0
      %v3911 = vadd.f32 %v554, %v3910
      %v3912 = vpop.f32.mrf.mxu0
      %v3913 = vadd.f32 %v554, %v3912
      %3914 = vmatmul.bf16.gmra.mxu0 %v1145
      %v3915 = vpop.f32.mrf.mxu0
      %v3916 = vadd.f32 %v554, %v3915
      %v3917 = vpop.f32.mrf.mxu0
      %v3918 = vadd.f32 %v554, %v3917
      %3919 = vdwg.mxu0
      %3920 = vmatpush.bf16.msra.mxu0 0
      %3921 = vmatpush.bf16.msra.mxu0 0
      %3922 = vmatpush.bf16.msra.mxu0 0
      %3923 = vmatpush.bf16.msra.mxu0 0
      %3924 = vmatpush.bf16.msra.mxu0 0
      %3925 = vmatpush.bf16.msra.mxu0 %v1239
      %3926 = vmatpush.bf16.msra.mxu0 %v992
      %3927 = vmatpush.bf16.msra.mxu0 %v958
      %3928 = vmatmul.bf16.gmra.mxu0 %v1100
      %v3929 = vpop.f32.mrf.mxu0
      %v3930 = vadd.f32 %v555, %v3929
      %v3931 = vpop.f32.mrf.mxu0
      %v3932 = vadd.f32 %v555, %v3931
      %3933 = vmatmul.bf16.gmra.mxu0 %v1103
      %v3934 = vpop.f32.mrf.mxu0
      %v3935 = vadd.f32 %v555, %v3934
      %v3936 = vpop.f32.mrf.mxu0
      %v3937 = vadd.f32 %v555, %v3936
      %3938 = vmatmul.bf16.gmra.mxu0 %v1106
      %v3939 = vpop.f32.mrf.mxu0
      %v3940 = vadd.f32 %v555, %v3939
      %v3941 = vpop.f32.mrf.mxu0
      %v3942 = vadd.f32 %v555, %v3941
      %3943 = vmatmul.bf16.gmra.mxu0 %v1109
      %v3944 = vpop.f32.mrf.mxu0
      %v3945 = vadd.f32 %v555, %v3944
      %v3946 = vpop.f32.mrf.mxu0
      %v3947 = vadd.f32 %v555, %v3946
      %3948 = vmatmul.bf16.gmra.mxu0 %v1112
      %v3949 = vpop.f32.mrf.mxu0
      %v3950 = vadd.f32 %v555, %v3949
      %v3951 = vpop.f32.mrf.mxu0
      %v3952 = vadd.f32 %v555, %v3951
      %3953 = vmatmul.bf16.gmra.mxu0 %v1115
      %v3954 = vpop.f32.mrf.mxu0
      %v3955 = vadd.f32 %v555, %v3954
      %v3956 = vpop.f32.mrf.mxu0
      %v3957 = vadd.f32 %v555, %v3956
      %3958 = vmatmul.bf16.gmra.mxu0 %v1118
      %v3959 = vpop.f32.mrf.mxu0
      %v3960 = vadd.f32 %v555, %v3959
      %v3961 = vpop.f32.mrf.mxu0
      %v3962 = vadd.f32 %v555, %v3961
      %3963 = vmatmul.bf16.gmra.mxu0 %v1121
      %v3964 = vpop.f32.mrf.mxu0
      %v3965 = vadd.f32 %v555, %v3964
      %v3966 = vpop.f32.mrf.mxu0
      %v3967 = vadd.f32 %v555, %v3966
      %3968 = vmatmul.bf16.gmra.mxu0 %v1124
      %v3969 = vpop.f32.mrf.mxu0
      %v3970 = vadd.f32 %v555, %v3969
      %v3971 = vpop.f32.mrf.mxu0
      %v3972 = vadd.f32 %v555, %v3971
      %3973 = vmatmul.bf16.gmra.mxu0 %v1127
      %v3974 = vpop.f32.mrf.mxu0
      %v3975 = vadd.f32 %v555, %v3974
      %v3976 = vpop.f32.mrf.mxu0
      %v3977 = vadd.f32 %v555, %v3976
      %3978 = vmatmul.bf16.gmra.mxu0 %v1130
      %v3979 = vpop.f32.mrf.mxu0
      %v3980 = vadd.f32 %v555, %v3979
      %v3981 = vpop.f32.mrf.mxu0
      %v3982 = vadd.f32 %v555, %v3981
      %3983 = vmatmul.bf16.gmra.mxu0 %v1133
      %v3984 = vpop.f32.mrf.mxu0
      %v3985 = vadd.f32 %v555, %v3984
      %v3986 = vpop.f32.mrf.mxu0
      %v3987 = vadd.f32 %v555, %v3986
      %3988 = vmatmul.bf16.gmra.mxu0 %v1136
      %v3989 = vpop.f32.mrf.mxu0
      %v3990 = vadd.f32 %v555, %v3989
      %v3991 = vpop.f32.mrf.mxu0
      %v3992 = vadd.f32 %v555, %v3991
      %3993 = vmatmul.bf16.gmra.mxu0 %v1139
      %v3994 = vpop.f32.mrf.mxu0
      %v3995 = vadd.f32 %v555, %v3994
      %v3996 = vpop.f32.mrf.mxu0
      %v3997 = vadd.f32 %v555, %v3996
      %3998 = vmatmul.bf16.gmra.mxu0 %v1142
      %v3999 = vpop.f32.mrf.mxu0
      %v4000 = vadd.f32 %v555, %v3999
      %v4001 = vpop.f32.mrf.mxu0
      %v4002 = vadd.f32 %v555, %v4001
      %4003 = vmatmul.bf16.gmra.mxu0 %v1145
      %v4004 = vpop.f32.mrf.mxu0
      %v4005 = vadd.f32 %v555, %v4004
      %v4006 = vpop.f32.mrf.mxu0
      %v4007 = vadd.f32 %v555, %v4006
      %4008 = vdwg.mxu0
      %4009 = vmatpush.bf16.msra.mxu0 0
      %4010 = vmatpush.bf16.msra.mxu0 0
      %4011 = vmatpush.bf16.msra.mxu0 0
      %4012 = vmatpush.bf16.msra.mxu0 0
      %4013 = vmatpush.bf16.msra.mxu0 0
      %4014 = vmatpush.bf16.msra.mxu0 %v1242
      %4015 = vmatpush.bf16.msra.mxu0 %v993
      %4016 = vmatpush.bf16.msra.mxu0 %v959
      %4017 = vmatmul.bf16.gmra.mxu0 %v1100
      %v4018 = vpop.f32.mrf.mxu0
      %v4019 = vadd.f32 %v556, %v4018
      %v4020 = vpop.f32.mrf.mxu0
      %v4021 = vadd.f32 %v556, %v4020
      %4022 = vmatmul.bf16.gmra.mxu0 %v1103
      %v4023 = vpop.f32.mrf.mxu0
      %v4024 = vadd.f32 %v556, %v4023
      %v4025 = vpop.f32.mrf.mxu0
      %v4026 = vadd.f32 %v556, %v4025
      %4027 = vmatmul.bf16.gmra.mxu0 %v1106
      %v4028 = vpop.f32.mrf.mxu0
      %v4029 = vadd.f32 %v556, %v4028
      %v4030 = vpop.f32.mrf.mxu0
      %v4031 = vadd.f32 %v556, %v4030
      %4032 = vmatmul.bf16.gmra.mxu0 %v1109
      %v4033 = vpop.f32.mrf.mxu0
      %v4034 = vadd.f32 %v556, %v4033
      %v4035 = vpop.f32.mrf.mxu0
      %v4036 = vadd.f32 %v556, %v4035
      %4037 = vmatmul.bf16.gmra.mxu0 %v1112
      %v4038 = vpop.f32.mrf.mxu0
      %v4039 = vadd.f32 %v556, %v4038
      %v4040 = vpop.f32.mrf.mxu0
      %v4041 = vadd.f32 %v556, %v4040
      %4042 = vmatmul.bf16.gmra.mxu0 %v1115
      %v4043 = vpop.f32.mrf.mxu0
      %v4044 = vadd.f32 %v556, %v4043
      %v4045 = vpop.f32.mrf.mxu0
      %v4046 = vadd.f32 %v556, %v4045
      %4047 = vmatmul.bf16.gmra.mxu0 %v1118
      %v4048 = vpop.f32.mrf.mxu0
      %v4049 = vadd.f32 %v556, %v4048
      %v4050 = vpop.f32.mrf.mxu0
      %v4051 = vadd.f32 %v556, %v4050
      %4052 = vmatmul.bf16.gmra.mxu0 %v1121
      %v4053 = vpop.f32.mrf.mxu0
      %v4054 = vadd.f32 %v556, %v4053
      %v4055 = vpop.f32.mrf.mxu0
      %v4056 = vadd.f32 %v556, %v4055
      %4057 = vmatmul.bf16.gmra.mxu0 %v1124
      %v4058 = vpop.f32.mrf.mxu0
      %v4059 = vadd.f32 %v556, %v4058
      %v4060 = vpop.f32.mrf.mxu0
      %v4061 = vadd.f32 %v556, %v4060
      %4062 = vmatmul.bf16.gmra.mxu0 %v1127
      %v4063 = vpop.f32.mrf.mxu0
      %v4064 = vadd.f32 %v556, %v4063
      %v4065 = vpop.f32.mrf.mxu0
      %v4066 = vadd.f32 %v556, %v4065
      %4067 = vmatmul.bf16.gmra.mxu0 %v1130
      %v4068 = vpop.f32.mrf.mxu0
      %v4069 = vadd.f32 %v556, %v4068
      %v4070 = vpop.f32.mrf.mxu0
      %v4071 = vadd.f32 %v556, %v4070
      %4072 = vmatmul.bf16.gmra.mxu0 %v1133
      %v4073 = vpop.f32.mrf.mxu0
      %v4074 = vadd.f32 %v556, %v4073
      %v4075 = vpop.f32.mrf.mxu0
      %v4076 = vadd.f32 %v556, %v4075
      %4077 = vmatmul.bf16.gmra.mxu0 %v1136
      %v4078 = vpop.f32.mrf.mxu0
      %v4079 = vadd.f32 %v556, %v4078
      %v4080 = vpop.f32.mrf.mxu0
      %v4081 = vadd.f32 %v556, %v4080
      %4082 = vmatmul.bf16.gmra.mxu0 %v1139
      %v4083 = vpop.f32.mrf.mxu0
      %v4084 = vadd.f32 %v556, %v4083
      %v4085 = vpop.f32.mrf.mxu0
      %v4086 = vadd.f32 %v556, %v4085
      %4087 = vmatmul.bf16.gmra.mxu0 %v1142
      %v4088 = vpop.f32.mrf.mxu0
      %v4089 = vadd.f32 %v556, %v4088
      %v4090 = vpop.f32.mrf.mxu0
      %v4091 = vadd.f32 %v556, %v4090
      %4092 = vmatmul.bf16.gmra.mxu0 %v1145
      %v4093 = vpop.f32.mrf.mxu0
      %v4094 = vadd.f32 %v556, %v4093
      %v4095 = vpop.f32.mrf.mxu0
      %v4096 = vadd.f32 %v556, %v4095
      %4097 = vdwg.mxu0
      %4098 = vmatpush.bf16.msra.mxu0 0
      %4099 = vmatpush.bf16.msra.mxu0 0
      %4100 = vmatpush.bf16.msra.mxu0 0
      %4101 = vmatpush.bf16.msra.mxu0 0
      %4102 = vmatpush.bf16.msra.mxu0 0
      %4103 = vmatpush.bf16.msra.mxu0 %v1245
      %4104 = vmatpush.bf16.msra.mxu0 %v994
      %4105 = vmatpush.bf16.msra.mxu0 %v960
      %4106 = vmatmul.bf16.gmra.mxu0 %v1100
      %v4107 = vpop.f32.mrf.mxu0
      %v4108 = vadd.f32 %v557, %v4107
      %v4109 = vpop.f32.mrf.mxu0
      %v4110 = vadd.f32 %v557, %v4109
      %4111 = vmatmul.bf16.gmra.mxu0 %v1103
      %v4112 = vpop.f32.mrf.mxu0
      %v4113 = vadd.f32 %v557, %v4112
      %v4114 = vpop.f32.mrf.mxu0
      %v4115 = vadd.f32 %v557, %v4114
      %4116 = vmatmul.bf16.gmra.mxu0 %v1106
      %v4117 = vpop.f32.mrf.mxu0
      %v4118 = vadd.f32 %v557, %v4117
      %v4119 = vpop.f32.mrf.mxu0
      %v4120 = vadd.f32 %v557, %v4119
      %4121 = vmatmul.bf16.gmra.mxu0 %v1109
      %v4122 = vpop.f32.mrf.mxu0
      %v4123 = vadd.f32 %v557, %v4122
      %v4124 = vpop.f32.mrf.mxu0
      %v4125 = vadd.f32 %v557, %v4124
      %4126 = vmatmul.bf16.gmra.mxu0 %v1112
      %v4127 = vpop.f32.mrf.mxu0
      %v4128 = vadd.f32 %v557, %v4127
      %v4129 = vpop.f32.mrf.mxu0
      %v4130 = vadd.f32 %v557, %v4129
      %4131 = vmatmul.bf16.gmra.mxu0 %v1115
      %v4132 = vpop.f32.mrf.mxu0
      %v4133 = vadd.f32 %v557, %v4132
      %v4134 = vpop.f32.mrf.mxu0
      %v4135 = vadd.f32 %v557, %v4134
      %4136 = vmatmul.bf16.gmra.mxu0 %v1118
      %v4137 = vpop.f32.mrf.mxu0
      %v4138 = vadd.f32 %v557, %v4137
      %v4139 = vpop.f32.mrf.mxu0
      %v4140 = vadd.f32 %v557, %v4139
      %4141 = vmatmul.bf16.gmra.mxu0 %v1121
      %v4142 = vpop.f32.mrf.mxu0
      %v4143 = vadd.f32 %v557, %v4142
      %v4144 = vpop.f32.mrf.mxu0
      %v4145 = vadd.f32 %v557, %v4144
      %4146 = vmatmul.bf16.gmra.mxu0 %v1124
      %v4147 = vpop.f32.mrf.mxu0
      %v4148 = vadd.f32 %v557, %v4147
      %v4149 = vpop.f32.mrf.mxu0
      %v4150 = vadd.f32 %v557, %v4149
      %4151 = vmatmul.bf16.gmra.mxu0 %v1127
      %v4152 = vpop.f32.mrf.mxu0
      %v4153 = vadd.f32 %v557, %v4152
      %v4154 = vpop.f32.mrf.mxu0
      %v4155 = vadd.f32 %v557, %v4154
      %4156 = vmatmul.bf16.gmra.mxu0 %v1130
      %v4157 = vpop.f32.mrf.mxu0
      %v4158 = vadd.f32 %v557, %v4157
      %v4159 = vpop.f32.mrf.mxu0
      %v4160 = vadd.f32 %v557, %v4159
      %4161 = vmatmul.bf16.gmra.mxu0 %v1133
      %v4162 = vpop.f32.mrf.mxu0
      %v4163 = vadd.f32 %v557, %v4162
      %v4164 = vpop.f32.mrf.mxu0
      %v4165 = vadd.f32 %v557, %v4164
      %4166 = vmatmul.bf16.gmra.mxu0 %v1136
      %v4167 = vpop.f32.mrf.mxu0
      %v4168 = vadd.f32 %v557, %v4167
      %v4169 = vpop.f32.mrf.mxu0
      %v4170 = vadd.f32 %v557, %v4169
      %4171 = vmatmul.bf16.gmra.mxu0 %v1139
      %v4172 = vpop.f32.mrf.mxu0
      %v4173 = vadd.f32 %v557, %v4172
      %v4174 = vpop.f32.mrf.mxu0
      %v4175 = vadd.f32 %v557, %v4174
      %4176 = vmatmul.bf16.gmra.mxu0 %v1142
      %v4177 = vpop.f32.mrf.mxu0
      %v4178 = vadd.f32 %v557, %v4177
      %v4179 = vpop.f32.mrf.mxu0
      %v4180 = vadd.f32 %v557, %v4179
      %4181 = vmatmul.bf16.gmra.mxu0 %v1145
      %v4182 = vpop.f32.mrf.mxu0
      %v4183 = vadd.f32 %v557, %v4182
      %v4184 = vpop.f32.mrf.mxu0
      %v4185 = vadd.f32 %v557, %v4184
      %4186 = vdwg.mxu0
      %4187 = vmatpush.bf16.msra.mxu0 0
      %4188 = vmatpush.bf16.msra.mxu0 0
      %4189 = vmatpush.bf16.msra.mxu0 0
      %4190 = vmatpush.bf16.msra.mxu0 0
      %4191 = vmatpush.bf16.msra.mxu0 0
      %4192 = vmatpush.bf16.msra.mxu0 %v1248
      %4193 = vmatpush.bf16.msra.mxu0 %v995
      %4194 = vmatpush.bf16.msra.mxu0 %v961
      %4195 = vmatmul.bf16.gmra.mxu0 %v1100
      %v4196 = vpop.f32.mrf.mxu0
      %v4197 = vadd.f32 %v558, %v4196
      %v4198 = vpop.f32.mrf.mxu0
      %v4199 = vadd.f32 %v558, %v4198
      %4200 = vmatmul.bf16.gmra.mxu0 %v1103
      %v4201 = vpop.f32.mrf.mxu0
      %v4202 = vadd.f32 %v558, %v4201
      %v4203 = vpop.f32.mrf.mxu0
      %v4204 = vadd.f32 %v558, %v4203
      %4205 = vmatmul.bf16.gmra.mxu0 %v1106
      %v4206 = vpop.f32.mrf.mxu0
      %v4207 = vadd.f32 %v558, %v4206
      %v4208 = vpop.f32.mrf.mxu0
      %v4209 = vadd.f32 %v558, %v4208
      %4210 = vmatmul.bf16.gmra.mxu0 %v1109
      %v4211 = vpop.f32.mrf.mxu0
      %v4212 = vadd.f32 %v558, %v4211
      %v4213 = vpop.f32.mrf.mxu0
      %v4214 = vadd.f32 %v558, %v4213
      %4215 = vmatmul.bf16.gmra.mxu0 %v1112
      %v4216 = vpop.f32.mrf.mxu0
      %v4217 = vadd.f32 %v558, %v4216
      %v4218 = vpop.f32.mrf.mxu0
      %v4219 = vadd.f32 %v558, %v4218
      %4220 = vmatmul.bf16.gmra.mxu0 %v1115
      %v4221 = vpop.f32.mrf.mxu0
      %v4222 = vadd.f32 %v558, %v4221
      %v4223 = vpop.f32.mrf.mxu0
      %v4224 = vadd.f32 %v558, %v4223
      %4225 = vmatmul.bf16.gmra.mxu0 %v1118
      %v4226 = vpop.f32.mrf.mxu0
      %v4227 = vadd.f32 %v558, %v4226
      %v4228 = vpop.f32.mrf.mxu0
      %v4229 = vadd.f32 %v558, %v4228
      %4230 = vmatmul.bf16.gmra.mxu0 %v1121
      %v4231 = vpop.f32.mrf.mxu0
      %v4232 = vadd.f32 %v558, %v4231
      %v4233 = vpop.f32.mrf.mxu0
      %v4234 = vadd.f32 %v558, %v4233
      %4235 = vmatmul.bf16.gmra.mxu0 %v1124
      %v4236 = vpop.f32.mrf.mxu0
      %v4237 = vadd.f32 %v558, %v4236
      %v4238 = vpop.f32.mrf.mxu0
      %v4239 = vadd.f32 %v558, %v4238
      %4240 = vmatmul.bf16.gmra.mxu0 %v1127
      %v4241 = vpop.f32.mrf.mxu0
      %v4242 = vadd.f32 %v558, %v4241
      %v4243 = vpop.f32.mrf.mxu0
      %v4244 = vadd.f32 %v558, %v4243
      %4245 = vmatmul.bf16.gmra.mxu0 %v1130
      %v4246 = vpop.f32.mrf.mxu0
      %v4247 = vadd.f32 %v558, %v4246
      %v4248 = vpop.f32.mrf.mxu0
      %v4249 = vadd.f32 %v558, %v4248
      %4250 = vmatmul.bf16.gmra.mxu0 %v1133
      %v4251 = vpop.f32.mrf.mxu0
      %v4252 = vadd.f32 %v558, %v4251
      %v4253 = vpop.f32.mrf.mxu0
      %v4254 = vadd.f32 %v558, %v4253
      %4255 = vmatmul.bf16.gmra.mxu0 %v1136
      %v4256 = vpop.f32.mrf.mxu0
      %v4257 = vadd.f32 %v558, %v4256
      %v4258 = vpop.f32.mrf.mxu0
      %v4259 = vadd.f32 %v558, %v4258
      %4260 = vmatmul.bf16.gmra.mxu0 %v1139
      %v4261 = vpop.f32.mrf.mxu0
      %v4262 = vadd.f32 %v558, %v4261
      %v4263 = vpop.f32.mrf.mxu0
      %v4264 = vadd.f32 %v558, %v4263
      %4265 = vmatmul.bf16.gmra.mxu0 %v1142
      %v4266 = vpop.f32.mrf.mxu0
      %v4267 = vadd.f32 %v558, %v4266
      %v4268 = vpop.f32.mrf.mxu0
      %v4269 = vadd.f32 %v558, %v4268
      %4270 = vmatmul.bf16.gmra.mxu0 %v1145
      %v4271 = vpop.f32.mrf.mxu0
      %v4272 = vadd.f32 %v558, %v4271
      %v4273 = vpop.f32.mrf.mxu0
      %v4274 = vadd.f32 %v558, %v4273
      %4275 = vdwg.mxu0
      %v4276 = vmax.f32 %v1260, 0.0
      %v4277 = vmax.f32 %v1349, 0.0
      %v4278 = vmax.f32 %v1438, 0.0
      %v4279 = vmax.f32 %v1527, 0.0
      %v4280 = vmax.f32 %v1616, 0.0
      %v4281 = vmax.f32 %v1705, 0.0
      %v4282 = vmax.f32 %v1794, 0.0
      %v4283 = vmax.f32 %v1883, 0.0
      %v4284 = vmax.f32 %v1972, 0.0
      %v4285 = vmax.f32 %v2061, 0.0
      %v4286 = vmax.f32 %v2150, 0.0
      %v4287 = vmax.f32 %v2239, 0.0
      %v4288 = vmax.f32 %v2328, 0.0
      %v4289 = vmax.f32 %v2417, 0.0
      %v4290 = vmax.f32 %v2506, 0.0
      %v4291 = vmax.f32 %v2595, 0.0
      %v4292 = vmax.f32 %v2684, 0.0
      %v4293 = vmax.f32 %v2773, 0.0
      %v4294 = vmax.f32 %v2862, 0.0
      %v4295 = vmax.f32 %v2951, 0.0
      %v4296 = vmax.f32 %v3040, 0.0
      %v4297 = vmax.f32 %v3129, 0.0
      %v4298 = vmax.f32 %v3218, 0.0
      %v4299 = vmax.f32 %v3307, 0.0
      %v4300 = vmax.f32 %v3396, 0.0
      %v4301 = vmax.f32 %v3485, 0.0
      %v4302 = vmax.f32 %v3574, 0.0
      %v4303 = vmax.f32 %v3663, 0.0
      %v4304 = vmax.f32 %v3752, 0.0
      %v4305 = vmax.f32 %v3841, 0.0
      %v4306 = vmax.f32 %v3930, 0.0
      %v4307 = vmax.f32 %v4019, 0.0
      %v4308 = vmax.f32 %v4108, 0.0
      %v4309 = vmax.f32 %v4197, 0.0
      %v4310 = vmax.f32 %v1262, 0.0
      %v4311 = vmax.f32 %v1351, 0.0
      %v4312 = vmax.f32 %v1440, 0.0
      %v4313 = vmax.f32 %v1529, 0.0
      %v4314 = vmax.f32 %v1618, 0.0
      %v4315 = vmax.f32 %v1707, 0.0
      %v4316 = vmax.f32 %v1796, 0.0
      %v4317 = vmax.f32 %v1885, 0.0
      %v4318 = vmax.f32 %v1974, 0.0
      %v4319 = vmax.f32 %v2063, 0.0
      %v4320 = vmax.f32 %v2152, 0.0
      %v4321 = vmax.f32 %v2241, 0.0
      %v4322 = vmax.f32 %v2330, 0.0
      %v4323 = vmax.f32 %v2419, 0.0
      %v4324 = vmax.f32 %v2508, 0.0
      %v4325 = vmax.f32 %v2597, 0.0
      %v4326 = vmax.f32 %v2686, 0.0
      %v4327 = vmax.f32 %v2775, 0.0
      %v4328 = vmax.f32 %v2864, 0.0
      %v4329 = vmax.f32 %v2953, 0.0
      %v4330 = vmax.f32 %v3042, 0.0
      %v4331 = vmax.f32 %v3131, 0.0
      %v4332 = vmax.f32 %v3220, 0.0
      %v4333 = vmax.f32 %v3309, 0.0
      %v4334 = vmax.f32 %v3398, 0.0
      %v4335 = vmax.f32 %v3487, 0.0
      %v4336 = vmax.f32 %v3576, 0.0
      %v4337 = vmax.f32 %v3665, 0.0
      %v4338 = vmax.f32 %v3754, 0.0
      %v4339 = vmax.f32 %v3843, 0.0
      %v4340 = vmax.f32 %v3932, 0.0
      %v4341 = vmax.f32 %v4021, 0.0
      %v4342 = vmax.f32 %v4110, 0.0
      %v4343 = vmax.f32 %v4199, 0.0
      %v4344 = vmax.f32 %v1265, 0.0
      %v4345 = vmax.f32 %v1354, 0.0
      %v4346 = vmax.f32 %v1443, 0.0
      %v4347 = vmax.f32 %v1532, 0.0
      %v4348 = vmax.f32 %v1621, 0.0
      %v4349 = vmax.f32 %v1710, 0.0
      %v4350 = vmax.f32 %v1799, 0.0
      %v4351 = vmax.f32 %v1888, 0.0
      %v4352 = vmax.f32 %v1977, 0.0
      %v4353 = vmax.f32 %v2066, 0.0
      %v4354 = vmax.f32 %v2155, 0.0
      %v4355 = vmax.f32 %v2244, 0.0
      %v4356 = vmax.f32 %v2333, 0.0
      %v4357 = vmax.f32 %v2422, 0.0
      %v4358 = vmax.f32 %v2511, 0.0
      %v4359 = vmax.f32 %v2600, 0.0
      %v4360 = vmax.f32 %v2689, 0.0
      %v4361 = vmax.f32 %v2778, 0.0
      %v4362 = vmax.f32 %v2867, 0.0
      %v4363 = vmax.f32 %v2956, 0.0
      %v4364 = vmax.f32 %v3045, 0.0
      %v4365 = vmax.f32 %v3134, 0.0
      %v4366 = vmax.f32 %v3223, 0.0
      %v4367 = vmax.f32 %v3312, 0.0
      %v4368 = vmax.f32 %v3401, 0.0
      %v4369 = vmax.f32 %v3490, 0.0
      %v4370 = vmax.f32 %v3579, 0.0
      %v4371 = vmax.f32 %v3668, 0.0
      %v4372 = vmax.f32 %v3757, 0.0
      %v4373 = vmax.f32 %v3846, 0.0
      %v4374 = vmax.f32 %v3935, 0.0
      %v4375 = vmax.f32 %v4024, 0.0
      %v4376 = vmax.f32 %v4113, 0.0
      %v4377 = vmax.f32 %v4202, 0.0
      %v4378 = vmax.f32 %v1267, 0.0
      %v4379 = vmax.f32 %v1356, 0.0
      %v4380 = vmax.f32 %v1445, 0.0
      %v4381 = vmax.f32 %v1534, 0.0
      %v4382 = vmax.f32 %v1623, 0.0
      %v4383 = vmax.f32 %v1712, 0.0
      %v4384 = vmax.f32 %v1801, 0.0
      %v4385 = vmax.f32 %v1890, 0.0
      %v4386 = vmax.f32 %v1979, 0.0
      %v4387 = vmax.f32 %v2068, 0.0
      %v4388 = vmax.f32 %v2157, 0.0
      %v4389 = vmax.f32 %v2246, 0.0
      %v4390 = vmax.f32 %v2335, 0.0
      %v4391 = vmax.f32 %v2424, 0.0
      %v4392 = vmax.f32 %v2513, 0.0
      %v4393 = vmax.f32 %v2602, 0.0
      %v4394 = vmax.f32 %v2691, 0.0
      %v4395 = vmax.f32 %v2780, 0.0
      %v4396 = vmax.f32 %v2869, 0.0
      %v4397 = vmax.f32 %v2958, 0.0
      %v4398 = vmax.f32 %v3047, 0.0
      %v4399 = vmax.f32 %v3136, 0.0
      %v4400 = vmax.f32 %v3225, 0.0
      %v4401 = vmax.f32 %v3314, 0.0
      %v4402 = vmax.f32 %v3403, 0.0
      %v4403 = vmax.f32 %v3492, 0.0
      %v4404 = vmax.f32 %v3581, 0.0
      %v4405 = vmax.f32 %v3670, 0.0
      %v4406 = vmax.f32 %v3759, 0.0
      %v4407 = vmax.f32 %v3848, 0.0
      %v4408 = vmax.f32 %v3937, 0.0
      %v4409 = vmax.f32 %v4026, 0.0
      %v4410 = vmax.f32 %v4115, 0.0
      %v4411 = vmax.f32 %v4204, 0.0
      %v4412 = vmax.f32 %v1270, 0.0
      %v4413 = vmax.f32 %v1359, 0.0
      %v4414 = vmax.f32 %v1448, 0.0
      %v4415 = vmax.f32 %v1537, 0.0
      %v4416 = vmax.f32 %v1626, 0.0
      %v4417 = vmax.f32 %v1715, 0.0
      %v4418 = vmax.f32 %v1804, 0.0
      %v4419 = vmax.f32 %v1893, 0.0
      %v4420 = vmax.f32 %v1982, 0.0
      %v4421 = vmax.f32 %v2071, 0.0
      %v4422 = vmax.f32 %v2160, 0.0
      %v4423 = vmax.f32 %v2249, 0.0
      %v4424 = vmax.f32 %v2338, 0.0
      %v4425 = vmax.f32 %v2427, 0.0
      %v4426 = vmax.f32 %v2516, 0.0
      %v4427 = vmax.f32 %v2605, 0.0
      %v4428 = vmax.f32 %v2694, 0.0
      %v4429 = vmax.f32 %v2783, 0.0
      %v4430 = vmax.f32 %v2872, 0.0
      %v4431 = vmax.f32 %v2961, 0.0
      %v4432 = vmax.f32 %v3050, 0.0
      %v4433 = vmax.f32 %v3139, 0.0
      %v4434 = vmax.f32 %v3228, 0.0
      %v4435 = vmax.f32 %v3317, 0.0
      %v4436 = vmax.f32 %v3406, 0.0
      %v4437 = vmax.f32 %v3495, 0.0
      %v4438 = vmax.f32 %v3584, 0.0
      %v4439 = vmax.f32 %v3673, 0.0
      %v4440 = vmax.f32 %v3762, 0.0
      %v4441 = vmax.f32 %v3851, 0.0
      %v4442 = vmax.f32 %v3940, 0.0
      %v4443 = vmax.f32 %v4029, 0.0
      %v4444 = vmax.f32 %v4118, 0.0
      %v4445 = vmax.f32 %v4207, 0.0
      %v4446 = vmax.f32 %v1272, 0.0
      %v4447 = vmax.f32 %v1361, 0.0
      %v4448 = vmax.f32 %v1450, 0.0
      %v4449 = vmax.f32 %v1539, 0.0
      %v4450 = vmax.f32 %v1628, 0.0
      %v4451 = vmax.f32 %v1717, 0.0
      %v4452 = vmax.f32 %v1806, 0.0
      %v4453 = vmax.f32 %v1895, 0.0
      %v4454 = vmax.f32 %v1984, 0.0
      %v4455 = vmax.f32 %v2073, 0.0
      %v4456 = vmax.f32 %v2162, 0.0
      %v4457 = vmax.f32 %v2251, 0.0
      %v4458 = vmax.f32 %v2340, 0.0
      %v4459 = vmax.f32 %v2429, 0.0
      %v4460 = vmax.f32 %v2518, 0.0
      %v4461 = vmax.f32 %v2607, 0.0
      %v4462 = vmax.f32 %v2696, 0.0
      %v4463 = vmax.f32 %v2785, 0.0
      %v4464 = vmax.f32 %v2874, 0.0
      %v4465 = vmax.f32 %v2963, 0.0
      %v4466 = vmax.f32 %v3052, 0.0
      %v4467 = vmax.f32 %v3141, 0.0
      %v4468 = vmax.f32 %v3230, 0.0
      %v4469 = vmax.f32 %v3319, 0.0
      %v4470 = vmax.f32 %v3408, 0.0
      %v4471 = vmax.f32 %v3497, 0.0
      %v4472 = vmax.f32 %v3586, 0.0
      %v4473 = vmax.f32 %v3675, 0.0
      %v4474 = vmax.f32 %v3764, 0.0
      %v4475 = vmax.f32 %v3853, 0.0
      %v4476 = vmax.f32 %v3942, 0.0
      %v4477 = vmax.f32 %v4031, 0.0
      %v4478 = vmax.f32 %v4120, 0.0
      %v4479 = vmax.f32 %v4209, 0.0
      %v4480 = vmax.f32 %v1275, 0.0
      %v4481 = vmax.f32 %v1364, 0.0
      %v4482 = vmax.f32 %v1453, 0.0
      %v4483 = vmax.f32 %v1542, 0.0
      %v4484 = vmax.f32 %v1631, 0.0
      %v4485 = vmax.f32 %v1720, 0.0
      %v4486 = vmax.f32 %v1809, 0.0
      %v4487 = vmax.f32 %v1898, 0.0
      %v4488 = vmax.f32 %v1987, 0.0
      %v4489 = vmax.f32 %v2076, 0.0
      %v4490 = vmax.f32 %v2165, 0.0
      %v4491 = vmax.f32 %v2254, 0.0
      %v4492 = vmax.f32 %v2343, 0.0
      %v4493 = vmax.f32 %v2432, 0.0
      %v4494 = vmax.f32 %v2521, 0.0
      %v4495 = vmax.f32 %v2610, 0.0
      %v4496 = vmax.f32 %v2699, 0.0
      %v4497 = vmax.f32 %v2788, 0.0
      %v4498 = vmax.f32 %v2877, 0.0
      %v4499 = vmax.f32 %v2966, 0.0
      %v4500 = vmax.f32 %v3055, 0.0
      %v4501 = vmax.f32 %v3144, 0.0
      %v4502 = vmax.f32 %v3233, 0.0
      %v4503 = vmax.f32 %v3322, 0.0
      %v4504 = vmax.f32 %v3411, 0.0
      %v4505 = vmax.f32 %v3500, 0.0
      %v4506 = vmax.f32 %v3589, 0.0
      %v4507 = vmax.f32 %v3678, 0.0
      %v4508 = vmax.f32 %v3767, 0.0
      %v4509 = vmax.f32 %v3856, 0.0
      %v4510 = vmax.f32 %v3945, 0.0
      %v4511 = vmax.f32 %v4034, 0.0
      %v4512 = vmax.f32 %v4123, 0.0
      %v4513 = vmax.f32 %v4212, 0.0
      %v4514 = vmax.f32 %v1277, 0.0
      %v4515 = vmax.f32 %v1366, 0.0
      %v4516 = vmax.f32 %v1455, 0.0
      %v4517 = vmax.f32 %v1544, 0.0
      %v4518 = vmax.f32 %v1633, 0.0
      %v4519 = vmax.f32 %v1722, 0.0
      %v4520 = vmax.f32 %v1811, 0.0
      %v4521 = vmax.f32 %v1900, 0.0
      %v4522 = vmax.f32 %v1989, 0.0
      %v4523 = vmax.f32 %v2078, 0.0
      %v4524 = vmax.f32 %v2167, 0.0
      %v4525 = vmax.f32 %v2256, 0.0
      %v4526 = vmax.f32 %v2345, 0.0
      %v4527 = vmax.f32 %v2434, 0.0
      %v4528 = vmax.f32 %v2523, 0.0
      %v4529 = vmax.f32 %v2612, 0.0
      %v4530 = vmax.f32 %v2701, 0.0
      %v4531 = vmax.f32 %v2790, 0.0
      %v4532 = vmax.f32 %v2879, 0.0
      %v4533 = vmax.f32 %v2968, 0.0
      %v4534 = vmax.f32 %v3057, 0.0
      %v4535 = vmax.f32 %v3146, 0.0
      %v4536 = vmax.f32 %v3235, 0.0
      %v4537 = vmax.f32 %v3324, 0.0
      %v4538 = vmax.f32 %v3413, 0.0
      %v4539 = vmax.f32 %v3502, 0.0
      %v4540 = vmax.f32 %v3591, 0.0
      %v4541 = vmax.f32 %v3680, 0.0
      %v4542 = vmax.f32 %v3769, 0.0
      %v4543 = vmax.f32 %v3858, 0.0
      %v4544 = vmax.f32 %v3947, 0.0
      %v4545 = vmax.f32 %v4036, 0.0
      %v4546 = vmax.f32 %v4125, 0.0
      %v4547 = vmax.f32 %v4214, 0.0
      %v4548 = vmax.f32 %v1280, 0.0
      %v4549 = vmax.f32 %v1369, 0.0
      %v4550 = vmax.f32 %v1458, 0.0
      %v4551 = vmax.f32 %v1547, 0.0
      %v4552 = vmax.f32 %v1636, 0.0
      %v4553 = vmax.f32 %v1725, 0.0
      %v4554 = vmax.f32 %v1814, 0.0
      %v4555 = vmax.f32 %v1903, 0.0
      %v4556 = vmax.f32 %v1992, 0.0
      %v4557 = vmax.f32 %v2081, 0.0
      %v4558 = vmax.f32 %v2170, 0.0
      %v4559 = vmax.f32 %v2259, 0.0
      %v4560 = vmax.f32 %v2348, 0.0
      %v4561 = vmax.f32 %v2437, 0.0
      %v4562 = vmax.f32 %v2526, 0.0
      %v4563 = vmax.f32 %v2615, 0.0
      %v4564 = vmax.f32 %v2704, 0.0
      %v4565 = vmax.f32 %v2793, 0.0
      %v4566 = vmax.f32 %v2882, 0.0
      %v4567 = vmax.f32 %v2971, 0.0
      %v4568 = vmax.f32 %v3060, 0.0
      %v4569 = vmax.f32 %v3149, 0.0
      %v4570 = vmax.f32 %v3238, 0.0
      %v4571 = vmax.f32 %v3327, 0.0
      %v4572 = vmax.f32 %v3416, 0.0
      %v4573 = vmax.f32 %v3505, 0.0
      %v4574 = vmax.f32 %v3594, 0.0
      %v4575 = vmax.f32 %v3683, 0.0
      %v4576 = vmax.f32 %v3772, 0.0
      %v4577 = vmax.f32 %v3861, 0.0
      %v4578 = vmax.f32 %v3950, 0.0
      %v4579 = vmax.f32 %v4039, 0.0
      %v4580 = vmax.f32 %v4128, 0.0
      %v4581 = vmax.f32 %v4217, 0.0
      %v4582 = vmax.f32 %v1282, 0.0
      %v4583 = vmax.f32 %v1371, 0.0
      %v4584 = vmax.f32 %v1460, 0.0
      %v4585 = vmax.f32 %v1549, 0.0
      %v4586 = vmax.f32 %v1638, 0.0
      %v4587 = vmax.f32 %v1727, 0.0
      %v4588 = vmax.f32 %v1816, 0.0
      %v4589 = vmax.f32 %v1905, 0.0
      %v4590 = vmax.f32 %v1994, 0.0
      %v4591 = vmax.f32 %v2083, 0.0
      %v4592 = vmax.f32 %v2172, 0.0
      %v4593 = vmax.f32 %v2261, 0.0
      %v4594 = vmax.f32 %v2350, 0.0
      %v4595 = vmax.f32 %v2439, 0.0
      %v4596 = vmax.f32 %v2528, 0.0
      %v4597 = vmax.f32 %v2617, 0.0
      %v4598 = vmax.f32 %v2706, 0.0
      %v4599 = vmax.f32 %v2795, 0.0
      %v4600 = vmax.f32 %v2884, 0.0
      %v4601 = vmax.f32 %v2973, 0.0
      %v4602 = vmax.f32 %v3062, 0.0
      %v4603 = vmax.f32 %v3151, 0.0
      %v4604 = vmax.f32 %v3240, 0.0
      %v4605 = vmax.f32 %v3329, 0.0
      %v4606 = vmax.f32 %v3418, 0.0
      %v4607 = vmax.f32 %v3507, 0.0
      %v4608 = vmax.f32 %v3596, 0.0
      %v4609 = vmax.f32 %v3685, 0.0
      %v4610 = vmax.f32 %v3774, 0.0
      %v4611 = vmax.f32 %v3863, 0.0
      %v4612 = vmax.f32 %v3952, 0.0
      %v4613 = vmax.f32 %v4041, 0.0
      %v4614 = vmax.f32 %v4130, 0.0
      %v4615 = vmax.f32 %v4219, 0.0
      %v4616 = vmax.f32 %v1285, 0.0
      %v4617 = vmax.f32 %v1374, 0.0
      %v4618 = vmax.f32 %v1463, 0.0
      %v4619 = vmax.f32 %v1552, 0.0
      %v4620 = vmax.f32 %v1641, 0.0
      %v4621 = vmax.f32 %v1730, 0.0
      %v4622 = vmax.f32 %v1819, 0.0
      %v4623 = vmax.f32 %v1908, 0.0
      %v4624 = vmax.f32 %v1997, 0.0
      %v4625 = vmax.f32 %v2086, 0.0
      %v4626 = vmax.f32 %v2175, 0.0
      %v4627 = vmax.f32 %v2264, 0.0
      %v4628 = vmax.f32 %v2353, 0.0
      %v4629 = vmax.f32 %v2442, 0.0
      %v4630 = vmax.f32 %v2531, 0.0
      %v4631 = vmax.f32 %v2620, 0.0
      %v4632 = vmax.f32 %v2709, 0.0
      %v4633 = vmax.f32 %v2798, 0.0
      %v4634 = vmax.f32 %v2887, 0.0
      %v4635 = vmax.f32 %v2976, 0.0
      %v4636 = vmax.f32 %v3065, 0.0
      %v4637 = vmax.f32 %v3154, 0.0
      %v4638 = vmax.f32 %v3243, 0.0
      %v4639 = vmax.f32 %v3332, 0.0
      %v4640 = vmax.f32 %v3421, 0.0
      %v4641 = vmax.f32 %v3510, 0.0
      %v4642 = vmax.f32 %v3599, 0.0
      %v4643 = vmax.f32 %v3688, 0.0
      %v4644 = vmax.f32 %v3777, 0.0
      %v4645 = vmax.f32 %v3866, 0.0
      %v4646 = vmax.f32 %v3955, 0.0
      %v4647 = vmax.f32 %v4044, 0.0
      %v4648 = vmax.f32 %v4133, 0.0
      %v4649 = vmax.f32 %v4222, 0.0
      %v4650 = vmax.f32 %v1287, 0.0
      %v4651 = vmax.f32 %v1376, 0.0
      %v4652 = vmax.f32 %v1465, 0.0
      %v4653 = vmax.f32 %v1554, 0.0
      %v4654 = vmax.f32 %v1643, 0.0
      %v4655 = vmax.f32 %v1732, 0.0
      %v4656 = vmax.f32 %v1821, 0.0
      %v4657 = vmax.f32 %v1910, 0.0
      %v4658 = vmax.f32 %v1999, 0.0
      %v4659 = vmax.f32 %v2088, 0.0
      %v4660 = vmax.f32 %v2177, 0.0
      %v4661 = vmax.f32 %v2266, 0.0
      %v4662 = vmax.f32 %v2355, 0.0
      %v4663 = vmax.f32 %v2444, 0.0
      %v4664 = vmax.f32 %v2533, 0.0
      %v4665 = vmax.f32 %v2622, 0.0
      %v4666 = vmax.f32 %v2711, 0.0
      %v4667 = vmax.f32 %v2800, 0.0
      %v4668 = vmax.f32 %v2889, 0.0
      %v4669 = vmax.f32 %v2978, 0.0
      %v4670 = vmax.f32 %v3067, 0.0
      %v4671 = vmax.f32 %v3156, 0.0
      %v4672 = vmax.f32 %v3245, 0.0
      %v4673 = vmax.f32 %v3334, 0.0
      %v4674 = vmax.f32 %v3423, 0.0
      %v4675 = vmax.f32 %v3512, 0.0
      %v4676 = vmax.f32 %v3601, 0.0
      %v4677 = vmax.f32 %v3690, 0.0
      %v4678 = vmax.f32 %v3779, 0.0
      %v4679 = vmax.f32 %v3868, 0.0
      %v4680 = vmax.f32 %v3957, 0.0
      %v4681 = vmax.f32 %v4046, 0.0
      %v4682 = vmax.f32 %v4135, 0.0
      %v4683 = vmax.f32 %v4224, 0.0
      %v4684 = vmax.f32 %v1290, 0.0
      %v4685 = vmax.f32 %v1379, 0.0
      %v4686 = vmax.f32 %v1468, 0.0
      %v4687 = vmax.f32 %v1557, 0.0
      %v4688 = vmax.f32 %v1646, 0.0
      %v4689 = vmax.f32 %v1735, 0.0
      %v4690 = vmax.f32 %v1824, 0.0
      %v4691 = vmax.f32 %v1913, 0.0
      %v4692 = vmax.f32 %v2002, 0.0
      %v4693 = vmax.f32 %v2091, 0.0
      %v4694 = vmax.f32 %v2180, 0.0
      %v4695 = vmax.f32 %v2269, 0.0
      %v4696 = vmax.f32 %v2358, 0.0
      %v4697 = vmax.f32 %v2447, 0.0
      %v4698 = vmax.f32 %v2536, 0.0
      %v4699 = vmax.f32 %v2625, 0.0
      %v4700 = vmax.f32 %v2714, 0.0
      %v4701 = vmax.f32 %v2803, 0.0
      %v4702 = vmax.f32 %v2892, 0.0
      %v4703 = vmax.f32 %v2981, 0.0
      %v4704 = vmax.f32 %v3070, 0.0
      %v4705 = vmax.f32 %v3159, 0.0
      %v4706 = vmax.f32 %v3248, 0.0
      %v4707 = vmax.f32 %v3337, 0.0
      %v4708 = vmax.f32 %v3426, 0.0
      %v4709 = vmax.f32 %v3515, 0.0
      %v4710 = vmax.f32 %v3604, 0.0
      %v4711 = vmax.f32 %v3693, 0.0
      %v4712 = vmax.f32 %v3782, 0.0
      %v4713 = vmax.f32 %v3871, 0.0
      %v4714 = vmax.f32 %v3960, 0.0
      %v4715 = vmax.f32 %v4049, 0.0
      %v4716 = vmax.f32 %v4138, 0.0
      %v4717 = vmax.f32 %v4227, 0.0
      %v4718 = vmax.f32 %v1292, 0.0
      %v4719 = vmax.f32 %v1381, 0.0
      %v4720 = vmax.f32 %v1470, 0.0
      %v4721 = vmax.f32 %v1559, 0.0
      %v4722 = vmax.f32 %v1648, 0.0
      %v4723 = vmax.f32 %v1737, 0.0
      %v4724 = vmax.f32 %v1826, 0.0
      %v4725 = vmax.f32 %v1915, 0.0
      %v4726 = vmax.f32 %v2004, 0.0
      %v4727 = vmax.f32 %v2093, 0.0
      %v4728 = vmax.f32 %v2182, 0.0
      %v4729 = vmax.f32 %v2271, 0.0
      %v4730 = vmax.f32 %v2360, 0.0
      %v4731 = vmax.f32 %v2449, 0.0
      %v4732 = vmax.f32 %v2538, 0.0
      %v4733 = vmax.f32 %v2627, 0.0
      %v4734 = vmax.f32 %v2716, 0.0
      %v4735 = vmax.f32 %v2805, 0.0
      %v4736 = vmax.f32 %v2894, 0.0
      %v4737 = vmax.f32 %v2983, 0.0
      %v4738 = vmax.f32 %v3072, 0.0
      %v4739 = vmax.f32 %v3161, 0.0
      %v4740 = vmax.f32 %v3250, 0.0
      %v4741 = vmax.f32 %v3339, 0.0
      %v4742 = vmax.f32 %v3428, 0.0
      %v4743 = vmax.f32 %v3517, 0.0
      %v4744 = vmax.f32 %v3606, 0.0
      %v4745 = vmax.f32 %v3695, 0.0
      %v4746 = vmax.f32 %v3784, 0.0
      %v4747 = vmax.f32 %v3873, 0.0
      %v4748 = vmax.f32 %v3962, 0.0
      %v4749 = vmax.f32 %v4051, 0.0
      %v4750 = vmax.f32 %v4140, 0.0
      %v4751 = vmax.f32 %v4229, 0.0
      %v4752 = vmax.f32 %v1295, 0.0
      %v4753 = vmax.f32 %v1384, 0.0
      %v4754 = vmax.f32 %v1473, 0.0
      %v4755 = vmax.f32 %v1562, 0.0
      %v4756 = vmax.f32 %v1651, 0.0
      %v4757 = vmax.f32 %v1740, 0.0
      %v4758 = vmax.f32 %v1829, 0.0
      %v4759 = vmax.f32 %v1918, 0.0
      %v4760 = vmax.f32 %v2007, 0.0
      %v4761 = vmax.f32 %v2096, 0.0
      %v4762 = vmax.f32 %v2185, 0.0
      %v4763 = vmax.f32 %v2274, 0.0
      %v4764 = vmax.f32 %v2363, 0.0
      %v4765 = vmax.f32 %v2452, 0.0
      %v4766 = vmax.f32 %v2541, 0.0
      %v4767 = vmax.f32 %v2630, 0.0
      %v4768 = vmax.f32 %v2719, 0.0
      %v4769 = vmax.f32 %v2808, 0.0
      %v4770 = vmax.f32 %v2897, 0.0
      %v4771 = vmax.f32 %v2986, 0.0
      %v4772 = vmax.f32 %v3075, 0.0
      %v4773 = vmax.f32 %v3164, 0.0
      %v4774 = vmax.f32 %v3253, 0.0
      %v4775 = vmax.f32 %v3342, 0.0
      %v4776 = vmax.f32 %v3431, 0.0
      %v4777 = vmax.f32 %v3520, 0.0
      %v4778 = vmax.f32 %v3609, 0.0
      %v4779 = vmax.f32 %v3698, 0.0
      %v4780 = vmax.f32 %v3787, 0.0
      %v4781 = vmax.f32 %v3876, 0.0
      %v4782 = vmax.f32 %v3965, 0.0
      %v4783 = vmax.f32 %v4054, 0.0
      %v4784 = vmax.f32 %v4143, 0.0
      %v4785 = vmax.f32 %v4232, 0.0
      %v4786 = vmax.f32 %v1297, 0.0
      %v4787 = vmax.f32 %v1386, 0.0
      %v4788 = vmax.f32 %v1475, 0.0
      %v4789 = vmax.f32 %v1564, 0.0
      %v4790 = vmax.f32 %v1653, 0.0
      %v4791 = vmax.f32 %v1742, 0.0
      %v4792 = vmax.f32 %v1831, 0.0
      %v4793 = vmax.f32 %v1920, 0.0
      %v4794 = vmax.f32 %v2009, 0.0
      %v4795 = vmax.f32 %v2098, 0.0
      %v4796 = vmax.f32 %v2187, 0.0
      %v4797 = vmax.f32 %v2276, 0.0
      %v4798 = vmax.f32 %v2365, 0.0
      %v4799 = vmax.f32 %v2454, 0.0
      %v4800 = vmax.f32 %v2543, 0.0
      %v4801 = vmax.f32 %v2632, 0.0
      %v4802 = vmax.f32 %v2721, 0.0
      %v4803 = vmax.f32 %v2810, 0.0
      %v4804 = vmax.f32 %v2899, 0.0
      %v4805 = vmax.f32 %v2988, 0.0
      %v4806 = vmax.f32 %v3077, 0.0
      %v4807 = vmax.f32 %v3166, 0.0
      %v4808 = vmax.f32 %v3255, 0.0
      %v4809 = vmax.f32 %v3344, 0.0
      %v4810 = vmax.f32 %v3433, 0.0
      %v4811 = vmax.f32 %v3522, 0.0
      %v4812 = vmax.f32 %v3611, 0.0
      %v4813 = vmax.f32 %v3700, 0.0
      %v4814 = vmax.f32 %v3789, 0.0
      %v4815 = vmax.f32 %v3878, 0.0
      %v4816 = vmax.f32 %v3967, 0.0
      %v4817 = vmax.f32 %v4056, 0.0
      %v4818 = vmax.f32 %v4145, 0.0
      %v4819 = vmax.f32 %v4234, 0.0
      %v4820 = vmax.f32 %v1300, 0.0
      %v4821 = vmax.f32 %v1389, 0.0
      %v4822 = vmax.f32 %v1478, 0.0
      %v4823 = vmax.f32 %v1567, 0.0
      %v4824 = vmax.f32 %v1656, 0.0
      %v4825 = vmax.f32 %v1745, 0.0
      %v4826 = vmax.f32 %v1834, 0.0
      %v4827 = vmax.f32 %v1923, 0.0
      %v4828 = vmax.f32 %v2012, 0.0
      %v4829 = vmax.f32 %v2101, 0.0
      %v4830 = vmax.f32 %v2190, 0.0
      %v4831 = vmax.f32 %v2279, 0.0
      %v4832 = vmax.f32 %v2368, 0.0
      %v4833 = vmax.f32 %v2457, 0.0
      %v4834 = vmax.f32 %v2546, 0.0
      %v4835 = vmax.f32 %v2635, 0.0
      %v4836 = vmax.f32 %v2724, 0.0
      %v4837 = vmax.f32 %v2813, 0.0
      %v4838 = vmax.f32 %v2902, 0.0
      %v4839 = vmax.f32 %v2991, 0.0
      %v4840 = vmax.f32 %v3080, 0.0
      %v4841 = vmax.f32 %v3169, 0.0
      %v4842 = vmax.f32 %v3258, 0.0
      %v4843 = vmax.f32 %v3347, 0.0
      %v4844 = vmax.f32 %v3436, 0.0
      %v4845 = vmax.f32 %v3525, 0.0
      %v4846 = vmax.f32 %v3614, 0.0
      %v4847 = vmax.f32 %v3703, 0.0
      %v4848 = vmax.f32 %v3792, 0.0
      %v4849 = vmax.f32 %v3881, 0.0
      %v4850 = vmax.f32 %v3970, 0.0
      %v4851 = vmax.f32 %v4059, 0.0
      %v4852 = vmax.f32 %v4148, 0.0
      %v4853 = vmax.f32 %v4237, 0.0
      %v4854 = vmax.f32 %v1302, 0.0
      %v4855 = vmax.f32 %v1391, 0.0
      %v4856 = vmax.f32 %v1480, 0.0
      %v4857 = vmax.f32 %v1569, 0.0
      %v4858 = vmax.f32 %v1658, 0.0
      %v4859 = vmax.f32 %v1747, 0.0
      %v4860 = vmax.f32 %v1836, 0.0
      %v4861 = vmax.f32 %v1925, 0.0
      %v4862 = vmax.f32 %v2014, 0.0
      %v4863 = vmax.f32 %v2103, 0.0
      %v4864 = vmax.f32 %v2192, 0.0
      %v4865 = vmax.f32 %v2281, 0.0
      %v4866 = vmax.f32 %v2370, 0.0
      %v4867 = vmax.f32 %v2459, 0.0
      %v4868 = vmax.f32 %v2548, 0.0
      %v4869 = vmax.f32 %v2637, 0.0
      %v4870 = vmax.f32 %v2726, 0.0
      %v4871 = vmax.f32 %v2815, 0.0
      %v4872 = vmax.f32 %v2904, 0.0
      %v4873 = vmax.f32 %v2993, 0.0
      %v4874 = vmax.f32 %v3082, 0.0
      %v4875 = vmax.f32 %v3171, 0.0
      %v4876 = vmax.f32 %v3260, 0.0
      %v4877 = vmax.f32 %v3349, 0.0
      %v4878 = vmax.f32 %v3438, 0.0
      %v4879 = vmax.f32 %v3527, 0.0
      %v4880 = vmax.f32 %v3616, 0.0
      %v4881 = vmax.f32 %v3705, 0.0
      %v4882 = vmax.f32 %v3794, 0.0
      %v4883 = vmax.f32 %v3883, 0.0
      %v4884 = vmax.f32 %v3972, 0.0
      %v4885 = vmax.f32 %v4061, 0.0
      %v4886 = vmax.f32 %v4150, 0.0
      %v4887 = vmax.f32 %v4239, 0.0
      %v4888 = vmax.f32 %v1305, 0.0
      %v4889 = vmax.f32 %v1394, 0.0
      %v4890 = vmax.f32 %v1483, 0.0
      %v4891 = vmax.f32 %v1572, 0.0
      %v4892 = vmax.f32 %v1661, 0.0
      %v4893 = vmax.f32 %v1750, 0.0
      %v4894 = vmax.f32 %v1839, 0.0
      %v4895 = vmax.f32 %v1928, 0.0
      %v4896 = vmax.f32 %v2017, 0.0
      %v4897 = vmax.f32 %v2106, 0.0
      %v4898 = vmax.f32 %v2195, 0.0
      %v4899 = vmax.f32 %v2284, 0.0
      %v4900 = vmax.f32 %v2373, 0.0
      %v4901 = vmax.f32 %v2462, 0.0
      %v4902 = vmax.f32 %v2551, 0.0
      %v4903 = vmax.f32 %v2640, 0.0
      %v4904 = vmax.f32 %v2729, 0.0
      %v4905 = vmax.f32 %v2818, 0.0
      %v4906 = vmax.f32 %v2907, 0.0
      %v4907 = vmax.f32 %v2996, 0.0
      %v4908 = vmax.f32 %v3085, 0.0
      %v4909 = vmax.f32 %v3174, 0.0
      %v4910 = vmax.f32 %v3263, 0.0
      %v4911 = vmax.f32 %v3352, 0.0
      %v4912 = vmax.f32 %v3441, 0.0
      %v4913 = vmax.f32 %v3530, 0.0
      %v4914 = vmax.f32 %v3619, 0.0
      %v4915 = vmax.f32 %v3708, 0.0
      %v4916 = vmax.f32 %v3797, 0.0
      %v4917 = vmax.f32 %v3886, 0.0
      %v4918 = vmax.f32 %v3975, 0.0
      %v4919 = vmax.f32 %v4064, 0.0
      %v4920 = vmax.f32 %v4153, 0.0
      %v4921 = vmax.f32 %v4242, 0.0
      %v4922 = vmax.f32 %v1307, 0.0
      %v4923 = vmax.f32 %v1396, 0.0
      %v4924 = vmax.f32 %v1485, 0.0
      %v4925 = vmax.f32 %v1574, 0.0
      %v4926 = vmax.f32 %v1663, 0.0
      %v4927 = vmax.f32 %v1752, 0.0
      %v4928 = vmax.f32 %v1841, 0.0
      %v4929 = vmax.f32 %v1930, 0.0
      %v4930 = vmax.f32 %v2019, 0.0
      %v4931 = vmax.f32 %v2108, 0.0
      %v4932 = vmax.f32 %v2197, 0.0
      %v4933 = vmax.f32 %v2286, 0.0
      %v4934 = vmax.f32 %v2375, 0.0
      %v4935 = vmax.f32 %v2464, 0.0
      %v4936 = vmax.f32 %v2553, 0.0
      %v4937 = vmax.f32 %v2642, 0.0
      %v4938 = vmax.f32 %v2731, 0.0
      %v4939 = vmax.f32 %v2820, 0.0
      %v4940 = vmax.f32 %v2909, 0.0
      %v4941 = vmax.f32 %v2998, 0.0
      %v4942 = vmax.f32 %v3087, 0.0
      %v4943 = vmax.f32 %v3176, 0.0
      %v4944 = vmax.f32 %v3265, 0.0
      %v4945 = vmax.f32 %v3354, 0.0
      %v4946 = vmax.f32 %v3443, 0.0
      %v4947 = vmax.f32 %v3532, 0.0
      %v4948 = vmax.f32 %v3621, 0.0
      %v4949 = vmax.f32 %v3710, 0.0
      %v4950 = vmax.f32 %v3799, 0.0
      %v4951 = vmax.f32 %v3888, 0.0
      %v4952 = vmax.f32 %v3977, 0.0
      %v4953 = vmax.f32 %v4066, 0.0
      %v4954 = vmax.f32 %v4155, 0.0
      %v4955 = vmax.f32 %v4244, 0.0
      %v4956 = vmax.f32 %v1310, 0.0
      %v4957 = vmax.f32 %v1399, 0.0
      %v4958 = vmax.f32 %v1488, 0.0
      %v4959 = vmax.f32 %v1577, 0.0
      %v4960 = vmax.f32 %v1666, 0.0
      %v4961 = vmax.f32 %v1755, 0.0
      %v4962 = vmax.f32 %v1844, 0.0
      %v4963 = vmax.f32 %v1933, 0.0
      %v4964 = vmax.f32 %v2022, 0.0
      %v4965 = vmax.f32 %v2111, 0.0
      %v4966 = vmax.f32 %v2200, 0.0
      %v4967 = vmax.f32 %v2289, 0.0
      %v4968 = vmax.f32 %v2378, 0.0
      %v4969 = vmax.f32 %v2467, 0.0
      %v4970 = vmax.f32 %v2556, 0.0
      %v4971 = vmax.f32 %v2645, 0.0
      %v4972 = vmax.f32 %v2734, 0.0
      %v4973 = vmax.f32 %v2823, 0.0
      %v4974 = vmax.f32 %v2912, 0.0
      %v4975 = vmax.f32 %v3001, 0.0
      %v4976 = vmax.f32 %v3090, 0.0
      %v4977 = vmax.f32 %v3179, 0.0
      %v4978 = vmax.f32 %v3268, 0.0
      %v4979 = vmax.f32 %v3357, 0.0
      %v4980 = vmax.f32 %v3446, 0.0
      %v4981 = vmax.f32 %v3535, 0.0
      %v4982 = vmax.f32 %v3624, 0.0
      %v4983 = vmax.f32 %v3713, 0.0
      %v4984 = vmax.f32 %v3802, 0.0
      %v4985 = vmax.f32 %v3891, 0.0
      %v4986 = vmax.f32 %v3980, 0.0
      %v4987 = vmax.f32 %v4069, 0.0
      %v4988 = vmax.f32 %v4158, 0.0
      %v4989 = vmax.f32 %v4247, 0.0
      %v4990 = vmax.f32 %v1312, 0.0
      %v4991 = vmax.f32 %v1401, 0.0
      %v4992 = vmax.f32 %v1490, 0.0
      %v4993 = vmax.f32 %v1579, 0.0
      %v4994 = vmax.f32 %v1668, 0.0
      %v4995 = vmax.f32 %v1757, 0.0
      %v4996 = vmax.f32 %v1846, 0.0
      %v4997 = vmax.f32 %v1935, 0.0
      %v4998 = vmax.f32 %v2024, 0.0
      %v4999 = vmax.f32 %v2113, 0.0
      %v5000 = vmax.f32 %v2202, 0.0
      %v5001 = vmax.f32 %v2291, 0.0
      %v5002 = vmax.f32 %v2380, 0.0
      %v5003 = vmax.f32 %v2469, 0.0
      %v5004 = vmax.f32 %v2558, 0.0
      %v5005 = vmax.f32 %v2647, 0.0
      %v5006 = vmax.f32 %v2736, 0.0
      %v5007 = vmax.f32 %v2825, 0.0
      %v5008 = vmax.f32 %v2914, 0.0
      %v5009 = vmax.f32 %v3003, 0.0
      %v5010 = vmax.f32 %v3092, 0.0
      %v5011 = vmax.f32 %v3181, 0.0
      %v5012 = vmax.f32 %v3270, 0.0
      %v5013 = vmax.f32 %v3359, 0.0
      %v5014 = vmax.f32 %v3448, 0.0
      %v5015 = vmax.f32 %v3537, 0.0
      %v5016 = vmax.f32 %v3626, 0.0
      %v5017 = vmax.f32 %v3715, 0.0
      %v5018 = vmax.f32 %v3804, 0.0
      %v5019 = vmax.f32 %v3893, 0.0
      %v5020 = vmax.f32 %v3982, 0.0
      %v5021 = vmax.f32 %v4071, 0.0
      %v5022 = vmax.f32 %v4160, 0.0
      %v5023 = vmax.f32 %v4249, 0.0
      %v5024 = vmax.f32 %v1315, 0.0
      %v5025 = vmax.f32 %v1404, 0.0
      %v5026 = vmax.f32 %v1493, 0.0
      %v5027 = vmax.f32 %v1582, 0.0
      %v5028 = vmax.f32 %v1671, 0.0
      %v5029 = vmax.f32 %v1760, 0.0
      %v5030 = vmax.f32 %v1849, 0.0
      %v5031 = vmax.f32 %v1938, 0.0
      %v5032 = vmax.f32 %v2027, 0.0
      %v5033 = vmax.f32 %v2116, 0.0
      %v5034 = vmax.f32 %v2205, 0.0
      %v5035 = vmax.f32 %v2294, 0.0
      %v5036 = vmax.f32 %v2383, 0.0
      %v5037 = vmax.f32 %v2472, 0.0
      %v5038 = vmax.f32 %v2561, 0.0
      %v5039 = vmax.f32 %v2650, 0.0
      %v5040 = vmax.f32 %v2739, 0.0
      %v5041 = vmax.f32 %v2828, 0.0
      %v5042 = vmax.f32 %v2917, 0.0
      %v5043 = vmax.f32 %v3006, 0.0
      %v5044 = vmax.f32 %v3095, 0.0
      %v5045 = vmax.f32 %v3184, 0.0
      %v5046 = vmax.f32 %v3273, 0.0
      %v5047 = vmax.f32 %v3362, 0.0
      %v5048 = vmax.f32 %v3451, 0.0
      %v5049 = vmax.f32 %v3540, 0.0
      %v5050 = vmax.f32 %v3629, 0.0
      %v5051 = vmax.f32 %v3718, 0.0
      %v5052 = vmax.f32 %v3807, 0.0
      %v5053 = vmax.f32 %v3896, 0.0
      %v5054 = vmax.f32 %v3985, 0.0
      %v5055 = vmax.f32 %v4074, 0.0
      %v5056 = vmax.f32 %v4163, 0.0
      %v5057 = vmax.f32 %v4252, 0.0
      %v5058 = vmax.f32 %v1317, 0.0
      %v5059 = vmax.f32 %v1406, 0.0
      %v5060 = vmax.f32 %v1495, 0.0
      %v5061 = vmax.f32 %v1584, 0.0
      %v5062 = vmax.f32 %v1673, 0.0
      %v5063 = vmax.f32 %v1762, 0.0
      %v5064 = vmax.f32 %v1851, 0.0
      %v5065 = vmax.f32 %v1940, 0.0
      %v5066 = vmax.f32 %v2029, 0.0
      %v5067 = vmax.f32 %v2118, 0.0
      %v5068 = vmax.f32 %v2207, 0.0
      %v5069 = vmax.f32 %v2296, 0.0
      %v5070 = vmax.f32 %v2385, 0.0
      %v5071 = vmax.f32 %v2474, 0.0
      %v5072 = vmax.f32 %v2563, 0.0
      %v5073 = vmax.f32 %v2652, 0.0
      %v5074 = vmax.f32 %v2741, 0.0
      %v5075 = vmax.f32 %v2830, 0.0
      %v5076 = vmax.f32 %v2919, 0.0
      %v5077 = vmax.f32 %v3008, 0.0
      %v5078 = vmax.f32 %v3097, 0.0
      %v5079 = vmax.f32 %v3186, 0.0
      %v5080 = vmax.f32 %v3275, 0.0
      %v5081 = vmax.f32 %v3364, 0.0
      %v5082 = vmax.f32 %v3453, 0.0
      %v5083 = vmax.f32 %v3542, 0.0
      %v5084 = vmax.f32 %v3631, 0.0
      %v5085 = vmax.f32 %v3720, 0.0
      %v5086 = vmax.f32 %v3809, 0.0
      %v5087 = vmax.f32 %v3898, 0.0
      %v5088 = vmax.f32 %v3987, 0.0
      %v5089 = vmax.f32 %v4076, 0.0
      %v5090 = vmax.f32 %v4165, 0.0
      %v5091 = vmax.f32 %v4254, 0.0
      %v5092 = vmax.f32 %v1320, 0.0
      %v5093 = vmax.f32 %v1409, 0.0
      %v5094 = vmax.f32 %v1498, 0.0
      %v5095 = vmax.f32 %v1587, 0.0
      %v5096 = vmax.f32 %v1676, 0.0
      %v5097 = vmax.f32 %v1765, 0.0
      %v5098 = vmax.f32 %v1854, 0.0
      %v5099 = vmax.f32 %v1943, 0.0
      %v5100 = vmax.f32 %v2032, 0.0
      %v5101 = vmax.f32 %v2121, 0.0
      %v5102 = vmax.f32 %v2210, 0.0
      %v5103 = vmax.f32 %v2299, 0.0
      %v5104 = vmax.f32 %v2388, 0.0
      %v5105 = vmax.f32 %v2477, 0.0
      %v5106 = vmax.f32 %v2566, 0.0
      %v5107 = vmax.f32 %v2655, 0.0
      %v5108 = vmax.f32 %v2744, 0.0
      %v5109 = vmax.f32 %v2833, 0.0
      %v5110 = vmax.f32 %v2922, 0.0
      %v5111 = vmax.f32 %v3011, 0.0
      %v5112 = vmax.f32 %v3100, 0.0
      %v5113 = vmax.f32 %v3189, 0.0
      %v5114 = vmax.f32 %v3278, 0.0
      %v5115 = vmax.f32 %v3367, 0.0
      %v5116 = vmax.f32 %v3456, 0.0
      %v5117 = vmax.f32 %v3545, 0.0
      %v5118 = vmax.f32 %v3634, 0.0
      %v5119 = vmax.f32 %v3723, 0.0
      %v5120 = vmax.f32 %v3812, 0.0
      %v5121 = vmax.f32 %v3901, 0.0
      %v5122 = vmax.f32 %v3990, 0.0
      %v5123 = vmax.f32 %v4079, 0.0
      %v5124 = vmax.f32 %v4168, 0.0
      %v5125 = vmax.f32 %v4257, 0.0
      %v5126 = vmax.f32 %v1322, 0.0
      %v5127 = vmax.f32 %v1411, 0.0
      %v5128 = vmax.f32 %v1500, 0.0
      %v5129 = vmax.f32 %v1589, 0.0
      %v5130 = vmax.f32 %v1678, 0.0
      %v5131 = vmax.f32 %v1767, 0.0
      %v5132 = vmax.f32 %v1856, 0.0
      %v5133 = vmax.f32 %v1945, 0.0
      %v5134 = vmax.f32 %v2034, 0.0
      %v5135 = vmax.f32 %v2123, 0.0
      %v5136 = vmax.f32 %v2212, 0.0
      %v5137 = vmax.f32 %v2301, 0.0
      %v5138 = vmax.f32 %v2390, 0.0
      %v5139 = vmax.f32 %v2479, 0.0
      %v5140 = vmax.f32 %v2568, 0.0
      %v5141 = vmax.f32 %v2657, 0.0
      %v5142 = vmax.f32 %v2746, 0.0
      %v5143 = vmax.f32 %v2835, 0.0
      %v5144 = vmax.f32 %v2924, 0.0
      %v5145 = vmax.f32 %v3013, 0.0
      %v5146 = vmax.f32 %v3102, 0.0
      %v5147 = vmax.f32 %v3191, 0.0
      %v5148 = vmax.f32 %v3280, 0.0
      %v5149 = vmax.f32 %v3369, 0.0
      %v5150 = vmax.f32 %v3458, 0.0
      %v5151 = vmax.f32 %v3547, 0.0
      %v5152 = vmax.f32 %v3636, 0.0
      %v5153 = vmax.f32 %v3725, 0.0
      %v5154 = vmax.f32 %v3814, 0.0
      %v5155 = vmax.f32 %v3903, 0.0
      %v5156 = vmax.f32 %v3992, 0.0
      %v5157 = vmax.f32 %v4081, 0.0
      %v5158 = vmax.f32 %v4170, 0.0
      %v5159 = vmax.f32 %v4259, 0.0
      %v5160 = vmax.f32 %v1325, 0.0
      %v5161 = vmax.f32 %v1414, 0.0
      %v5162 = vmax.f32 %v1503, 0.0
      %v5163 = vmax.f32 %v1592, 0.0
      %v5164 = vmax.f32 %v1681, 0.0
      %v5165 = vmax.f32 %v1770, 0.0
      %v5166 = vmax.f32 %v1859, 0.0
      %v5167 = vmax.f32 %v1948, 0.0
      %v5168 = vmax.f32 %v2037, 0.0
      %v5169 = vmax.f32 %v2126, 0.0
      %v5170 = vmax.f32 %v2215, 0.0
      %v5171 = vmax.f32 %v2304, 0.0
      %v5172 = vmax.f32 %v2393, 0.0
      %v5173 = vmax.f32 %v2482, 0.0
      %v5174 = vmax.f32 %v2571, 0.0
      %v5175 = vmax.f32 %v2660, 0.0
      %v5176 = vmax.f32 %v2749, 0.0
      %v5177 = vmax.f32 %v2838, 0.0
      %v5178 = vmax.f32 %v2927, 0.0
      %v5179 = vmax.f32 %v3016, 0.0
      %v5180 = vmax.f32 %v3105, 0.0
      %v5181 = vmax.f32 %v3194, 0.0
      %v5182 = vmax.f32 %v3283, 0.0
      %v5183 = vmax.f32 %v3372, 0.0
      %v5184 = vmax.f32 %v3461, 0.0
      %v5185 = vmax.f32 %v3550, 0.0
      %v5186 = vmax.f32 %v3639, 0.0
      %v5187 = vmax.f32 %v3728, 0.0
      %v5188 = vmax.f32 %v3817, 0.0
      %v5189 = vmax.f32 %v3906, 0.0
      %v5190 = vmax.f32 %v3995, 0.0
      %v5191 = vmax.f32 %v4084, 0.0
      %v5192 = vmax.f32 %v4173, 0.0
      %v5193 = vmax.f32 %v4262, 0.0
      %v5194 = vmax.f32 %v1327, 0.0
      %v5195 = vmax.f32 %v1416, 0.0
      %v5196 = vmax.f32 %v1505, 0.0
      %v5197 = vmax.f32 %v1594, 0.0
      %v5198 = vmax.f32 %v1683, 0.0
      %v5199 = vmax.f32 %v1772, 0.0
      %v5200 = vmax.f32 %v1861, 0.0
      %v5201 = vmax.f32 %v1950, 0.0
      %v5202 = vmax.f32 %v2039, 0.0
      %v5203 = vmax.f32 %v2128, 0.0
      %v5204 = vmax.f32 %v2217, 0.0
      %v5205 = vmax.f32 %v2306, 0.0
      %v5206 = vmax.f32 %v2395, 0.0
      %v5207 = vmax.f32 %v2484, 0.0
      %v5208 = vmax.f32 %v2573, 0.0
      %v5209 = vmax.f32 %v2662, 0.0
      %v5210 = vmax.f32 %v2751, 0.0
      %v5211 = vmax.f32 %v2840, 0.0
      %v5212 = vmax.f32 %v2929, 0.0
      %v5213 = vmax.f32 %v3018, 0.0
      %v5214 = vmax.f32 %v3107, 0.0
      %v5215 = vmax.f32 %v3196, 0.0
      %v5216 = vmax.f32 %v3285, 0.0
      %v5217 = vmax.f32 %v3374, 0.0
      %v5218 = vmax.f32 %v3463, 0.0
      %v5219 = vmax.f32 %v3552, 0.0
      %v5220 = vmax.f32 %v3641, 0.0
      %v5221 = vmax.f32 %v3730, 0.0
      %v5222 = vmax.f32 %v3819, 0.0
      %v5223 = vmax.f32 %v3908, 0.0
      %v5224 = vmax.f32 %v3997, 0.0
      %v5225 = vmax.f32 %v4086, 0.0
      %v5226 = vmax.f32 %v4175, 0.0
      %v5227 = vmax.f32 %v4264, 0.0
      %v5228 = vmax.f32 %v1330, 0.0
      %v5229 = vmax.f32 %v1419, 0.0
      %v5230 = vmax.f32 %v1508, 0.0
      %v5231 = vmax.f32 %v1597, 0.0
      %v5232 = vmax.f32 %v1686, 0.0
      %v5233 = vmax.f32 %v1775, 0.0
      %v5234 = vmax.f32 %v1864, 0.0
      %v5235 = vmax.f32 %v1953, 0.0
      %v5236 = vmax.f32 %v2042, 0.0
      %v5237 = vmax.f32 %v2131, 0.0
      %v5238 = vmax.f32 %v2220, 0.0
      %v5239 = vmax.f32 %v2309, 0.0
      %v5240 = vmax.f32 %v2398, 0.0
      %v5241 = vmax.f32 %v2487, 0.0
      %v5242 = vmax.f32 %v2576, 0.0
      %v5243 = vmax.f32 %v2665, 0.0
      %v5244 = vmax.f32 %v2754, 0.0
      %v5245 = vmax.f32 %v2843, 0.0
      %v5246 = vmax.f32 %v2932, 0.0
      %v5247 = vmax.f32 %v3021, 0.0
      %v5248 = vmax.f32 %v3110, 0.0
      %v5249 = vmax.f32 %v3199, 0.0
      %v5250 = vmax.f32 %v3288, 0.0
      %v5251 = vmax.f32 %v3377, 0.0
      %v5252 = vmax.f32 %v3466, 0.0
      %v5253 = vmax.f32 %v3555, 0.0
      %v5254 = vmax.f32 %v3644, 0.0
      %v5255 = vmax.f32 %v3733, 0.0
      %v5256 = vmax.f32 %v3822, 0.0
      %v5257 = vmax.f32 %v3911, 0.0
      %v5258 = vmax.f32 %v4000, 0.0
      %v5259 = vmax.f32 %v4089, 0.0
      %v5260 = vmax.f32 %v4178, 0.0
      %v5261 = vmax.f32 %v4267, 0.0
      %v5262 = vmax.f32 %v1332, 0.0
      %v5263 = vmax.f32 %v1421, 0.0
      %v5264 = vmax.f32 %v1510, 0.0
      %v5265 = vmax.f32 %v1599, 0.0
      %v5266 = vmax.f32 %v1688, 0.0
      %v5267 = vmax.f32 %v1777, 0.0
      %v5268 = vmax.f32 %v1866, 0.0
      %v5269 = vmax.f32 %v1955, 0.0
      %v5270 = vmax.f32 %v2044, 0.0
      %v5271 = vmax.f32 %v2133, 0.0
      %v5272 = vmax.f32 %v2222, 0.0
      %v5273 = vmax.f32 %v2311, 0.0
      %v5274 = vmax.f32 %v2400, 0.0
      %v5275 = vmax.f32 %v2489, 0.0
      %v5276 = vmax.f32 %v2578, 0.0
      %v5277 = vmax.f32 %v2667, 0.0
      %v5278 = vmax.f32 %v2756, 0.0
      %v5279 = vmax.f32 %v2845, 0.0
      %v5280 = vmax.f32 %v2934, 0.0
      %v5281 = vmax.f32 %v3023, 0.0
      %v5282 = vmax.f32 %v3112, 0.0
      %v5283 = vmax.f32 %v3201, 0.0
      %v5284 = vmax.f32 %v3290, 0.0
      %v5285 = vmax.f32 %v3379, 0.0
      %v5286 = vmax.f32 %v3468, 0.0
      %v5287 = vmax.f32 %v3557, 0.0
      %v5288 = vmax.f32 %v3646, 0.0
      %v5289 = vmax.f32 %v3735, 0.0
      %v5290 = vmax.f32 %v3824, 0.0
      %v5291 = vmax.f32 %v3913, 0.0
      %v5292 = vmax.f32 %v4002, 0.0
      %v5293 = vmax.f32 %v4091, 0.0
      %v5294 = vmax.f32 %v4180, 0.0
      %v5295 = vmax.f32 %v4269, 0.0
      %v5296 = vmax.f32 %v1335, 0.0
      %v5297 = vmax.f32 %v1424, 0.0
      %v5298 = vmax.f32 %v1513, 0.0
      %v5299 = vmax.f32 %v1602, 0.0
      %v5300 = vmax.f32 %v1691, 0.0
      %v5301 = vmax.f32 %v1780, 0.0
      %v5302 = vmax.f32 %v1869, 0.0
      %v5303 = vmax.f32 %v1958, 0.0
      %v5304 = vmax.f32 %v2047, 0.0
      %v5305 = vmax.f32 %v2136, 0.0
      %v5306 = vmax.f32 %v2225, 0.0
      %v5307 = vmax.f32 %v2314, 0.0
      %v5308 = vmax.f32 %v2403, 0.0
      %v5309 = vmax.f32 %v2492, 0.0
      %v5310 = vmax.f32 %v2581, 0.0
      %v5311 = vmax.f32 %v2670, 0.0
      %v5312 = vmax.f32 %v2759, 0.0
      %v5313 = vmax.f32 %v2848, 0.0
      %v5314 = vmax.f32 %v2937, 0.0
      %v5315 = vmax.f32 %v3026, 0.0
      %v5316 = vmax.f32 %v3115, 0.0
      %v5317 = vmax.f32 %v3204, 0.0
      %v5318 = vmax.f32 %v3293, 0.0
      %v5319 = vmax.f32 %v3382, 0.0
      %v5320 = vmax.f32 %v3471, 0.0
      %v5321 = vmax.f32 %v3560, 0.0
      %v5322 = vmax.f32 %v3649, 0.0
      %v5323 = vmax.f32 %v3738, 0.0
      %v5324 = vmax.f32 %v3827, 0.0
      %v5325 = vmax.f32 %v3916, 0.0
      %v5326 = vmax.f32 %v4005, 0.0
      %v5327 = vmax.f32 %v4094, 0.0
      %v5328 = vmax.f32 %v4183, 0.0
      %v5329 = vmax.f32 %v4272, 0.0
      %v5330 = vmax.f32 %v1337, 0.0
      %v5331 = vmax.f32 %v1426, 0.0
      %v5332 = vmax.f32 %v1515, 0.0
      %v5333 = vmax.f32 %v1604, 0.0
      %v5334 = vmax.f32 %v1693, 0.0
      %v5335 = vmax.f32 %v1782, 0.0
      %v5336 = vmax.f32 %v1871, 0.0
      %v5337 = vmax.f32 %v1960, 0.0
      %v5338 = vmax.f32 %v2049, 0.0
      %v5339 = vmax.f32 %v2138, 0.0
      %v5340 = vmax.f32 %v2227, 0.0
      %v5341 = vmax.f32 %v2316, 0.0
      %v5342 = vmax.f32 %v2405, 0.0
      %v5343 = vmax.f32 %v2494, 0.0
      %v5344 = vmax.f32 %v2583, 0.0
      %v5345 = vmax.f32 %v2672, 0.0
      %v5346 = vmax.f32 %v2761, 0.0
      %v5347 = vmax.f32 %v2850, 0.0
      %v5348 = vmax.f32 %v2939, 0.0
      %v5349 = vmax.f32 %v3028, 0.0
      %v5350 = vmax.f32 %v3117, 0.0
      %v5351 = vmax.f32 %v3206, 0.0
      %v5352 = vmax.f32 %v3295, 0.0
      %v5353 = vmax.f32 %v3384, 0.0
      %v5354 = vmax.f32 %v3473, 0.0
      %v5355 = vmax.f32 %v3562, 0.0
      %v5356 = vmax.f32 %v3651, 0.0
      %v5357 = vmax.f32 %v3740, 0.0
      %v5358 = vmax.f32 %v3829, 0.0
      %v5359 = vmax.f32 %v3918, 0.0
      %v5360 = vmax.f32 %v4007, 0.0
      %v5361 = vmax.f32 %v4096, 0.0
      %v5362 = vmax.f32 %v4185, 0.0
      %v5363 = vmax.f32 %v4274, 0.0
      %v5364 = vld [vmem:[#allocation2] sm:$0xff]
      %v5365 = vld [vmem:[#allocation2 + $0x8] sm:$0xff]
      %v5366 = vld [vmem:[#allocation2 + $0x10] sm:$0xff]
      %v5367 = vld [vmem:[#allocation2 + $0x18] sm:$0xff]
      %v5368 = vld [vmem:[#allocation2 + $0x20] sm:$0xff]
      %v5369 = vld [vmem:[#allocation2 + $0x28] sm:$0xff]
      %v5370 = vld [vmem:[#allocation2 + $0x30] sm:$0xff]
      %v5371 = vld [vmem:[#allocation2 + $0x38] sm:$0xff]
      %v5372 = vld [vmem:[#allocation2 + $0x40] sm:$0xff]
      %v5373 = vld [vmem:[#allocation2 + $0x48] sm:$0xff]
      %v5374 = vld [vmem:[#allocation2 + $0x50] sm:$0xff]
      %v5375 = vld [vmem:[#allocation2 + $0x58] sm:$0xff]
      %v5376 = vld [vmem:[#allocation2 + $0x60] sm:$0xff]
      %v5377 = vld [vmem:[#allocation2 + $0x68] sm:$0xff]
      %v5378 = vld [vmem:[#allocation2 + $0x70] sm:$0xff]
      %v5379 = vld [vmem:[#allocation2 + $0x78] sm:$0xff]
      %v5380 = vld [vmem:[#allocation2 + $0x80] sm:$0xff]
      %v5381 = vld [vmem:[#allocation2 + $0x88] sm:$0xff]
      %v5382 = vld [vmem:[#allocation2 + $0x90] sm:$0xff]
      %v5383 = vld [vmem:[#allocation2 + $0x98] sm:$0xff]
      %v5384 = vld [vmem:[#allocation2 + $0xa0] sm:$0xff]
      %v5385 = vld [vmem:[#allocation2 + $0xa8] sm:$0xff]
      %v5386 = vld [vmem:[#allocation2 + $0xb0] sm:$0xff]
      %v5387 = vld [vmem:[#allocation2 + $0xb8] sm:$0xff]
      %v5388 = vld [vmem:[#allocation2 + $0xc0] sm:$0xff]
      %v5389 = vld [vmem:[#allocation2 + $0xc8] sm:$0xff]
      %v5390 = vld [vmem:[#allocation2 + $0xd0] sm:$0xff]
      %v5391 = vld [vmem:[#allocation2 + $0xd8] sm:$0xff]
      %v5392 = vld [vmem:[#allocation2 + $0xe0] sm:$0xff]
      %v5393 = vld [vmem:[#allocation2 + $0xe8] sm:$0xff]
      %v5394 = vld [vmem:[#allocation2 + $0xf0] sm:$0xff]
      %v5395 = vld [vmem:[#allocation2 + $0xf8] sm:$0xff]
      %v5396 = vld [vmem:[#allocation2 + $0x100] sm:$0xff]
      %v5397 = vld [vmem:[#allocation2 + $0x108] sm:$0xff]
      %v5398 = vadd.f32 %v4276, %v4310
      %v5399 = vadd.f32 %v5398, %v4344
      %v5400 = vadd.f32 %v5399, %v4378
      %v5401 = vadd.f32 %v5400, %v4412
      %v5402 = vadd.f32 %v5401, %v4446
      %v5403 = vadd.f32 %v5402, %v4480
      %v5404 = vadd.f32 %v5403, %v4514
      %v5405 = vadd.f32 %v5404, %v4548
      %v5406 = vadd.f32 %v5405, %v4582
      %v5407 = vadd.f32 %v5406, %v4616
      %v5408 = vadd.f32 %v5407, %v4650
      %v5409 = vadd.f32 %v5408, %v4684
      %v5410 = vadd.f32 %v5409, %v4718
      %v5411 = vadd.f32 %v5410, %v4752
      %v5412 = vadd.f32 %v5411, %v4786
      %v5413 = vadd.f32 %v5412, %v4820
      %v5414 = vadd.f32 %v5413, %v4854
      %v5415 = vadd.f32 %v5414, %v4888
      %v5416 = vadd.f32 %v5415, %v4922
      %v5417 = vadd.f32 %v5416, %v4956
      %v5418 = vadd.f32 %v5417, %v4990
      %v5419 = vadd.f32 %v5418, %v5024
      %v5420 = vadd.f32 %v5419, %v5058
      %v5421 = vadd.f32 %v5420, %v5092
      %v5422 = vadd.f32 %v5421, %v5126
      %v5423 = vadd.f32 %v5422, %v5160
      %v5424 = vadd.f32 %v5423, %v5194
      %v5425 = vadd.f32 %v5424, %v5228
      %v5426 = vadd.f32 %v5425, %v5262
      %v5427 = vadd.f32 %v5426, %v5296
      %v5428 = vadd.f32 %v5427, %v5330
      %v5429 = vadd.f32 %v4277, %v4311
      %v5430 = vadd.f32 %v5429, %v4345
      %v5431 = vadd.f32 %v5430, %v4379
      %v5432 = vadd.f32 %v5431, %v4413
      %v5433 = vadd.f32 %v5432, %v4447
      %v5434 = vadd.f32 %v5433, %v4481
      %v5435 = vadd.f32 %v5434, %v4515
      %v5436 = vadd.f32 %v5435, %v4549
      %v5437 = vadd.f32 %v5436, %v4583
      %v5438 = vadd.f32 %v5437, %v4617
      %v5439 = vadd.f32 %v5438, %v4651
      %v5440 = vadd.f32 %v5439, %v4685
      %v5441 = vadd.f32 %v5440, %v4719
      %v5442 = vadd.f32 %v5441, %v4753
      %v5443 = vadd.f32 %v5442, %v4787
      %v5444 = vadd.f32 %v5443, %v4821
      %v5445 = vadd.f32 %v5444, %v4855
      %v5446 = vadd.f32 %v5445, %v4889
      %v5447 = vadd.f32 %v5446, %v4923
      %v5448 = vadd.f32 %v5447, %v4957
      %v5449 = vadd.f32 %v5448, %v4991
      %v5450 = vadd.f32 %v5449, %v5025
      %v5451 = vadd.f32 %v5450, %v5059
      %v5452 = vadd.f32 %v5451, %v5093
      %v5453 = vadd.f32 %v5452, %v5127
      %v5454 = vadd.f32 %v5453, %v5161
      %v5455 = vadd.f32 %v5454, %v5195
      %v5456 = vadd.f32 %v5455, %v5229
      %v5457 = vadd.f32 %v5456, %v5263
      %v5458 = vadd.f32 %v5457, %v5297
      %v5459 = vadd.f32 %v5458, %v5331
      %v5460 = vadd.f32 %v4278, %v4312
      %v5461 = vadd.f32 %v5460, %v4346
      %v5462 = vadd.f32 %v5461, %v4380
      %v5463 = vadd.f32 %v5462, %v4414
      %v5464 = vadd.f32 %v5463, %v4448
      %v5465 = vadd.f32 %v5464, %v4482
      %v5466 = vadd.f32 %v5465, %v4516
      %v5467 = vadd.f32 %v5466, %v4550
      %v5468 = vadd.f32 %v5467, %v4584
      %v5469 = vadd.f32 %v5468, %v4618
      %v5470 = vadd.f32 %v5469, %v4652
      %v5471 = vadd.f32 %v5470, %v4686
      %v5472 = vadd.f32 %v5471, %v4720
      %v5473 = vadd.f32 %v5472, %v4754
      %v5474 = vadd.f32 %v5473, %v4788
      %v5475 = vadd.f32 %v5474, %v4822
      %v5476 = vadd.f32 %v5475, %v4856
      %v5477 = vadd.f32 %v5476, %v4890
      %v5478 = vadd.f32 %v5477, %v4924
      %v5479 = vadd.f32 %v5478, %v4958
      %v5480 = vadd.f32 %v5479, %v4992
      %v5481 = vadd.f32 %v5480, %v5026
      %v5482 = vadd.f32 %v5481, %v5060
      %v5483 = vadd.f32 %v5482, %v5094
      %v5484 = vadd.f32 %v5483, %v5128
      %v5485 = vadd.f32 %v5484, %v5162
      %v5486 = vadd.f32 %v5485, %v5196
      %v5487 = vadd.f32 %v5486, %v5230
      %v5488 = vadd.f32 %v5487, %v5264
      %v5489 = vadd.f32 %v5488, %v5298
      %v5490 = vadd.f32 %v5489, %v5332
      %v5491 = vadd.f32 %v4279, %v4313
      %v5492 = vadd.f32 %v5491, %v4347
      %v5493 = vadd.f32 %v5492, %v4381
      %v5494 = vadd.f32 %v5493, %v4415
      %v5495 = vadd.f32 %v5494, %v4449
      %v5496 = vadd.f32 %v5495, %v4483
      %v5497 = vadd.f32 %v5496, %v4517
      %v5498 = vadd.f32 %v5497, %v4551
      %v5499 = vadd.f32 %v5498, %v4585
      %v5500 = vadd.f32 %v5499, %v4619
      %v5501 = vadd.f32 %v5500, %v4653
      %v5502 = vadd.f32 %v5501, %v4687
      %v5503 = vadd.f32 %v5502, %v4721
      %v5504 = vadd.f32 %v5503, %v4755
      %v5505 = vadd.f32 %v5504, %v4789
      %v5506 = vadd.f32 %v5505, %v4823
      %v5507 = vadd.f32 %v5506, %v4857
      %v5508 = vadd.f32 %v5507, %v4891
      %v5509 = vadd.f32 %v5508, %v4925
      %v5510 = vadd.f32 %v5509, %v4959
      %v5511 = vadd.f32 %v5510, %v4993
      %v5512 = vadd.f32 %v5511, %v5027
      %v5513 = vadd.f32 %v5512, %v5061
      %v5514 = vadd.f32 %v5513, %v5095
      %v5515 = vadd.f32 %v5514, %v5129
      %v5516 = vadd.f32 %v5515, %v5163
      %v5517 = vadd.f32 %v5516, %v5197
      %v5518 = vadd.f32 %v5517, %v5231
      %v5519 = vadd.f32 %v5518, %v5265
      %v5520 = vadd.f32 %v5519, %v5299
      %v5521 = vadd.f32 %v5520, %v5333
      %v5522 = vadd.f32 %v4280, %v4314
      %v5523 = vadd.f32 %v5522, %v4348
      %v5524 = vadd.f32 %v5523, %v4382
      %v5525 = vadd.f32 %v5524, %v4416
      %v5526 = vadd.f32 %v5525, %v4450
      %v5527 = vadd.f32 %v5526, %v4484
      %v5528 = vadd.f32 %v5527, %v4518
      %v5529 = vadd.f32 %v5528, %v4552
      %v5530 = vadd.f32 %v5529, %v4586
      %v5531 = vadd.f32 %v5530, %v4620
      %v5532 = vadd.f32 %v5531, %v4654
      %v5533 = vadd.f32 %v5532, %v4688
      %v5534 = vadd.f32 %v5533, %v4722
      %v5535 = vadd.f32 %v5534, %v4756
      %v5536 = vadd.f32 %v5535, %v4790
      %v5537 = vadd.f32 %v5536, %v4824
      %v5538 = vadd.f32 %v5537, %v4858
      %v5539 = vadd.f32 %v5538, %v4892
      %v5540 = vadd.f32 %v5539, %v4926
      %v5541 = vadd.f32 %v5540, %v4960
      %v5542 = vadd.f32 %v5541, %v4994
      %v5543 = vadd.f32 %v5542, %v5028
      %v5544 = vadd.f32 %v5543, %v5062
      %v5545 = vadd.f32 %v5544, %v5096
      %v5546 = vadd.f32 %v5545, %v5130
      %v5547 = vadd.f32 %v5546, %v5164
      %v5548 = vadd.f32 %v5547, %v5198
      %v5549 = vadd.f32 %v5548, %v5232
      %v5550 = vadd.f32 %v5549, %v5266
      %v5551 = vadd.f32 %v5550, %v5300
      %v5552 = vadd.f32 %v5551, %v5334
      %v5553 = vadd.f32 %v4281, %v4315
      %v5554 = vadd.f32 %v5553, %v4349
      %v5555 = vadd.f32 %v5554, %v4383
      %v5556 = vadd.f32 %v5555, %v4417
      %v5557 = vadd.f32 %v5556, %v4451
      %v5558 = vadd.f32 %v5557, %v4485
      %v5559 = vadd.f32 %v5558, %v4519
      %v5560 = vadd.f32 %v5559, %v4553
      %v5561 = vadd.f32 %v5560, %v4587
      %v5562 = vadd.f32 %v5561, %v4621
      %v5563 = vadd.f32 %v5562, %v4655
      %v5564 = vadd.f32 %v5563, %v4689
      %v5565 = vadd.f32 %v5564, %v4723
      %v5566 = vadd.f32 %v5565, %v4757
      %v5567 = vadd.f32 %v5566, %v4791
      %v5568 = vadd.f32 %v5567, %v4825
      %v5569 = vadd.f32 %v5568, %v4859
      %v5570 = vadd.f32 %v5569, %v4893
      %v5571 = vadd.f32 %v5570, %v4927
      %v5572 = vadd.f32 %v5571, %v4961
      %v5573 = vadd.f32 %v5572, %v4995
      %v5574 = vadd.f32 %v5573, %v5029
      %v5575 = vadd.f32 %v5574, %v5063
      %v5576 = vadd.f32 %v5575, %v5097
      %v5577 = vadd.f32 %v5576, %v5131
      %v5578 = vadd.f32 %v5577, %v5165
      %v5579 = vadd.f32 %v5578, %v5199
      %v5580 = vadd.f32 %v5579, %v5233
      %v5581 = vadd.f32 %v5580, %v5267
      %v5582 = vadd.f32 %v5581, %v5301
      %v5583 = vadd.f32 %v5582, %v5335
      %v5584 = vadd.f32 %v4282, %v4316
      %v5585 = vadd.f32 %v5584, %v4350
      %v5586 = vadd.f32 %v5585, %v4384
      %v5587 = vadd.f32 %v5586, %v4418
      %v5588 = vadd.f32 %v5587, %v4452
      %v5589 = vadd.f32 %v5588, %v4486
      %v5590 = vadd.f32 %v5589, %v4520
      %v5591 = vadd.f32 %v5590, %v4554
      %v5592 = vadd.f32 %v5591, %v4588
      %v5593 = vadd.f32 %v5592, %v4622
      %v5594 = vadd.f32 %v5593, %v4656
      %v5595 = vadd.f32 %v5594, %v4690
      %v5596 = vadd.f32 %v5595, %v4724
      %v5597 = vadd.f32 %v5596, %v4758
      %v5598 = vadd.f32 %v5597, %v4792
      %v5599 = vadd.f32 %v5598, %v4826
      %v5600 = vadd.f32 %v5599, %v4860
      %v5601 = vadd.f32 %v5600, %v4894
      %v5602 = vadd.f32 %v5601, %v4928
      %v5603 = vadd.f32 %v5602, %v4962
      %v5604 = vadd.f32 %v5603, %v4996
      %v5605 = vadd.f32 %v5604, %v5030
      %v5606 = vadd.f32 %v5605, %v5064
      %v5607 = vadd.f32 %v5606, %v5098
      %v5608 = vadd.f32 %v5607, %v5132
      %v5609 = vadd.f32 %v5608, %v5166
      %v5610 = vadd.f32 %v5609, %v5200
      %v5611 = vadd.f32 %v5610, %v5234
      %v5612 = vadd.f32 %v5611, %v5268
      %v5613 = vadd.f32 %v5612, %v5302
      %v5614 = vadd.f32 %v5613, %v5336
      %v5615 = vadd.f32 %v4283, %v4317
      %v5616 = vadd.f32 %v5615, %v4351
      %v5617 = vadd.f32 %v5616, %v4385
      %v5618 = vadd.f32 %v5617, %v4419
      %v5619 = vadd.f32 %v5618, %v4453
      %v5620 = vadd.f32 %v5619, %v4487
      %v5621 = vadd.f32 %v5620, %v4521
      %v5622 = vadd.f32 %v5621, %v4555
      %v5623 = vadd.f32 %v5622, %v4589
      %v5624 = vadd.f32 %v5623, %v4623
      %v5625 = vadd.f32 %v5624, %v4657
      %v5626 = vadd.f32 %v5625, %v4691
      %v5627 = vadd.f32 %v5626, %v4725
      %v5628 = vadd.f32 %v5627, %v4759
      %v5629 = vadd.f32 %v5628, %v4793
      %v5630 = vadd.f32 %v5629, %v4827
      %v5631 = vadd.f32 %v5630, %v4861
      %v5632 = vadd.f32 %v5631, %v4895
      %v5633 = vadd.f32 %v5632, %v4929
      %v5634 = vadd.f32 %v5633, %v4963
      %v5635 = vadd.f32 %v5634, %v4997
      %v5636 = vadd.f32 %v5635, %v5031
      %v5637 = vadd.f32 %v5636, %v5065
      %v5638 = vadd.f32 %v5637, %v5099
      %v5639 = vadd.f32 %v5638, %v5133
      %v5640 = vadd.f32 %v5639, %v5167
      %v5641 = vadd.f32 %v5640, %v5201
      %v5642 = vadd.f32 %v5641, %v5235
      %v5643 = vadd.f32 %v5642, %v5269
      %v5644 = vadd.f32 %v5643, %v5303
      %v5645 = vadd.f32 %v5644, %v5337
      %v5646 = vadd.f32 %v4284, %v4318
      %v5647 = vadd.f32 %v5646, %v4352
      %v5648 = vadd.f32 %v5647, %v4386
      %v5649 = vadd.f32 %v5648, %v4420
      %v5650 = vadd.f32 %v5649, %v4454
      %v5651 = vadd.f32 %v5650, %v4488
      %v5652 = vadd.f32 %v5651, %v4522
      %v5653 = vadd.f32 %v5652, %v4556
      %v5654 = vadd.f32 %v5653, %v4590
      %v5655 = vadd.f32 %v5654, %v4624
      %v5656 = vadd.f32 %v5655, %v4658
      %v5657 = vadd.f32 %v5656, %v4692
      %v5658 = vadd.f32 %v5657, %v4726
      %v5659 = vadd.f32 %v5658, %v4760
      %v5660 = vadd.f32 %v5659, %v4794
      %v5661 = vadd.f32 %v5660, %v4828
      %v5662 = vadd.f32 %v5661, %v4862
      %v5663 = vadd.f32 %v5662, %v4896
      %v5664 = vadd.f32 %v5663, %v4930
      %v5665 = vadd.f32 %v5664, %v4964
      %v5666 = vadd.f32 %v5665, %v4998
      %v5667 = vadd.f32 %v5666, %v5032
      %v5668 = vadd.f32 %v5667, %v5066
      %v5669 = vadd.f32 %v5668, %v5100
      %v5670 = vadd.f32 %v5669, %v5134
      %v5671 = vadd.f32 %v5670, %v5168
      %v5672 = vadd.f32 %v5671, %v5202
      %v5673 = vadd.f32 %v5672, %v5236
      %v5674 = vadd.f32 %v5673, %v5270
      %v5675 = vadd.f32 %v5674, %v5304
      %v5676 = vadd.f32 %v5675, %v5338
      %v5677 = vadd.f32 %v4285, %v4319
      %v5678 = vadd.f32 %v5677, %v4353
      %v5679 = vadd.f32 %v5678, %v4387
      %v5680 = vadd.f32 %v5679, %v4421
      %v5681 = vadd.f32 %v5680, %v4455
      %v5682 = vadd.f32 %v5681, %v4489
      %v5683 = vadd.f32 %v5682, %v4523
      %v5684 = vadd.f32 %v5683, %v4557
      %v5685 = vadd.f32 %v5684, %v4591
      %v5686 = vadd.f32 %v5685, %v4625
      %v5687 = vadd.f32 %v5686, %v4659
      %v5688 = vadd.f32 %v5687, %v4693
      %v5689 = vadd.f32 %v5688, %v4727
      %v5690 = vadd.f32 %v5689, %v4761
      %v5691 = vadd.f32 %v5690, %v4795
      %v5692 = vadd.f32 %v5691, %v4829
      %v5693 = vadd.f32 %v5692, %v4863
      %v5694 = vadd.f32 %v5693, %v4897
      %v5695 = vadd.f32 %v5694, %v4931
      %v5696 = vadd.f32 %v5695, %v4965
      %v5697 = vadd.f32 %v5696, %v4999
      %v5698 = vadd.f32 %v5697, %v5033
      %v5699 = vadd.f32 %v5698, %v5067
      %v5700 = vadd.f32 %v5699, %v5101
      %v5701 = vadd.f32 %v5700, %v5135
      %v5702 = vadd.f32 %v5701, %v5169
      %v5703 = vadd.f32 %v5702, %v5203
      %v5704 = vadd.f32 %v5703, %v5237
      %v5705 = vadd.f32 %v5704, %v5271
      %v5706 = vadd.f32 %v5705, %v5305
      %v5707 = vadd.f32 %v5706, %v5339
      %v5708 = vadd.f32 %v4286, %v4320
      %v5709 = vadd.f32 %v5708, %v4354
      %v5710 = vadd.f32 %v5709, %v4388
      %v5711 = vadd.f32 %v5710, %v4422
      %v5712 = vadd.f32 %v5711, %v4456
      %v5713 = vadd.f32 %v5712, %v4490
      %v5714 = vadd.f32 %v5713, %v4524
      %v5715 = vadd.f32 %v5714, %v4558
      %v5716 = vadd.f32 %v5715, %v4592
      %v5717 = vadd.f32 %v5716, %v4626
      %v5718 = vadd.f32 %v5717, %v4660
      %v5719 = vadd.f32 %v5718, %v4694
      %v5720 = vadd.f32 %v5719, %v4728
      %v5721 = vadd.f32 %v5720, %v4762
      %v5722 = vadd.f32 %v5721, %v4796
      %v5723 = vadd.f32 %v5722, %v4830
      %v5724 = vadd.f32 %v5723, %v4864
      %v5725 = vadd.f32 %v5724, %v4898
      %v5726 = vadd.f32 %v5725, %v4932
      %v5727 = vadd.f32 %v5726, %v4966
      %v5728 = vadd.f32 %v5727, %v5000
      %v5729 = vadd.f32 %v5728, %v5034
      %v5730 = vadd.f32 %v5729, %v5068
      %v5731 = vadd.f32 %v5730, %v5102
      %v5732 = vadd.f32 %v5731, %v5136
      %v5733 = vadd.f32 %v5732, %v5170
      %v5734 = vadd.f32 %v5733, %v5204
      %v5735 = vadd.f32 %v5734, %v5238
      %v5736 = vadd.f32 %v5735, %v5272
      %v5737 = vadd.f32 %v5736, %v5306
      %v5738 = vadd.f32 %v5737, %v5340
      %v5739 = vadd.f32 %v4287, %v4321
      %v5740 = vadd.f32 %v5739, %v4355
      %v5741 = vadd.f32 %v5740, %v4389
      %v5742 = vadd.f32 %v5741, %v4423
      %v5743 = vadd.f32 %v5742, %v4457
      %v5744 = vadd.f32 %v5743, %v4491
      %v5745 = vadd.f32 %v5744, %v4525
      %v5746 = vadd.f32 %v5745, %v4559
      %v5747 = vadd.f32 %v5746, %v4593
      %v5748 = vadd.f32 %v5747, %v4627
      %v5749 = vadd.f32 %v5748, %v4661
      %v5750 = vadd.f32 %v5749, %v4695
      %v5751 = vadd.f32 %v5750, %v4729
      %v5752 = vadd.f32 %v5751, %v4763
      %v5753 = vadd.f32 %v5752, %v4797
      %v5754 = vadd.f32 %v5753, %v4831
      %v5755 = vadd.f32 %v5754, %v4865
      %v5756 = vadd.f32 %v5755, %v4899
      %v5757 = vadd.f32 %v5756, %v4933
      %v5758 = vadd.f32 %v5757, %v4967
      %v5759 = vadd.f32 %v5758, %v5001
      %v5760 = vadd.f32 %v5759, %v5035
      %v5761 = vadd.f32 %v5760, %v5069
      %v5762 = vadd.f32 %v5761, %v5103
      %v5763 = vadd.f32 %v5762, %v5137
      %v5764 = vadd.f32 %v5763, %v5171
      %v5765 = vadd.f32 %v5764, %v5205
      %v5766 = vadd.f32 %v5765, %v5239
      %v5767 = vadd.f32 %v5766, %v5273
      %v5768 = vadd.f32 %v5767, %v5307
      %v5769 = vadd.f32 %v5768, %v5341
      %v5770 = vadd.f32 %v4288, %v4322
      %v5771 = vadd.f32 %v5770, %v4356
      %v5772 = vadd.f32 %v5771, %v4390
      %v5773 = vadd.f32 %v5772, %v4424
      %v5774 = vadd.f32 %v5773, %v4458
      %v5775 = vadd.f32 %v5774, %v4492
      %v5776 = vadd.f32 %v5775, %v4526
      %v5777 = vadd.f32 %v5776, %v4560
      %v5778 = vadd.f32 %v5777, %v4594
      %v5779 = vadd.f32 %v5778, %v4628
      %v5780 = vadd.f32 %v5779, %v4662
      %v5781 = vadd.f32 %v5780, %v4696
      %v5782 = vadd.f32 %v5781, %v4730
      %v5783 = vadd.f32 %v5782, %v4764
      %v5784 = vadd.f32 %v5783, %v4798
      %v5785 = vadd.f32 %v5784, %v4832
      %v5786 = vadd.f32 %v5785, %v4866
      %v5787 = vadd.f32 %v5786, %v4900
      %v5788 = vadd.f32 %v5787, %v4934
      %v5789 = vadd.f32 %v5788, %v4968
      %v5790 = vadd.f32 %v5789, %v5002
      %v5791 = vadd.f32 %v5790, %v5036
      %v5792 = vadd.f32 %v5791, %v5070
      %v5793 = vadd.f32 %v5792, %v5104
      %v5794 = vadd.f32 %v5793, %v5138
      %v5795 = vadd.f32 %v5794, %v5172
      %v5796 = vadd.f32 %v5795, %v5206
      %v5797 = vadd.f32 %v5796, %v5240
      %v5798 = vadd.f32 %v5797, %v5274
      %v5799 = vadd.f32 %v5798, %v5308
      %v5800 = vadd.f32 %v5799, %v5342
      %v5801 = vadd.f32 %v4289, %v4323
      %v5802 = vadd.f32 %v5801, %v4357
      %v5803 = vadd.f32 %v5802, %v4391
      %v5804 = vadd.f32 %v5803, %v4425
      %v5805 = vadd.f32 %v5804, %v4459
      %v5806 = vadd.f32 %v5805, %v4493
      %v5807 = vadd.f32 %v5806, %v4527
      %v5808 = vadd.f32 %v5807, %v4561
      %v5809 = vadd.f32 %v5808, %v4595
      %v5810 = vadd.f32 %v5809, %v4629
      %v5811 = vadd.f32 %v5810, %v4663
      %v5812 = vadd.f32 %v5811, %v4697
      %v5813 = vadd.f32 %v5812, %v4731
      %v5814 = vadd.f32 %v5813, %v4765
      %v5815 = vadd.f32 %v5814, %v4799
      %v5816 = vadd.f32 %v5815, %v4833
      %v5817 = vadd.f32 %v5816, %v4867
      %v5818 = vadd.f32 %v5817, %v4901
      %v5819 = vadd.f32 %v5818, %v4935
      %v5820 = vadd.f32 %v5819, %v4969
      %v5821 = vadd.f32 %v5820, %v5003
      %v5822 = vadd.f32 %v5821, %v5037
      %v5823 = vadd.f32 %v5822, %v5071
      %v5824 = vadd.f32 %v5823, %v5105
      %v5825 = vadd.f32 %v5824, %v5139
      %v5826 = vadd.f32 %v5825, %v5173
      %v5827 = vadd.f32 %v5826, %v5207
      %v5828 = vadd.f32 %v5827, %v5241
      %v5829 = vadd.f32 %v5828, %v5275
      %v5830 = vadd.f32 %v5829, %v5309
      %v5831 = vadd.f32 %v5830, %v5343
      %v5832 = vadd.f32 %v4290, %v4324
      %v5833 = vadd.f32 %v5832, %v4358
      %v5834 = vadd.f32 %v5833, %v4392
      %v5835 = vadd.f32 %v5834, %v4426
      %v5836 = vadd.f32 %v5835, %v4460
      %v5837 = vadd.f32 %v5836, %v4494
      %v5838 = vadd.f32 %v5837, %v4528
      %v5839 = vadd.f32 %v5838, %v4562
      %v5840 = vadd.f32 %v5839, %v4596
      %v5841 = vadd.f32 %v5840, %v4630
      %v5842 = vadd.f32 %v5841, %v4664
      %v5843 = vadd.f32 %v5842, %v4698
      %v5844 = vadd.f32 %v5843, %v4732
      %v5845 = vadd.f32 %v5844, %v4766
      %v5846 = vadd.f32 %v5845, %v4800
      %v5847 = vadd.f32 %v5846, %v4834
      %v5848 = vadd.f32 %v5847, %v4868
      %v5849 = vadd.f32 %v5848, %v4902
      %v5850 = vadd.f32 %v5849, %v4936
      %v5851 = vadd.f32 %v5850, %v4970
      %v5852 = vadd.f32 %v5851, %v5004
      %v5853 = vadd.f32 %v5852, %v5038
      %v5854 = vadd.f32 %v5853, %v5072
      %v5855 = vadd.f32 %v5854, %v5106
      %v5856 = vadd.f32 %v5855, %v5140
      %v5857 = vadd.f32 %v5856, %v5174
      %v5858 = vadd.f32 %v5857, %v5208
      %v5859 = vadd.f32 %v5858, %v5242
      %v5860 = vadd.f32 %v5859, %v5276
      %v5861 = vadd.f32 %v5860, %v5310
      %v5862 = vadd.f32 %v5861, %v5344
      %v5863 = vadd.f32 %v4291, %v4325
      %v5864 = vadd.f32 %v5863, %v4359
      %v5865 = vadd.f32 %v5864, %v4393
      %v5866 = vadd.f32 %v5865, %v4427
      %v5867 = vadd.f32 %v5866, %v4461
      %v5868 = vadd.f32 %v5867, %v4495
      %v5869 = vadd.f32 %v5868, %v4529
      %v5870 = vadd.f32 %v5869, %v4563
      %v5871 = vadd.f32 %v5870, %v4597
      %v5872 = vadd.f32 %v5871, %v4631
      %v5873 = vadd.f32 %v5872, %v4665
      %v5874 = vadd.f32 %v5873, %v4699
      %v5875 = vadd.f32 %v5874, %v4733
      %v5876 = vadd.f32 %v5875, %v4767
      %v5877 = vadd.f32 %v5876, %v4801
      %v5878 = vadd.f32 %v5877, %v4835
      %v5879 = vadd.f32 %v5878, %v4869
      %v5880 = vadd.f32 %v5879, %v4903
      %v5881 = vadd.f32 %v5880, %v4937
      %v5882 = vadd.f32 %v5881, %v4971
      %v5883 = vadd.f32 %v5882, %v5005
      %v5884 = vadd.f32 %v5883, %v5039
      %v5885 = vadd.f32 %v5884, %v5073
      %v5886 = vadd.f32 %v5885, %v5107
      %v5887 = vadd.f32 %v5886, %v5141
      %v5888 = vadd.f32 %v5887, %v5175
      %v5889 = vadd.f32 %v5888, %v5209
      %v5890 = vadd.f32 %v5889, %v5243
      %v5891 = vadd.f32 %v5890, %v5277
      %v5892 = vadd.f32 %v5891, %v5311
      %v5893 = vadd.f32 %v5892, %v5345
      %v5894 = vadd.f32 %v4292, %v4326
      %v5895 = vadd.f32 %v5894, %v4360
      %v5896 = vadd.f32 %v5895, %v4394
      %v5897 = vadd.f32 %v5896, %v4428
      %v5898 = vadd.f32 %v5897, %v4462
      %v5899 = vadd.f32 %v5898, %v4496
      %v5900 = vadd.f32 %v5899, %v4530
      %v5901 = vadd.f32 %v5900, %v4564
      %v5902 = vadd.f32 %v5901, %v4598
      %v5903 = vadd.f32 %v5902, %v4632
      %v5904 = vadd.f32 %v5903, %v4666
      %v5905 = vadd.f32 %v5904, %v4700
      %v5906 = vadd.f32 %v5905, %v4734
      %v5907 = vadd.f32 %v5906, %v4768
      %v5908 = vadd.f32 %v5907, %v4802
      %v5909 = vadd.f32 %v5908, %v4836
      %v5910 = vadd.f32 %v5909, %v4870
      %v5911 = vadd.f32 %v5910, %v4904
      %v5912 = vadd.f32 %v5911, %v4938
      %v5913 = vadd.f32 %v5912, %v4972
      %v5914 = vadd.f32 %v5913, %v5006
      %v5915 = vadd.f32 %v5914, %v5040
      %v5916 = vadd.f32 %v5915, %v5074
      %v5917 = vadd.f32 %v5916, %v5108
      %v5918 = vadd.f32 %v5917, %v5142
      %v5919 = vadd.f32 %v5918, %v5176
      %v5920 = vadd.f32 %v5919, %v5210
      %v5921 = vadd.f32 %v5920, %v5244
      %v5922 = vadd.f32 %v5921, %v5278
      %v5923 = vadd.f32 %v5922, %v5312
      %v5924 = vadd.f32 %v5923, %v5346
      %v5925 = vadd.f32 %v4293, %v4327
      %v5926 = vadd.f32 %v5925, %v4361
      %v5927 = vadd.f32 %v5926, %v4395
      %v5928 = vadd.f32 %v5927, %v4429
      %v5929 = vadd.f32 %v5928, %v4463
      %v5930 = vadd.f32 %v5929, %v4497
      %v5931 = vadd.f32 %v5930, %v4531
      %v5932 = vadd.f32 %v5931, %v4565
      %v5933 = vadd.f32 %v5932, %v4599
      %v5934 = vadd.f32 %v5933, %v4633
      %v5935 = vadd.f32 %v5934, %v4667
      %v5936 = vadd.f32 %v5935, %v4701
      %v5937 = vadd.f32 %v5936, %v4735
      %v5938 = vadd.f32 %v5937, %v4769
      %v5939 = vadd.f32 %v5938, %v4803
      %v5940 = vadd.f32 %v5939, %v4837
      %v5941 = vadd.f32 %v5940, %v4871
      %v5942 = vadd.f32 %v5941, %v4905
      %v5943 = vadd.f32 %v5942, %v4939
      %v5944 = vadd.f32 %v5943, %v4973
      %v5945 = vadd.f32 %v5944, %v5007
      %v5946 = vadd.f32 %v5945, %v5041
      %v5947 = vadd.f32 %v5946, %v5075
      %v5948 = vadd.f32 %v5947, %v5109
      %v5949 = vadd.f32 %v5948, %v5143
      %v5950 = vadd.f32 %v5949, %v5177
      %v5951 = vadd.f32 %v5950, %v5211
      %v5952 = vadd.f32 %v5951, %v5245
      %v5953 = vadd.f32 %v5952, %v5279
      %v5954 = vadd.f32 %v5953, %v5313
      %v5955 = vadd.f32 %v5954, %v5347
      %v5956 = vadd.f32 %v4294, %v4328
      %v5957 = vadd.f32 %v5956, %v4362
      %v5958 = vadd.f32 %v5957, %v4396
      %v5959 = vadd.f32 %v5958, %v4430
      %v5960 = vadd.f32 %v5959, %v4464
      %v5961 = vadd.f32 %v5960, %v4498
      %v5962 = vadd.f32 %v5961, %v4532
      %v5963 = vadd.f32 %v5962, %v4566
      %v5964 = vadd.f32 %v5963, %v4600
      %v5965 = vadd.f32 %v5964, %v4634
      %v5966 = vadd.f32 %v5965, %v4668
      %v5967 = vadd.f32 %v5966, %v4702
      %v5968 = vadd.f32 %v5967, %v4736
      %v5969 = vadd.f32 %v5968, %v4770
      %v5970 = vadd.f32 %v5969, %v4804
      %v5971 = vadd.f32 %v5970, %v4838
      %v5972 = vadd.f32 %v5971, %v4872
      %v5973 = vadd.f32 %v5972, %v4906
      %v5974 = vadd.f32 %v5973, %v4940
      %v5975 = vadd.f32 %v5974, %v4974
      %v5976 = vadd.f32 %v5975, %v5008
      %v5977 = vadd.f32 %v5976, %v5042
      %v5978 = vadd.f32 %v5977, %v5076
      %v5979 = vadd.f32 %v5978, %v5110
      %v5980 = vadd.f32 %v5979, %v5144
      %v5981 = vadd.f32 %v5980, %v5178
      %v5982 = vadd.f32 %v5981, %v5212
      %v5983 = vadd.f32 %v5982, %v5246
      %v5984 = vadd.f32 %v5983, %v5280
      %v5985 = vadd.f32 %v5984, %v5314
      %v5986 = vadd.f32 %v5985, %v5348
      %v5987 = vadd.f32 %v4295, %v4329
      %v5988 = vadd.f32 %v5987, %v4363
      %v5989 = vadd.f32 %v5988, %v4397
      %v5990 = vadd.f32 %v5989, %v4431
      %v5991 = vadd.f32 %v5990, %v4465
      %v5992 = vadd.f32 %v5991, %v4499
      %v5993 = vadd.f32 %v5992, %v4533
      %v5994 = vadd.f32 %v5993, %v4567
      %v5995 = vadd.f32 %v5994, %v4601
      %v5996 = vadd.f32 %v5995, %v4635
      %v5997 = vadd.f32 %v5996, %v4669
      %v5998 = vadd.f32 %v5997, %v4703
      %v5999 = vadd.f32 %v5998, %v4737
      %v6000 = vadd.f32 %v5999, %v4771
      %v6001 = vadd.f32 %v6000, %v4805
      %v6002 = vadd.f32 %v6001, %v4839
      %v6003 = vadd.f32 %v6002, %v4873
      %v6004 = vadd.f32 %v6003, %v4907
      %v6005 = vadd.f32 %v6004, %v4941
      %v6006 = vadd.f32 %v6005, %v4975
      %v6007 = vadd.f32 %v6006, %v5009
      %v6008 = vadd.f32 %v6007, %v5043
      %v6009 = vadd.f32 %v6008, %v5077
      %v6010 = vadd.f32 %v6009, %v5111
      %v6011 = vadd.f32 %v6010, %v5145
      %v6012 = vadd.f32 %v6011, %v5179
      %v6013 = vadd.f32 %v6012, %v5213
      %v6014 = vadd.f32 %v6013, %v5247
      %v6015 = vadd.f32 %v6014, %v5281
      %v6016 = vadd.f32 %v6015, %v5315
      %v6017 = vadd.f32 %v6016, %v5349
      %v6018 = vadd.f32 %v4296, %v4330
      %v6019 = vadd.f32 %v6018, %v4364
      %v6020 = vadd.f32 %v6019, %v4398
      %v6021 = vadd.f32 %v6020, %v4432
      %v6022 = vadd.f32 %v6021, %v4466
      %v6023 = vadd.f32 %v6022, %v4500
      %v6024 = vadd.f32 %v6023, %v4534
      %v6025 = vadd.f32 %v6024, %v4568
      %v6026 = vadd.f32 %v6025, %v4602
      %v6027 = vadd.f32 %v6026, %v4636
      %v6028 = vadd.f32 %v6027, %v4670
      %v6029 = vadd.f32 %v6028, %v4704
      %v6030 = vadd.f32 %v6029, %v4738
      %v6031 = vadd.f32 %v6030, %v4772
      %v6032 = vadd.f32 %v6031, %v4806
      %v6033 = vadd.f32 %v6032, %v4840
      %v6034 = vadd.f32 %v6033, %v4874
      %v6035 = vadd.f32 %v6034, %v4908
      %v6036 = vadd.f32 %v6035, %v4942
      %v6037 = vadd.f32 %v6036, %v4976
      %v6038 = vadd.f32 %v6037, %v5010
      %v6039 = vadd.f32 %v6038, %v5044
      %v6040 = vadd.f32 %v6039, %v5078
      %v6041 = vadd.f32 %v6040, %v5112
      %v6042 = vadd.f32 %v6041, %v5146
      %v6043 = vadd.f32 %v6042, %v5180
      %v6044 = vadd.f32 %v6043, %v5214
      %v6045 = vadd.f32 %v6044, %v5248
      %v6046 = vadd.f32 %v6045, %v5282
      %v6047 = vadd.f32 %v6046, %v5316
      %v6048 = vadd.f32 %v6047, %v5350
      %v6049 = vadd.f32 %v4297, %v4331
      %v6050 = vadd.f32 %v6049, %v4365
      %v6051 = vadd.f32 %v6050, %v4399
      %v6052 = vadd.f32 %v6051, %v4433
      %v6053 = vadd.f32 %v6052, %v4467
      %v6054 = vadd.f32 %v6053, %v4501
      %v6055 = vadd.f32 %v6054, %v4535
      %v6056 = vadd.f32 %v6055, %v4569
      %v6057 = vadd.f32 %v6056, %v4603
      %v6058 = vadd.f32 %v6057, %v4637
      %v6059 = vadd.f32 %v6058, %v4671
      %v6060 = vadd.f32 %v6059, %v4705
      %v6061 = vadd.f32 %v6060, %v4739
      %v6062 = vadd.f32 %v6061, %v4773
      %v6063 = vadd.f32 %v6062, %v4807
      %v6064 = vadd.f32 %v6063, %v4841
      %v6065 = vadd.f32 %v6064, %v4875
      %v6066 = vadd.f32 %v6065, %v4909
      %v6067 = vadd.f32 %v6066, %v4943
      %v6068 = vadd.f32 %v6067, %v4977
      %v6069 = vadd.f32 %v6068, %v5011
      %v6070 = vadd.f32 %v6069, %v5045
      %v6071 = vadd.f32 %v6070, %v5079
      %v6072 = vadd.f32 %v6071, %v5113
      %v6073 = vadd.f32 %v6072, %v5147
      %v6074 = vadd.f32 %v6073, %v5181
      %v6075 = vadd.f32 %v6074, %v5215
      %v6076 = vadd.f32 %v6075, %v5249
      %v6077 = vadd.f32 %v6076, %v5283
      %v6078 = vadd.f32 %v6077, %v5317
      %v6079 = vadd.f32 %v6078, %v5351
      %v6080 = vadd.f32 %v4298, %v4332
      %v6081 = vadd.f32 %v6080, %v4366
      %v6082 = vadd.f32 %v6081, %v4400
      %v6083 = vadd.f32 %v6082, %v4434
      %v6084 = vadd.f32 %v6083, %v4468
      %v6085 = vadd.f32 %v6084, %v4502
      %v6086 = vadd.f32 %v6085, %v4536
      %v6087 = vadd.f32 %v6086, %v4570
      %v6088 = vadd.f32 %v6087, %v4604
      %v6089 = vadd.f32 %v6088, %v4638
      %v6090 = vadd.f32 %v6089, %v4672
      %v6091 = vadd.f32 %v6090, %v4706
      %v6092 = vadd.f32 %v6091, %v4740
      %v6093 = vadd.f32 %v6092, %v4774
      %v6094 = vadd.f32 %v6093, %v4808
      %v6095 = vadd.f32 %v6094, %v4842
      %v6096 = vadd.f32 %v6095, %v4876
      %v6097 = vadd.f32 %v6096, %v4910
      %v6098 = vadd.f32 %v6097, %v4944
      %v6099 = vadd.f32 %v6098, %v4978
      %v6100 = vadd.f32 %v6099, %v5012
      %v6101 = vadd.f32 %v6100, %v5046
      %v6102 = vadd.f32 %v6101, %v5080
      %v6103 = vadd.f32 %v6102, %v5114
      %v6104 = vadd.f32 %v6103, %v5148
      %v6105 = vadd.f32 %v6104, %v5182
      %v6106 = vadd.f32 %v6105, %v5216
      %v6107 = vadd.f32 %v6106, %v5250
      %v6108 = vadd.f32 %v6107, %v5284
      %v6109 = vadd.f32 %v6108, %v5318
      %v6110 = vadd.f32 %v6109, %v5352
      %v6111 = vadd.f32 %v4299, %v4333
      %v6112 = vadd.f32 %v6111, %v4367
      %v6113 = vadd.f32 %v6112, %v4401
      %v6114 = vadd.f32 %v6113, %v4435
      %v6115 = vadd.f32 %v6114, %v4469
      %v6116 = vadd.f32 %v6115, %v4503
      %v6117 = vadd.f32 %v6116, %v4537
      %v6118 = vadd.f32 %v6117, %v4571
      %v6119 = vadd.f32 %v6118, %v4605
      %v6120 = vadd.f32 %v6119, %v4639
      %v6121 = vadd.f32 %v6120, %v4673
      %v6122 = vadd.f32 %v6121, %v4707
      %v6123 = vadd.f32 %v6122, %v4741
      %v6124 = vadd.f32 %v6123, %v4775
      %v6125 = vadd.f32 %v6124, %v4809
      %v6126 = vadd.f32 %v6125, %v4843
      %v6127 = vadd.f32 %v6126, %v4877
      %v6128 = vadd.f32 %v6127, %v4911
      %v6129 = vadd.f32 %v6128, %v4945
      %v6130 = vadd.f32 %v6129, %v4979
      %v6131 = vadd.f32 %v6130, %v5013
      %v6132 = vadd.f32 %v6131, %v5047
      %v6133 = vadd.f32 %v6132, %v5081
      %v6134 = vadd.f32 %v6133, %v5115
      %v6135 = vadd.f32 %v6134, %v5149
      %v6136 = vadd.f32 %v6135, %v5183
      %v6137 = vadd.f32 %v6136, %v5217
      %v6138 = vadd.f32 %v6137, %v5251
      %v6139 = vadd.f32 %v6138, %v5285
      %v6140 = vadd.f32 %v6139, %v5319
      %v6141 = vadd.f32 %v6140, %v5353
      %v6142 = vadd.f32 %v4300, %v4334
      %v6143 = vadd.f32 %v6142, %v4368
      %v6144 = vadd.f32 %v6143, %v4402
      %v6145 = vadd.f32 %v6144, %v4436
      %v6146 = vadd.f32 %v6145, %v4470
      %v6147 = vadd.f32 %v6146, %v4504
      %v6148 = vadd.f32 %v6147, %v4538
      %v6149 = vadd.f32 %v6148, %v4572
      %v6150 = vadd.f32 %v6149, %v4606
      %v6151 = vadd.f32 %v6150, %v4640
      %v6152 = vadd.f32 %v6151, %v4674
      %v6153 = vadd.f32 %v6152, %v4708
      %v6154 = vadd.f32 %v6153, %v4742
      %v6155 = vadd.f32 %v6154, %v4776
      %v6156 = vadd.f32 %v6155, %v4810
      %v6157 = vadd.f32 %v6156, %v4844
      %v6158 = vadd.f32 %v6157, %v4878
      %v6159 = vadd.f32 %v6158, %v4912
      %v6160 = vadd.f32 %v6159, %v4946
      %v6161 = vadd.f32 %v6160, %v4980
      %v6162 = vadd.f32 %v6161, %v5014
      %v6163 = vadd.f32 %v6162, %v5048
      %v6164 = vadd.f32 %v6163, %v5082
      %v6165 = vadd.f32 %v6164, %v5116
      %v6166 = vadd.f32 %v6165, %v5150
      %v6167 = vadd.f32 %v6166, %v5184
      %v6168 = vadd.f32 %v6167, %v5218
      %v6169 = vadd.f32 %v6168, %v5252
      %v6170 = vadd.f32 %v6169, %v5286
      %v6171 = vadd.f32 %v6170, %v5320
      %v6172 = vadd.f32 %v6171, %v5354
      %v6173 = vadd.f32 %v4301, %v4335
      %v6174 = vadd.f32 %v6173, %v4369
      %v6175 = vadd.f32 %v6174, %v4403
      %v6176 = vadd.f32 %v6175, %v4437
      %v6177 = vadd.f32 %v6176, %v4471
      %v6178 = vadd.f32 %v6177, %v4505
      %v6179 = vadd.f32 %v6178, %v4539
      %v6180 = vadd.f32 %v6179, %v4573
      %v6181 = vadd.f32 %v6180, %v4607
      %v6182 = vadd.f32 %v6181, %v4641
      %v6183 = vadd.f32 %v6182, %v4675
      %v6184 = vadd.f32 %v6183, %v4709
      %v6185 = vadd.f32 %v6184, %v4743
      %v6186 = vadd.f32 %v6185, %v4777
      %v6187 = vadd.f32 %v6186, %v4811
      %v6188 = vadd.f32 %v6187, %v4845
      %v6189 = vadd.f32 %v6188, %v4879
      %v6190 = vadd.f32 %v6189, %v4913
      %v6191 = vadd.f32 %v6190, %v4947
      %v6192 = vadd.f32 %v6191, %v4981
      %v6193 = vadd.f32 %v6192, %v5015
      %v6194 = vadd.f32 %v6193, %v5049
      %v6195 = vadd.f32 %v6194, %v5083
      %v6196 = vadd.f32 %v6195, %v5117
      %v6197 = vadd.f32 %v6196, %v5151
      %v6198 = vadd.f32 %v6197, %v5185
      %v6199 = vadd.f32 %v6198, %v5219
      %v6200 = vadd.f32 %v6199, %v5253
      %v6201 = vadd.f32 %v6200, %v5287
      %v6202 = vadd.f32 %v6201, %v5321
      %v6203 = vadd.f32 %v6202, %v5355
      %v6204 = vadd.f32 %v4302, %v4336
      %v6205 = vadd.f32 %v6204, %v4370
      %v6206 = vadd.f32 %v6205, %v4404
      %v6207 = vadd.f32 %v6206, %v4438
      %v6208 = vadd.f32 %v6207, %v4472
      %v6209 = vadd.f32 %v6208, %v4506
      %v6210 = vadd.f32 %v6209, %v4540
      %v6211 = vadd.f32 %v6210, %v4574
      %v6212 = vadd.f32 %v6211, %v4608
      %v6213 = vadd.f32 %v6212, %v4642
      %v6214 = vadd.f32 %v6213, %v4676
      %v6215 = vadd.f32 %v6214, %v4710
      %v6216 = vadd.f32 %v6215, %v4744
      %v6217 = vadd.f32 %v6216, %v4778
      %v6218 = vadd.f32 %v6217, %v4812
      %v6219 = vadd.f32 %v6218, %v4846
      %v6220 = vadd.f32 %v6219, %v4880
      %v6221 = vadd.f32 %v6220, %v4914
      %v6222 = vadd.f32 %v6221, %v4948
      %v6223 = vadd.f32 %v6222, %v4982
      %v6224 = vadd.f32 %v6223, %v5016
      %v6225 = vadd.f32 %v6224, %v5050
      %v6226 = vadd.f32 %v6225, %v5084
      %v6227 = vadd.f32 %v6226, %v5118
      %v6228 = vadd.f32 %v6227, %v5152
      %v6229 = vadd.f32 %v6228, %v5186
      %v6230 = vadd.f32 %v6229, %v5220
      %v6231 = vadd.f32 %v6230, %v5254
      %v6232 = vadd.f32 %v6231, %v5288
      %v6233 = vadd.f32 %v6232, %v5322
      %v6234 = vadd.f32 %v6233, %v5356
      %v6235 = vadd.f32 %v4303, %v4337
      %v6236 = vadd.f32 %v6235, %v4371
      %v6237 = vadd.f32 %v6236, %v4405
      %v6238 = vadd.f32 %v6237, %v4439
      %v6239 = vadd.f32 %v6238, %v4473
      %v6240 = vadd.f32 %v6239, %v4507
      %v6241 = vadd.f32 %v6240, %v4541
      %v6242 = vadd.f32 %v6241, %v4575
      %v6243 = vadd.f32 %v6242, %v4609
      %v6244 = vadd.f32 %v6243, %v4643
      %v6245 = vadd.f32 %v6244, %v4677
      %v6246 = vadd.f32 %v6245, %v4711
      %v6247 = vadd.f32 %v6246, %v4745
      %v6248 = vadd.f32 %v6247, %v4779
      %v6249 = vadd.f32 %v6248, %v4813
      %v6250 = vadd.f32 %v6249, %v4847
      %v6251 = vadd.f32 %v6250, %v4881
      %v6252 = vadd.f32 %v6251, %v4915
      %v6253 = vadd.f32 %v6252, %v4949
      %v6254 = vadd.f32 %v6253, %v4983
      %v6255 = vadd.f32 %v6254, %v5017
      %v6256 = vadd.f32 %v6255, %v5051
      %v6257 = vadd.f32 %v6256, %v5085
      %v6258 = vadd.f32 %v6257, %v5119
      %v6259 = vadd.f32 %v6258, %v5153
      %v6260 = vadd.f32 %v6259, %v5187
      %v6261 = vadd.f32 %v6260, %v5221
      %v6262 = vadd.f32 %v6261, %v5255
      %v6263 = vadd.f32 %v6262, %v5289
      %v6264 = vadd.f32 %v6263, %v5323
      %v6265 = vadd.f32 %v6264, %v5357
      %v6266 = vadd.f32 %v4304, %v4338
      %v6267 = vadd.f32 %v6266, %v4372
      %v6268 = vadd.f32 %v6267, %v4406
      %v6269 = vadd.f32 %v6268, %v4440
      %v6270 = vadd.f32 %v6269, %v4474
      %v6271 = vadd.f32 %v6270, %v4508
      %v6272 = vadd.f32 %v6271, %v4542
      %v6273 = vadd.f32 %v6272, %v4576
      %v6274 = vadd.f32 %v6273, %v4610
      %v6275 = vadd.f32 %v6274, %v4644
      %v6276 = vadd.f32 %v6275, %v4678
      %v6277 = vadd.f32 %v6276, %v4712
      %v6278 = vadd.f32 %v6277, %v4746
      %v6279 = vadd.f32 %v6278, %v4780
      %v6280 = vadd.f32 %v6279, %v4814
      %v6281 = vadd.f32 %v6280, %v4848
      %v6282 = vadd.f32 %v6281, %v4882
      %v6283 = vadd.f32 %v6282, %v4916
      %v6284 = vadd.f32 %v6283, %v4950
      %v6285 = vadd.f32 %v6284, %v4984
      %v6286 = vadd.f32 %v6285, %v5018
      %v6287 = vadd.f32 %v6286, %v5052
      %v6288 = vadd.f32 %v6287, %v5086
      %v6289 = vadd.f32 %v6288, %v5120
      %v6290 = vadd.f32 %v6289, %v5154
      %v6291 = vadd.f32 %v6290, %v5188
      %v6292 = vadd.f32 %v6291, %v5222
      %v6293 = vadd.f32 %v6292, %v5256
      %v6294 = vadd.f32 %v6293, %v5290
      %v6295 = vadd.f32 %v6294, %v5324
      %v6296 = vadd.f32 %v6295, %v5358
      %v6297 = vadd.f32 %v4305, %v4339
      %v6298 = vadd.f32 %v6297, %v4373
      %v6299 = vadd.f32 %v6298, %v4407
      %v6300 = vadd.f32 %v6299, %v4441
      %v6301 = vadd.f32 %v6300, %v4475
      %v6302 = vadd.f32 %v6301, %v4509
      %v6303 = vadd.f32 %v6302, %v4543
      %v6304 = vadd.f32 %v6303, %v4577
      %v6305 = vadd.f32 %v6304, %v4611
      %v6306 = vadd.f32 %v6305, %v4645
      %v6307 = vadd.f32 %v6306, %v4679
      %v6308 = vadd.f32 %v6307, %v4713
      %v6309 = vadd.f32 %v6308, %v4747
      %v6310 = vadd.f32 %v6309, %v4781
      %v6311 = vadd.f32 %v6310, %v4815
      %v6312 = vadd.f32 %v6311, %v4849
      %v6313 = vadd.f32 %v6312, %v4883
      %v6314 = vadd.f32 %v6313, %v4917
      %v6315 = vadd.f32 %v6314, %v4951
      %v6316 = vadd.f32 %v6315, %v4985
      %v6317 = vadd.f32 %v6316, %v5019
      %v6318 = vadd.f32 %v6317, %v5053
      %v6319 = vadd.f32 %v6318, %v5087
      %v6320 = vadd.f32 %v6319, %v5121
      %v6321 = vadd.f32 %v6320, %v5155
      %v6322 = vadd.f32 %v6321, %v5189
      %v6323 = vadd.f32 %v6322, %v5223
      %v6324 = vadd.f32 %v6323, %v5257
      %v6325 = vadd.f32 %v6324, %v5291
      %v6326 = vadd.f32 %v6325, %v5325
      %v6327 = vadd.f32 %v6326, %v5359
      %v6328 = vadd.f32 %v4306, %v4340
      %v6329 = vadd.f32 %v6328, %v4374
      %v6330 = vadd.f32 %v6329, %v4408
      %v6331 = vadd.f32 %v6330, %v4442
      %v6332 = vadd.f32 %v6331, %v4476
      %v6333 = vadd.f32 %v6332, %v4510
      %v6334 = vadd.f32 %v6333, %v4544
      %v6335 = vadd.f32 %v6334, %v4578
      %v6336 = vadd.f32 %v6335, %v4612
      %v6337 = vadd.f32 %v6336, %v4646
      %v6338 = vadd.f32 %v6337, %v4680
      %v6339 = vadd.f32 %v6338, %v4714
      %v6340 = vadd.f32 %v6339, %v4748
      %v6341 = vadd.f32 %v6340, %v4782
      %v6342 = vadd.f32 %v6341, %v4816
      %v6343 = vadd.f32 %v6342, %v4850
      %v6344 = vadd.f32 %v6343, %v4884
      %v6345 = vadd.f32 %v6344, %v4918
      %v6346 = vadd.f32 %v6345, %v4952
      %v6347 = vadd.f32 %v6346, %v4986
      %v6348 = vadd.f32 %v6347, %v5020
      %v6349 = vadd.f32 %v6348, %v5054
      %v6350 = vadd.f32 %v6349, %v5088
      %v6351 = vadd.f32 %v6350, %v5122
      %v6352 = vadd.f32 %v6351, %v5156
      %v6353 = vadd.f32 %v6352, %v5190
      %v6354 = vadd.f32 %v6353, %v5224
      %v6355 = vadd.f32 %v6354, %v5258
      %v6356 = vadd.f32 %v6355, %v5292
      %v6357 = vadd.f32 %v6356, %v5326
      %v6358 = vadd.f32 %v6357, %v5360
      %v6359 = vadd.f32 %v4307, %v4341
      %v6360 = vadd.f32 %v6359, %v4375
      %v6361 = vadd.f32 %v6360, %v4409
      %v6362 = vadd.f32 %v6361, %v4443
      %v6363 = vadd.f32 %v6362, %v4477
      %v6364 = vadd.f32 %v6363, %v4511
      %v6365 = vadd.f32 %v6364, %v4545
      %v6366 = vadd.f32 %v6365, %v4579
      %v6367 = vadd.f32 %v6366, %v4613
      %v6368 = vadd.f32 %v6367, %v4647
      %v6369 = vadd.f32 %v6368, %v4681
      %v6370 = vadd.f32 %v6369, %v4715
      %v6371 = vadd.f32 %v6370, %v4749
      %v6372 = vadd.f32 %v6371, %v4783
      %v6373 = vadd.f32 %v6372, %v4817
      %v6374 = vadd.f32 %v6373, %v4851
      %v6375 = vadd.f32 %v6374, %v4885
      %v6376 = vadd.f32 %v6375, %v4919
      %v6377 = vadd.f32 %v6376, %v4953
      %v6378 = vadd.f32 %v6377, %v4987
      %v6379 = vadd.f32 %v6378, %v5021
      %v6380 = vadd.f32 %v6379, %v5055
      %v6381 = vadd.f32 %v6380, %v5089
      %v6382 = vadd.f32 %v6381, %v5123
      %v6383 = vadd.f32 %v6382, %v5157
      %v6384 = vadd.f32 %v6383, %v5191
      %v6385 = vadd.f32 %v6384, %v5225
      %v6386 = vadd.f32 %v6385, %v5259
      %v6387 = vadd.f32 %v6386, %v5293
      %v6388 = vadd.f32 %v6387, %v5327
      %v6389 = vadd.f32 %v6388, %v5361
      %v6390 = vadd.f32 %v4308, %v4342
      %v6391 = vadd.f32 %v6390, %v4376
      %v6392 = vadd.f32 %v6391, %v4410
      %v6393 = vadd.f32 %v6392, %v4444
      %v6394 = vadd.f32 %v6393, %v4478
      %v6395 = vadd.f32 %v6394, %v4512
      %v6396 = vadd.f32 %v6395, %v4546
      %v6397 = vadd.f32 %v6396, %v4580
      %v6398 = vadd.f32 %v6397, %v4614
      %v6399 = vadd.f32 %v6398, %v4648
      %v6400 = vadd.f32 %v6399, %v4682
      %v6401 = vadd.f32 %v6400, %v4716
      %v6402 = vadd.f32 %v6401, %v4750
      %v6403 = vadd.f32 %v6402, %v4784
      %v6404 = vadd.f32 %v6403, %v4818
      %v6405 = vadd.f32 %v6404, %v4852
      %v6406 = vadd.f32 %v6405, %v4886
      %v6407 = vadd.f32 %v6406, %v4920
      %v6408 = vadd.f32 %v6407, %v4954
      %v6409 = vadd.f32 %v6408, %v4988
      %v6410 = vadd.f32 %v6409, %v5022
      %v6411 = vadd.f32 %v6410, %v5056
      %v6412 = vadd.f32 %v6411, %v5090
      %v6413 = vadd.f32 %v6412, %v5124
      %v6414 = vadd.f32 %v6413, %v5158
      %v6415 = vadd.f32 %v6414, %v5192
      %v6416 = vadd.f32 %v6415, %v5226
      %v6417 = vadd.f32 %v6416, %v5260
      %v6418 = vadd.f32 %v6417, %v5294
      %v6419 = vadd.f32 %v6418, %v5328
      %v6420 = vadd.f32 %v6419, %v5362
      %v6421 = vadd.f32 %v4309, %v4343
      %v6422 = vadd.f32 %v6421, %v4377
      %v6423 = vadd.f32 %v6422, %v4411
      %v6424 = vadd.f32 %v6423, %v4445
      %v6425 = vadd.f32 %v6424, %v4479
      %v6426 = vadd.f32 %v6425, %v4513
      %v6427 = vadd.f32 %v6426, %v4547
      %v6428 = vadd.f32 %v6427, %v4581
      %v6429 = vadd.f32 %v6428, %v4615
      %v6430 = vadd.f32 %v6429, %v4649
      %v6431 = vadd.f32 %v6430, %v4683
      %v6432 = vadd.f32 %v6431, %v4717
      %v6433 = vadd.f32 %v6432, %v4751
      %v6434 = vadd.f32 %v6433, %v4785
      %v6435 = vadd.f32 %v6434, %v4819
      %v6436 = vadd.f32 %v6435, %v4853
      %v6437 = vadd.f32 %v6436, %v4887
      %v6438 = vadd.f32 %v6437, %v4921
      %v6439 = vadd.f32 %v6438, %v4955
      %v6440 = vadd.f32 %v6439, %v4989
      %v6441 = vadd.f32 %v6440, %v5023
      %v6442 = vadd.f32 %v6441, %v5057
      %v6443 = vadd.f32 %v6442, %v5091
      %v6444 = vadd.f32 %v6443, %v5125
      %v6445 = vadd.f32 %v6444, %v5159
      %v6446 = vadd.f32 %v6445, %v5193
      %v6447 = vadd.f32 %v6446, %v5227
      %v6448 = vadd.f32 %v6447, %v5261
      %v6449 = vadd.f32 %v6448, %v5295
      %v6450 = vadd.f32 %v6449, %v5329
      %v6451 = vadd.f32 %v6450, %v5363
      %v6452 = vadd.f32 %v5364, %v5428
      %v6453 = vadd.f32 %v5365, %v5459
      %v6454 = vadd.f32 %v5366, %v5490
      %v6455 = vadd.f32 %v5367, %v5521
      %v6456 = vadd.f32 %v5368, %v5552
      %v6457 = vadd.f32 %v5369, %v5583
      %v6458 = vadd.f32 %v5370, %v5614
      %v6459 = vadd.f32 %v5371, %v5645
      %v6460 = vadd.f32 %v5372, %v5676
      %v6461 = vadd.f32 %v5373, %v5707
      %v6462 = vadd.f32 %v5374, %v5738
      %v6463 = vadd.f32 %v5375, %v5769
      %v6464 = vadd.f32 %v5376, %v5800
      %v6465 = vadd.f32 %v5377, %v5831
      %v6466 = vadd.f32 %v5378, %v5862
      %v6467 = vadd.f32 %v5379, %v5893
      %v6468 = vadd.f32 %v5380, %v5924
      %v6469 = vadd.f32 %v5381, %v5955
      %v6470 = vadd.f32 %v5382, %v5986
      %v6471 = vadd.f32 %v5383, %v6017
      %v6472 = vadd.f32 %v5384, %v6048
      %v6473 = vadd.f32 %v5385, %v6079
      %v6474 = vadd.f32 %v5386, %v6110
      %v6475 = vadd.f32 %v5387, %v6141
      %v6476 = vadd.f32 %v5388, %v6172
      %v6477 = vadd.f32 %v5389, %v6203
      %v6478 = vadd.f32 %v5390, %v6234
      %v6479 = vadd.f32 %v5391, %v6265
      %v6480 = vadd.f32 %v5392, %v6296
      %v6481 = vadd.f32 %v5393, %v6327
      %v6482 = vadd.f32 %v5394, %v6358
      %v6483 = vadd.f32 %v5395, %v6389
      %v6484 = vadd.f32 %v5396, %v6420
      %v6485 = vadd.f32 %v5397, %v6451
      %6486 = vst [vmem:[#allocation2] sm:$0xff] %v6452
      %6487 = vst [vmem:[#allocation2 + $0x8] sm:$0xff] %v6453
      %6488 = vst [vmem:[#allocation2 + $0x10] sm:$0xff] %v6454
      %6489 = vst [vmem:[#allocation2 + $0x18] sm:$0xff] %v6455
      %6490 = vst [vmem:[#allocation2 + $0x20] sm:$0xff] %v6456
      %6491 = vst [vmem:[#allocation2 + $0x28] sm:$0xff] %v6457
      %6492 = vst [vmem:[#allocation2 + $0x30] sm:$0xff] %v6458
      %6493 = vst [vmem:[#allocation2 + $0x38] sm:$0xff] %v6459
      %6494 = vst [vmem:[#allocation2 + $0x40] sm:$0xff] %v6460
      %6495 = vst [vmem:[#allocation2 + $0x48] sm:$0xff] %v6461
      %6496 = vst [vmem:[#allocation2 + $0x50] sm:$0xff] %v6462
      %6497 = vst [vmem:[#allocation2 + $0x58] sm:$0xff] %v6463
      %6498 = vst [vmem:[#allocation2 + $0x60] sm:$0xff] %v6464
      %6499 = vst [vmem:[#allocation2 + $0x68] sm:$0xff] %v6465
      %6500 = vst [vmem:[#allocation2 + $0x70] sm:$0xff] %v6466
      %6501 = vst [vmem:[#allocation2 + $0x78] sm:$0xff] %v6467
      %6502 = vst [vmem:[#allocation2 + $0x80] sm:$0xff] %v6468
      %6503 = vst [vmem:[#allocation2 + $0x88] sm:$0xff] %v6469
      %6504 = vst [vmem:[#allocation2 + $0x90] sm:$0xff] %v6470
      %6505 = vst [vmem:[#allocation2 + $0x98] sm:$0xff] %v6471
      %6506 = vst [vmem:[#allocation2 + $0xa0] sm:$0xff] %v6472
      %6507 = vst [vmem:[#allocation2 + $0xa8] sm:$0xff] %v6473
      %6508 = vst [vmem:[#allocation2 + $0xb0] sm:$0xff] %v6474
      %6509 = vst [vmem:[#allocation2 + $0xb8] sm:$0xff] %v6475
      %6510 = vst [vmem:[#allocation2 + $0xc0] sm:$0xff] %v6476
      %6511 = vst [vmem:[#allocation2 + $0xc8] sm:$0xff] %v6477
      %6512 = vst [vmem:[#allocation2 + $0xd0] sm:$0xff] %v6478
      %6513 = vst [vmem:[#allocation2 + $0xd8] sm:$0xff] %v6479
      %6514 = vst [vmem:[#allocation2 + $0xe0] sm:$0xff] %v6480
      %6515 = vst [vmem:[#allocation2 + $0xe8] sm:$0xff] %v6481
      %6516 = vst [vmem:[#allocation2 + $0xf0] sm:$0xff] %v6482
      %6517 = vst [vmem:[#allocation2 + $0xf8] sm:$0xff] %v6483
      %6518 = vst [vmem:[#allocation2 + $0x100] sm:$0xff] %v6484
      %6519 = vst [vmem:[#allocation2 + $0x108] sm:$0xff] %v6485
      // Predicated region
      $region61: #{my_densenet_forward.1} parent=55 // pred_check
        %p6520 = pneg %p360
      $region62: #{my_densenet_forward.1} parent=55 // pred_check_branch
        %6522 = sbr.rel (%p6520) target = $region64
      $region63: #{my_densenet_forward.1} parent=55 // pred_region
        %v6523 = vld [vmem:[#allocation2] sm:$0xff]
        %v6524 = vld [vmem:[#allocation2 + $0x8] sm:$0xff]
        %v6525 = vld [vmem:[#allocation2 + $0x10] sm:$0xff]
        %v6526 = vld [vmem:[#allocation2 + $0x18] sm:$0xff]
        %v6527 = vld [vmem:[#allocation2 + $0x20] sm:$0xff]
        %v6528 = vld [vmem:[#allocation2 + $0x28] sm:$0xff]
        %v6529 = vld [vmem:[#allocation2 + $0x30] sm:$0xff]
        %v6530 = vld [vmem:[#allocation2 + $0x38] sm:$0xff]
        %v6531 = vld [vmem:[#allocation2 + $0x40] sm:$0xff]
        %v6532 = vld [vmem:[#allocation2 + $0x48] sm:$0xff]
        %v6533 = vld [vmem:[#allocation2 + $0x50] sm:$0xff]
        %v6534 = vld [vmem:[#allocation2 + $0x58] sm:$0xff]
        %v6535 = vld [vmem:[#allocation2 + $0x60] sm:$0xff]
        %v6536 = vld [vmem:[#allocation2 + $0x68] sm:$0xff]
        %v6537 = vld [vmem:[#allocation2 + $0x70] sm:$0xff]
        %v6538 = vld [vmem:[#allocation2 + $0x78] sm:$0xff]
        %v6539 = vld [vmem:[#allocation2 + $0x80] sm:$0xff]
        %v6540 = vld [vmem:[#allocation2 + $0x88] sm:$0xff]
        %v6541 = vld [vmem:[#allocation2 + $0x90] sm:$0xff]
        %v6542 = vld [vmem:[#allocation2 + $0x98] sm:$0xff]
        %v6543 = vld [vmem:[#allocation2 + $0xa0] sm:$0xff]
        %v6544 = vld [vmem:[#allocation2 + $0xa8] sm:$0xff]
        %v6545 = vld [vmem:[#allocation2 + $0xb0] sm:$0xff]
        %v6546 = vld [vmem:[#allocation2 + $0xb8] sm:$0xff]
        %v6547 = vld [vmem:[#allocation2 + $0xc0] sm:$0xff]
        %v6548 = vld [vmem:[#allocation2 + $0xc8] sm:$0xff]
        %v6549 = vld [vmem:[#allocation2 + $0xd0] sm:$0xff]
        %v6550 = vld [vmem:[#allocation2 + $0xd8] sm:$0xff]
        %v6551 = vld [vmem:[#allocation2 + $0xe0] sm:$0xff]
        %v6552 = vld [vmem:[#allocation2 + $0xe8] sm:$0xff]
        %v6553 = vld [vmem:[#allocation2 + $0xf0] sm:$0xff]
        %v6554 = vld [vmem:[#allocation2 + $0xf8] sm:$0xff]
        %v6555 = vld [vmem:[#allocation2 + $0x100] sm:$0xff]
        %v6556 = vld [vmem:[#allocation2 + $0x108] sm:$0xff]
        %v6557 = vrot.slane %v6523, 4
        %v6558 = vadd.f32 %v6523, %v6557
        %v6559 = vrot.slane %v6558, 2
        %v6560 = vadd.f32 %v6558, %v6559
        %v6561 = vrot.slane %v6560, 1
        %v6562 = vadd.f32 %v6560, %v6561
        %v6563 = vrot.slane %v6524, 4
        %v6564 = vadd.f32 %v6524, %v6563
        %v6565 = vrot.slane %v6564, 2
        %v6566 = vadd.f32 %v6564, %v6565
        %v6567 = vrot.slane %v6566, 1
        %v6568 = vadd.f32 %v6566, %v6567
        %v6569 = vrot.slane %v6525, 4
        %v6570 = vadd.f32 %v6525, %v6569
        %v6571 = vrot.slane %v6570, 2
        %v6572 = vadd.f32 %v6570, %v6571
        %v6573 = vrot.slane %v6572, 1
        %v6574 = vadd.f32 %v6572, %v6573
        %v6575 = vrot.slane %v6526, 4
        %v6576 = vadd.f32 %v6526, %v6575
        %v6577 = vrot.slane %v6576, 2
        %v6578 = vadd.f32 %v6576, %v6577
        %v6579 = vrot.slane %v6578, 1
        %v6580 = vadd.f32 %v6578, %v6579
        %v6581 = vrot.slane %v6527, 4
        %v6582 = vadd.f32 %v6527, %v6581
        %v6583 = vrot.slane %v6582, 2
        %v6584 = vadd.f32 %v6582, %v6583
        %v6585 = vrot.slane %v6584, 1
        %v6586 = vadd.f32 %v6584, %v6585
        %v6587 = vrot.slane %v6528, 4
        %v6588 = vadd.f32 %v6528, %v6587
        %v6589 = vrot.slane %v6588, 2
        %v6590 = vadd.f32 %v6588, %v6589
        %v6591 = vrot.slane %v6590, 1
        %v6592 = vadd.f32 %v6590, %v6591
        %v6593 = vrot.slane %v6529, 4
        %v6594 = vadd.f32 %v6529, %v6593
        %v6595 = vrot.slane %v6594, 2
        %v6596 = vadd.f32 %v6594, %v6595
        %v6597 = vrot.slane %v6596, 1
        %v6598 = vadd.f32 %v6596, %v6597
        %v6599 = vrot.slane %v6530, 4
        %v6600 = vadd.f32 %v6530, %v6599
        %v6601 = vrot.slane %v6600, 2
        %v6602 = vadd.f32 %v6600, %v6601
        %v6603 = vrot.slane %v6602, 1
        %v6604 = vadd.f32 %v6602, %v6603
        %v6605 = vrot.slane %v6531, 4
        %v6606 = vadd.f32 %v6531, %v6605
        %v6607 = vrot.slane %v6606, 2
        %v6608 = vadd.f32 %v6606, %v6607
        %v6609 = vrot.slane %v6608, 1
        %v6610 = vadd.f32 %v6608, %v6609
        %v6611 = vrot.slane %v6532, 4
        %v6612 = vadd.f32 %v6532, %v6611
        %v6613 = vrot.slane %v6612, 2
        %v6614 = vadd.f32 %v6612, %v6613
        %v6615 = vrot.slane %v6614, 1
        %v6616 = vadd.f32 %v6614, %v6615
        %v6617 = vrot.slane %v6533, 4
        %v6618 = vadd.f32 %v6533, %v6617
        %v6619 = vrot.slane %v6618, 2
        %v6620 = vadd.f32 %v6618, %v6619
        %v6621 = vrot.slane %v6620, 1
        %v6622 = vadd.f32 %v6620, %v6621
        %v6623 = vrot.slane %v6534, 4
        %v6624 = vadd.f32 %v6534, %v6623
        %v6625 = vrot.slane %v6624, 2
        %v6626 = vadd.f32 %v6624, %v6625
        %v6627 = vrot.slane %v6626, 1
        %v6628 = vadd.f32 %v6626, %v6627
        %v6629 = vrot.slane %v6535, 4
        %v6630 = vadd.f32 %v6535, %v6629
        %v6631 = vrot.slane %v6630, 2
        %v6632 = vadd.f32 %v6630, %v6631
        %v6633 = vrot.slane %v6632, 1
        %v6634 = vadd.f32 %v6632, %v6633
        %v6635 = vrot.slane %v6536, 4
        %v6636 = vadd.f32 %v6536, %v6635
        %v6637 = vrot.slane %v6636, 2
        %v6638 = vadd.f32 %v6636, %v6637
        %v6639 = vrot.slane %v6638, 1
        %v6640 = vadd.f32 %v6638, %v6639
        %v6641 = vrot.slane %v6537, 4
        %v6642 = vadd.f32 %v6537, %v6641
        %v6643 = vrot.slane %v6642, 2
        %v6644 = vadd.f32 %v6642, %v6643
        %v6645 = vrot.slane %v6644, 1
        %v6646 = vadd.f32 %v6644, %v6645
        %v6647 = vrot.slane %v6538, 4
        %v6648 = vadd.f32 %v6538, %v6647
        %v6649 = vrot.slane %v6648, 2
        %v6650 = vadd.f32 %v6648, %v6649
        %v6651 = vrot.slane %v6650, 1
        %v6652 = vadd.f32 %v6650, %v6651
        %v6653 = vrot.slane %v6539, 4
        %v6654 = vadd.f32 %v6539, %v6653
        %v6655 = vrot.slane %v6654, 2
        %v6656 = vadd.f32 %v6654, %v6655
        %v6657 = vrot.slane %v6656, 1
        %v6658 = vadd.f32 %v6656, %v6657
        %v6659 = vrot.slane %v6540, 4
        %v6660 = vadd.f32 %v6540, %v6659
        %v6661 = vrot.slane %v6660, 2
        %v6662 = vadd.f32 %v6660, %v6661
        %v6663 = vrot.slane %v6662, 1
        %v6664 = vadd.f32 %v6662, %v6663
        %v6665 = vrot.slane %v6541, 4
        %v6666 = vadd.f32 %v6541, %v6665
        %v6667 = vrot.slane %v6666, 2
        %v6668 = vadd.f32 %v6666, %v6667
        %v6669 = vrot.slane %v6668, 1
        %v6670 = vadd.f32 %v6668, %v6669
        %v6671 = vrot.slane %v6542, 4
        %v6672 = vadd.f32 %v6542, %v6671
        %v6673 = vrot.slane %v6672, 2
        %v6674 = vadd.f32 %v6672, %v6673
        %v6675 = vrot.slane %v6674, 1
        %v6676 = vadd.f32 %v6674, %v6675
        %v6677 = vrot.slane %v6543, 4
        %v6678 = vadd.f32 %v6543, %v6677
        %v6679 = vrot.slane %v6678, 2
        %v6680 = vadd.f32 %v6678, %v6679
        %v6681 = vrot.slane %v6680, 1
        %v6682 = vadd.f32 %v6680, %v6681
        %v6683 = vrot.slane %v6544, 4
        %v6684 = vadd.f32 %v6544, %v6683
        %v6685 = vrot.slane %v6684, 2
        %v6686 = vadd.f32 %v6684, %v6685
        %v6687 = vrot.slane %v6686, 1
        %v6688 = vadd.f32 %v6686, %v6687
        %v6689 = vrot.slane %v6545, 4
        %v6690 = vadd.f32 %v6545, %v6689
        %v6691 = vrot.slane %v6690, 2
        %v6692 = vadd.f32 %v6690, %v6691
        %v6693 = vrot.slane %v6692, 1
        %v6694 = vadd.f32 %v6692, %v6693
        %v6695 = vrot.slane %v6546, 4
        %v6696 = vadd.f32 %v6546, %v6695
        %v6697 = vrot.slane %v6696, 2
        %v6698 = vadd.f32 %v6696, %v6697
        %v6699 = vrot.slane %v6698, 1
        %v6700 = vadd.f32 %v6698, %v6699
        %v6701 = vrot.slane %v6547, 4
        %v6702 = vadd.f32 %v6547, %v6701
        %v6703 = vrot.slane %v6702, 2
        %v6704 = vadd.f32 %v6702, %v6703
        %v6705 = vrot.slane %v6704, 1
        %v6706 = vadd.f32 %v6704, %v6705
        %v6707 = vrot.slane %v6548, 4
        %v6708 = vadd.f32 %v6548, %v6707
        %v6709 = vrot.slane %v6708, 2
        %v6710 = vadd.f32 %v6708, %v6709
        %v6711 = vrot.slane %v6710, 1
        %v6712 = vadd.f32 %v6710, %v6711
        %v6713 = vrot.slane %v6549, 4
        %v6714 = vadd.f32 %v6549, %v6713
        %v6715 = vrot.slane %v6714, 2
        %v6716 = vadd.f32 %v6714, %v6715
        %v6717 = vrot.slane %v6716, 1
        %v6718 = vadd.f32 %v6716, %v6717
        %v6719 = vrot.slane %v6550, 4
        %v6720 = vadd.f32 %v6550, %v6719
        %v6721 = vrot.slane %v6720, 2
        %v6722 = vadd.f32 %v6720, %v6721
        %v6723 = vrot.slane %v6722, 1
        %v6724 = vadd.f32 %v6722, %v6723
        %v6725 = vrot.slane %v6551, 4
        %v6726 = vadd.f32 %v6551, %v6725
        %v6727 = vrot.slane %v6726, 2
        %v6728 = vadd.f32 %v6726, %v6727
        %v6729 = vrot.slane %v6728, 1
        %v6730 = vadd.f32 %v6728, %v6729
        %v6731 = vrot.slane %v6552, 4
        %v6732 = vadd.f32 %v6552, %v6731
        %v6733 = vrot.slane %v6732, 2
        %v6734 = vadd.f32 %v6732, %v6733
        %v6735 = vrot.slane %v6734, 1
        %v6736 = vadd.f32 %v6734, %v6735
        %v6737 = vrot.slane %v6553, 4
        %v6738 = vadd.f32 %v6553, %v6737
        %v6739 = vrot.slane %v6738, 2
        %v6740 = vadd.f32 %v6738, %v6739
        %v6741 = vrot.slane %v6740, 1
        %v6742 = vadd.f32 %v6740, %v6741
        %v6743 = vrot.slane %v6554, 4
        %v6744 = vadd.f32 %v6554, %v6743
        %v6745 = vrot.slane %v6744, 2
        %v6746 = vadd.f32 %v6744, %v6745
        %v6747 = vrot.slane %v6746, 1
        %v6748 = vadd.f32 %v6746, %v6747
        %v6749 = vrot.slane %v6555, 4
        %v6750 = vadd.f32 %v6555, %v6749
        %v6751 = vrot.slane %v6750, 2
        %v6752 = vadd.f32 %v6750, %v6751
        %v6753 = vrot.slane %v6752, 1
        %v6754 = vadd.f32 %v6752, %v6753
        %v6755 = vrot.slane %v6556, 4
        %v6756 = vadd.f32 %v6556, %v6755
        %v6757 = vrot.slane %v6756, 2
        %v6758 = vadd.f32 %v6756, %v6757
        %v6759 = vrot.slane %v6758, 1
        %v6760 = vadd.f32 %v6758, %v6759
        %v6761 = vmul.f32 %v6562, 0.00390625
        %v6762 = vmul.f32 %v6568, 0.00390625
        %v6763 = vmul.f32 %v6574, 0.00390625
        %v6764 = vmul.f32 %v6580, 0.00390625
        %v6765 = vmul.f32 %v6586, 0.00390625
        %v6766 = vmul.f32 %v6592, 0.00390625
        %v6767 = vmul.f32 %v6598, 0.00390625
        %v6768 = vmul.f32 %v6604, 0.00390625
        %v6769 = vmul.f32 %v6610, 0.00390625
        %v6770 = vmul.f32 %v6616, 0.00390625
        %v6771 = vmul.f32 %v6622, 0.00390625
        %v6772 = vmul.f32 %v6628, 0.00390625
        %v6773 = vmul.f32 %v6634, 0.00390625
        %v6774 = vmul.f32 %v6640, 0.00390625
        %v6775 = vmul.f32 %v6646, 0.00390625
        %v6776 = vmul.f32 %v6652, 0.00390625
        %v6777 = vmul.f32 %v6658, 0.00390625
        %v6778 = vmul.f32 %v6664, 0.00390625
        %v6779 = vmul.f32 %v6670, 0.00390625
        %v6780 = vmul.f32 %v6676, 0.00390625
        %v6781 = vmul.f32 %v6682, 0.00390625
        %v6782 = vmul.f32 %v6688, 0.00390625
        %v6783 = vmul.f32 %v6694, 0.00390625
        %v6784 = vmul.f32 %v6700, 0.00390625
        %v6785 = vmul.f32 %v6706, 0.00390625
        %v6786 = vmul.f32 %v6712, 0.00390625
        %v6787 = vmul.f32 %v6718, 0.00390625
        %v6788 = vmul.f32 %v6724, 0.00390625
        %v6789 = vmul.f32 %v6730, 0.00390625
        %v6790 = vmul.f32 %v6736, 0.00390625
        %v6791 = vmul.f32 %v6742, 0.00390625
        %v6792 = vmul.f32 %v6748, 0.00390625
        %v6793 = vmul.f32 %v6754, 0.00390625
        %v6794 = vmul.f32 %v6760, 0.00390625
        %v6795 = vpack.c.bf16 %v6761, %v6761
        %v6796 = vpack.c.bf16 %v6762, %v6762
        %v6797 = vpack.c.bf16 %v6763, %v6763
        %v6798 = vpack.c.bf16 %v6764, %v6764
        %v6799 = vpack.c.bf16 %v6765, %v6765
        %v6800 = vpack.c.bf16 %v6766, %v6766
        %v6801 = vpack.c.bf16 %v6767, %v6767
        %v6802 = vpack.c.bf16 %v6768, %v6768
        %v6803 = vpack.c.bf16 %v6769, %v6769
        %v6804 = vpack.c.bf16 %v6770, %v6770
        %v6805 = vpack.c.bf16 %v6771, %v6771
        %v6806 = vpack.c.bf16 %v6772, %v6772
        %v6807 = vpack.c.bf16 %v6773, %v6773
        %v6808 = vpack.c.bf16 %v6774, %v6774
        %v6809 = vpack.c.bf16 %v6775, %v6775
        %v6810 = vpack.c.bf16 %v6776, %v6776
        %v6811 = vpack.c.bf16 %v6777, %v6777
        %v6812 = vpack.c.bf16 %v6778, %v6778
        %v6813 = vpack.c.bf16 %v6779, %v6779
        %v6814 = vpack.c.bf16 %v6780, %v6780
        %v6815 = vpack.c.bf16 %v6781, %v6781
        %v6816 = vpack.c.bf16 %v6782, %v6782
        %v6817 = vpack.c.bf16 %v6783, %v6783
        %v6818 = vpack.c.bf16 %v6784, %v6784
        %v6819 = vpack.c.bf16 %v6785, %v6785
        %v6820 = vpack.c.bf16 %v6786, %v6786
        %v6821 = vpack.c.bf16 %v6787, %v6787
        %v6822 = vpack.c.bf16 %v6788, %v6788
        %v6823 = vpack.c.bf16 %v6789, %v6789
        %v6824 = vpack.c.bf16 %v6790, %v6790
        %v6825 = vpack.c.bf16 %v6791, %v6791
        %v6826 = vpack.c.bf16 %v6792, %v6792
        %v6827 = vpack.c.bf16 %v6793, %v6793
        %v6828 = vpack.c.bf16 %v6794, %v6794
        %v6829 = vld [vmem:[%s3] sm:$0xf]
        %v6830 = vld [vmem:[%s3 + $0x4] sm:$0xf]
        %v6831 = vld [vmem:[%s3 + $0x8] sm:$0xf]
        %v6832 = vld [vmem:[%s3 + $0xc] sm:$0xf]
        %v6833 = vld [vmem:[%s3 + $0x10] sm:$0xf]
        %v6834 = vld [vmem:[%s3 + $0x14] sm:$0xf]
        %v6835 = vld [vmem:[%s3 + $0x18] sm:$0xf]
        %v6836 = vld [vmem:[%s3 + $0x1c] sm:$0xf]
        %v6837 = vld [vmem:[%s3 + $0x20] sm:$0xf]
        %v6838 = vld [vmem:[%s3 + $0x24] sm:$0xf]
        %v6839 = vld [vmem:[%s3 + $0x28] sm:$0xf]
        %v6840 = vld [vmem:[%s3 + $0x2c] sm:$0xf]
        %v6841 = vld [vmem:[%s3 + $0x30] sm:$0xf]
        %v6842 = vld [vmem:[%s3 + $0x34] sm:$0xf]
        %v6843 = vld [vmem:[%s3 + $0x38] sm:$0xf]
        %v6844 = vld [vmem:[%s3 + $0x3c] sm:$0xf]
        %v6845 = vld [vmem:[%s3 + $0x40] sm:$0xf]
        %v6846 = vld [vmem:[%s3 + $0x44] sm:$0xf]
        %v6847 = vld [vmem:[%s3 + $0x48] sm:$0xf]
        %v6848 = vld [vmem:[%s3 + $0x4c] sm:$0xf]
        %v6849 = vld [vmem:[%s3 + $0x50] sm:$0xf]
        %v6850 = vld [vmem:[%s3 + $0x54] sm:$0xf]
        %v6851 = vld [vmem:[%s3 + $0x58] sm:$0xf]
        %v6852 = vld [vmem:[%s3 + $0x5c] sm:$0xf]
        %v6853 = vld [vmem:[%s3 + $0x60] sm:$0xf]
        %v6854 = vld [vmem:[%s3 + $0x64] sm:$0xf]
        %v6855 = vld [vmem:[%s3 + $0x68] sm:$0xf]
        %v6856 = vld [vmem:[%s3 + $0x6c] sm:$0xf]
        %v6857 = vld [vmem:[%s3 + $0x70] sm:$0xf]
        %v6858 = vld [vmem:[%s3 + $0x74] sm:$0xf]
        %v6859 = vld [vmem:[%s3 + $0x78] sm:$0xf]
        %v6860 = vld [vmem:[%s3 + $0x7c] sm:$0xf]
        %v6861 = vld [vmem:[%s3 + $0x80] sm:$0xf]
        %v6862 = vld [vmem:[%s3 + $0x84] sm:$0xf]
        %v6863 = vld [vmem:[%s3 + $0x88] sm:$0xf]
        %v6864 = vld [vmem:[%s3 + $0x8c] sm:$0xf]
        %v6865 = vld [vmem:[%s3 + $0x90] sm:$0xf]
        %v6866 = vld [vmem:[%s3 + $0x94] sm:$0xf]
        %v6867 = vld [vmem:[%s3 + $0x98] sm:$0xf]
        %v6868 = vld [vmem:[%s3 + $0x9c] sm:$0xf]
        %v6869 = vld [vmem:[%s3 + $0xa0] sm:$0xf]
        %v6870 = vld [vmem:[%s3 + $0xa4] sm:$0xf]
        %v6871 = vld [vmem:[%s3 + $0xa8] sm:$0xf]
        %v6872 = vld [vmem:[%s3 + $0xac] sm:$0xf]
        %v6873 = vld [vmem:[%s3 + $0xb0] sm:$0xf]
        %v6874 = vld [vmem:[%s3 + $0xb4] sm:$0xf]
        %v6875 = vld [vmem:[%s3 + $0xb8] sm:$0xf]
        %v6876 = vld [vmem:[%s3 + $0xbc] sm:$0xf]
        %v6877 = vld [vmem:[%s3 + $0xc0] sm:$0xf]
        %v6878 = vld [vmem:[%s3 + $0xc4] sm:$0xf]
        %v6879 = vld [vmem:[%s3 + $0xc8] sm:$0xf]
        %v6880 = vld [vmem:[%s3 + $0xcc] sm:$0xf]
        %v6881 = vld [vmem:[%s3 + $0xd0] sm:$0xf]
        %v6882 = vld [vmem:[%s3 + $0xd4] sm:$0xf]
        %v6883 = vld [vmem:[%s3 + $0xd8] sm:$0xf]
        %v6884 = vld [vmem:[%s3 + $0xdc] sm:$0xf]
        %v6885 = vld [vmem:[%s3 + $0xe0] sm:$0xf]
        %v6886 = vld [vmem:[%s3 + $0xe4] sm:$0xf]
        %v6887 = vld [vmem:[%s3 + $0xe8] sm:$0xf]
        %v6888 = vld [vmem:[%s3 + $0xec] sm:$0xf]
        %v6889 = vld [vmem:[%s3 + $0xf0] sm:$0xf]
        %v6890 = vld [vmem:[%s3 + $0xf4] sm:$0xf]
        %v6891 = vld [vmem:[%s3 + $0xf8] sm:$0xf]
        %v6892 = vld [vmem:[%s3 + $0xfc] sm:$0xf]
        %v6893 = vld [vmem:[%s3 + $0x100] sm:$0xf]
        %v6894 = vld [vmem:[%s3 + $0x104] sm:$0xf]
        %v6895 = vld [vmem:[%s3 + $0x108] sm:$0xf]
        %v6896 = vld [vmem:[%s3 + $0x10c] sm:$0xf]
        %v6897 = vld [vmem:[%s3 + $0x110] sm:$0xf]
        %v6898 = vld [vmem:[%s3 + $0x114] sm:$0xf]
        %v6899 = vld [vmem:[%s3 + $0x118] sm:$0xf]
        %v6900 = vld [vmem:[%s3 + $0x11c] sm:$0xf]
        %v6901 = vld [vmem:[%s3 + $0x120] sm:$0xf]
        %v6902 = vld [vmem:[%s3 + $0x124] sm:$0xf]
        %v6903 = vld [vmem:[%s3 + $0x128] sm:$0xf]
        %v6904 = vld [vmem:[%s3 + $0x12c] sm:$0xf]
        %v6905 = vld [vmem:[%s3 + $0x130] sm:$0xf]
        %v6906 = vld [vmem:[%s3 + $0x134] sm:$0xf]
        %v6907 = vld [vmem:[%s3 + $0x138] sm:$0xf]
        %v6908 = vld [vmem:[%s3 + $0x13c] sm:$0xf]
        %v6909 = vld [vmem:[%s3 + $0x140] sm:$0xf]
        %v6910 = vld [vmem:[%s3 + $0x144] sm:$0xf]
        %v6911 = vld [vmem:[%s3 + $0x148] sm:$0xf]
        %v6912 = vld [vmem:[%s3 + $0x14c] sm:$0xf]
        %v6913 = vld [vmem:[%s3 + $0x150] sm:$0xf]
        %v6914 = vld [vmem:[%s3 + $0x154] sm:$0xf]
        %v6915 = vld [vmem:[%s3 + $0x158] sm:$0xf]
        %v6916 = vld [vmem:[%s3 + $0x15c] sm:$0xf]
        %v6917 = vld [vmem:[%s3 + $0x160] sm:$0xf]
        %v6918 = vld [vmem:[%s3 + $0x164] sm:$0xf]
        %v6919 = vld [vmem:[%s3 + $0x168] sm:$0xf]
        %v6920 = vld [vmem:[%s3 + $0x16c] sm:$0xf]
        %v6921 = vld [vmem:[%s3 + $0x170] sm:$0xf]
        %v6922 = vld [vmem:[%s3 + $0x174] sm:$0xf]
        %v6923 = vld [vmem:[%s3 + $0x178] sm:$0xf]
        %v6924 = vld [vmem:[%s3 + $0x17c] sm:$0xf]
        %v6925 = vld [vmem:[%s3 + $0x180] sm:$0xf]
        %v6926 = vld [vmem:[%s3 + $0x184] sm:$0xf]
        %v6927 = vld [vmem:[%s3 + $0x188] sm:$0xf]
        %v6928 = vld [vmem:[%s3 + $0x18c] sm:$0xf]
        %v6929 = vld [vmem:[%s3 + $0x190] sm:$0xf]
        %v6930 = vld [vmem:[%s3 + $0x194] sm:$0xf]
        %v6931 = vld [vmem:[%s3 + $0x198] sm:$0xf]
        %v6932 = vld [vmem:[%s3 + $0x19c] sm:$0xf]
        %v6933 = vld [vmem:[%s3 + $0x1a0] sm:$0xf]
        %v6934 = vld [vmem:[%s3 + $0x1a4] sm:$0xf]
        %v6935 = vld [vmem:[%s3 + $0x1a8] sm:$0xf]
        %v6936 = vld [vmem:[%s3 + $0x1ac] sm:$0xf]
        %v6937 = vld [vmem:[%s3 + $0x1b0] sm:$0xf]
        %v6938 = vld [vmem:[%s3 + $0x1b4] sm:$0xf]
        %v6939 = vld [vmem:[%s3 + $0x1b8] sm:$0xf]
        %v6940 = vld [vmem:[%s3 + $0x1bc] sm:$0xf]
        %v6941 = vld [vmem:[%s3 + $0x1c0] sm:$0xf]
        %v6942 = vld [vmem:[%s3 + $0x1c4] sm:$0xf]
        %v6943 = vld [vmem:[%s3 + $0x1c8] sm:$0xf]
        %v6944 = vld [vmem:[%s3 + $0x1cc] sm:$0xf]
        %v6945 = vld [vmem:[%s3 + $0x1d0] sm:$0xf]
        %v6946 = vld [vmem:[%s3 + $0x1d4] sm:$0xf]
        %v6947 = vld [vmem:[%s3 + $0x1d8] sm:$0xf]
        %v6948 = vld [vmem:[%s3 + $0x1dc] sm:$0xf]
        %v6949 = vld [vmem:[%s3 + $0x1e0] sm:$0xf]
        %v6950 = vld [vmem:[%s3 + $0x1e4] sm:$0xf]
        %v6951 = vld [vmem:[%s3 + $0x1e8] sm:$0xf]
        %v6952 = vld [vmem:[%s3 + $0x1ec] sm:$0xf]
        %v6953 = vld [vmem:[%s3 + $0x1f0] sm:$0xf]
        %v6954 = vld [vmem:[%s3 + $0x1f4] sm:$0xf]
        %v6955 = vld [vmem:[%s3 + $0x1f8] sm:$0xf]
        %v6956 = vld [vmem:[%s3 + $0x1fc] sm:$0xf]
        %v6957 = vld [vmem:[%s3 + $0x200] sm:$0xf]
        %v6958 = vld [vmem:[%s3 + $0x204] sm:$0xf]
        %v6959 = vld [vmem:[%s3 + $0x208] sm:$0xf]
        %v6960 = vld [vmem:[%s3 + $0x20c] sm:$0xf]
        %v6961 = vld [vmem:[%s3 + $0x210] sm:$0xf]
        %v6962 = vld [vmem:[%s3 + $0x214] sm:$0xf]
        %v6963 = vld [vmem:[%s3 + $0x218] sm:$0xf]
        %v6964 = vld [vmem:[%s3 + $0x21c] sm:$0xf]
        %v6965 = vld [vmem:[%s3 + $0x220] sm:$0xf]
        %v6966 = vld [vmem:[%s3 + $0x224] sm:$0xf]
        %v6967 = vld [vmem:[%s3 + $0x228] sm:$0xf]
        %v6968 = vld [vmem:[%s3 + $0x22c] sm:$0xf]
        %v6969 = vld [vmem:[%s3 + $0x230] sm:$0xf]
        %v6970 = vld [vmem:[%s3 + $0x234] sm:$0xf]
        %v6971 = vld [vmem:[%s3 + $0x238] sm:$0xf]
        %v6972 = vld [vmem:[%s3 + $0x23c] sm:$0xf]
        %v6973 = vld [vmem:[%s3 + $0x240] sm:$0xf]
        %v6974 = vld [vmem:[%s3 + $0x244] sm:$0xf]
        %v6975 = vld [vmem:[%s3 + $0x248] sm:$0xf]
        %v6976 = vld [vmem:[%s3 + $0x24c] sm:$0xf]
        %v6977 = vld [vmem:[%s3 + $0x250] sm:$0xf]
        %v6978 = vld [vmem:[%s3 + $0x254] sm:$0xf]
        %v6979 = vld [vmem:[%s3 + $0x258] sm:$0xf]
        %v6980 = vld [vmem:[%s3 + $0x25c] sm:$0xf]
        %v6981 = vld [vmem:[%s3 + $0x260] sm:$0xf]
        %v6982 = vld [vmem:[%s3 + $0x264] sm:$0xf]
        %v6983 = vld [vmem:[%s3 + $0x268] sm:$0xf]
        %v6984 = vld [vmem:[%s3 + $0x26c] sm:$0xf]
        %v6985 = vld [vmem:[%s3 + $0x270] sm:$0xf]
        %v6986 = vld [vmem:[%s3 + $0x274] sm:$0xf]
        %v6987 = vld [vmem:[%s3 + $0x278] sm:$0xf]
        %v6988 = vld [vmem:[%s3 + $0x27c] sm:$0xf]
        %v6989 = vld [vmem:[%s3 + $0x280] sm:$0xf]
        %v6990 = vld [vmem:[%s3 + $0x284] sm:$0xf]
        %v6991 = vld [vmem:[%s3 + $0x288] sm:$0xf]
        %v6992 = vld [vmem:[%s3 + $0x28c] sm:$0xf]
        %v6993 = vld [vmem:[%s3 + $0x290] sm:$0xf]
        %v6994 = vld [vmem:[%s3 + $0x294] sm:$0xf]
        %v6995 = vld [vmem:[%s3 + $0x298] sm:$0xf]
        %v6996 = vld [vmem:[%s3 + $0x29c] sm:$0xf]
        %v6997 = vld [vmem:[%s3 + $0x2a0] sm:$0xf]
        %v6998 = vld [vmem:[%s3 + $0x2a4] sm:$0xf]
        %v6999 = vld [vmem:[%s3 + $0x2a8] sm:$0xf]
        %v7000 = vld [vmem:[%s3 + $0x2ac] sm:$0xf]
        %v7001 = vld [vmem:[%s3 + $0x2b0] sm:$0xf]
        %v7002 = vld [vmem:[%s3 + $0x2b4] sm:$0xf]
        %v7003 = vld [vmem:[%s3 + $0x2b8] sm:$0xf]
        %v7004 = vld [vmem:[%s3 + $0x2bc] sm:$0xf]
        %v7005 = vld [vmem:[%s3 + $0x2c0] sm:$0xf]
        %v7006 = vld [vmem:[%s3 + $0x2c4] sm:$0xf]
        %v7007 = vld [vmem:[%s3 + $0x2c8] sm:$0xf]
        %v7008 = vld [vmem:[%s3 + $0x2cc] sm:$0xf]
        %v7009 = vld [vmem:[%s3 + $0x2d0] sm:$0xf]
        %v7010 = vld [vmem:[%s3 + $0x2d4] sm:$0xf]
        %v7011 = vld [vmem:[%s3 + $0x2d8] sm:$0xf]
        %v7012 = vld [vmem:[%s3 + $0x2dc] sm:$0xf]
        %v7013 = vld [vmem:[%s3 + $0x2e0] sm:$0xf]
        %v7014 = vld [vmem:[%s3 + $0x2e4] sm:$0xf]
        %v7015 = vld [vmem:[%s3 + $0x2e8] sm:$0xf]
        %v7016 = vld [vmem:[%s3 + $0x2ec] sm:$0xf]
        %v7017 = vld [vmem:[%s3 + $0x2f0] sm:$0xf]
        %v7018 = vld [vmem:[%s3 + $0x2f4] sm:$0xf]
        %v7019 = vld [vmem:[%s3 + $0x2f8] sm:$0xf]
        %v7020 = vld [vmem:[%s3 + $0x2fc] sm:$0xf]
        %v7021 = vld [vmem:[%s3 + $0x300] sm:$0xf]
        %v7022 = vld [vmem:[%s3 + $0x304] sm:$0xf]
        %v7023 = vld [vmem:[%s3 + $0x308] sm:$0xf]
        %v7024 = vld [vmem:[%s3 + $0x30c] sm:$0xf]
        %v7025 = vld [vmem:[%s3 + $0x310] sm:$0xf]
        %v7026 = vld [vmem:[%s3 + $0x314] sm:$0xf]
        %v7027 = vld [vmem:[%s3 + $0x318] sm:$0xf]
        %v7028 = vld [vmem:[%s3 + $0x31c] sm:$0xf]
        %v7029 = vld [vmem:[%s3 + $0x320] sm:$0xf]
        %v7030 = vld [vmem:[%s3 + $0x324] sm:$0xf]
        %v7031 = vld [vmem:[%s3 + $0x328] sm:$0xf]
        %v7032 = vld [vmem:[%s3 + $0x32c] sm:$0xf]
        %v7033 = vld [vmem:[%s3 + $0x330] sm:$0xf]
        %v7034 = vld [vmem:[%s3 + $0x334] sm:$0xf]
        %v7035 = vld [vmem:[%s3 + $0x338] sm:$0xf]
        %v7036 = vld [vmem:[%s3 + $0x33c] sm:$0xf]
        %v7037 = vld [vmem:[%s3 + $0x340] sm:$0xf]
        %v7038 = vld [vmem:[%s3 + $0x344] sm:$0xf]
        %v7039 = vld [vmem:[%s3 + $0x348] sm:$0xf]
        %v7040 = vld [vmem:[%s3 + $0x34c] sm:$0xf]
        %v7041 = vld [vmem:[%s3 + $0x350] sm:$0xf]
        %v7042 = vld [vmem:[%s3 + $0x354] sm:$0xf]
        %v7043 = vld [vmem:[%s3 + $0x358] sm:$0xf]
        %v7044 = vld [vmem:[%s3 + $0x35c] sm:$0xf]
        %v7045 = vld [vmem:[%s3 + $0x360] sm:$0xf]
        %v7046 = vld [vmem:[%s3 + $0x364] sm:$0xf]
        %v7047 = vld [vmem:[%s3 + $0x368] sm:$0xf]
        %v7048 = vld [vmem:[%s3 + $0x36c] sm:$0xf]
        %v7049 = vld [vmem:[%s3 + $0x370] sm:$0xf]
        %v7050 = vld [vmem:[%s3 + $0x374] sm:$0xf]
        %v7051 = vld [vmem:[%s3 + $0x378] sm:$0xf]
        %v7052 = vld [vmem:[%s3 + $0x37c] sm:$0xf]
        %v7053 = vld [vmem:[%s3 + $0x380] sm:$0xf]
        %v7054 = vld [vmem:[%s3 + $0x384] sm:$0xf]
        %v7055 = vld [vmem:[%s3 + $0x388] sm:$0xf]
        %v7056 = vld [vmem:[%s3 + $0x38c] sm:$0xf]
        %v7057 = vld [vmem:[%s3 + $0x390] sm:$0xf]
        %v7058 = vld [vmem:[%s3 + $0x394] sm:$0xf]
        %v7059 = vld [vmem:[%s3 + $0x398] sm:$0xf]
        %v7060 = vld [vmem:[%s3 + $0x39c] sm:$0xf]
        %v7061 = vld [vmem:[%s3 + $0x3a0] sm:$0xf]
        %v7062 = vld [vmem:[%s3 + $0x3a4] sm:$0xf]
        %v7063 = vld [vmem:[%s3 + $0x3a8] sm:$0xf]
        %v7064 = vld [vmem:[%s3 + $0x3ac] sm:$0xf]
        %v7065 = vld [vmem:[%s3 + $0x3b0] sm:$0xf]
        %v7066 = vld [vmem:[%s3 + $0x3b4] sm:$0xf]
        %v7067 = vld [vmem:[%s3 + $0x3b8] sm:$0xf]
        %v7068 = vld [vmem:[%s3 + $0x3bc] sm:$0xf]
        %v7069 = vld [vmem:[%s3 + $0x3c0] sm:$0xf]
        %v7070 = vld [vmem:[%s3 + $0x3c4] sm:$0xf]
        %v7071 = vld [vmem:[%s3 + $0x3c8] sm:$0xf]
        %v7072 = vld [vmem:[%s3 + $0x3cc] sm:$0xf]
        %v7073 = vld [vmem:[%s3 + $0x3d0] sm:$0xf]
        %v7074 = vld [vmem:[%s3 + $0x3d4] sm:$0xf]
        %v7075 = vld [vmem:[%s3 + $0x3d8] sm:$0xf]
        %v7076 = vld [vmem:[%s3 + $0x3dc] sm:$0xf]
        %v7077 = vld [vmem:[%s3 + $0x3e0] sm:$0xf]
        %v7078 = vld [vmem:[%s3 + $0x3e4] sm:$0xf]
        %v7079 = vld [vmem:[%s3 + $0x3e8] sm:$0xf]
        %v7080 = vld [vmem:[%s3 + $0x3ec] sm:$0xf]
        %v7081 = vld [vmem:[%s3 + $0x3f0] sm:$0xf]
        %v7082 = vld [vmem:[%s3 + $0x3f4] sm:$0xf]
        %v7083 = vld [vmem:[%s3 + $0x3f8] sm:$0xf]
        %v7084 = vld [vmem:[%s3 + $0x3fc] sm:$0xf]
        %v7085 = vld [vmem:[%s3 + $0x400] sm:$0xf]
        %v7086 = vld [vmem:[%s3 + $0x404] sm:$0xf]
        %v7087 = vld [vmem:[%s3 + $0x408] sm:$0xf]
        %v7088 = vld [vmem:[%s3 + $0x40c] sm:$0xf]
        %v7089 = vld [vmem:[%s3 + $0x410] sm:$0xf]
        %v7090 = vld [vmem:[%s3 + $0x414] sm:$0xf]
        %v7091 = vld [vmem:[%s3 + $0x418] sm:$0xf]
        %v7092 = vld [vmem:[%s3 + $0x41c] sm:$0xf]
        %v7093 = vld [vmem:[%s3 + $0x420] sm:$0xf]
        %v7094 = vld [vmem:[%s3 + $0x424] sm:$0xf]
        %v7095 = vld [vmem:[%s3 + $0x428] sm:$0xf]
        %v7096 = vld [vmem:[%s3 + $0x42c] sm:$0xf]
        %v7097 = vld [vmem:[%s3 + $0x430] sm:$0xf]
        %v7098 = vld [vmem:[%s3 + $0x434] sm:$0xf]
        %v7099 = vld [vmem:[%s3 + $0x438] sm:$0xf]
        %v7100 = vld [vmem:[%s3 + $0x43c] sm:$0xf]
        %v7101 = vld [vmem:[%s3 + $0x440] sm:$0xf]
        %v7102 = vld [vmem:[%s3 + $0x444] sm:$0xf]
        %v7103 = vld [vmem:[%s3 + $0x448] sm:$0xf]
        %v7104 = vld [vmem:[%s3 + $0x44c] sm:$0xf]
        %v7105 = vld [vmem:[%s3 + $0x450] sm:$0xf]
        %v7106 = vld [vmem:[%s3 + $0x454] sm:$0xf]
        %v7107 = vld [vmem:[%s3 + $0x458] sm:$0xf]
        %v7108 = vld [vmem:[%s3 + $0x45c] sm:$0xf]
        %v7109 = vld [vmem:[%s3 + $0x460] sm:$0xf]
        %v7110 = vld [vmem:[%s3 + $0x464] sm:$0xf]
        %v7111 = vld [vmem:[%s3 + $0x468] sm:$0xf]
        %v7112 = vld [vmem:[%s3 + $0x46c] sm:$0xf]
        %v7113 = vld [vmem:[%s3 + $0x470] sm:$0xf]
        %v7114 = vld [vmem:[%s3 + $0x474] sm:$0xf]
        %v7115 = vld [vmem:[%s3 + $0x478] sm:$0xf]
        %v7116 = vld [vmem:[%s3 + $0x47c] sm:$0xf]
        %v7117 = vld [vmem:[%s3 + $0x480] sm:$0xf]
        %v7118 = vld [vmem:[%s3 + $0x484] sm:$0xf]
        %v7119 = vld [vmem:[%s3 + $0x488] sm:$0xf]
        %v7120 = vld [vmem:[%s3 + $0x48c] sm:$0xf]
        %v7121 = vld [vmem:[%s3 + $0x490] sm:$0xf]
        %v7122 = vld [vmem:[%s3 + $0x494] sm:$0xf]
        %v7123 = vld [vmem:[%s3 + $0x498] sm:$0xf]
        %v7124 = vld [vmem:[%s3 + $0x49c] sm:$0xf]
        %v7125 = vld [vmem:[%s3 + $0x4a0] sm:$0xf]
        %v7126 = vld [vmem:[%s3 + $0x4a4] sm:$0xf]
        %v7127 = vld [vmem:[%s3 + $0x4a8] sm:$0xf]
        %v7128 = vld [vmem:[%s3 + $0x4ac] sm:$0xf]
        %v7129 = vld [vmem:[%s3 + $0x4b0] sm:$0xf]
        %v7130 = vld [vmem:[%s3 + $0x4b4] sm:$0xf]
        %v7131 = vld [vmem:[%s3 + $0x4b8] sm:$0xf]
        %v7132 = vld [vmem:[%s3 + $0x4bc] sm:$0xf]
        %v7133 = vld [vmem:[%s3 + $0x4c0] sm:$0xf]
        %v7134 = vld [vmem:[%s3 + $0x4c4] sm:$0xf]
        %v7135 = vld [vmem:[%s3 + $0x4c8] sm:$0xf]
        %v7136 = vld [vmem:[%s3 + $0x4cc] sm:$0xf]
        %v7137 = vld [vmem:[%s3 + $0x4d0] sm:$0xf]
        %v7138 = vld [vmem:[%s3 + $0x4d4] sm:$0xf]
        %v7139 = vld [vmem:[%s3 + $0x4d8] sm:$0xf]
        %v7140 = vld [vmem:[%s3 + $0x4dc] sm:$0xf]
        %v7141 = vld [vmem:[%s3 + $0x4e0] sm:$0xf]
        %v7142 = vld [vmem:[%s3 + $0x4e4] sm:$0xf]
        %v7143 = vld [vmem:[%s3 + $0x4e8] sm:$0xf]
        %v7144 = vld [vmem:[%s3 + $0x4ec] sm:$0xf]
        %v7145 = vld [vmem:[%s3 + $0x4f0] sm:$0xf]
        %v7146 = vld [vmem:[%s3 + $0x4f4] sm:$0xf]
        %v7147 = vld [vmem:[%s3 + $0x4f8] sm:$0xf]
        %v7148 = vld [vmem:[%s3 + $0x4fc] sm:$0xf]
        %v7149 = vld [vmem:[%s3 + $0x500] sm:$0xf]
        %v7150 = vld [vmem:[%s3 + $0x504] sm:$0xf]
        %v7151 = vld [vmem:[%s3 + $0x508] sm:$0xf]
        %v7152 = vld [vmem:[%s3 + $0x50c] sm:$0xf]
        %v7153 = vld [vmem:[%s3 + $0x510] sm:$0xf]
        %v7154 = vld [vmem:[%s3 + $0x514] sm:$0xf]
        %v7155 = vld [vmem:[%s3 + $0x518] sm:$0xf]
        %v7156 = vld [vmem:[%s3 + $0x51c] sm:$0xf]
        %v7157 = vld [vmem:[%s3 + $0x520] sm:$0xf]
        %v7158 = vld [vmem:[%s3 + $0x524] sm:$0xf]
        %v7159 = vld [vmem:[%s3 + $0x528] sm:$0xf]
        %v7160 = vld [vmem:[%s3 + $0x52c] sm:$0xf]
        %v7161 = vld [vmem:[%s3 + $0x530] sm:$0xf]
        %v7162 = vld [vmem:[%s3 + $0x534] sm:$0xf]
        %v7163 = vld [vmem:[%s3 + $0x538] sm:$0xf]
        %v7164 = vld [vmem:[%s3 + $0x53c] sm:$0xf]
        %v7165 = vld [vmem:[%s3 + $0x540] sm:$0xf]
        %v7166 = vld [vmem:[%s3 + $0x544] sm:$0xf]
        %v7167 = vld [vmem:[%s3 + $0x548] sm:$0xf]
        %v7168 = vld [vmem:[%s3 + $0x54c] sm:$0xf]
        %v7169 = vld [vmem:[%s3 + $0x550] sm:$0xf]
        %v7170 = vld [vmem:[%s3 + $0x554] sm:$0xf]
        %v7171 = vld [vmem:[%s3 + $0x558] sm:$0xf]
        %v7172 = vld [vmem:[%s3 + $0x55c] sm:$0xf]
        %v7173 = vld [vmem:[%s3 + $0x560] sm:$0xf]
        %v7174 = vld [vmem:[%s3 + $0x564] sm:$0xf]
        %v7175 = vld [vmem:[%s3 + $0x568] sm:$0xf]
        %v7176 = vld [vmem:[%s3 + $0x56c] sm:$0xf]
        %v7177 = vld [vmem:[%s3 + $0x570] sm:$0xf]
        %v7178 = vld [vmem:[%s3 + $0x574] sm:$0xf]
        %v7179 = vld [vmem:[%s3 + $0x578] sm:$0xf]
        %v7180 = vld [vmem:[%s3 + $0x57c] sm:$0xf]
        %v7181 = vld [vmem:[%s3 + $0x580] sm:$0xf]
        %v7182 = vld [vmem:[%s3 + $0x584] sm:$0xf]
        %v7183 = vld [vmem:[%s3 + $0x588] sm:$0xf]
        %v7184 = vld [vmem:[%s3 + $0x58c] sm:$0xf]
        %v7185 = vld [vmem:[%s3 + $0x590] sm:$0xf]
        %v7186 = vld [vmem:[%s3 + $0x594] sm:$0xf]
        %v7187 = vld [vmem:[%s3 + $0x598] sm:$0xf]
        %v7188 = vld [vmem:[%s3 + $0x59c] sm:$0xf]
        %v7189 = vld [vmem:[%s3 + $0x5a0] sm:$0xf]
        %v7190 = vld [vmem:[%s3 + $0x5a4] sm:$0xf]
        %v7191 = vld [vmem:[%s3 + $0x5a8] sm:$0xf]
        %v7192 = vld [vmem:[%s3 + $0x5ac] sm:$0xf]
        %v7193 = vld [vmem:[%s3 + $0x5b0] sm:$0xf]
        %v7194 = vld [vmem:[%s3 + $0x5b4] sm:$0xf]
        %v7195 = vld [vmem:[%s3 + $0x5b8] sm:$0xf]
        %v7196 = vld [vmem:[%s3 + $0x5bc] sm:$0xf]
        %v7197 = vld [vmem:[%s3 + $0x5c0] sm:$0xf]
        %v7198 = vld [vmem:[%s3 + $0x5c4] sm:$0xf]
        %v7199 = vld [vmem:[%s3 + $0x5c8] sm:$0xf]
        %v7200 = vld [vmem:[%s3 + $0x5cc] sm:$0xf]
        %v7201 = vld [vmem:[%s3 + $0x5d0] sm:$0xf]
        %v7202 = vld [vmem:[%s3 + $0x5d4] sm:$0xf]
        %v7203 = vld [vmem:[%s3 + $0x5d8] sm:$0xf]
        %v7204 = vld [vmem:[%s3 + $0x5dc] sm:$0xf]
        %v7205 = vld [vmem:[%s3 + $0x5e0] sm:$0xf]
        %v7206 = vld [vmem:[%s3 + $0x5e4] sm:$0xf]
        %v7207 = vld [vmem:[%s3 + $0x5e8] sm:$0xf]
        %v7208 = vld [vmem:[%s3 + $0x5ec] sm:$0xf]
        %v7209 = vld [vmem:[%s3 + $0x5f0] sm:$0xf]
        %v7210 = vld [vmem:[%s3 + $0x5f4] sm:$0xf]
        %v7211 = vld [vmem:[%s3 + $0x5f8] sm:$0xf]
        %v7212 = vld [vmem:[%s3 + $0x5fc] sm:$0xf]
        %v7213 = vld [vmem:[%s3 + $0x600] sm:$0xf]
        %v7214 = vld [vmem:[%s3 + $0x604] sm:$0xf]
        %v7215 = vld [vmem:[%s3 + $0x608] sm:$0xf]
        %v7216 = vld [vmem:[%s3 + $0x60c] sm:$0xf]
        %v7217 = vld [vmem:[%s3 + $0x610] sm:$0xf]
        %v7218 = vld [vmem:[%s3 + $0x614] sm:$0xf]
        %v7219 = vld [vmem:[%s3 + $0x618] sm:$0xf]
        %v7220 = vld [vmem:[%s3 + $0x61c] sm:$0xf]
        %v7221 = vld [vmem:[%s3 + $0x620] sm:$0xf]
        %v7222 = vld [vmem:[%s3 + $0x624] sm:$0xf]
        %v7223 = vld [vmem:[%s3 + $0x628] sm:$0xf]
        %v7224 = vld [vmem:[%s3 + $0x62c] sm:$0xf]
        %v7225 = vld [vmem:[%s3 + $0x630] sm:$0xf]
        %v7226 = vld [vmem:[%s3 + $0x634] sm:$0xf]
        %v7227 = vld [vmem:[%s3 + $0x638] sm:$0xf]
        %v7228 = vld [vmem:[%s3 + $0x63c] sm:$0xf]
        %v7229 = vld [vmem:[%s3 + $0x640] sm:$0xf]
        %v7230 = vld [vmem:[%s3 + $0x644] sm:$0xf]
        %v7231 = vld [vmem:[%s3 + $0x648] sm:$0xf]
        %v7232 = vld [vmem:[%s3 + $0x64c] sm:$0xf]
        %v7233 = vld [vmem:[%s3 + $0x650] sm:$0xf]
        %v7234 = vld [vmem:[%s3 + $0x654] sm:$0xf]
        %v7235 = vld [vmem:[%s3 + $0x658] sm:$0xf]
        %v7236 = vld [vmem:[%s3 + $0x65c] sm:$0xf]
        %v7237 = vld [vmem:[%s3 + $0x660] sm:$0xf]
        %v7238 = vld [vmem:[%s3 + $0x664] sm:$0xf]
        %v7239 = vld [vmem:[%s3 + $0x668] sm:$0xf]
        %v7240 = vld [vmem:[%s3 + $0x66c] sm:$0xf]
        %v7241 = vld [vmem:[%s3 + $0x670] sm:$0xf]
        %v7242 = vld [vmem:[%s3 + $0x674] sm:$0xf]
        %v7243 = vld [vmem:[%s3 + $0x678] sm:$0xf]
        %v7244 = vld [vmem:[%s3 + $0x67c] sm:$0xf]
        %v7245 = vld [vmem:[%s3 + $0x680] sm:$0xf]
        %v7246 = vld [vmem:[%s3 + $0x684] sm:$0xf]
        %v7247 = vld [vmem:[%s3 + $0x688] sm:$0xf]
        %v7248 = vld [vmem:[%s3 + $0x68c] sm:$0xf]
        %v7249 = vld [vmem:[%s3 + $0x690] sm:$0xf]
        %v7250 = vld [vmem:[%s3 + $0x694] sm:$0xf]
        %v7251 = vld [vmem:[%s3 + $0x698] sm:$0xf]
        %v7252 = vld [vmem:[%s3 + $0x69c] sm:$0xf]
        %v7253 = vld [vmem:[%s3 + $0x6a0] sm:$0xf]
        %v7254 = vld [vmem:[%s3 + $0x6a4] sm:$0xf]
        %v7255 = vld [vmem:[%s3 + $0x6a8] sm:$0xf]
        %v7256 = vld [vmem:[%s3 + $0x6ac] sm:$0xf]
        %v7257 = vld [vmem:[%s3 + $0x6b0] sm:$0xf]
        %v7258 = vld [vmem:[%s3 + $0x6b4] sm:$0xf]
        %v7259 = vld [vmem:[%s3 + $0x6b8] sm:$0xf]
        %v7260 = vld [vmem:[%s3 + $0x6bc] sm:$0xf]
        %v7261 = vld [vmem:[%s3 + $0x6c0] sm:$0xf]
        %v7262 = vld [vmem:[%s3 + $0x6c4] sm:$0xf]
        %v7263 = vld [vmem:[%s3 + $0x6c8] sm:$0xf]
        %v7264 = vld [vmem:[%s3 + $0x6cc] sm:$0xf]
        %v7265 = vld [vmem:[%s3 + $0x6d0] sm:$0xf]
        %v7266 = vld [vmem:[%s3 + $0x6d4] sm:$0xf]
        %v7267 = vld [vmem:[%s3 + $0x6d8] sm:$0xf]
        %v7268 = vld [vmem:[%s3 + $0x6dc] sm:$0xf]
        %v7269 = vld [vmem:[%s3 + $0x6e0] sm:$0xf]
        %v7270 = vld [vmem:[%s3 + $0x6e4] sm:$0xf]
        %v7271 = vld [vmem:[%s3 + $0x6e8] sm:$0xf]
        %v7272 = vld [vmem:[%s3 + $0x6ec] sm:$0xf]
        %v7273 = vld [vmem:[%s3 + $0x6f0] sm:$0xf]
        %v7274 = vld [vmem:[%s3 + $0x6f4] sm:$0xf]
        %v7275 = vld [vmem:[%s3 + $0x6f8] sm:$0xf]
        %v7276 = vld [vmem:[%s3 + $0x6fc] sm:$0xf]
        %v7277 = vld [vmem:[%s3 + $0x700] sm:$0xf]
        %v7278 = vld [vmem:[%s3 + $0x704] sm:$0xf]
        %v7279 = vld [vmem:[%s3 + $0x708] sm:$0xf]
        %v7280 = vld [vmem:[%s3 + $0x70c] sm:$0xf]
        %v7281 = vld [vmem:[%s3 + $0x710] sm:$0xf]
        %v7282 = vld [vmem:[%s3 + $0x714] sm:$0xf]
        %v7283 = vld [vmem:[%s3 + $0x718] sm:$0xf]
        %v7284 = vld [vmem:[%s3 + $0x71c] sm:$0xf]
        %v7285 = vld [vmem:[%s3 + $0x720] sm:$0xf]
        %v7286 = vld [vmem:[%s3 + $0x724] sm:$0xf]
        %v7287 = vld [vmem:[%s3 + $0x728] sm:$0xf]
        %v7288 = vld [vmem:[%s3 + $0x72c] sm:$0xf]
        %v7289 = vld [vmem:[%s3 + $0x730] sm:$0xf]
        %v7290 = vld [vmem:[%s3 + $0x734] sm:$0xf]
        %v7291 = vld [vmem:[%s3 + $0x738] sm:$0xf]
        %v7292 = vld [vmem:[%s3 + $0x73c] sm:$0xf]
        %v7293 = vld [vmem:[%s3 + $0x740] sm:$0xf]
        %v7294 = vld [vmem:[%s3 + $0x744] sm:$0xf]
        %v7295 = vld [vmem:[%s3 + $0x748] sm:$0xf]
        %v7296 = vld [vmem:[%s3 + $0x74c] sm:$0xf]
        %v7297 = vld [vmem:[%s3 + $0x750] sm:$0xf]
        %v7298 = vld [vmem:[%s3 + $0x754] sm:$0xf]
        %v7299 = vld [vmem:[%s3 + $0x758] sm:$0xf]
        %v7300 = vld [vmem:[%s3 + $0x75c] sm:$0xf]
        %v7301 = vld [vmem:[%s3 + $0x760] sm:$0xf]
        %v7302 = vld [vmem:[%s3 + $0x764] sm:$0xf]
        %v7303 = vld [vmem:[%s3 + $0x768] sm:$0xf]
        %v7304 = vld [vmem:[%s3 + $0x76c] sm:$0xf]
        %v7305 = vld [vmem:[%s3 + $0x770] sm:$0xf]
        %v7306 = vld [vmem:[%s3 + $0x774] sm:$0xf]
        %v7307 = vld [vmem:[%s3 + $0x778] sm:$0xf]
        %v7308 = vld [vmem:[%s3 + $0x77c] sm:$0xf]
        %v7309 = vld [vmem:[%s3 + $0x780] sm:$0xf]
        %v7310 = vld [vmem:[%s3 + $0x784] sm:$0xf]
        %v7311 = vld [vmem:[%s3 + $0x788] sm:$0xf]
        %v7312 = vld [vmem:[%s3 + $0x78c] sm:$0xf]
        %v7313 = vld [vmem:[%s3 + $0x790] sm:$0xf]
        %v7314 = vld [vmem:[%s3 + $0x794] sm:$0xf]
        %v7315 = vld [vmem:[%s3 + $0x798] sm:$0xf]
        %v7316 = vld [vmem:[%s3 + $0x79c] sm:$0xf]
        %v7317 = vld [vmem:[%s3 + $0x7a0] sm:$0xf]
        %v7318 = vld [vmem:[%s3 + $0x7a4] sm:$0xf]
        %v7319 = vld [vmem:[%s3 + $0x7a8] sm:$0xf]
        %v7320 = vld [vmem:[%s3 + $0x7ac] sm:$0xf]
        %v7321 = vld [vmem:[%s3 + $0x7b0] sm:$0xf]
        %v7322 = vld [vmem:[%s3 + $0x7b4] sm:$0xf]
        %v7323 = vld [vmem:[%s3 + $0x7b8] sm:$0xf]
        %v7324 = vld [vmem:[%s3 + $0x7bc] sm:$0xf]
        %v7325 = vld [vmem:[%s3 + $0x7c0] sm:$0xf]
        %v7326 = vld [vmem:[%s3 + $0x7c4] sm:$0xf]
        %v7327 = vld [vmem:[%s3 + $0x7c8] sm:$0xf]
        %v7328 = vld [vmem:[%s3 + $0x7cc] sm:$0xf]
        %v7329 = vld [vmem:[%s3 + $0x7d0] sm:$0xf]
        %v7330 = vld [vmem:[%s3 + $0x7d4] sm:$0xf]
        %v7331 = vld [vmem:[%s3 + $0x7d8] sm:$0xf]
        %v7332 = vld [vmem:[%s3 + $0x7dc] sm:$0xf]
        %v7333 = vld [vmem:[%s3 + $0x7e0] sm:$0xf]
        %v7334 = vld [vmem:[%s3 + $0x7e4] sm:$0xf]
        %v7335 = vld [vmem:[%s3 + $0x7e8] sm:$0xf]
        %v7336 = vld [vmem:[%s3 + $0x7ec] sm:$0xf]
        %v7337 = vld [vmem:[%s3 + $0x7f0] sm:$0xf]
        %v7338 = vld [vmem:[%s3 + $0x7f4] sm:$0xf]
        %v7339 = vld [vmem:[%s3 + $0x7f8] sm:$0xf]
        %v7340 = vld [vmem:[%s3 + $0x7fc] sm:$0xf]
        %v7341 = vld [vmem:[%s3 + $0x800] sm:$0xf]
        %v7342 = vld [vmem:[%s3 + $0x804] sm:$0xf]
        %v7343 = vld [vmem:[%s3 + $0x808] sm:$0xf]
        %v7344 = vld [vmem:[%s3 + $0x80c] sm:$0xf]
        %v7345 = vld [vmem:[%s3 + $0x810] sm:$0xf]
        %v7346 = vld [vmem:[%s3 + $0x814] sm:$0xf]
        %v7347 = vld [vmem:[%s3 + $0x818] sm:$0xf]
        %v7348 = vld [vmem:[%s3 + $0x81c] sm:$0xf]
        %v7349 = vld [vmem:[%s3 + $0x820] sm:$0xf]
        %v7350 = vld [vmem:[%s3 + $0x824] sm:$0xf]
        %v7351 = vld [vmem:[%s3 + $0x828] sm:$0xf]
        %v7352 = vld [vmem:[%s3 + $0x82c] sm:$0xf]
        %v7353 = vld [vmem:[%s3 + $0x830] sm:$0xf]
        %v7354 = vld [vmem:[%s3 + $0x834] sm:$0xf]
        %v7355 = vld [vmem:[%s3 + $0x838] sm:$0xf]
        %v7356 = vld [vmem:[%s3 + $0x83c] sm:$0xf]
        %v7357 = vld [vmem:[%s3 + $0x840] sm:$0xf]
        %v7358 = vld [vmem:[%s3 + $0x844] sm:$0xf]
        %v7359 = vld [vmem:[%s3 + $0x848] sm:$0xf]
        %v7360 = vld [vmem:[%s3 + $0x84c] sm:$0xf]
        %v7361 = vld [vmem:[%s3 + $0x850] sm:$0xf]
        %v7362 = vld [vmem:[%s3 + $0x854] sm:$0xf]
        %v7363 = vld [vmem:[%s3 + $0x858] sm:$0xf]
        %v7364 = vld [vmem:[%s3 + $0x85c] sm:$0xf]
        %v7365 = vld [vmem:[%s3 + $0x860] sm:$0xf]
        %v7366 = vld [vmem:[%s3 + $0x864] sm:$0xf]
        %v7367 = vld [vmem:[%s3 + $0x868] sm:$0xf]
        %v7368 = vld [vmem:[%s3 + $0x86c] sm:$0xf]
        %v7369 = vld [vmem:[%s3 + $0x870] sm:$0xf]
        %v7370 = vld [vmem:[%s3 + $0x874] sm:$0xf]
        %v7371 = vld [vmem:[%s3 + $0x878] sm:$0xf]
        %v7372 = vld [vmem:[%s3 + $0x87c] sm:$0xf]
        %v7373 = vld [vmem:[%s4] sm:$0x1]
        %v7918 = vunpack.c.l.b16 %v6829
        %v7919 = vunpack.c.l.b16 %v6830
        %v7920 = vunpack.c.l.b16 %v6831
        %v7921 = vunpack.c.l.b16 %v6832
        %v7922 = vunpack.c.l.b16 %v6833
        %v7923 = vunpack.c.l.b16 %v6834
        %v7924 = vunpack.c.l.b16 %v6835
        %v7925 = vunpack.c.l.b16 %v6836
        %v7926 = vunpack.c.l.b16 %v6837
        %v7927 = vunpack.c.l.b16 %v6838
        %v7928 = vunpack.c.l.b16 %v6839
        %v7929 = vunpack.c.l.b16 %v6840
        %v7930 = vunpack.c.l.b16 %v6841
        %v7931 = vunpack.c.l.b16 %v6842
        %v7932 = vunpack.c.l.b16 %v6843
        %v7933 = vunpack.c.l.b16 %v6844
        %v7934 = vunpack.c.l.b16 %v6845
        %v7935 = vunpack.c.l.b16 %v6846
        %v7936 = vunpack.c.l.b16 %v6847
        %v7937 = vunpack.c.l.b16 %v6848
        %v7938 = vunpack.c.l.b16 %v6849
        %v7939 = vunpack.c.l.b16 %v6850
        %v7940 = vunpack.c.l.b16 %v6851
        %v7941 = vunpack.c.l.b16 %v6852
        %v7942 = vunpack.c.l.b16 %v6853
        %v7943 = vunpack.c.l.b16 %v6854
        %v7944 = vunpack.c.l.b16 %v6855
        %v7945 = vunpack.c.l.b16 %v6856
        %v7946 = vunpack.c.l.b16 %v6857
        %v7947 = vunpack.c.l.b16 %v6858
        %v7948 = vunpack.c.l.b16 %v6859
        %v7949 = vunpack.c.l.b16 %v6860
        %v7950 = vunpack.c.l.b16 %v6861
        %v7951 = vunpack.c.l.b16 %v6862
        %v7952 = vunpack.c.l.b16 %v6863
        %v7953 = vunpack.c.l.b16 %v6864
        %v7954 = vunpack.c.l.b16 %v6865
        %v7955 = vunpack.c.l.b16 %v6866
        %v7956 = vunpack.c.l.b16 %v6867
        %v7957 = vunpack.c.l.b16 %v6868
        %v7958 = vunpack.c.l.b16 %v6869
        %v7959 = vunpack.c.l.b16 %v6870
        %v7960 = vunpack.c.l.b16 %v6871
        %v7961 = vunpack.c.l.b16 %v6872
        %v7962 = vunpack.c.l.b16 %v6873
        %v7963 = vunpack.c.l.b16 %v6874
        %v7964 = vunpack.c.l.b16 %v6875
        %v7965 = vunpack.c.l.b16 %v6876
        %v7966 = vunpack.c.l.b16 %v6877
        %v7967 = vunpack.c.l.b16 %v6878
        %v7968 = vunpack.c.l.b16 %v6879
        %v7969 = vunpack.c.l.b16 %v6880
        %v7970 = vunpack.c.l.b16 %v6881
        %v7971 = vunpack.c.l.b16 %v6882
        %v7972 = vunpack.c.l.b16 %v6883
        %v7973 = vunpack.c.l.b16 %v6884
        %v7974 = vunpack.c.l.b16 %v6885
        %v7975 = vunpack.c.l.b16 %v6886
        %v7976 = vunpack.c.l.b16 %v6887
        %v7977 = vunpack.c.l.b16 %v6888
        %v7978 = vunpack.c.l.b16 %v6889
        %v7979 = vunpack.c.l.b16 %v6890
        %v7980 = vunpack.c.l.b16 %v6891
        %v7981 = vunpack.c.l.b16 %v6892
        %v7982 = vunpack.c.l.b16 %v6893
        %v7983 = vunpack.c.l.b16 %v6894
        %v7984 = vunpack.c.l.b16 %v6895
        %v7985 = vunpack.c.l.b16 %v6896
        %v7986 = vunpack.c.l.b16 %v6897
        %v7987 = vunpack.c.l.b16 %v6898
        %v7988 = vunpack.c.l.b16 %v6899
        %v7989 = vunpack.c.l.b16 %v6900
        %v7990 = vunpack.c.l.b16 %v6901
        %v7991 = vunpack.c.l.b16 %v6902
        %v7992 = vunpack.c.l.b16 %v6903
        %v7993 = vunpack.c.l.b16 %v6904
        %v7994 = vunpack.c.l.b16 %v6905
        %v7995 = vunpack.c.l.b16 %v6906
        %v7996 = vunpack.c.l.b16 %v6907
        %v7997 = vunpack.c.l.b16 %v6908
        %v7998 = vunpack.c.l.b16 %v6909
        %v7999 = vunpack.c.l.b16 %v6910
        %v8000 = vunpack.c.l.b16 %v6911
        %v8001 = vunpack.c.l.b16 %v6912
        %v8002 = vunpack.c.l.b16 %v6913
        %v8003 = vunpack.c.l.b16 %v6914
        %v8004 = vunpack.c.l.b16 %v6915
        %v8005 = vunpack.c.l.b16 %v6916
        %v8006 = vunpack.c.l.b16 %v6917
        %v8007 = vunpack.c.l.b16 %v6918
        %v8008 = vunpack.c.l.b16 %v6919
        %v8009 = vunpack.c.l.b16 %v6920
        %v8010 = vunpack.c.l.b16 %v6921
        %v8011 = vunpack.c.l.b16 %v6922
        %v8012 = vunpack.c.l.b16 %v6923
        %v8013 = vunpack.c.l.b16 %v6924
        %v8014 = vunpack.c.l.b16 %v6925
        %v8015 = vunpack.c.l.b16 %v6926
        %v8016 = vunpack.c.l.b16 %v6927
        %v8017 = vunpack.c.l.b16 %v6928
        %v8018 = vunpack.c.l.b16 %v6929
        %v8019 = vunpack.c.l.b16 %v6930
        %v8020 = vunpack.c.l.b16 %v6931
        %v8021 = vunpack.c.l.b16 %v6932
        %v8022 = vunpack.c.l.b16 %v6933
        %v8023 = vunpack.c.l.b16 %v6934
        %v8024 = vunpack.c.l.b16 %v6935
        %v8025 = vunpack.c.l.b16 %v6936
        %v8026 = vunpack.c.l.b16 %v6937
        %v8027 = vunpack.c.l.b16 %v6938
        %v8028 = vunpack.c.l.b16 %v6939
        %v8029 = vunpack.c.l.b16 %v6940
        %v8030 = vunpack.c.l.b16 %v6941
        %v8031 = vunpack.c.l.b16 %v6942
        %v8032 = vunpack.c.l.b16 %v6943
        %v8033 = vunpack.c.l.b16 %v6944
        %v8034 = vunpack.c.l.b16 %v6945
        %v8035 = vunpack.c.l.b16 %v6946
        %v8036 = vunpack.c.l.b16 %v6947
        %v8037 = vunpack.c.l.b16 %v6948
        %v8038 = vunpack.c.l.b16 %v6949
        %v8039 = vunpack.c.l.b16 %v6950
        %v8040 = vunpack.c.l.b16 %v6951
        %v8041 = vunpack.c.l.b16 %v6952
        %v8042 = vunpack.c.l.b16 %v6953
        %v8043 = vunpack.c.l.b16 %v6954
        %v8044 = vunpack.c.l.b16 %v6955
        %v8045 = vunpack.c.l.b16 %v6956
        %v8046 = vunpack.c.l.b16 %v6957
        %v8047 = vunpack.c.l.b16 %v6958
        %v8048 = vunpack.c.l.b16 %v6959
        %v8049 = vunpack.c.l.b16 %v6960
        %v8050 = vunpack.c.l.b16 %v6961
        %v8051 = vunpack.c.l.b16 %v6962
        %v8052 = vunpack.c.l.b16 %v6963
        %v8053 = vunpack.c.l.b16 %v6964
        %v8054 = vunpack.c.l.b16 %v6965
        %v8055 = vunpack.c.l.b16 %v6966
        %v8056 = vunpack.c.l.b16 %v6967
        %v8057 = vunpack.c.l.b16 %v6968
        %v8058 = vunpack.c.l.b16 %v6969
        %v8059 = vunpack.c.l.b16 %v6970
        %v8060 = vunpack.c.l.b16 %v6971
        %v8061 = vunpack.c.l.b16 %v6972
        %v8062 = vunpack.c.l.b16 %v6973
        %v8063 = vunpack.c.l.b16 %v6974
        %v8064 = vunpack.c.l.b16 %v6975
        %v8065 = vunpack.c.l.b16 %v6976
        %v8066 = vunpack.c.l.b16 %v6977
        %v8067 = vunpack.c.l.b16 %v6978
        %v8068 = vunpack.c.l.b16 %v6979
        %v8069 = vunpack.c.l.b16 %v6980
        %v8070 = vunpack.c.l.b16 %v6981
        %v8071 = vunpack.c.l.b16 %v6982
        %v8072 = vunpack.c.l.b16 %v6983
        %v8073 = vunpack.c.l.b16 %v6984
        %v8074 = vunpack.c.l.b16 %v6985
        %v8075 = vunpack.c.l.b16 %v6986
        %v8076 = vunpack.c.l.b16 %v6987
        %v8077 = vunpack.c.l.b16 %v6988
        %v8078 = vunpack.c.l.b16 %v6989
        %v8079 = vunpack.c.l.b16 %v6990
        %v8080 = vunpack.c.l.b16 %v6991
        %v8081 = vunpack.c.l.b16 %v6992
        %v8082 = vunpack.c.l.b16 %v6993
        %v8083 = vunpack.c.l.b16 %v6994
        %v8084 = vunpack.c.l.b16 %v6995
        %v8085 = vunpack.c.l.b16 %v6996
        %v8086 = vunpack.c.l.b16 %v6997
        %v8087 = vunpack.c.l.b16 %v6998
        %v8088 = vunpack.c.l.b16 %v6999
        %v8089 = vunpack.c.l.b16 %v7000
        %v8090 = vunpack.c.l.b16 %v7001
        %v8091 = vunpack.c.l.b16 %v7002
        %v8092 = vunpack.c.l.b16 %v7003
        %v8093 = vunpack.c.l.b16 %v7004
        %v8094 = vunpack.c.l.b16 %v7005
        %v8095 = vunpack.c.l.b16 %v7006
        %v8096 = vunpack.c.l.b16 %v7007
        %v8097 = vunpack.c.l.b16 %v7008
        %v8098 = vunpack.c.l.b16 %v7009
        %v8099 = vunpack.c.l.b16 %v7010
        %v8100 = vunpack.c.l.b16 %v7011
        %v8101 = vunpack.c.l.b16 %v7012
        %v8102 = vunpack.c.l.b16 %v7013
        %v8103 = vunpack.c.l.b16 %v7014
        %v8104 = vunpack.c.l.b16 %v7015
        %v8105 = vunpack.c.l.b16 %v7016
        %v8106 = vunpack.c.l.b16 %v7017
        %v8107 = vunpack.c.l.b16 %v7018
        %v8108 = vunpack.c.l.b16 %v7019
        %v8109 = vunpack.c.l.b16 %v7020
        %v8110 = vunpack.c.l.b16 %v7021
        %v8111 = vunpack.c.l.b16 %v7022
        %v8112 = vunpack.c.l.b16 %v7023
        %v8113 = vunpack.c.l.b16 %v7024
        %v8114 = vunpack.c.l.b16 %v7025
        %v8115 = vunpack.c.l.b16 %v7026
        %v8116 = vunpack.c.l.b16 %v7027
        %v8117 = vunpack.c.l.b16 %v7028
        %v8118 = vunpack.c.l.b16 %v7029
        %v8119 = vunpack.c.l.b16 %v7030
        %v8120 = vunpack.c.l.b16 %v7031
        %v8121 = vunpack.c.l.b16 %v7032
        %v8122 = vunpack.c.l.b16 %v7033
        %v8123 = vunpack.c.l.b16 %v7034
        %v8124 = vunpack.c.l.b16 %v7035
        %v8125 = vunpack.c.l.b16 %v7036
        %v8126 = vunpack.c.l.b16 %v7037
        %v8127 = vunpack.c.l.b16 %v7038
        %v8128 = vunpack.c.l.b16 %v7039
        %v8129 = vunpack.c.l.b16 %v7040
        %v8130 = vunpack.c.l.b16 %v7041
        %v8131 = vunpack.c.l.b16 %v7042
        %v8132 = vunpack.c.l.b16 %v7043
        %v8133 = vunpack.c.l.b16 %v7044
        %v8134 = vunpack.c.l.b16 %v7045
        %v8135 = vunpack.c.l.b16 %v7046
        %v8136 = vunpack.c.l.b16 %v7047
        %v8137 = vunpack.c.l.b16 %v7048
        %v8138 = vunpack.c.l.b16 %v7049
        %v8139 = vunpack.c.l.b16 %v7050
        %v8140 = vunpack.c.l.b16 %v7051
        %v8141 = vunpack.c.l.b16 %v7052
        %v8142 = vunpack.c.l.b16 %v7053
        %v8143 = vunpack.c.l.b16 %v7054
        %v8144 = vunpack.c.l.b16 %v7055
        %v8145 = vunpack.c.l.b16 %v7056
        %v8146 = vunpack.c.l.b16 %v7057
        %v8147 = vunpack.c.l.b16 %v7058
        %v8148 = vunpack.c.l.b16 %v7059
        %v8149 = vunpack.c.l.b16 %v7060
        %v8150 = vunpack.c.l.b16 %v7061
        %v8151 = vunpack.c.l.b16 %v7062
        %v8152 = vunpack.c.l.b16 %v7063
        %v8153 = vunpack.c.l.b16 %v7064
        %v8154 = vunpack.c.l.b16 %v7065
        %v8155 = vunpack.c.l.b16 %v7066
        %v8156 = vunpack.c.l.b16 %v7067
        %v8157 = vunpack.c.l.b16 %v7068
        %v8158 = vunpack.c.l.b16 %v7069
        %v8159 = vunpack.c.l.b16 %v7070
        %v8160 = vunpack.c.l.b16 %v7071
        %v8161 = vunpack.c.l.b16 %v7072
        %v8162 = vunpack.c.l.b16 %v7073
        %v8163 = vunpack.c.l.b16 %v7074
        %v8164 = vunpack.c.l.b16 %v7075
        %v8165 = vunpack.c.l.b16 %v7076
        %v8166 = vunpack.c.l.b16 %v7077
        %v8167 = vunpack.c.l.b16 %v7078
        %v8168 = vunpack.c.l.b16 %v7079
        %v8169 = vunpack.c.l.b16 %v7080
        %v8170 = vunpack.c.l.b16 %v7081
        %v8171 = vunpack.c.l.b16 %v7082
        %v8172 = vunpack.c.l.b16 %v7083
        %v8173 = vunpack.c.l.b16 %v7084
        %v8174 = vunpack.c.l.b16 %v7085
        %v8175 = vunpack.c.l.b16 %v7086
        %v8176 = vunpack.c.l.b16 %v7087
        %v8177 = vunpack.c.l.b16 %v7088
        %v8178 = vunpack.c.l.b16 %v7089
        %v8179 = vunpack.c.l.b16 %v7090
        %v8180 = vunpack.c.l.b16 %v7091
        %v8181 = vunpack.c.l.b16 %v7092
        %v8182 = vunpack.c.l.b16 %v7093
        %v8183 = vunpack.c.l.b16 %v7094
        %v8184 = vunpack.c.l.b16 %v7095
        %v8185 = vunpack.c.l.b16 %v7096
        %v8186 = vunpack.c.l.b16 %v7097
        %v8187 = vunpack.c.l.b16 %v7098
        %v8188 = vunpack.c.l.b16 %v7099
        %v8189 = vunpack.c.l.b16 %v7100
        %v8190 = vunpack.c.l.b16 %v7101
        %v8191 = vunpack.c.l.b16 %v7102
        %v8192 = vunpack.c.l.b16 %v7103
        %v8193 = vunpack.c.l.b16 %v7104
        %v8194 = vunpack.c.l.b16 %v7105
        %v8195 = vunpack.c.l.b16 %v7106
        %v8196 = vunpack.c.l.b16 %v7107
        %v8197 = vunpack.c.l.b16 %v7108
        %v8198 = vunpack.c.l.b16 %v7109
        %v8199 = vunpack.c.l.b16 %v7110
        %v8200 = vunpack.c.l.b16 %v7111
        %v8201 = vunpack.c.l.b16 %v7112
        %v8202 = vunpack.c.l.b16 %v7113
        %v8203 = vunpack.c.l.b16 %v7114
        %v8204 = vunpack.c.l.b16 %v7115
        %v8205 = vunpack.c.l.b16 %v7116
        %v8206 = vunpack.c.l.b16 %v7117
        %v8207 = vunpack.c.l.b16 %v7118
        %v8208 = vunpack.c.l.b16 %v7119
        %v8209 = vunpack.c.l.b16 %v7120
        %v8210 = vunpack.c.l.b16 %v7121
        %v8211 = vunpack.c.l.b16 %v7122
        %v8212 = vunpack.c.l.b16 %v7123
        %v8213 = vunpack.c.l.b16 %v7124
        %v8214 = vunpack.c.l.b16 %v7125
        %v8215 = vunpack.c.l.b16 %v7126
        %v8216 = vunpack.c.l.b16 %v7127
        %v8217 = vunpack.c.l.b16 %v7128
        %v8218 = vunpack.c.l.b16 %v7129
        %v8219 = vunpack.c.l.b16 %v7130
        %v8220 = vunpack.c.l.b16 %v7131
        %v8221 = vunpack.c.l.b16 %v7132
        %v8222 = vunpack.c.l.b16 %v7133
        %v8223 = vunpack.c.l.b16 %v7134
        %v8224 = vunpack.c.l.b16 %v7135
        %v8225 = vunpack.c.l.b16 %v7136
        %v8226 = vunpack.c.l.b16 %v7137
        %v8227 = vunpack.c.l.b16 %v7138
        %v8228 = vunpack.c.l.b16 %v7139
        %v8229 = vunpack.c.l.b16 %v7140
        %v8230 = vunpack.c.l.b16 %v7141
        %v8231 = vunpack.c.l.b16 %v7142
        %v8232 = vunpack.c.l.b16 %v7143
        %v8233 = vunpack.c.l.b16 %v7144
        %v8234 = vunpack.c.l.b16 %v7145
        %v8235 = vunpack.c.l.b16 %v7146
        %v8236 = vunpack.c.l.b16 %v7147
        %v8237 = vunpack.c.l.b16 %v7148
        %v8238 = vunpack.c.l.b16 %v7149
        %v8239 = vunpack.c.l.b16 %v7150
        %v8240 = vunpack.c.l.b16 %v7151
        %v8241 = vunpack.c.l.b16 %v7152
        %v8242 = vunpack.c.l.b16 %v7153
        %v8243 = vunpack.c.l.b16 %v7154
        %v8244 = vunpack.c.l.b16 %v7155
        %v8245 = vunpack.c.l.b16 %v7156
        %v8246 = vunpack.c.l.b16 %v7157
        %v8247 = vunpack.c.l.b16 %v7158
        %v8248 = vunpack.c.l.b16 %v7159
        %v8249 = vunpack.c.l.b16 %v7160
        %v8250 = vunpack.c.l.b16 %v7161
        %v8251 = vunpack.c.l.b16 %v7162
        %v8252 = vunpack.c.l.b16 %v7163
        %v8253 = vunpack.c.l.b16 %v7164
        %v8254 = vunpack.c.l.b16 %v7165
        %v8255 = vunpack.c.l.b16 %v7166
        %v8256 = vunpack.c.l.b16 %v7167
        %v8257 = vunpack.c.l.b16 %v7168
        %v8258 = vunpack.c.l.b16 %v7169
        %v8259 = vunpack.c.l.b16 %v7170
        %v8260 = vunpack.c.l.b16 %v7171
        %v8261 = vunpack.c.l.b16 %v7172
        %v8262 = vunpack.c.l.b16 %v7173
        %v8263 = vunpack.c.l.b16 %v7174
        %v8264 = vunpack.c.l.b16 %v7175
        %v8265 = vunpack.c.l.b16 %v7176
        %v8266 = vunpack.c.l.b16 %v7177
        %v8267 = vunpack.c.l.b16 %v7178
        %v8268 = vunpack.c.l.b16 %v7179
        %v8269 = vunpack.c.l.b16 %v7180
        %v8270 = vunpack.c.l.b16 %v7181
        %v8271 = vunpack.c.l.b16 %v7182
        %v8272 = vunpack.c.l.b16 %v7183
        %v8273 = vunpack.c.l.b16 %v7184
        %v8274 = vunpack.c.l.b16 %v7185
        %v8275 = vunpack.c.l.b16 %v7186
        %v8276 = vunpack.c.l.b16 %v7187
        %v8277 = vunpack.c.l.b16 %v7188
        %v8278 = vunpack.c.l.b16 %v7189
        %v8279 = vunpack.c.l.b16 %v7190
        %v8280 = vunpack.c.l.b16 %v7191
        %v8281 = vunpack.c.l.b16 %v7192
        %v8282 = vunpack.c.l.b16 %v7193
        %v8283 = vunpack.c.l.b16 %v7194
        %v8284 = vunpack.c.l.b16 %v7195
        %v8285 = vunpack.c.l.b16 %v7196
        %v8286 = vunpack.c.l.b16 %v7197
        %v8287 = vunpack.c.l.b16 %v7198
        %v8288 = vunpack.c.l.b16 %v7199
        %v8289 = vunpack.c.l.b16 %v7200
        %v8290 = vunpack.c.l.b16 %v7201
        %v8291 = vunpack.c.l.b16 %v7202
        %v8292 = vunpack.c.l.b16 %v7203
        %v8293 = vunpack.c.l.b16 %v7204
        %v8294 = vunpack.c.l.b16 %v7205
        %v8295 = vunpack.c.l.b16 %v7206
        %v8296 = vunpack.c.l.b16 %v7207
        %v8297 = vunpack.c.l.b16 %v7208
        %v8298 = vunpack.c.l.b16 %v7209
        %v8299 = vunpack.c.l.b16 %v7210
        %v8300 = vunpack.c.l.b16 %v7211
        %v8301 = vunpack.c.l.b16 %v7212
        %v8302 = vunpack.c.l.b16 %v7213
        %v8303 = vunpack.c.l.b16 %v7214
        %v8304 = vunpack.c.l.b16 %v7215
        %v8305 = vunpack.c.l.b16 %v7216
        %v8306 = vunpack.c.l.b16 %v7217
        %v8307 = vunpack.c.l.b16 %v7218
        %v8308 = vunpack.c.l.b16 %v7219
        %v8309 = vunpack.c.l.b16 %v7220
        %v8310 = vunpack.c.l.b16 %v7221
        %v8311 = vunpack.c.l.b16 %v7222
        %v8312 = vunpack.c.l.b16 %v7223
        %v8313 = vunpack.c.l.b16 %v7224
        %v8314 = vunpack.c.l.b16 %v7225
        %v8315 = vunpack.c.l.b16 %v7226
        %v8316 = vunpack.c.l.b16 %v7227
        %v8317 = vunpack.c.l.b16 %v7228
        %v8318 = vunpack.c.l.b16 %v7229
        %v8319 = vunpack.c.l.b16 %v7230
        %v8320 = vunpack.c.l.b16 %v7231
        %v8321 = vunpack.c.l.b16 %v7232
        %v8322 = vunpack.c.l.b16 %v7233
        %v8323 = vunpack.c.l.b16 %v7234
        %v8324 = vunpack.c.l.b16 %v7235
        %v8325 = vunpack.c.l.b16 %v7236
        %v8326 = vunpack.c.l.b16 %v7237
        %v8327 = vunpack.c.l.b16 %v7238
        %v8328 = vunpack.c.l.b16 %v7239
        %v8329 = vunpack.c.l.b16 %v7240
        %v8330 = vunpack.c.l.b16 %v7241
        %v8331 = vunpack.c.l.b16 %v7242
        %v8332 = vunpack.c.l.b16 %v7243
        %v8333 = vunpack.c.l.b16 %v7244
        %v8334 = vunpack.c.l.b16 %v7245
        %v8335 = vunpack.c.l.b16 %v7246
        %v8336 = vunpack.c.l.b16 %v7247
        %v8337 = vunpack.c.l.b16 %v7248
        %v8338 = vunpack.c.l.b16 %v7249
        %v8339 = vunpack.c.l.b16 %v7250
        %v8340 = vunpack.c.l.b16 %v7251
        %v8341 = vunpack.c.l.b16 %v7252
        %v8342 = vunpack.c.l.b16 %v7253
        %v8343 = vunpack.c.l.b16 %v7254
        %v8344 = vunpack.c.l.b16 %v7255
        %v8345 = vunpack.c.l.b16 %v7256
        %v8346 = vunpack.c.l.b16 %v7257
        %v8347 = vunpack.c.l.b16 %v7258
        %v8348 = vunpack.c.l.b16 %v7259
        %v8349 = vunpack.c.l.b16 %v7260
        %v8350 = vunpack.c.l.b16 %v7261
        %v8351 = vunpack.c.l.b16 %v7262
        %v8352 = vunpack.c.l.b16 %v7263
        %v8353 = vunpack.c.l.b16 %v7264
        %v8354 = vunpack.c.l.b16 %v7265
        %v8355 = vunpack.c.l.b16 %v7266
        %v8356 = vunpack.c.l.b16 %v7267
        %v8357 = vunpack.c.l.b16 %v7268
        %v8358 = vunpack.c.l.b16 %v7269
        %v8359 = vunpack.c.l.b16 %v7270
        %v8360 = vunpack.c.l.b16 %v7271
        %v8361 = vunpack.c.l.b16 %v7272
        %v8362 = vunpack.c.l.b16 %v7273
        %v8363 = vunpack.c.l.b16 %v7274
        %v8364 = vunpack.c.l.b16 %v7275
        %v8365 = vunpack.c.l.b16 %v7276
        %v8366 = vunpack.c.l.b16 %v7277
        %v8367 = vunpack.c.l.b16 %v7278
        %v8368 = vunpack.c.l.b16 %v7279
        %v8369 = vunpack.c.l.b16 %v7280
        %v8370 = vunpack.c.l.b16 %v7281
        %v8371 = vunpack.c.l.b16 %v7282
        %v8372 = vunpack.c.l.b16 %v7283
        %v8373 = vunpack.c.l.b16 %v7284
        %v8374 = vunpack.c.l.b16 %v7285
        %v8375 = vunpack.c.l.b16 %v7286
        %v8376 = vunpack.c.l.b16 %v7287
        %v8377 = vunpack.c.l.b16 %v7288
        %v8378 = vunpack.c.l.b16 %v7289
        %v8379 = vunpack.c.l.b16 %v7290
        %v8380 = vunpack.c.l.b16 %v7291
        %v8381 = vunpack.c.l.b16 %v7292
        %v8382 = vunpack.c.l.b16 %v7293
        %v8383 = vunpack.c.l.b16 %v7294
        %v8384 = vunpack.c.l.b16 %v7295
        %v8385 = vunpack.c.l.b16 %v7296
        %v8386 = vunpack.c.l.b16 %v7297
        %v8387 = vunpack.c.l.b16 %v7298
        %v8388 = vunpack.c.l.b16 %v7299
        %v8389 = vunpack.c.l.b16 %v7300
        %v8390 = vunpack.c.l.b16 %v7301
        %v8391 = vunpack.c.l.b16 %v7302
        %v8392 = vunpack.c.l.b16 %v7303
        %v8393 = vunpack.c.l.b16 %v7304
        %v8394 = vunpack.c.l.b16 %v7305
        %v8395 = vunpack.c.l.b16 %v7306
        %v8396 = vunpack.c.l.b16 %v7307
        %v8397 = vunpack.c.l.b16 %v7308
        %v8398 = vunpack.c.l.b16 %v7309
        %v8399 = vunpack.c.l.b16 %v7310
        %v8400 = vunpack.c.l.b16 %v7311
        %v8401 = vunpack.c.l.b16 %v7312
        %v8402 = vunpack.c.l.b16 %v7313
        %v8403 = vunpack.c.l.b16 %v7314
        %v8404 = vunpack.c.l.b16 %v7315
        %v8405 = vunpack.c.l.b16 %v7316
        %v8406 = vunpack.c.l.b16 %v7317
        %v8407 = vunpack.c.l.b16 %v7318
        %v8408 = vunpack.c.l.b16 %v7319
        %v8409 = vunpack.c.l.b16 %v7320
        %v8410 = vunpack.c.l.b16 %v7321
        %v8411 = vunpack.c.l.b16 %v7322
        %v8412 = vunpack.c.l.b16 %v7323
        %v8413 = vunpack.c.l.b16 %v7324
        %v8414 = vunpack.c.l.b16 %v7325
        %v8415 = vunpack.c.l.b16 %v7326
        %v8416 = vunpack.c.l.b16 %v7327
        %v8417 = vunpack.c.l.b16 %v7328
        %v8418 = vunpack.c.l.b16 %v7329
        %v8419 = vunpack.c.l.b16 %v7330
        %v8420 = vunpack.c.l.b16 %v7331
        %v8421 = vunpack.c.l.b16 %v7332
        %v8422 = vunpack.c.l.b16 %v7333
        %v8423 = vunpack.c.l.b16 %v7334
        %v8424 = vunpack.c.l.b16 %v7335
        %v8425 = vunpack.c.l.b16 %v7336
        %v8426 = vunpack.c.l.b16 %v7337
        %v8427 = vunpack.c.l.b16 %v7338
        %v8428 = vunpack.c.l.b16 %v7339
        %v8429 = vunpack.c.l.b16 %v7340
        %v8430 = vunpack.c.l.b16 %v7341
        %v8431 = vunpack.c.l.b16 %v7342
        %v8432 = vunpack.c.l.b16 %v7343
        %v8433 = vunpack.c.l.b16 %v7344
        %v8434 = vunpack.c.l.b16 %v7345
        %v8435 = vunpack.c.l.b16 %v7346
        %v8436 = vunpack.c.l.b16 %v7347
        %v8437 = vunpack.c.l.b16 %v7348
        %v8438 = vunpack.c.l.b16 %v7349
        %v8439 = vunpack.c.l.b16 %v7350
        %v8440 = vunpack.c.l.b16 %v7351
        %v8441 = vunpack.c.l.b16 %v7352
        %v8442 = vunpack.c.l.b16 %v7353
        %v8443 = vunpack.c.l.b16 %v7354
        %v8444 = vunpack.c.l.b16 %v7355
        %v8445 = vunpack.c.l.b16 %v7356
        %v8446 = vunpack.c.l.b16 %v7357
        %v8447 = vunpack.c.l.b16 %v7358
        %v8448 = vunpack.c.l.b16 %v7359
        %v8449 = vunpack.c.l.b16 %v7360
        %v8450 = vunpack.c.l.b16 %v7361
        %v8451 = vunpack.c.l.b16 %v7362
        %v8452 = vunpack.c.l.b16 %v7363
        %v8453 = vunpack.c.l.b16 %v7364
        %v8454 = vunpack.c.l.b16 %v7365
        %v8455 = vunpack.c.l.b16 %v7366
        %v8456 = vunpack.c.l.b16 %v7367
        %v8457 = vunpack.c.l.b16 %v7368
        %v8458 = vunpack.c.l.b16 %v7369
        %v8459 = vunpack.c.l.b16 %v7370
        %v8460 = vunpack.c.l.b16 %v7371
        %v8461 = vunpack.c.l.b16 %v7372
        %v8462 = vpack.c.b16 %v7919, %v7918
        %v8463 = vpack.c.b16 %v7921, %v7920
        %v8464 = vpack.c.b16 %v7923, %v7922
        %v8465 = vpack.c.b16 %v7925, %v7924
        %v8466 = vpack.c.b16 %v7927, %v7926
        %v8467 = vpack.c.b16 %v7929, %v7928
        %v8468 = vpack.c.b16 %v7931, %v7930
        %v8469 = vpack.c.b16 %v7933, %v7932
        %v8470 = vpack.c.b16 %v7935, %v7934
        %v8471 = vpack.c.b16 %v7937, %v7936
        %v8472 = vpack.c.b16 %v7939, %v7938
        %v8473 = vpack.c.b16 %v7941, %v7940
        %v8474 = vpack.c.b16 %v7943, %v7942
        %v8475 = vpack.c.b16 %v7945, %v7944
        %v8476 = vpack.c.b16 %v7947, %v7946
        %v8477 = vpack.c.b16 %v7949, %v7948
        %v8478 = vpack.c.b16 %v7951, %v7950
        %v8479 = vpack.c.b16 %v7953, %v7952
        %v8480 = vpack.c.b16 %v7955, %v7954
        %v8481 = vpack.c.b16 %v7957, %v7956
        %v8482 = vpack.c.b16 %v7959, %v7958
        %v8483 = vpack.c.b16 %v7961, %v7960
        %v8484 = vpack.c.b16 %v7963, %v7962
        %v8485 = vpack.c.b16 %v7965, %v7964
        %v8486 = vpack.c.b16 %v7967, %v7966
        %v8487 = vpack.c.b16 %v7969, %v7968
        %v8488 = vpack.c.b16 %v7971, %v7970
        %v8489 = vpack.c.b16 %v7973, %v7972
        %v8490 = vpack.c.b16 %v7975, %v7974
        %v8491 = vpack.c.b16 %v7977, %v7976
        %v8492 = vpack.c.b16 %v7979, %v7978
        %v8493 = vpack.c.b16 %v7981, %v7980
        %v8494 = vpack.c.b16 %v7983, %v7982
        %v8495 = vpack.c.b16 %v7985, %v7984
        %v8496 = vpack.c.b16 %v7987, %v7986
        %v8497 = vpack.c.b16 %v7989, %v7988
        %v8498 = vpack.c.b16 %v7991, %v7990
        %v8499 = vpack.c.b16 %v7993, %v7992
        %v8500 = vpack.c.b16 %v7995, %v7994
        %v8501 = vpack.c.b16 %v7997, %v7996
        %v8502 = vpack.c.b16 %v7999, %v7998
        %v8503 = vpack.c.b16 %v8001, %v8000
        %v8504 = vpack.c.b16 %v8003, %v8002
        %v8505 = vpack.c.b16 %v8005, %v8004
        %v8506 = vpack.c.b16 %v8007, %v8006
        %v8507 = vpack.c.b16 %v8009, %v8008
        %v8508 = vpack.c.b16 %v8011, %v8010
        %v8509 = vpack.c.b16 %v8013, %v8012
        %v8510 = vpack.c.b16 %v8015, %v8014
        %v8511 = vpack.c.b16 %v8017, %v8016
        %v8512 = vpack.c.b16 %v8019, %v8018
        %v8513 = vpack.c.b16 %v8021, %v8020
        %v8514 = vpack.c.b16 %v8023, %v8022
        %v8515 = vpack.c.b16 %v8025, %v8024
        %v8516 = vpack.c.b16 %v8027, %v8026
        %v8517 = vpack.c.b16 %v8029, %v8028
        %v8518 = vpack.c.b16 %v8031, %v8030
        %v8519 = vpack.c.b16 %v8033, %v8032
        %v8520 = vpack.c.b16 %v8035, %v8034
        %v8521 = vpack.c.b16 %v8037, %v8036
        %v8522 = vpack.c.b16 %v8039, %v8038
        %v8523 = vpack.c.b16 %v8041, %v8040
        %v8524 = vpack.c.b16 %v8043, %v8042
        %v8525 = vpack.c.b16 %v8045, %v8044
        %v8526 = vpack.c.b16 %v8047, %v8046
        %v8527 = vpack.c.b16 %v8049, %v8048
        %v8528 = vpack.c.b16 %v8051, %v8050
        %v8529 = vpack.c.b16 %v8053, %v8052
        %v8530 = vpack.c.b16 %v8055, %v8054
        %v8531 = vpack.c.b16 %v8057, %v8056
        %v8532 = vpack.c.b16 %v8059, %v8058
        %v8533 = vpack.c.b16 %v8061, %v8060
        %v8534 = vpack.c.b16 %v8063, %v8062
        %v8535 = vpack.c.b16 %v8065, %v8064
        %v8536 = vpack.c.b16 %v8067, %v8066
        %v8537 = vpack.c.b16 %v8069, %v8068
        %v8538 = vpack.c.b16 %v8071, %v8070
        %v8539 = vpack.c.b16 %v8073, %v8072
        %v8540 = vpack.c.b16 %v8075, %v8074
        %v8541 = vpack.c.b16 %v8077, %v8076
        %v8542 = vpack.c.b16 %v8079, %v8078
        %v8543 = vpack.c.b16 %v8081, %v8080
        %v8544 = vpack.c.b16 %v8083, %v8082
        %v8545 = vpack.c.b16 %v8085, %v8084
        %v8546 = vpack.c.b16 %v8087, %v8086
        %v8547 = vpack.c.b16 %v8089, %v8088
        %v8548 = vpack.c.b16 %v8091, %v8090
        %v8549 = vpack.c.b16 %v8093, %v8092
        %v8550 = vpack.c.b16 %v8095, %v8094
        %v8551 = vpack.c.b16 %v8097, %v8096
        %v8552 = vpack.c.b16 %v8099, %v8098
        %v8553 = vpack.c.b16 %v8101, %v8100
        %v8554 = vpack.c.b16 %v8103, %v8102
        %v8555 = vpack.c.b16 %v8105, %v8104
        %v8556 = vpack.c.b16 %v8107, %v8106
        %v8557 = vpack.c.b16 %v8109, %v8108
        %v8558 = vpack.c.b16 %v8111, %v8110
        %v8559 = vpack.c.b16 %v8113, %v8112
        %v8560 = vpack.c.b16 %v8115, %v8114
        %v8561 = vpack.c.b16 %v8117, %v8116
        %v8562 = vpack.c.b16 %v8119, %v8118
        %v8563 = vpack.c.b16 %v8121, %v8120
        %v8564 = vpack.c.b16 %v8123, %v8122
        %v8565 = vpack.c.b16 %v8125, %v8124
        %v8566 = vpack.c.b16 %v8127, %v8126
        %v8567 = vpack.c.b16 %v8129, %v8128
        %v8568 = vpack.c.b16 %v8131, %v8130
        %v8569 = vpack.c.b16 %v8133, %v8132
        %v8570 = vpack.c.b16 %v8135, %v8134
        %v8571 = vpack.c.b16 %v8137, %v8136
        %v8572 = vpack.c.b16 %v8139, %v8138
        %v8573 = vpack.c.b16 %v8141, %v8140
        %v8574 = vpack.c.b16 %v8143, %v8142
        %v8575 = vpack.c.b16 %v8145, %v8144
        %v8576 = vpack.c.b16 %v8147, %v8146
        %v8577 = vpack.c.b16 %v8149, %v8148
        %v8578 = vpack.c.b16 %v8151, %v8150
        %v8579 = vpack.c.b16 %v8153, %v8152
        %v8580 = vpack.c.b16 %v8155, %v8154
        %v8581 = vpack.c.b16 %v8157, %v8156
        %v8582 = vpack.c.b16 %v8159, %v8158
        %v8583 = vpack.c.b16 %v8161, %v8160
        %v8584 = vpack.c.b16 %v8163, %v8162
        %v8585 = vpack.c.b16 %v8165, %v8164
        %v8586 = vpack.c.b16 %v8167, %v8166
        %v8587 = vpack.c.b16 %v8169, %v8168
        %v8588 = vpack.c.b16 %v8171, %v8170
        %v8589 = vpack.c.b16 %v8173, %v8172
        %v8590 = vpack.c.b16 %v8175, %v8174
        %v8591 = vpack.c.b16 %v8177, %v8176
        %v8592 = vpack.c.b16 %v8179, %v8178
        %v8593 = vpack.c.b16 %v8181, %v8180
        %v8594 = vpack.c.b16 %v8183, %v8182
        %v8595 = vpack.c.b16 %v8185, %v8184
        %v8596 = vpack.c.b16 %v8187, %v8186
        %v8597 = vpack.c.b16 %v8189, %v8188
        %v8598 = vpack.c.b16 %v8191, %v8190
        %v8599 = vpack.c.b16 %v8193, %v8192
        %v8600 = vpack.c.b16 %v8195, %v8194
        %v8601 = vpack.c.b16 %v8197, %v8196
        %v8602 = vpack.c.b16 %v8199, %v8198
        %v8603 = vpack.c.b16 %v8201, %v8200
        %v8604 = vpack.c.b16 %v8203, %v8202
        %v8605 = vpack.c.b16 %v8205, %v8204
        %v8606 = vpack.c.b16 %v8207, %v8206
        %v8607 = vpack.c.b16 %v8209, %v8208
        %v8608 = vpack.c.b16 %v8211, %v8210
        %v8609 = vpack.c.b16 %v8213, %v8212
        %v8610 = vpack.c.b16 %v8215, %v8214
        %v8611 = vpack.c.b16 %v8217, %v8216
        %v8612 = vpack.c.b16 %v8219, %v8218
        %v8613 = vpack.c.b16 %v8221, %v8220
        %v8614 = vpack.c.b16 %v8223, %v8222
        %v8615 = vpack.c.b16 %v8225, %v8224
        %v8616 = vpack.c.b16 %v8227, %v8226
        %v8617 = vpack.c.b16 %v8229, %v8228
        %v8618 = vpack.c.b16 %v8231, %v8230
        %v8619 = vpack.c.b16 %v8233, %v8232
        %v8620 = vpack.c.b16 %v8235, %v8234
        %v8621 = vpack.c.b16 %v8237, %v8236
        %v8622 = vpack.c.b16 %v8239, %v8238
        %v8623 = vpack.c.b16 %v8241, %v8240
        %v8624 = vpack.c.b16 %v8243, %v8242
        %v8625 = vpack.c.b16 %v8245, %v8244
        %v8626 = vpack.c.b16 %v8247, %v8246
        %v8627 = vpack.c.b16 %v8249, %v8248
        %v8628 = vpack.c.b16 %v8251, %v8250
        %v8629 = vpack.c.b16 %v8253, %v8252
        %v8630 = vpack.c.b16 %v8255, %v8254
        %v8631 = vpack.c.b16 %v8257, %v8256
        %v8632 = vpack.c.b16 %v8259, %v8258
        %v8633 = vpack.c.b16 %v8261, %v8260
        %v8634 = vpack.c.b16 %v8263, %v8262
        %v8635 = vpack.c.b16 %v8265, %v8264
        %v8636 = vpack.c.b16 %v8267, %v8266
        %v8637 = vpack.c.b16 %v8269, %v8268
        %v8638 = vpack.c.b16 %v8271, %v8270
        %v8639 = vpack.c.b16 %v8273, %v8272
        %v8640 = vpack.c.b16 %v8275, %v8274
        %v8641 = vpack.c.b16 %v8277, %v8276
        %v8642 = vpack.c.b16 %v8279, %v8278
        %v8643 = vpack.c.b16 %v8281, %v8280
        %v8644 = vpack.c.b16 %v8283, %v8282
        %v8645 = vpack.c.b16 %v8285, %v8284
        %v8646 = vpack.c.b16 %v8287, %v8286
        %v8647 = vpack.c.b16 %v8289, %v8288
        %v8648 = vpack.c.b16 %v8291, %v8290
        %v8649 = vpack.c.b16 %v8293, %v8292
        %v8650 = vpack.c.b16 %v8295, %v8294
        %v8651 = vpack.c.b16 %v8297, %v8296
        %v8652 = vpack.c.b16 %v8299, %v8298
        %v8653 = vpack.c.b16 %v8301, %v8300
        %v8654 = vpack.c.b16 %v8303, %v8302
        %v8655 = vpack.c.b16 %v8305, %v8304
        %v8656 = vpack.c.b16 %v8307, %v8306
        %v8657 = vpack.c.b16 %v8309, %v8308
        %v8658 = vpack.c.b16 %v8311, %v8310
        %v8659 = vpack.c.b16 %v8313, %v8312
        %v8660 = vpack.c.b16 %v8315, %v8314
        %v8661 = vpack.c.b16 %v8317, %v8316
        %v8662 = vpack.c.b16 %v8319, %v8318
        %v8663 = vpack.c.b16 %v8321, %v8320
        %v8664 = vpack.c.b16 %v8323, %v8322
        %v8665 = vpack.c.b16 %v8325, %v8324
        %v8666 = vpack.c.b16 %v8327, %v8326
        %v8667 = vpack.c.b16 %v8329, %v8328
        %v8668 = vpack.c.b16 %v8331, %v8330
        %v8669 = vpack.c.b16 %v8333, %v8332
        %v8670 = vpack.c.b16 %v8335, %v8334
        %v8671 = vpack.c.b16 %v8337, %v8336
        %v8672 = vpack.c.b16 %v8339, %v8338
        %v8673 = vpack.c.b16 %v8341, %v8340
        %v8674 = vpack.c.b16 %v8343, %v8342
        %v8675 = vpack.c.b16 %v8345, %v8344
        %v8676 = vpack.c.b16 %v8347, %v8346
        %v8677 = vpack.c.b16 %v8349, %v8348
        %v8678 = vpack.c.b16 %v8351, %v8350
        %v8679 = vpack.c.b16 %v8353, %v8352
        %v8680 = vpack.c.b16 %v8355, %v8354
        %v8681 = vpack.c.b16 %v8357, %v8356
        %v8682 = vpack.c.b16 %v8359, %v8358
        %v8683 = vpack.c.b16 %v8361, %v8360
        %v8684 = vpack.c.b16 %v8363, %v8362
        %v8685 = vpack.c.b16 %v8365, %v8364
        %v8686 = vpack.c.b16 %v8367, %v8366
        %v8687 = vpack.c.b16 %v8369, %v8368
        %v8688 = vpack.c.b16 %v8371, %v8370
        %v8689 = vpack.c.b16 %v8373, %v8372
        %v8690 = vpack.c.b16 %v8375, %v8374
        %v8691 = vpack.c.b16 %v8377, %v8376
        %v8692 = vpack.c.b16 %v8379, %v8378
        %v8693 = vpack.c.b16 %v8381, %v8380
        %v8694 = vpack.c.b16 %v8383, %v8382
        %v8695 = vpack.c.b16 %v8385, %v8384
        %v8696 = vpack.c.b16 %v8387, %v8386
        %v8697 = vpack.c.b16 %v8389, %v8388
        %v8698 = vpack.c.b16 %v8391, %v8390
        %v8699 = vpack.c.b16 %v8393, %v8392
        %v8700 = vpack.c.b16 %v8395, %v8394
        %v8701 = vpack.c.b16 %v8397, %v8396
        %v8702 = vpack.c.b16 %v8399, %v8398
        %v8703 = vpack.c.b16 %v8401, %v8400
        %v8704 = vpack.c.b16 %v8403, %v8402
        %v8705 = vpack.c.b16 %v8405, %v8404
        %v8706 = vpack.c.b16 %v8407, %v8406
        %v8707 = vpack.c.b16 %v8409, %v8408
        %v8708 = vpack.c.b16 %v8411, %v8410
        %v8709 = vpack.c.b16 %v8413, %v8412
        %v8710 = vpack.c.b16 %v8415, %v8414
        %v8711 = vpack.c.b16 %v8417, %v8416
        %v8712 = vpack.c.b16 %v8419, %v8418
        %v8713 = vpack.c.b16 %v8421, %v8420
        %v8714 = vpack.c.b16 %v8423, %v8422
        %v8715 = vpack.c.b16 %v8425, %v8424
        %v8716 = vpack.c.b16 %v8427, %v8426
        %v8717 = vpack.c.b16 %v8429, %v8428
        %v8718 = vpack.c.b16 %v8431, %v8430
        %v8719 = vpack.c.b16 %v8433, %v8432
        %v8720 = vpack.c.b16 %v8435, %v8434
        %v8721 = vpack.c.b16 %v8437, %v8436
        %v8722 = vpack.c.b16 %v8439, %v8438
        %v8723 = vpack.c.b16 %v8441, %v8440
        %v8724 = vpack.c.b16 %v8443, %v8442
        %v8725 = vpack.c.b16 %v8445, %v8444
        %v8726 = vpack.c.b16 %v8447, %v8446
        %v8727 = vpack.c.b16 %v8449, %v8448
        %v8728 = vpack.c.b16 %v8451, %v8450
        %v8729 = vpack.c.b16 %v8453, %v8452
        %v8730 = vpack.c.b16 %v8455, %v8454
        %v8731 = vpack.c.b16 %v8457, %v8456
        %v8732 = vpack.c.b16 %v8459, %v8458
        %v8733 = vpack.c.b16 %v8461, %v8460
        %9006 = vmatpush.bf16.msra.mxu0 %v8469
        %9007 = vmatpush.bf16.msra.mxu0 %v8468
        %9008 = vmatpush.bf16.msra.mxu0 %v8467
        %9009 = vmatpush.bf16.msra.mxu0 %v8466
        %9010 = vmatpush.bf16.msra.mxu0 %v8465
        %9011 = vmatpush.bf16.msra.mxu0 %v8464
        %9012 = vmatpush.bf16.msra.mxu0 %v8463
        %9013 = vmatpush.bf16.msra.mxu0 %v8462
        %9014 = vmatmul.bf16.gmra.mxu0 %v6795
        %v9015 = vpop.f32.mrf.mxu0
        %v9016 = vadd.f32 %v7373, %v9015
        %v9017 = vpop.f32.mrf.mxu0
        %9018 = vdwg.mxu0
        %9019 = vmatpush.bf16.msra.mxu0 %v8477
        %9020 = vmatpush.bf16.msra.mxu0 %v8476
        %9021 = vmatpush.bf16.msra.mxu0 %v8475
        %9022 = vmatpush.bf16.msra.mxu0 %v8474
        %9023 = vmatpush.bf16.msra.mxu0 %v8473
        %9024 = vmatpush.bf16.msra.mxu0 %v8472
        %9025 = vmatpush.bf16.msra.mxu0 %v8471
        %9026 = vmatpush.bf16.msra.mxu0 %v8470
        %9027 = vmatmul.bf16.gmra.mxu0 %v6796
        %v9028 = vpop.f32.mrf.mxu0
        %v9029 = vadd.f32 %v9016, %v9028
        %v9030 = vpop.f32.mrf.mxu0
        %9031 = vdwg.mxu0
        %9032 = vmatpush.bf16.msra.mxu0 %v8485
        %9033 = vmatpush.bf16.msra.mxu0 %v8484
        %9034 = vmatpush.bf16.msra.mxu0 %v8483
        %9035 = vmatpush.bf16.msra.mxu0 %v8482
        %9036 = vmatpush.bf16.msra.mxu0 %v8481
        %9037 = vmatpush.bf16.msra.mxu0 %v8480
        %9038 = vmatpush.bf16.msra.mxu0 %v8479
        %9039 = vmatpush.bf16.msra.mxu0 %v8478
        %9040 = vmatmul.bf16.gmra.mxu0 %v6797
        %v9041 = vpop.f32.mrf.mxu0
        %v9042 = vadd.f32 %v9029, %v9041
        %v9043 = vpop.f32.mrf.mxu0
        %9044 = vdwg.mxu0
        %9045 = vmatpush.bf16.msra.mxu0 %v8493
        %9046 = vmatpush.bf16.msra.mxu0 %v8492
        %9047 = vmatpush.bf16.msra.mxu0 %v8491
        %9048 = vmatpush.bf16.msra.mxu0 %v8490
        %9049 = vmatpush.bf16.msra.mxu0 %v8489
        %9050 = vmatpush.bf16.msra.mxu0 %v8488
        %9051 = vmatpush.bf16.msra.mxu0 %v8487
        %9052 = vmatpush.bf16.msra.mxu0 %v8486
        %9053 = vmatmul.bf16.gmra.mxu0 %v6798
        %v9054 = vpop.f32.mrf.mxu0
        %v9055 = vadd.f32 %v9042, %v9054
        %v9056 = vpop.f32.mrf.mxu0
        %9057 = vdwg.mxu0
        %9058 = vmatpush.bf16.msra.mxu0 %v8501
        %9059 = vmatpush.bf16.msra.mxu0 %v8500
        %9060 = vmatpush.bf16.msra.mxu0 %v8499
        %9061 = vmatpush.bf16.msra.mxu0 %v8498
        %9062 = vmatpush.bf16.msra.mxu0 %v8497
        %9063 = vmatpush.bf16.msra.mxu0 %v8496
        %9064 = vmatpush.bf16.msra.mxu0 %v8495
        %9065 = vmatpush.bf16.msra.mxu0 %v8494
        %9066 = vmatmul.bf16.gmra.mxu0 %v6799
        %v9067 = vpop.f32.mrf.mxu0
        %v9068 = vadd.f32 %v9055, %v9067
        %v9069 = vpop.f32.mrf.mxu0
        %9070 = vdwg.mxu0
        %9071 = vmatpush.bf16.msra.mxu0 %v8509
        %9072 = vmatpush.bf16.msra.mxu0 %v8508
        %9073 = vmatpush.bf16.msra.mxu0 %v8507
        %9074 = vmatpush.bf16.msra.mxu0 %v8506
        %9075 = vmatpush.bf16.msra.mxu0 %v8505
        %9076 = vmatpush.bf16.msra.mxu0 %v8504
        %9077 = vmatpush.bf16.msra.mxu0 %v8503
        %9078 = vmatpush.bf16.msra.mxu0 %v8502
        %9079 = vmatmul.bf16.gmra.mxu0 %v6800
        %v9080 = vpop.f32.mrf.mxu0
        %v9081 = vadd.f32 %v9068, %v9080
        %v9082 = vpop.f32.mrf.mxu0
        %9083 = vdwg.mxu0
        %9084 = vmatpush.bf16.msra.mxu0 %v8517
        %9085 = vmatpush.bf16.msra.mxu0 %v8516
        %9086 = vmatpush.bf16.msra.mxu0 %v8515
        %9087 = vmatpush.bf16.msra.mxu0 %v8514
        %9088 = vmatpush.bf16.msra.mxu0 %v8513
        %9089 = vmatpush.bf16.msra.mxu0 %v8512
        %9090 = vmatpush.bf16.msra.mxu0 %v8511
        %9091 = vmatpush.bf16.msra.mxu0 %v8510
        %9092 = vmatmul.bf16.gmra.mxu0 %v6801
        %v9093 = vpop.f32.mrf.mxu0
        %v9094 = vadd.f32 %v9081, %v9093
        %v9095 = vpop.f32.mrf.mxu0
        %9096 = vdwg.mxu0
        %9097 = vmatpush.bf16.msra.mxu0 %v8525
        %9098 = vmatpush.bf16.msra.mxu0 %v8524
        %9099 = vmatpush.bf16.msra.mxu0 %v8523
        %9100 = vmatpush.bf16.msra.mxu0 %v8522
        %9101 = vmatpush.bf16.msra.mxu0 %v8521
        %9102 = vmatpush.bf16.msra.mxu0 %v8520
        %9103 = vmatpush.bf16.msra.mxu0 %v8519
        %9104 = vmatpush.bf16.msra.mxu0 %v8518
        %9105 = vmatmul.bf16.gmra.mxu0 %v6802
        %v9106 = vpop.f32.mrf.mxu0
        %v9107 = vadd.f32 %v9094, %v9106
        %v9108 = vpop.f32.mrf.mxu0
        %9109 = vdwg.mxu0
        %9110 = vmatpush.bf16.msra.mxu0 %v8533
        %9111 = vmatpush.bf16.msra.mxu0 %v8532
        %9112 = vmatpush.bf16.msra.mxu0 %v8531
        %9113 = vmatpush.bf16.msra.mxu0 %v8530
        %9114 = vmatpush.bf16.msra.mxu0 %v8529
        %9115 = vmatpush.bf16.msra.mxu0 %v8528
        %9116 = vmatpush.bf16.msra.mxu0 %v8527
        %9117 = vmatpush.bf16.msra.mxu0 %v8526
        %9118 = vmatmul.bf16.gmra.mxu0 %v6803
        %v9119 = vpop.f32.mrf.mxu0
        %v9120 = vadd.f32 %v9107, %v9119
        %v9121 = vpop.f32.mrf.mxu0
        %9122 = vdwg.mxu0
        %9123 = vmatpush.bf16.msra.mxu0 %v8541
        %9124 = vmatpush.bf16.msra.mxu0 %v8540
        %9125 = vmatpush.bf16.msra.mxu0 %v8539
        %9126 = vmatpush.bf16.msra.mxu0 %v8538
        %9127 = vmatpush.bf16.msra.mxu0 %v8537
        %9128 = vmatpush.bf16.msra.mxu0 %v8536
        %9129 = vmatpush.bf16.msra.mxu0 %v8535
        %9130 = vmatpush.bf16.msra.mxu0 %v8534
        %9131 = vmatmul.bf16.gmra.mxu0 %v6804
        %v9132 = vpop.f32.mrf.mxu0
        %v9133 = vadd.f32 %v9120, %v9132
        %v9134 = vpop.f32.mrf.mxu0
        %9135 = vdwg.mxu0
        %9136 = vmatpush.bf16.msra.mxu0 %v8549
        %9137 = vmatpush.bf16.msra.mxu0 %v8548
        %9138 = vmatpush.bf16.msra.mxu0 %v8547
        %9139 = vmatpush.bf16.msra.mxu0 %v8546
        %9140 = vmatpush.bf16.msra.mxu0 %v8545
        %9141 = vmatpush.bf16.msra.mxu0 %v8544
        %9142 = vmatpush.bf16.msra.mxu0 %v8543
        %9143 = vmatpush.bf16.msra.mxu0 %v8542
        %9144 = vmatmul.bf16.gmra.mxu0 %v6805
        %v9145 = vpop.f32.mrf.mxu0
        %v9146 = vadd.f32 %v9133, %v9145
        %v9147 = vpop.f32.mrf.mxu0
        %9148 = vdwg.mxu0
        %9149 = vmatpush.bf16.msra.mxu0 %v8557
        %9150 = vmatpush.bf16.msra.mxu0 %v8556
        %9151 = vmatpush.bf16.msra.mxu0 %v8555
        %9152 = vmatpush.bf16.msra.mxu0 %v8554
        %9153 = vmatpush.bf16.msra.mxu0 %v8553
        %9154 = vmatpush.bf16.msra.mxu0 %v8552
        %9155 = vmatpush.bf16.msra.mxu0 %v8551
        %9156 = vmatpush.bf16.msra.mxu0 %v8550
        %9157 = vmatmul.bf16.gmra.mxu0 %v6806
        %v9158 = vpop.f32.mrf.mxu0
        %v9159 = vadd.f32 %v9146, %v9158
        %v9160 = vpop.f32.mrf.mxu0
        %9161 = vdwg.mxu0
        %9162 = vmatpush.bf16.msra.mxu0 %v8565
        %9163 = vmatpush.bf16.msra.mxu0 %v8564
        %9164 = vmatpush.bf16.msra.mxu0 %v8563
        %9165 = vmatpush.bf16.msra.mxu0 %v8562
        %9166 = vmatpush.bf16.msra.mxu0 %v8561
        %9167 = vmatpush.bf16.msra.mxu0 %v8560
        %9168 = vmatpush.bf16.msra.mxu0 %v8559
        %9169 = vmatpush.bf16.msra.mxu0 %v8558
        %9170 = vmatmul.bf16.gmra.mxu0 %v6807
        %v9171 = vpop.f32.mrf.mxu0
        %v9172 = vadd.f32 %v9159, %v9171
        %v9173 = vpop.f32.mrf.mxu0
        %9174 = vdwg.mxu0
        %9175 = vmatpush.bf16.msra.mxu0 %v8573
        %9176 = vmatpush.bf16.msra.mxu0 %v8572
        %9177 = vmatpush.bf16.msra.mxu0 %v8571
        %9178 = vmatpush.bf16.msra.mxu0 %v8570
        %9179 = vmatpush.bf16.msra.mxu0 %v8569
        %9180 = vmatpush.bf16.msra.mxu0 %v8568
        %9181 = vmatpush.bf16.msra.mxu0 %v8567
        %9182 = vmatpush.bf16.msra.mxu0 %v8566
        %9183 = vmatmul.bf16.gmra.mxu0 %v6808
        %v9184 = vpop.f32.mrf.mxu0
        %v9185 = vadd.f32 %v9172, %v9184
        %v9186 = vpop.f32.mrf.mxu0
        %9187 = vdwg.mxu0
        %9188 = vmatpush.bf16.msra.mxu0 %v8581
        %9189 = vmatpush.bf16.msra.mxu0 %v8580
        %9190 = vmatpush.bf16.msra.mxu0 %v8579
        %9191 = vmatpush.bf16.msra.mxu0 %v8578
        %9192 = vmatpush.bf16.msra.mxu0 %v8577
        %9193 = vmatpush.bf16.msra.mxu0 %v8576
        %9194 = vmatpush.bf16.msra.mxu0 %v8575
        %9195 = vmatpush.bf16.msra.mxu0 %v8574
        %9196 = vmatmul.bf16.gmra.mxu0 %v6809
        %v9197 = vpop.f32.mrf.mxu0
        %v9198 = vadd.f32 %v9185, %v9197
        %v9199 = vpop.f32.mrf.mxu0
        %9200 = vdwg.mxu0
        %9201 = vmatpush.bf16.msra.mxu0 %v8589
        %9202 = vmatpush.bf16.msra.mxu0 %v8588
        %9203 = vmatpush.bf16.msra.mxu0 %v8587
        %9204 = vmatpush.bf16.msra.mxu0 %v8586
        %9205 = vmatpush.bf16.msra.mxu0 %v8585
        %9206 = vmatpush.bf16.msra.mxu0 %v8584
        %9207 = vmatpush.bf16.msra.mxu0 %v8583
        %9208 = vmatpush.bf16.msra.mxu0 %v8582
        %9209 = vmatmul.bf16.gmra.mxu0 %v6810
        %v9210 = vpop.f32.mrf.mxu0
        %v9211 = vadd.f32 %v9198, %v9210
        %v9212 = vpop.f32.mrf.mxu0
        %9213 = vdwg.mxu0
        %9214 = vmatpush.bf16.msra.mxu0 %v8597
        %9215 = vmatpush.bf16.msra.mxu0 %v8596
        %9216 = vmatpush.bf16.msra.mxu0 %v8595
        %9217 = vmatpush.bf16.msra.mxu0 %v8594
        %9218 = vmatpush.bf16.msra.mxu0 %v8593
        %9219 = vmatpush.bf16.msra.mxu0 %v8592
        %9220 = vmatpush.bf16.msra.mxu0 %v8591
        %9221 = vmatpush.bf16.msra.mxu0 %v8590
        %9222 = vmatmul.bf16.gmra.mxu0 %v6811
        %v9223 = vpop.f32.mrf.mxu0
        %v9224 = vadd.f32 %v9211, %v9223
        %v9225 = vpop.f32.mrf.mxu0
        %9226 = vdwg.mxu0
        %9227 = vmatpush.bf16.msra.mxu0 %v8605
        %9228 = vmatpush.bf16.msra.mxu0 %v8604
        %9229 = vmatpush.bf16.msra.mxu0 %v8603
        %9230 = vmatpush.bf16.msra.mxu0 %v8602
        %9231 = vmatpush.bf16.msra.mxu0 %v8601
        %9232 = vmatpush.bf16.msra.mxu0 %v8600
        %9233 = vmatpush.bf16.msra.mxu0 %v8599
        %9234 = vmatpush.bf16.msra.mxu0 %v8598
        %9235 = vmatmul.bf16.gmra.mxu0 %v6812
        %v9236 = vpop.f32.mrf.mxu0
        %v9237 = vadd.f32 %v9224, %v9236
        %v9238 = vpop.f32.mrf.mxu0
        %9239 = vdwg.mxu0
        %9240 = vmatpush.bf16.msra.mxu0 %v8613
        %9241 = vmatpush.bf16.msra.mxu0 %v8612
        %9242 = vmatpush.bf16.msra.mxu0 %v8611
        %9243 = vmatpush.bf16.msra.mxu0 %v8610
        %9244 = vmatpush.bf16.msra.mxu0 %v8609
        %9245 = vmatpush.bf16.msra.mxu0 %v8608
        %9246 = vmatpush.bf16.msra.mxu0 %v8607
        %9247 = vmatpush.bf16.msra.mxu0 %v8606
        %9248 = vmatmul.bf16.gmra.mxu0 %v6813
        %v9249 = vpop.f32.mrf.mxu0
        %v9250 = vadd.f32 %v9237, %v9249
        %v9251 = vpop.f32.mrf.mxu0
        %9252 = vdwg.mxu0
        %9253 = vmatpush.bf16.msra.mxu0 %v8621
        %9254 = vmatpush.bf16.msra.mxu0 %v8620
        %9255 = vmatpush.bf16.msra.mxu0 %v8619
        %9256 = vmatpush.bf16.msra.mxu0 %v8618
        %9257 = vmatpush.bf16.msra.mxu0 %v8617
        %9258 = vmatpush.bf16.msra.mxu0 %v8616
        %9259 = vmatpush.bf16.msra.mxu0 %v8615
        %9260 = vmatpush.bf16.msra.mxu0 %v8614
        %9261 = vmatmul.bf16.gmra.mxu0 %v6814
        %v9262 = vpop.f32.mrf.mxu0
        %v9263 = vadd.f32 %v9250, %v9262
        %v9264 = vpop.f32.mrf.mxu0
        %9265 = vdwg.mxu0
        %9266 = vmatpush.bf16.msra.mxu0 %v8629
        %9267 = vmatpush.bf16.msra.mxu0 %v8628
        %9268 = vmatpush.bf16.msra.mxu0 %v8627
        %9269 = vmatpush.bf16.msra.mxu0 %v8626
        %9270 = vmatpush.bf16.msra.mxu0 %v8625
        %9271 = vmatpush.bf16.msra.mxu0 %v8624
        %9272 = vmatpush.bf16.msra.mxu0 %v8623
        %9273 = vmatpush.bf16.msra.mxu0 %v8622
        %9274 = vmatmul.bf16.gmra.mxu0 %v6815
        %v9275 = vpop.f32.mrf.mxu0
        %v9276 = vadd.f32 %v9263, %v9275
        %v9277 = vpop.f32.mrf.mxu0
        %9278 = vdwg.mxu0
        %9279 = vmatpush.bf16.msra.mxu0 %v8637
        %9280 = vmatpush.bf16.msra.mxu0 %v8636
        %9281 = vmatpush.bf16.msra.mxu0 %v8635
        %9282 = vmatpush.bf16.msra.mxu0 %v8634
        %9283 = vmatpush.bf16.msra.mxu0 %v8633
        %9284 = vmatpush.bf16.msra.mxu0 %v8632
        %9285 = vmatpush.bf16.msra.mxu0 %v8631
        %9286 = vmatpush.bf16.msra.mxu0 %v8630
        %9287 = vmatmul.bf16.gmra.mxu0 %v6816
        %v9288 = vpop.f32.mrf.mxu0
        %v9289 = vadd.f32 %v9276, %v9288
        %v9290 = vpop.f32.mrf.mxu0
        %9291 = vdwg.mxu0
        %9292 = vmatpush.bf16.msra.mxu0 %v8645
        %9293 = vmatpush.bf16.msra.mxu0 %v8644
        %9294 = vmatpush.bf16.msra.mxu0 %v8643
        %9295 = vmatpush.bf16.msra.mxu0 %v8642
        %9296 = vmatpush.bf16.msra.mxu0 %v8641
        %9297 = vmatpush.bf16.msra.mxu0 %v8640
        %9298 = vmatpush.bf16.msra.mxu0 %v8639
        %9299 = vmatpush.bf16.msra.mxu0 %v8638
        %9300 = vmatmul.bf16.gmra.mxu0 %v6817
        %v9301 = vpop.f32.mrf.mxu0
        %v9302 = vadd.f32 %v9289, %v9301
        %v9303 = vpop.f32.mrf.mxu0
        %9304 = vdwg.mxu0
        %9305 = vmatpush.bf16.msra.mxu0 %v8653
        %9306 = vmatpush.bf16.msra.mxu0 %v8652
        %9307 = vmatpush.bf16.msra.mxu0 %v8651
        %9308 = vmatpush.bf16.msra.mxu0 %v8650
        %9309 = vmatpush.bf16.msra.mxu0 %v8649
        %9310 = vmatpush.bf16.msra.mxu0 %v8648
        %9311 = vmatpush.bf16.msra.mxu0 %v8647
        %9312 = vmatpush.bf16.msra.mxu0 %v8646
        %9313 = vmatmul.bf16.gmra.mxu0 %v6818
        %v9314 = vpop.f32.mrf.mxu0
        %v9315 = vadd.f32 %v9302, %v9314
        %v9316 = vpop.f32.mrf.mxu0
        %9317 = vdwg.mxu0
        %9318 = vmatpush.bf16.msra.mxu0 %v8661
        %9319 = vmatpush.bf16.msra.mxu0 %v8660
        %9320 = vmatpush.bf16.msra.mxu0 %v8659
        %9321 = vmatpush.bf16.msra.mxu0 %v8658
        %9322 = vmatpush.bf16.msra.mxu0 %v8657
        %9323 = vmatpush.bf16.msra.mxu0 %v8656
        %9324 = vmatpush.bf16.msra.mxu0 %v8655
        %9325 = vmatpush.bf16.msra.mxu0 %v8654
        %9326 = vmatmul.bf16.gmra.mxu0 %v6819
        %v9327 = vpop.f32.mrf.mxu0
        %v9328 = vadd.f32 %v9315, %v9327
        %v9329 = vpop.f32.mrf.mxu0
        %9330 = vdwg.mxu0
        %9331 = vmatpush.bf16.msra.mxu0 %v8669
        %9332 = vmatpush.bf16.msra.mxu0 %v8668
        %9333 = vmatpush.bf16.msra.mxu0 %v8667
        %9334 = vmatpush.bf16.msra.mxu0 %v8666
        %9335 = vmatpush.bf16.msra.mxu0 %v8665
        %9336 = vmatpush.bf16.msra.mxu0 %v8664
        %9337 = vmatpush.bf16.msra.mxu0 %v8663
        %9338 = vmatpush.bf16.msra.mxu0 %v8662
        %9339 = vmatmul.bf16.gmra.mxu0 %v6820
        %v9340 = vpop.f32.mrf.mxu0
        %v9341 = vadd.f32 %v9328, %v9340
        %v9342 = vpop.f32.mrf.mxu0
        %9343 = vdwg.mxu0
        %9344 = vmatpush.bf16.msra.mxu0 %v8677
        %9345 = vmatpush.bf16.msra.mxu0 %v8676
        %9346 = vmatpush.bf16.msra.mxu0 %v8675
        %9347 = vmatpush.bf16.msra.mxu0 %v8674
        %9348 = vmatpush.bf16.msra.mxu0 %v8673
        %9349 = vmatpush.bf16.msra.mxu0 %v8672
        %9350 = vmatpush.bf16.msra.mxu0 %v8671
        %9351 = vmatpush.bf16.msra.mxu0 %v8670
        %9352 = vmatmul.bf16.gmra.mxu0 %v6821
        %v9353 = vpop.f32.mrf.mxu0
        %v9354 = vadd.f32 %v9341, %v9353
        %v9355 = vpop.f32.mrf.mxu0
        %9356 = vdwg.mxu0
        %9357 = vmatpush.bf16.msra.mxu0 %v8685
        %9358 = vmatpush.bf16.msra.mxu0 %v8684
        %9359 = vmatpush.bf16.msra.mxu0 %v8683
        %9360 = vmatpush.bf16.msra.mxu0 %v8682
        %9361 = vmatpush.bf16.msra.mxu0 %v8681
        %9362 = vmatpush.bf16.msra.mxu0 %v8680
        %9363 = vmatpush.bf16.msra.mxu0 %v8679
        %9364 = vmatpush.bf16.msra.mxu0 %v8678
        %9365 = vmatmul.bf16.gmra.mxu0 %v6822
        %v9366 = vpop.f32.mrf.mxu0
        %v9367 = vadd.f32 %v9354, %v9366
        %v9368 = vpop.f32.mrf.mxu0
        %9369 = vdwg.mxu0
        %9370 = vmatpush.bf16.msra.mxu0 %v8693
        %9371 = vmatpush.bf16.msra.mxu0 %v8692
        %9372 = vmatpush.bf16.msra.mxu0 %v8691
        %9373 = vmatpush.bf16.msra.mxu0 %v8690
        %9374 = vmatpush.bf16.msra.mxu0 %v8689
        %9375 = vmatpush.bf16.msra.mxu0 %v8688
        %9376 = vmatpush.bf16.msra.mxu0 %v8687
        %9377 = vmatpush.bf16.msra.mxu0 %v8686
        %9378 = vmatmul.bf16.gmra.mxu0 %v6823
        %v9379 = vpop.f32.mrf.mxu0
        %v9380 = vadd.f32 %v9367, %v9379
        %v9381 = vpop.f32.mrf.mxu0
        %9382 = vdwg.mxu0
        %9383 = vmatpush.bf16.msra.mxu0 %v8701
        %9384 = vmatpush.bf16.msra.mxu0 %v8700
        %9385 = vmatpush.bf16.msra.mxu0 %v8699
        %9386 = vmatpush.bf16.msra.mxu0 %v8698
        %9387 = vmatpush.bf16.msra.mxu0 %v8697
        %9388 = vmatpush.bf16.msra.mxu0 %v8696
        %9389 = vmatpush.bf16.msra.mxu0 %v8695
        %9390 = vmatpush.bf16.msra.mxu0 %v8694
        %9391 = vmatmul.bf16.gmra.mxu0 %v6824
        %v9392 = vpop.f32.mrf.mxu0
        %v9393 = vadd.f32 %v9380, %v9392
        %v9394 = vpop.f32.mrf.mxu0
        %9395 = vdwg.mxu0
        %9396 = vmatpush.bf16.msra.mxu0 %v8709
        %9397 = vmatpush.bf16.msra.mxu0 %v8708
        %9398 = vmatpush.bf16.msra.mxu0 %v8707
        %9399 = vmatpush.bf16.msra.mxu0 %v8706
        %9400 = vmatpush.bf16.msra.mxu0 %v8705
        %9401 = vmatpush.bf16.msra.mxu0 %v8704
        %9402 = vmatpush.bf16.msra.mxu0 %v8703
        %9403 = vmatpush.bf16.msra.mxu0 %v8702
        %9404 = vmatmul.bf16.gmra.mxu0 %v6825
        %v9405 = vpop.f32.mrf.mxu0
        %v9406 = vadd.f32 %v9393, %v9405
        %v9407 = vpop.f32.mrf.mxu0
        %9408 = vdwg.mxu0
        %9409 = vmatpush.bf16.msra.mxu0 %v8717
        %9410 = vmatpush.bf16.msra.mxu0 %v8716
        %9411 = vmatpush.bf16.msra.mxu0 %v8715
        %9412 = vmatpush.bf16.msra.mxu0 %v8714
        %9413 = vmatpush.bf16.msra.mxu0 %v8713
        %9414 = vmatpush.bf16.msra.mxu0 %v8712
        %9415 = vmatpush.bf16.msra.mxu0 %v8711
        %9416 = vmatpush.bf16.msra.mxu0 %v8710
        %9417 = vmatmul.bf16.gmra.mxu0 %v6826
        %v9418 = vpop.f32.mrf.mxu0
        %v9419 = vadd.f32 %v9406, %v9418
        %v9420 = vpop.f32.mrf.mxu0
        %9421 = vdwg.mxu0
        %9422 = vmatpush.bf16.msra.mxu0 %v8725
        %9423 = vmatpush.bf16.msra.mxu0 %v8724
        %9424 = vmatpush.bf16.msra.mxu0 %v8723
        %9425 = vmatpush.bf16.msra.mxu0 %v8722
        %9426 = vmatpush.bf16.msra.mxu0 %v8721
        %9427 = vmatpush.bf16.msra.mxu0 %v8720
        %9428 = vmatpush.bf16.msra.mxu0 %v8719
        %9429 = vmatpush.bf16.msra.mxu0 %v8718
        %9430 = vmatmul.bf16.gmra.mxu0 %v6827
        %v9431 = vpop.f32.mrf.mxu0
        %v9432 = vadd.f32 %v9419, %v9431
        %v9433 = vpop.f32.mrf.mxu0
        %9434 = vdwg.mxu0
        %9435 = vmatpush.bf16.msra.mxu0 %v8733
        %9436 = vmatpush.bf16.msra.mxu0 %v8732
        %9437 = vmatpush.bf16.msra.mxu0 %v8731
        %9438 = vmatpush.bf16.msra.mxu0 %v8730
        %9439 = vmatpush.bf16.msra.mxu0 %v8729
        %9440 = vmatpush.bf16.msra.mxu0 %v8728
        %9441 = vmatpush.bf16.msra.mxu0 %v8727
        %9442 = vmatpush.bf16.msra.mxu0 %v8726
        %9443 = vmatmul.bf16.gmra.mxu0 %v6828
        %v9444 = vpop.f32.mrf.mxu0
        %v9445 = vadd.f32 %v9432, %v9444
        %v9446 = vpop.f32.mrf.mxu0
        %9447 = vdwg.mxu0
        %v9448 = vld [vmem:[%s5] sm:$0xff]
        %v9449 = vld [vmem:[%s5 + $0x8] sm:$0xff]
        %v9450 = vld [vmem:[%s5 + $0x10] sm:$0xff]
        %v9451 = vld [vmem:[%s5 + $0x18] sm:$0xff]
        %v9452 = vld [vmem:[%s5 + $0x20] sm:$0xff]
        %v9453 = vld [vmem:[%s5 + $0x28] sm:$0xff]
        %v9454 = vld [vmem:[%s5 + $0x30] sm:$0xff]
        %v9455 = vld [vmem:[%s5 + $0x38] sm:$0xff]
        %v9456 = vld [vmem:[%s5 + $0x40] sm:$0xff]
        %v9457 = vld [vmem:[%s5 + $0x48] sm:$0xff]
        %v9458 = vld [vmem:[%s5 + $0x50] sm:$0xff]
        %v9459 = vld [vmem:[%s5 + $0x58] sm:$0xff]
        %v9460 = vld [vmem:[%s5 + $0x60] sm:$0xff]
        %v9461 = vld [vmem:[%s5 + $0x68] sm:$0xff]
        %v9462 = vld [vmem:[%s5 + $0x70] sm:$0xff]
        %v9463 = vld [vmem:[%s5 + $0x78] sm:$0xff]
        %v9464 = vld [vmem:[%s6] sm:$0x1]
        %9465 = vmatpush.msra.mxu0 %v9463
        %9466 = vmatpush.msra.mxu0 %v9462
        %9467 = vmatpush.msra.mxu0 %v9461
        %9468 = vmatpush.msra.mxu0 %v9460
        %9469 = vmatpush.msra.mxu0 %v9459
        %9470 = vmatpush.msra.mxu0 %v9458
        %9471 = vmatpush.msra.mxu0 %v9457
        %9472 = vmatpush.msra.mxu0 %v9456
        %9473 = vmatpush.msra.mxu0 %v9455
        %9474 = vmatpush.msra.mxu0 %v9454
        %9475 = vmatpush.msra.mxu0 %v9453
        %9476 = vmatpush.msra.mxu0 %v9452
        %9477 = vmatpush.msra.mxu0 %v9451
        %9478 = vmatpush.msra.mxu0 %v9450
        %9479 = vmatpush.msra.mxu0 %v9449
        %9480 = vmatpush.msra.mxu0 %v9448
        %9481 = vmatmul.f32.gmra.mxu0 %v9445
        %v9482 = vpop.f32.mrf.mxu0
        %v9483 = vadd.f32 %v9464, %v9482
        %9484 = vdwg.mxu0
        %v9485 = vmax.f32 %v9483, 0.0
        %v9486 = vld [vmem:[%s7] sm:$0xff]
        %v9487 = vld [vmem:[%s7 + $0x8] sm:$0xff]
        %v9488 = vld [vmem:[%s7 + $0x10] sm:$0xff]
        %v9489 = vld [vmem:[%s7 + $0x18] sm:$0xff]
        %v9490 = vld [vmem:[%s7 + $0x20] sm:$0xff]
        %v9491 = vld [vmem:[%s7 + $0x28] sm:$0xff]
        %v9492 = vld [vmem:[%s7 + $0x30] sm:$0xff]
        %v9493 = vld [vmem:[%s7 + $0x38] sm:$0xff]
        %v9494 = vld [vmem:[%s7 + $0x40] sm:$0xff]
        %v9495 = vld [vmem:[%s7 + $0x48] sm:$0xff]
        %v9496 = vld [vmem:[%s7 + $0x50] sm:$0xff]
        %v9497 = vld [vmem:[%s7 + $0x58] sm:$0xff]
        %v9498 = vld [vmem:[%s7 + $0x60] sm:$0xff]
        %v9499 = vld [vmem:[%s7 + $0x68] sm:$0xff]
        %v9500 = vld [vmem:[%s7 + $0x70] sm:$0xff]
        %v9501 = vld [vmem:[%s7 + $0x78] sm:$0xff]
        %v9502 = vld [vmem:[%s8] sm:$0x1]
        %9503 = vmatpush.msra.mxu0 %v9501
        %9504 = vmatpush.msra.mxu0 %v9500
        %9505 = vmatpush.msra.mxu0 %v9499
        %9506 = vmatpush.msra.mxu0 %v9498
        %9507 = vmatpush.msra.mxu0 %v9497
        %9508 = vmatpush.msra.mxu0 %v9496
        %9509 = vmatpush.msra.mxu0 %v9495
        %9510 = vmatpush.msra.mxu0 %v9494
        %9511 = vmatpush.msra.mxu0 %v9493
        %9512 = vmatpush.msra.mxu0 %v9492
        %9513 = vmatpush.msra.mxu0 %v9491
        %9514 = vmatpush.msra.mxu0 %v9490
        %9515 = vmatpush.msra.mxu0 %v9489
        %9516 = vmatpush.msra.mxu0 %v9488
        %9517 = vmatpush.msra.mxu0 %v9487
        %9518 = vmatpush.msra.mxu0 %v9486
        %9519 = vmatmul.f32.gmra.mxu0 %v9485
        %v9520 = vpop.f32.mrf.mxu0
        %v9521 = vadd.f32 %v9502, %v9520
        %9522 = vdwg.mxu0
        %v9523 = vxor.u32 %v9521, 2147483648
        %v9524 = vmul.f32 %v9523, 1.442695
        %v9525 = vpow.pop %v9524
        %v9526 = vadd.f32 %v9525, 1.0
        %v9527 = vrcp.pop %v9526
        %v9528 = vmul.f32 %v9526, %v9527
        %v9529 = vsub.f32 1.0, %v9528
        %v9530 = vmul.f32 %v9527, %v9529
        %v9531 = vadd.f32 %v9527, %v9530
        %vm9532 = vweird.f32 %v9526
        %vm9533 = vweird.f32 %v9527
        %vm9534 = vmor %vm9532, %vm9533
        %v9535 = vsel %vm9534, %v9527, %v9531
        %v9536 = vand.u32 2147483647, %v9526
        %vm9537 = vcmp.eq.f32.partialorder %v9536, 8.507059e+37
        %v9538 = vand.u32 %v9526, 2147483648
        %v9539 = vor.u32 1.1754944e-38, %v9538
        %v9540 = vsel %vm9537, %v9539, %v9535
        %v9541 = vmul.f32 1.0, %v9540
        %v9542 = vperm.slane %v9541, 0
        %9543 = vst [vmem:[%s358] sm:$0xff] %v9542
      $region64: #{my_densenet_forward.1} parent=55 // pred_fallthru
        _
      %p9544 = scmp.lt.s32.totalorder %s24, 1
      %s9545 = scalar_select %p9544, %s24, 1
      %s9546 = smul.addr %s9545, 8
      %s9547 = scalar_lea.vmem %s9, %s9546
      // Predicated region
      $region65: #{my_densenet_forward.1} parent=55 // pred_check
        %p9548 = pneg %p246
      $region66: #{my_densenet_forward.1} parent=55 // pred_check_branch
        %9550 = sbr.rel (%p9548) target = $region68
      $region67: #{my_densenet_forward.1} parent=55 // pred_region
        _
      $region68: #{my_densenet_forward.1} parent=55 // pred_fallthru
        _
    $region56: #{my_densenet_forward.1} parent=5 // pred_fallthru
      _
    %p9551 = scmp.le.s32.totalorder 2, %s15
    // Predicated region
    $region69: #{my_densenet_forward.1} parent=5 // pred_check
      %p9552 = pneg %p9551
    $region70: #{my_densenet_forward.1} parent=5 // pred_check_branch
      %9554 = sbr.rel (%p9552) target = $region72
    $region71: #{my_densenet_forward.1} parent=5 // pred_region
      %s9555 = ssub.s32 %s15, 2
      // Predicated region
      $region73: #{my_densenet_forward.1} parent=71 // pred_check
        %p9556 = pneg %p252
      $region74: #{my_densenet_forward.1} parent=71 // pred_check_branch
        %9558 = sbr.rel (%p9556) target = $region76
      $region75: #{my_densenet_forward.1} parent=71 // pred_region
        %p9559 = scmp.lt.s32.totalorder %s26, 1
        %s9560 = scalar_select %p9559, %s26, 1
        %s9561 = smul.addr %s9560, 8
        %s9562 = scalar_lea.vmem %s9, %s9561
      $region76: #{my_densenet_forward.1} parent=71 // pred_fallthru
        _
    $region72: #{my_densenet_forward.1} parent=5 // pred_fallthru
      _
  $region6: #{my_densenet_forward.1} parent=0 // loop_footer
    %s19 = sadd.s32 1, %s15
  $region7: #{my_densenet_forward.1} parent=0 // loop_footer_branch
    %14 = sbr.rel target = $region3
  $region8: #{my_densenet_forward.1} parent=0 // loop_exit
    _

</llo_original>
